<compile_context>
chip_gen: v5e
topology: v5e:2x2
jax: 0.10.0
libtpu: 0.0.40
codegen_flags: <defaults>
</compile_context>

<pallas_src>
import functools
import warnings

import jax
import jax.numpy as jnp
from jax.experimental import pallas as pl
from jax.experimental.pallas import tpu as pltpu


# --------------------------------------------------------------------------- #
# Kernel
# --------------------------------------------------------------------------- #
def painn_update_kernel(ns_ref, nv_ref,
                        w_uv_ref, b_uv_ref,
                        w1_ref, b1_ref,
                        w2_ref, b2_ref,
                        out_s_ref, out_v_ref,
                        *, fuse_uv):
    three, tm, F = nv_ref.shape
    ns = ns_ref[...]                                   # (tm, F)     bf16/f32
    nv = nv_ref[...]                                   # (3, tm, F)  bf16/f32

    # Leading-dim merge (3, tm, F) -> (3*tm, F): free view (tm % 8 == 0).
    nv2d = nv.reshape(three * tm, F).astype(jnp.bfloat16)

    # ---- update_U / update_V ------------------------------------------------
    if fuse_uv:
        # One (3*tm, F) x (F, 2F) matmul; the [:, :F] / [:, F:] slices fall on
        # 128-lane boundaries (free).  Preferred for small F (memory-bound).
        uv2d = (jnp.dot(nv2d, w_uv_ref[...],
                        preferred_element_type=jnp.float32)
                + b_uv_ref[...])                       # (3*tm, 2F) f32
        Uv = uv2d[:, :F].reshape(three, tm, F)
        Vv = uv2d[:, F:].reshape(three, tm, F)
    else:
        # Un-fused: avoids the wide (3*tm, 2F) f32 intermediate -> lower peak
        # VMEM for large F (v7x's 64 MiB VMEM).
        Uv = (jnp.dot(nv2d, w_uv_ref[:, :F],
                      preferred_element_type=jnp.float32)
              + b_uv_ref[:, :F]).reshape(three, tm, F)
        Vv = (jnp.dot(nv2d, w_uv_ref[:, F:],
                      preferred_element_type=jnp.float32)
              + b_uv_ref[:, F:]).reshape(three, tm, F)

    # ---- ||Vv|| over the vector-component axis (torch dim=1) -----------------
    # Component axis leads -> three full-vreg VPU adds.  Matches
    # torch.linalg.norm (no epsilon); forward-only, so no NaN-grad concern.
    Vv_norm = jnp.sqrt(jnp.sum(Vv * Vv, axis=0))       # (tm, F) f32

    # ---- update_mlp layer 1: Linear(2F -> F) ---------------------------------
    # Two accumulated K=F matmuls instead of materializing a (tm, 2F) concat.
    h = (jnp.dot(Vv_norm.astype(jnp.bfloat16), w1_ref[:F, :],
                 preferred_element_type=jnp.float32)
         + jnp.dot(ns.astype(jnp.bfloat16), w1_ref[F:, :],
                   preferred_element_type=jnp.float32)
         + b1_ref[...])                                # (tm, F) f32
    h = h * jax.nn.sigmoid(h)                          # SiLU (EUP), f32

    # ---- update_mlp layer 2: Linear(F -> 3F) ---------------------------------
    a = (jnp.dot(h.astype(jnp.bfloat16), w2_ref[...],
                 preferred_element_type=jnp.float32)
         + b2_ref[...])                                # (tm, 3F) f32
    a_vv = a[:, :F]
    a_sv = a[:, F:2 * F]
    a_ss = a[:, 2 * F:]

    # ---- gating / residuals ---------------------------------------------------
    delta_v = a_vv[None, :, :] * Uv                    # broadcast over component
    inner = jnp.sum(Uv * Vv, axis=0)                   # (tm, F) f32
    delta_s = a_sv * inner + a_ss

    out_s_ref[...] = (ns.astype(jnp.float32) + delta_s).astype(out_s_ref.dtype)
    out_v_ref[...] = (nv.astype(jnp.float32) + delta_v).astype(out_v_ref.dtype)


# --------------------------------------------------------------------------- #
# Tile / VMEM budgeting
# --------------------------------------------------------------------------- #
def _vmem_bytes_estimate(tm, F, act_itemsize):
    # Double-buffered pipelined tiles: (ns + 3-component nv), in and out.
    io = 2 * 2 * (4 * tm * F) * act_itemsize
    # Resident weights (worst case: double-buffered) + f32 biases.
    weights = 2 * (7 * F * F * 2 + 6 * F * 4)
    # f32 intermediates inside the body (uv2d / Uv / Vv / a / delta_v / ...).
    temps = 28 * tm * F * 4
    return io + weights + temps


def _select_tm(N, F, tm, act_itemsize, vmem_budget_bytes=40 * 1024 * 1024):
    if tm is None:
        tm = 256                       # 128 -> 256: better HBM-roofline fraction
    tm = max(8, min(tm, N))
    # Keep >= 2 grid steps when N allows, so v7x's two TensorCores both work.
    if N >= 16 and tm > N // 2:
        tm = N // 2
    tm = max(8, (tm // 8) * 8)
    # Shrink until the VMEM estimate fits (v7x: 64 MiB physical VMEM).
    while tm > 8 and _vmem_bytes_estimate(tm, F, act_itemsize) > vmem_budget_bytes:
        tm = max(8, ((tm // 2) // 8) * 8)
    return tm


# --------------------------------------------------------------------------- #
# Wrappers
# --------------------------------------------------------------------------- #
def painn_update_cm(node_scalar, node_vector_cm, params, *, tm=None,
                    fuse_uv=None, single_buffer_weights=True):
    """PaiNN update, component-major layout.

    node_scalar:    (N, F)      bf16 or f32
    node_vector_cm: (3, N, F)   bf16 or f32  (torch's (N, 3, F) transposed)
    Returns (out_scalar (N, F), out_vector_cm (3, N, F)) in the input dtypes.
    """
    N, F = node_scalar.shape
    assert node_vector_cm.shape == (3, N, F)
    assert F % 128 == 0, "feature dim must be a multiple of 128 (lane dim)"

    act_itemsize = max(jnp.dtype(node_scalar.dtype).itemsize,
                       jnp.dtype(node_vector_cm.dtype).itemsize)
    tm = _select_tm(N, F, tm, act_itemsize)
    if fuse_uv is None:
        fuse_uv = F < 512              # un-fuse at large F to cut peak VMEM

    # Pad N to a multiple of tm (only when needed); outputs sliced back.
    pad = (-N) % tm
    ns_p, nv_p = node_scalar, node_vector_cm
    if pad:
        ns_p = jnp.pad(ns_p, ((0, pad), (0, 0)))
        nv_p = jnp.pad(nv_p, ((0, 0), (0, pad), (0, 0)))
    Np = N + pad
    grid = (Np // tm,)

    w_uv, b_uv, w1, b1, w2, b2 = params

    est = _vmem_bytes_estimate(tm, F, act_itemsize)
    vmem_limit_bytes = int(min(56 * 1024 * 1024, max(32 * 1024 * 1024, 2 * est)))

    # Advisory cost estimate (U/V 12NF^2, mlp1 4NF^2, mlp2 6NF^2).
    flops = 22 * Np * F * F
    transcendentals = 2 * Np * F
    bytes_accessed = (2 * 4 * Np * F * act_itemsize     # ns + 3*nv, in + out
                      + 7 * F * F * 2                   # bf16 weights
                      + 6 * F * 4)                      # f32 biases

    out_shape = (
        jax.ShapeDtypeStruct((Np, F), node_scalar.dtype),
        jax.ShapeDtypeStruct((3, Np, F), node_vector_cm.dtype),
    )

    kernel = functools.partial(painn_update_kernel, fuse_uv=fuse_uv)

    def _call(single_buffer):
        wkw = ({"pipeline_mode": pl.Buffered(buffer_count=1)}
               if single_buffer else {})

        def resident(shape):
            return pl.BlockSpec(shape, lambda i, _s=shape: (0,) * len(_s), **wkw)

        grid_spec = pltpu.PrefetchScalarGridSpec(
            num_scalar_prefetch=0,
            grid=grid,
            in_specs=[
                pl.BlockSpec((tm, F), lambda i: (i, 0)),        # node_scalar
                pl.BlockSpec((3, tm, F), lambda i: (0, i, 0)),  # node_vector (3,N,F)
                resident((F, 2 * F)), resident((1, 2 * F)),     # W_[U|V], b_[U|V]
                resident((2 * F, F)), resident((1, F)),         # W1, b1
                resident((F, 3 * F)), resident((1, 3 * F)),     # W2, b2
            ],
            out_specs=[
                pl.BlockSpec((tm, F), lambda i: (i, 0)),
                pl.BlockSpec((3, tm, F), lambda i: (0, i, 0)),
            ],
        )
        return pl.pallas_call(
            kernel,
            grid_spec=grid_spec,
            out_shape=out_shape,
            compiler_params=pltpu.CompilerParams(
                dimension_semantics=("parallel",),
                vmem_limit_bytes=vmem_limit_bytes),
            cost_estimate=pl.CostEstimate(
                flops=flops, transcendentals=transcendentals,
                bytes_accessed=bytes_accessed),
        )(ns_p, nv_p, w_uv, b_uv, w1, b1, w2, b2)

    if single_buffer_weights:
        try:
            out_s, out_v = _call(True)
        except Exception as e:  # noqa: BLE001 - build-dependent Buffered(1) support
            warnings.warn(
                "pl.Buffered(buffer_count=1) rejected by this build; resident "
                "weights fall back to double buffering (doubles their VMEM "
                f"footprint, relevant for large F on v7x). Error: {e!r}")
            out_s, out_v = _call(False)
    else:
        out_s, out_v = _call(False)

    if pad:
        out_s = out_s[:N]
        out_v = out_v[:, :N]
    return out_s, out_v


def painn_update(node_scalar, node_vector, params, **kwargs):
    """Torch-layout convenience wrapper: node_vector is (N, 3, F).

    NOTE: the two transposes below each cost a full extra HBM pass over
    node_vector; prefer `painn_update_cm` with (3, N, F) end-to-end.
    """
    out_s, out_v_cm = painn_update_cm(
        node_scalar, jnp.transpose(node_vector, (1, 0, 2)), params, **kwargs)
    return out_s, jnp.transpose(out_v_cm, (1, 0, 2))


# --------------------------------------------------------------------------- #
# Parameters & pure-JAX reference
# --------------------------------------------------------------------------- #
def init_params(node_size, key):
    """Deterministic synthetic weights, shapes matching the torch module.
    Matmul weights are fused + stored bf16 [in, out]; biases stay f32."""
    F = node_size
    ks = jax.random.split(key, 8)
    s = 0.05
    W_U = s * jax.random.normal(ks[0], (F, F), jnp.float32)
    b_U = s * jax.random.normal(ks[1], (1, F), jnp.float32)
    W_V = s * jax.random.normal(ks[2], (F, F), jnp.float32)
    b_V = s * jax.random.normal(ks[3], (1, F), jnp.float32)
    W1 = s * jax.random.normal(ks[4], (2 * F, F), jnp.float32)   # Linear(2F->F)
    b1 = s * jax.random.normal(ks[5], (1, F), jnp.float32)
    W2 = s * jax.random.normal(ks[6], (F, 3 * F), jnp.float32)   # Linear(F->3F)
    b2 = s * jax.random.normal(ks[7], (1, 3 * F), jnp.float32)

    W_UV = jnp.concatenate([W_U, W_V], axis=1).astype(jnp.bfloat16)  # (F, 2F)
    b_UV = jnp.concatenate([b_U, b_V], axis=1)                       # (1, 2F)
    return (W_UV, b_UV, W1.astype(jnp.bfloat16), b1,
            W2.astype(jnp.bfloat16), b2)


def painn_update_ref_cm(node_scalar, node_vector_cm, params, *,
                        matmul_dtype=jnp.float32):
    """Pure-JAX reference mirroring the torch forward (component-major I/O).
    matmul_dtype=bfloat16 reproduces the kernel's mixed-precision matmuls."""
    W_UV, b_UV, W1, b1, W2, b2 = params
    F = node_scalar.shape[-1]
    cast = lambda x: x.astype(matmul_dtype)
    ns = node_scalar.astype(jnp.float32)
    nv = node_vector_cm.astype(jnp.float32)

    uv = jnp.einsum('vnf,fg->vng', cast(node_vector_cm), cast(W_UV),
                    preferred_element_type=jnp.float32) + b_UV
    Uv, Vv = uv[..., :F], uv[..., F:]
    Vv_norm = jnp.sqrt(jnp.sum(Vv * Vv, axis=0))
    mlp_in = jnp.concatenate([Vv_norm, ns], axis=1)
    h = jnp.dot(cast(mlp_in), cast(W1),
                preferred_element_type=jnp.float32) + b1
    h = h * jax.nn.sigmoid(h)
    a = jnp.dot(cast(h), cast(W2), preferred_element_type=jnp.float32) + b2
    a_vv, a_sv, a_ss = a[:, :F], a[:, F:2 * F], a[:, 2 * F:]
    delta_v = a_vv[None, :, :] * Uv
    inner = jnp.sum(Uv * Vv, axis=0)
    delta_s = a_sv * inner + a_ss
    return ns + delta_s, nv + delta_v


# --------------------------------------------------------------------------- #
# Demo / self-check
# --------------------------------------------------------------------------- #
if __name__ == "__main__":
    N = 512           # number of nodes  -> grid of 2 steps at tm=256
    F = 128           # node_size (feature / lane dimension)

    key = jax.random.PRNGKey(0)
    k_s, k_v, k_p = jax.random.split(key, 3)
    # bf16 activation I/O (kernel keeps norm/gating/residuals in f32).
    node_scalar = jax.random.normal(k_s, (N, F), jnp.float32).astype(jnp.bfloat16)
    node_vector_cm = jax.random.normal(
        k_v, (3, N, F), jnp.float32).astype(jnp.bfloat16)
    params = init_params(F, k_p)

    out_s, out_v = painn_update_cm(node_scalar, node_vector_cm, params)
    out_s = jax.block_until_ready(out_s)
    out_v = jax.block_until_ready(out_v)

    assert out_s.shape == (N, F) and out_v.shape == (3, N, F)
    assert out_s.dtype == node_scalar.dtype and out_v.dtype == node_vector_cm.dtype

    out_s_f = out_s.astype(jnp.float32)
    out_v_f = out_v.astype(jnp.float32)

    # Tight check vs. a reference using the kernel's exact matmul precision
    # (bf16 operands, f32 accumulation / elementwise); slack covers the bf16
    # output store rounding.
    ref_s_bf, ref_v_bf = painn_update_ref_cm(node_scalar, node_vector_cm,
                                             params, matmul_dtype=jnp.bfloat16)
    assert jnp.allclose(out_s_f, ref_s_bf, rtol=2e-2, atol=2e-2)
    assert jnp.allclose(out_v_f, ref_v_bf, rtol=2e-2, atol=2e-2)

    # Semantic check vs. the all-f32 torch-equivalent forward.
    ref_s, ref_v = painn_update_ref_cm(node_scalar, node_vector_cm, params,
                                       matmul_dtype=jnp.float32)
    assert jnp.allclose(out_s_f, ref_s, rtol=4e-2, atol=4e-2)
    assert jnp.allclose(out_v_f, ref_v, rtol=4e-2, atol=4e-2)

    # TODO(synk): torch.linalg.norm has no epsilon -> NaN gradients at Vv == 0
    # if this kernel ever gets a custom VJP (forward pass is exact as-is).

    print("KERNEL_OK")
</pallas_src>

<mosaic_0001>
module attributes {stable_mosaic.version = 11 : i64} {
  func.func @painn_update_kernel(%arg0: i32, %arg1: memref<256x128xbf16, #tpu.memory_space<vmem>>, %arg2: memref<3x256x128xbf16, #tpu.memory_space<vmem>>, %arg3: memref<128x256xbf16, #tpu.memory_space<vmem>>, %arg4: memref<1x256xf32, #tpu.memory_space<vmem>>, %arg5: memref<256x128xbf16, #tpu.memory_space<vmem>>, %arg6: memref<1x128xf32, #tpu.memory_space<vmem>>, %arg7: memref<128x384xbf16, #tpu.memory_space<vmem>>, %arg8: memref<1x384xf32, #tpu.memory_space<vmem>>, %arg9: memref<256x128xbf16, #tpu.memory_space<vmem>>, %arg10: memref<3x256x128xbf16, #tpu.memory_space<vmem>>) attributes {dimension_semantics = [#tpu.dimension_semantics<parallel>], iteration_bounds = array<i64: 2>, scalar_prefetch = 0 : i64, scratch_operands = 0 : i64, tpu.core_type = #tpu.core_type<tc>, window_params = [{transform_indices = @transform_0, window_bounds = array<i64: 256, 128>}, {transform_indices = @transform_1, window_bounds = array<i64: 3, 256, 128>}, {pipeline_mode = #tpu.pipeline_mode<synchronous>, transform_indices = @transform_2, window_bounds = array<i64: 128, 256>}, {pipeline_mode = #tpu.pipeline_mode<synchronous>, transform_indices = @transform_3, window_bounds = array<i64: 1, 256>}, {pipeline_mode = #tpu.pipeline_mode<synchronous>, transform_indices = @transform_4, window_bounds = array<i64: 256, 128>}, {pipeline_mode = #tpu.pipeline_mode<synchronous>, transform_indices = @transform_5, window_bounds = array<i64: 1, 128>}, {pipeline_mode = #tpu.pipeline_mode<synchronous>, transform_indices = @transform_6, window_bounds = array<i64: 128, 384>}, {pipeline_mode = #tpu.pipeline_mode<synchronous>, transform_indices = @transform_7, window_bounds = array<i64: 1, 384>}, {transform_indices = @transform_8, window_bounds = array<i64: 256, 128>}, {transform_indices = @transform_9, window_bounds = array<i64: 3, 256, 128>}]} {
    %c0 = arith.constant 0 : index
    %c0_0 = arith.constant 0 : index
    %0 = vector.load %arg1[%c0, %c0_0] : memref<256x128xbf16, #tpu.memory_space<vmem>>, vector<256x128xbf16>
    %c0_1 = arith.constant 0 : index
    %c0_2 = arith.constant 0 : index
    %c0_3 = arith.constant 0 : index
    %1 = vector.load %arg2[%c0_1, %c0_2, %c0_3] : memref<3x256x128xbf16, #tpu.memory_space<vmem>>, vector<3x256x128xbf16>
    %2 = vector.shape_cast %1 : vector<3x256x128xbf16> to vector<768x128xbf16>
    %c0_4 = arith.constant 0 : index
    %c0_5 = arith.constant 0 : index
    %3 = vector.load %arg3[%c0_4, %c0_5] : memref<128x256xbf16, #tpu.memory_space<vmem>>, vector<128x256xbf16>
    %cst = arith.constant dense<0.000000e+00> : vector<768x256xf32>
    %4 = tpu.matmul %2, %3, %cst {dimension_numbers = #tpu.dot_dimension_numbers<[1], [0], [0], [1], [0, 0, 1, 1], [], []>} : vector<768x128xbf16>, vector<128x256xbf16>, vector<768x256xf32> -> vector<768x256xf32>
    %c0_6 = arith.constant 0 : index
    %c0_7 = arith.constant 0 : index
    %5 = vector.load %arg4[%c0_6, %c0_7] : memref<1x256xf32, #tpu.memory_space<vmem>>, vector<1x256xf32>
    %6 = vector.broadcast %5 : vector<1x256xf32> to vector<768x256xf32>
    %7 = arith.addf %4, %6 : vector<768x256xf32>
    %8 = vector.extract_strided_slice %7 {offsets = [0, 0], sizes = [768, 128], strides = [1, 1]} : vector<768x256xf32> to vector<768x128xf32>
    %9 = vector.shape_cast %8 : vector<768x128xf32> to vector<3x256x128xf32>
    %10 = vector.extract_strided_slice %7 {offsets = [0, 128], sizes = [768, 128], strides = [1, 1]} : vector<768x256xf32> to vector<768x128xf32>
    %11 = vector.shape_cast %10 : vector<768x128xf32> to vector<3x256x128xf32>
    %12 = arith.mulf %11, %11 : vector<3x256x128xf32>
    %cst_8 = arith.constant dense<0.000000e+00> : vector<256x128xf32>
    %13 = vector.multi_reduction <add>, %12, %cst_8 [0] : vector<3x256x128xf32> to vector<256x128xf32>
    %14 = math.sqrt %13 : vector<256x128xf32>
    %15 = arith.truncf %14 : vector<256x128xf32> to vector<256x128xbf16>
    %c0_9 = arith.constant 0 : index
    %c0_10 = arith.constant 0 : index
    %16 = vector.load %arg5[%c0_9, %c0_10] : memref<256x128xbf16, #tpu.memory_space<vmem>>, vector<128x128xbf16>
    %cst_11 = arith.constant dense<0.000000e+00> : vector<256x128xf32>
    %17 = tpu.matmul %15, %16, %cst_11 {dimension_numbers = #tpu.dot_dimension_numbers<[1], [0], [0], [1], [0, 0, 1, 1], [], []>} : vector<256x128xbf16>, vector<128x128xbf16>, vector<256x128xf32> -> vector<256x128xf32>
    %c128 = arith.constant 128 : index
    %c0_12 = arith.constant 0 : index
    %18 = vector.load %arg5[%c128, %c0_12] : memref<256x128xbf16, #tpu.memory_space<vmem>>, vector<128x128xbf16>
    %cst_13 = arith.constant dense<0.000000e+00> : vector<256x128xf32>
    %19 = tpu.matmul %0, %18, %cst_13 {dimension_numbers = #tpu.dot_dimension_numbers<[1], [0], [0], [1], [0, 0, 1, 1], [], []>} : vector<256x128xbf16>, vector<128x128xbf16>, vector<256x128xf32> -> vector<256x128xf32>
    %20 = arith.addf %17, %19 : vector<256x128xf32>
    %c0_14 = arith.constant 0 : index
    %c0_15 = arith.constant 0 : index
    %21 = vector.load %arg6[%c0_14, %c0_15] : memref<1x128xf32, #tpu.memory_space<vmem>>, vector<1x128xf32>
    %22 = vector.broadcast %21 : vector<1x128xf32> to vector<256x128xf32>
    %23 = arith.addf %20, %22 : vector<256x128xf32>
    %24 = arith.negf %23 : vector<256x128xf32>
    %25 = math.exp %24 : vector<256x128xf32>
    %cst_16 = arith.constant 1.000000e+00 : f32
    %26 = vector.broadcast %cst_16 : f32 to vector<256x128xf32>
    %27 = arith.addf %26, %25 : vector<256x128xf32>
    %28 = arith.divf %26, %27 : vector<256x128xf32>
    %29 = arith.mulf %23, %28 : vector<256x128xf32>
    %30 = arith.truncf %29 : vector<256x128xf32> to vector<256x128xbf16>
    %c0_17 = arith.constant 0 : index
    %c0_18 = arith.constant 0 : index
    %31 = vector.load %arg7[%c0_17, %c0_18] : memref<128x384xbf16, #tpu.memory_space<vmem>>, vector<128x384xbf16>
    %cst_19 = arith.constant dense<0.000000e+00> : vector<256x384xf32>
    %32 = tpu.matmul %30, %31, %cst_19 {dimension_numbers = #tpu.dot_dimension_numbers<[1], [0], [0], [1], [0, 0, 1, 1], [], []>} : vector<256x128xbf16>, vector<128x384xbf16>, vector<256x384xf32> -> vector<256x384xf32>
    %c0_20 = arith.constant 0 : index
    %c0_21 = arith.constant 0 : index
    %33 = vector.load %arg8[%c0_20, %c0_21] : memref<1x384xf32, #tpu.memory_space<vmem>>, vector<1x384xf32>
    %34 = vector.broadcast %33 : vector<1x384xf32> to vector<256x384xf32>
    %35 = arith.addf %32, %34 : vector<256x384xf32>
    %36 = vector.extract_strided_slice %35 {offsets = [0, 0], sizes = [256, 128], strides = [1, 1]} : vector<256x384xf32> to vector<256x128xf32>
    %37 = vector.extract_strided_slice %35 {offsets = [0, 128], sizes = [256, 128], strides = [1, 1]} : vector<256x384xf32> to vector<256x128xf32>
    %38 = vector.extract_strided_slice %35 {offsets = [0, 256], sizes = [256, 128], strides = [1, 1]} : vector<256x384xf32> to vector<256x128xf32>
    %39 = vector.shape_cast %36 : vector<256x128xf32> to vector<1x256x128xf32>
    %40 = vector.broadcast %39 : vector<1x256x128xf32> to vector<3x256x128xf32>
    %41 = arith.mulf %40, %9 : vector<3x256x128xf32>
    %42 = arith.mulf %9, %11 : vector<3x256x128xf32>
    %cst_22 = arith.constant dense<0.000000e+00> : vector<256x128xf32>
    %43 = vector.multi_reduction <add>, %42, %cst_22 [0] : vector<3x256x128xf32> to vector<256x128xf32>
    %44 = arith.mulf %37, %43 : vector<256x128xf32>
    %45 = arith.addf %44, %38 : vector<256x128xf32>
    %46 = arith.extf %0 : vector<256x128xbf16> to vector<256x128xf32>
    %47 = arith.addf %46, %45 : vector<256x128xf32>
    %48 = arith.truncf %47 : vector<256x128xf32> to vector<256x128xbf16>
    %c0_23 = arith.constant 0 : index
    %c0_24 = arith.constant 0 : index
    %49 = vector.load %arg9[%c0_23, %c0_24] : memref<256x128xbf16, #tpu.memory_space<vmem>>, vector<256x128xbf16>
    tpu.vector_store %arg9[%c0_23, %c0_24], %48 {strides = array<i32>} : memref<256x128xbf16, #tpu.memory_space<vmem>>, vector<256x128xbf16>,
    %50 = arith.extf %1 : vector<3x256x128xbf16> to vector<3x256x128xf32>
    %51 = arith.addf %50, %41 : vector<3x256x128xf32>
    %52 = arith.truncf %51 : vector<3x256x128xf32> to vector<3x256x128xbf16>
    %c0_25 = arith.constant 0 : index
    %c0_26 = arith.constant 0 : index
    %c0_27 = arith.constant 0 : index
    %53 = vector.load %arg10[%c0_25, %c0_26, %c0_27] : memref<3x256x128xbf16, #tpu.memory_space<vmem>>, vector<3x256x128xbf16>
    tpu.vector_store %arg10[%c0_25, %c0_26, %c0_27], %52 {strides = array<i32>} : memref<3x256x128xbf16, #tpu.memory_space<vmem>>, vector<3x256x128xbf16>,
    return
  }
  func.func @transform_0(%arg0: i32) -> (i32, i32) {
    %c0_i32 = arith.constant 0 : i32
    %c0_i32_0 = arith.constant 0 : i32
    return %arg0, %c0_i32 : i32, i32
  }
  func.func @transform_1(%arg0: i32) -> (i32, i32, i32) {
    %c0_i32 = arith.constant 0 : i32
    %c0_i32_0 = arith.constant 0 : i32
    %c0_i32_1 = arith.constant 0 : i32
    return %c0_i32, %arg0, %c0_i32_0 : i32, i32, i32
  }
  func.func @transform_2(%arg0: i32) -> (i32, i32) {
    %c0_i32 = arith.constant 0 : i32
    %c0_i32_0 = arith.constant 0 : i32
    %c0_i32_1 = arith.constant 0 : i32
    return %c0_i32, %c0_i32_0 : i32, i32
  }
  func.func @transform_3(%arg0: i32) -> (i32, i32) {
    %c0_i32 = arith.constant 0 : i32
    %c0_i32_0 = arith.constant 0 : i32
    %c0_i32_1 = arith.constant 0 : i32
    return %c0_i32, %c0_i32_0 : i32, i32
  }
  func.func @transform_4(%arg0: i32) -> (i32, i32) {
    %c0_i32 = arith.constant 0 : i32
    %c0_i32_0 = arith.constant 0 : i32
    %c0_i32_1 = arith.constant 0 : i32
    return %c0_i32, %c0_i32_0 : i32, i32
  }
  func.func @transform_5(%arg0: i32) -> (i32, i32) {
    %c0_i32 = arith.constant 0 : i32
    %c0_i32_0 = arith.constant 0 : i32
    %c0_i32_1 = arith.constant 0 : i32
    return %c0_i32, %c0_i32_0 : i32, i32
  }
  func.func @transform_6(%arg0: i32) -> (i32, i32) {
    %c0_i32 = arith.constant 0 : i32
    %c0_i32_0 = arith.constant 0 : i32
    %c0_i32_1 = arith.constant 0 : i32
    return %c0_i32, %c0_i32_0 : i32, i32
  }
  func.func @transform_7(%arg0: i32) -> (i32, i32) {
    %c0_i32 = arith.constant 0 : i32
    %c0_i32_0 = arith.constant 0 : i32
    %c0_i32_1 = arith.constant 0 : i32
    return %c0_i32, %c0_i32_0 : i32, i32
  }
  func.func @transform_8(%arg0: i32) -> (i32, i32) {
    %c0_i32 = arith.constant 0 : i32
    %c0_i32_0 = arith.constant 0 : i32
    return %arg0, %c0_i32 : i32, i32
  }
  func.func @transform_9(%arg0: i32) -> (i32, i32, i32) {
    %c0_i32 = arith.constant 0 : i32
    %c0_i32_0 = arith.constant 0 : i32
    %c0_i32_1 = arith.constant 0 : i32
    return %c0_i32, %arg0, %c0_i32_0 : i32, i32, i32
  }
}

module attributes {stable_mosaic.version = 11 : i64} {
  func.func @painn_update_kernel(%arg0: i32, %arg1: memref<256x128xbf16, #tpu.memory_space<vmem>>, %arg2: memref<3x256x128xbf16, #tpu.memory_space<vmem>>, %arg3: memref<128x256xbf16, #tpu.memory_space<vmem>>, %arg4: memref<1x256xf32, #tpu.memory_space<vmem>>, %arg5: memref<256x128xbf16, #tpu.memory_space<vmem>>, %arg6: memref<1x128xf32, #tpu.memory_space<vmem>>, %arg7: memref<128x384xbf16, #tpu.memory_space<vmem>>, %arg8: memref<1x384xf32, #tpu.memory_space<vmem>>, %arg9: memref<256x128xbf16, #tpu.memory_space<vmem>>, %arg10: memref<3x256x128xbf16, #tpu.memory_space<vmem>>) attributes {dimension_semantics = [#tpu.dimension_semantics<parallel>], iteration_bounds = array<i64: 2>, scalar_prefetch = 0 : i64, scratch_operands = 0 : i64, tpu.core_type = #tpu.core_type<tc>, window_params = [{transform_indices = @transform_0, window_bounds = array<i64: 256, 128>}, {transform_indices = @transform_1, window_bounds = array<i64: 3, 256, 128>}, {pipeline_mode = #tpu.pipeline_mode<synchronous>, transform_indices = @transform_2, window_bounds = array<i64: 128, 256>}, {pipeline_mode = #tpu.pipeline_mode<synchronous>, transform_indices = @transform_3, window_bounds = array<i64: 1, 256>}, {pipeline_mode = #tpu.pipeline_mode<synchronous>, transform_indices = @transform_4, window_bounds = array<i64: 256, 128>}, {pipeline_mode = #tpu.pipeline_mode<synchronous>, transform_indices = @transform_5, window_bounds = array<i64: 1, 128>}, {pipeline_mode = #tpu.pipeline_mode<synchronous>, transform_indices = @transform_6, window_bounds = array<i64: 128, 384>}, {pipeline_mode = #tpu.pipeline_mode<synchronous>, transform_indices = @transform_7, window_bounds = array<i64: 1, 384>}, {transform_indices = @transform_8, window_bounds = array<i64: 256, 128>}, {transform_indices = @transform_9, window_bounds = array<i64: 3, 256, 128>}]} {
    %c0 = arith.constant 0 : index
    %c0_0 = arith.constant 0 : index
    %0 = vector.load %arg1[%c0, %c0_0] : memref<256x128xbf16, #tpu.memory_space<vmem>>, vector<256x128xbf16>
    %c0_1 = arith.constant 0 : index
    %c0_2 = arith.constant 0 : index
    %c0_3 = arith.constant 0 : index
    %1 = vector.load %arg2[%c0_1, %c0_2, %c0_3] : memref<3x256x128xbf16, #tpu.memory_space<vmem>>, vector<3x256x128xbf16>
    %2 = vector.shape_cast %1 : vector<3x256x128xbf16> to vector<768x128xbf16>
    %c0_4 = arith.constant 0 : index
    %c0_5 = arith.constant 0 : index
    %3 = vector.load %arg3[%c0_4, %c0_5] : memref<128x256xbf16, #tpu.memory_space<vmem>>, vector<128x256xbf16>
    %cst = arith.constant dense<0.000000e+00> : vector<768x256xf32>
    %4 = tpu.matmul %2, %3, %cst {dimension_numbers = #tpu.dot_dimension_numbers<[1], [0], [0], [1], [0, 0, 1, 1], [], []>} : vector<768x128xbf16>, vector<128x256xbf16>, vector<768x256xf32> -> vector<768x256xf32>
    %c0_6 = arith.constant 0 : index
    %c0_7 = arith.constant 0 : index
    %5 = vector.load %arg4[%c0_6, %c0_7] : memref<1x256xf32, #tpu.memory_space<vmem>>, vector<1x256xf32>
    %6 = vector.broadcast %5 : vector<1x256xf32> to vector<768x256xf32>
    %7 = arith.addf %4, %6 : vector<768x256xf32>
    %8 = vector.extract_strided_slice %7 {offsets = [0, 0], sizes = [768, 128], strides = [1, 1]} : vector<768x256xf32> to vector<768x128xf32>
    %9 = vector.shape_cast %8 : vector<768x128xf32> to vector<3x256x128xf32>
    %10 = vector.extract_strided_slice %7 {offsets = [0, 128], sizes = [768, 128], strides = [1, 1]} : vector<768x256xf32> to vector<768x128xf32>
    %11 = vector.shape_cast %10 : vector<768x128xf32> to vector<3x256x128xf32>
    %12 = arith.mulf %11, %11 : vector<3x256x128xf32>
    %cst_8 = arith.constant dense<0.000000e+00> : vector<256x128xf32>
    %13 = vector.multi_reduction <add>, %12, %cst_8 [0] : vector<3x256x128xf32> to vector<256x128xf32>
    %14 = math.sqrt %13 : vector<256x128xf32>
    %15 = arith.truncf %14 : vector<256x128xf32> to vector<256x128xbf16>
    %c0_9 = arith.constant 0 : index
    %c0_10 = arith.constant 0 : index
    %16 = vector.load %arg5[%c0_9, %c0_10] : memref<256x128xbf16, #tpu.memory_space<vmem>>, vector<128x128xbf16>
    %cst_11 = arith.constant dense<0.000000e+00> : vector<256x128xf32>
    %17 = tpu.matmul %15, %16, %cst_11 {dimension_numbers = #tpu.dot_dimension_numbers<[1], [0], [0], [1], [0, 0, 1, 1], [], []>} : vector<256x128xbf16>, vector<128x128xbf16>, vector<256x128xf32> -> vector<256x128xf32>
    %c128 = arith.constant 128 : index
    %c0_12 = arith.constant 0 : index
    %18 = vector.load %arg5[%c128, %c0_12] : memref<256x128xbf16, #tpu.memory_space<vmem>>, vector<128x128xbf16>
    %cst_13 = arith.constant dense<0.000000e+00> : vector<256x128xf32>
    %19 = tpu.matmul %0, %18, %cst_13 {dimension_numbers = #tpu.dot_dimension_numbers<[1], [0], [0], [1], [0, 0, 1, 1], [], []>} : vector<256x128xbf16>, vector<128x128xbf16>, vector<256x128xf32> -> vector<256x128xf32>
    %20 = arith.addf %17, %19 : vector<256x128xf32>
    %c0_14 = arith.constant 0 : index
    %c0_15 = arith.constant 0 : index
    %21 = vector.load %arg6[%c0_14, %c0_15] : memref<1x128xf32, #tpu.memory_space<vmem>>, vector<1x128xf32>
    %22 = vector.broadcast %21 : vector<1x128xf32> to vector<256x128xf32>
    %23 = arith.addf %20, %22 : vector<256x128xf32>
    %24 = arith.negf %23 : vector<256x128xf32>
    %25 = math.exp %24 : vector<256x128xf32>
    %cst_16 = arith.constant 1.000000e+00 : f32
    %26 = vector.broadcast %cst_16 : f32 to vector<256x128xf32>
    %27 = arith.addf %26, %25 : vector<256x128xf32>
    %28 = arith.divf %26, %27 : vector<256x128xf32>
    %29 = arith.mulf %23, %28 : vector<256x128xf32>
    %30 = arith.truncf %29 : vector<256x128xf32> to vector<256x128xbf16>
    %c0_17 = arith.constant 0 : index
    %c0_18 = arith.constant 0 : index
    %31 = vector.load %arg7[%c0_17, %c0_18] : memref<128x384xbf16, #tpu.memory_space<vmem>>, vector<128x384xbf16>
    %cst_19 = arith.constant dense<0.000000e+00> : vector<256x384xf32>
    %32 = tpu.matmul %30, %31, %cst_19 {dimension_numbers = #tpu.dot_dimension_numbers<[1], [0], [0], [1], [0, 0, 1, 1], [], []>} : vector<256x128xbf16>, vector<128x384xbf16>, vector<256x384xf32> -> vector<256x384xf32>
    %c0_20 = arith.constant 0 : index
    %c0_21 = arith.constant 0 : index
    %33 = vector.load %arg8[%c0_20, %c0_21] : memref<1x384xf32, #tpu.memory_space<vmem>>, vector<1x384xf32>
    %34 = vector.broadcast %33 : vector<1x384xf32> to vector<256x384xf32>
    %35 = arith.addf %32, %34 : vector<256x384xf32>
    %36 = vector.extract_strided_slice %35 {offsets = [0, 0], sizes = [256, 128], strides = [1, 1]} : vector<256x384xf32> to vector<256x128xf32>
    %37 = vector.extract_strided_slice %35 {offsets = [0, 128], sizes = [256, 128], strides = [1, 1]} : vector<256x384xf32> to vector<256x128xf32>
    %38 = vector.extract_strided_slice %35 {offsets = [0, 256], sizes = [256, 128], strides = [1, 1]} : vector<256x384xf32> to vector<256x128xf32>
    %39 = vector.shape_cast %36 : vector<256x128xf32> to vector<1x256x128xf32>
    %40 = vector.broadcast %39 : vector<1x256x128xf32> to vector<3x256x128xf32>
    %41 = arith.mulf %40, %9 : vector<3x256x128xf32>
    %42 = arith.mulf %9, %11 : vector<3x256x128xf32>
    %cst_22 = arith.constant dense<0.000000e+00> : vector<256x128xf32>
    %43 = vector.multi_reduction <add>, %42, %cst_22 [0] : vector<3x256x128xf32> to vector<256x128xf32>
    %44 = arith.mulf %37, %43 : vector<256x128xf32>
    %45 = arith.addf %44, %38 : vector<256x128xf32>
    %46 = arith.extf %0 : vector<256x128xbf16> to vector<256x128xf32>
    %47 = arith.addf %46, %45 : vector<256x128xf32>
    %48 = arith.truncf %47 : vector<256x128xf32> to vector<256x128xbf16>
    %c0_23 = arith.constant 0 : index
    %c0_24 = arith.constant 0 : index
    %49 = vector.load %arg9[%c0_23, %c0_24] : memref<256x128xbf16, #tpu.memory_space<vmem>>, vector<256x128xbf16>
    tpu.vector_store %arg9[%c0_23, %c0_24], %48 {strides = array<i32>} : memref<256x128xbf16, #tpu.memory_space<vmem>>, vector<256x128xbf16>,
    %50 = arith.extf %1 : vector<3x256x128xbf16> to vector<3x256x128xf32>
    %51 = arith.addf %50, %41 : vector<3x256x128xf32>
    %52 = arith.truncf %51 : vector<3x256x128xf32> to vector<3x256x128xbf16>
    %c0_25 = arith.constant 0 : index
    %c0_26 = arith.constant 0 : index
    %c0_27 = arith.constant 0 : index
    %53 = vector.load %arg10[%c0_25, %c0_26, %c0_27] : memref<3x256x128xbf16, #tpu.memory_space<vmem>>, vector<3x256x128xbf16>
    tpu.vector_store %arg10[%c0_25, %c0_26, %c0_27], %52 {strides = array<i32>} : memref<3x256x128xbf16, #tpu.memory_space<vmem>>, vector<3x256x128xbf16>,
    return
  }
  func.func @transform_0(%arg0: i32) -> (i32, i32) {
    %c0_i32 = arith.constant 0 : i32
    %c0_i32_0 = arith.constant 0 : i32
    return %arg0, %c0_i32 : i32, i32
  }
  func.func @transform_1(%arg0: i32) -> (i32, i32, i32) {
    %c0_i32 = arith.constant 0 : i32
    %c0_i32_0 = arith.constant 0 : i32
    %c0_i32_1 = arith.constant 0 : i32
    return %c0_i32, %arg0, %c0_i32_0 : i32, i32, i32
  }
  func.func @transform_2(%arg0: i32) -> (i32, i32) {
    %c0_i32 = arith.constant 0 : i32
    %c0_i32_0 = arith.constant 0 : i32
    %c0_i32_1 = arith.constant 0 : i32
    return %c0_i32, %c0_i32_0 : i32, i32
  }
  func.func @transform_3(%arg0: i32) -> (i32, i32) {
    %c0_i32 = arith.constant 0 : i32
    %c0_i32_0 = arith.constant 0 : i32
    %c0_i32_1 = arith.constant 0 : i32
    return %c0_i32, %c0_i32_0 : i32, i32
  }
  func.func @transform_4(%arg0: i32) -> (i32, i32) {
    %c0_i32 = arith.constant 0 : i32
    %c0_i32_0 = arith.constant 0 : i32
    %c0_i32_1 = arith.constant 0 : i32
    return %c0_i32, %c0_i32_0 : i32, i32
  }
  func.func @transform_5(%arg0: i32) -> (i32, i32) {
    %c0_i32 = arith.constant 0 : i32
    %c0_i32_0 = arith.constant 0 : i32
    %c0_i32_1 = arith.constant 0 : i32
    return %c0_i32, %c0_i32_0 : i32, i32
  }
  func.func @transform_6(%arg0: i32) -> (i32, i32) {
    %c0_i32 = arith.constant 0 : i32
    %c0_i32_0 = arith.constant 0 : i32
    %c0_i32_1 = arith.constant 0 : i32
    return %c0_i32, %c0_i32_0 : i32, i32
  }
  func.func @transform_7(%arg0: i32) -> (i32, i32) {
    %c0_i32 = arith.constant 0 : i32
    %c0_i32_0 = arith.constant 0 : i32
    %c0_i32_1 = arith.constant 0 : i32
    return %c0_i32, %c0_i32_0 : i32, i32
  }
  func.func @transform_8(%arg0: i32) -> (i32, i32) {
    %c0_i32 = arith.constant 0 : i32
    %c0_i32_0 = arith.constant 0 : i32
    return %arg0, %c0_i32 : i32, i32
  }
  func.func @transform_9(%arg0: i32) -> (i32, i32, i32) {
    %c0_i32 = arith.constant 0 : i32
    %c0_i32_0 = arith.constant 0 : i32
    %c0_i32_1 = arith.constant 0 : i32
    return %c0_i32, %arg0, %c0_i32_0 : i32, i32, i32
  }
}

</mosaic_0001>

<llo_original>
// kernel: tpu_custom_call.1
$region0: #{tpu_custom_call.1}
  #allocation0 [shape = 'u32[]', space=smem, size = 0x4, offset = 0x4, fixed_abs, tag = 'smem constant byte address 0x4 - core index']
  #allocation1 [shape = 'u32[72,128]{1,0:T(1,128)}', space=vmem, size = 0x9000, scoped, tag = 'internal scratch']
  #allocation16 [shape = 's32[]', space=sflag, size = 0x4, offset = 0, fixed_abs, tag = 'sflag constant byte address 0x0 - dummy sync flag']
  #allocation18 [shape = 's32[]', space=sflag, size = 0x4, offset = 0, fixed_abs, tag = 'sflag constant byte address 0x0 - dummy sync flag']
  %s0 = inlined_call_operand.hbm [shape: bf16[512,128], index: 0, kind: input, shape index: {}]
  %s1 = inlined_call_operand.hbm [shape: bf16[3,512,128], index: 1, kind: input, shape index: {}]
  %s2 = inlined_call_operand.hbm [shape: bf16[128,256], index: 2, kind: input, shape index: {}]
  %s3 = inlined_call_operand.vmem [shape: f32[1,256], index: 3, kind: input, shape index: {}]
  %s4 = inlined_call_operand.hbm [shape: bf16[256,128], index: 4, kind: input, shape index: {}]
  %s5 = inlined_call_operand.hbm [shape: f32[1,128], index: 5, kind: input, shape index: {}]
  %s6 = inlined_call_operand.hbm [shape: bf16[128,384], index: 6, kind: input, shape index: {}]
  %s7 = inlined_call_operand.vmem [shape: f32[1,384], index: 7, kind: input, shape index: {}]
  %s8 = inlined_call_operand.hbm [shape: bf16[512,128], index: 8, kind: output, shape index: {0}]
  %s9 = inlined_call_operand.hbm [shape: bf16[3,512,128], index: 9, kind: output, shape index: {1}]
  %10 = xla_tuple %s8, %s9
  %s11 = sld [smem:[#allocation0]]
  $region97: #{tpu_custom_call.1} parent=0
    _
  %s13 = ssub.s32 1, %s11
  %s14 = scalar_select 0, %s13, %s11
  $region1: #{tpu_custom_call.1} parent=0
    #allocation2 [shape = 'u8[131072]{0}', space=vmem, size = 0x20000, scoped, tag = 'input window, operand 0']
    #allocation3 [shape = 's32[2]{0}', space=sflag, size = 0x8, scoped, tag = 'scoped memory for tpu_custom_call.1']
    #allocation4 [shape = 's32[2]{0}', space=sflag, size = 0x8, scoped, tag = 'scoped memory for tpu_custom_call.1']
    #allocation5 [shape = 'u8[393216]{0}', space=vmem, size = 0x60000, scoped, tag = 'input window, operand 1']
    #allocation6 [shape = 's32[2]{0}', space=sflag, size = 0x8, scoped, tag = 'scoped memory for tpu_custom_call.1']
    #allocation7 [shape = 'u8[65536]{0}', space=vmem, size = 0x10000, scoped, tag = 'input window, operand 2, single buffered']
    #allocation8 [shape = 'u8[65536]{0}', space=vmem, size = 0x10000, scoped, tag = 'input window, operand 4, single buffered']
    #allocation9 [shape = 's32[1]{0}', space=sflag, size = 0x4, scoped, tag = 'scoped memory for tpu_custom_call.1']
    #allocation10 [shape = 'u8[512]{0}', space=vmem, size = 0x400, scoped, tag = 'input window, operand 5, single buffered']
    #allocation11 [shape = 'u8[98304]{0}', space=vmem, size = 0x18000, scoped, tag = 'input window, operand 6, single buffered']
    #allocation12 [shape = 's32[1]{0}', space=sflag, size = 0x4, scoped, tag = 'scoped memory for tpu_custom_call.1']
    #allocation13 [shape = 'u8[131072]{0}', space=vmem, size = 0x20000, scoped, tag = 'output window, operand 0']
    #allocation14 [shape = 'u8[393216]{0}', space=vmem, size = 0x60000, scoped, tag = 'output window, operand 1']
    #allocation15 [shape = 's32[2]{0}', space=sflag, size = 0x8, scoped, tag = 'scoped memory for tpu_custom_call.1']
    %15 = vsyncpa [#allocation3], 0
    %s16 = scalar_lea.sflag [#allocation3], 1
    %17 = vsyncpa %s16, 0
    %18 = vsyncpa [#allocation6], 0
    %s19 = scalar_lea.sflag [#allocation6], 1
    %20 = vsyncpa %s19, 0
    %21 = vsyncpa [#allocation9], 0
    %22 = vsyncpa [#allocation12], 0
    %23 = vsyncpa [#allocation4], 0
    %s24 = scalar_lea.sflag [#allocation4], 1
    %25 = vsyncpa %s24, 0
    %26 = vsyncpa [#allocation15], 0
    %s27 = scalar_lea.sflag [#allocation15], 1
    %28 = vsyncpa %s27, 0
    loop: start=0, step=1, limit=4
    $region2: #{tpu_custom_call.1} parent=1 // loop_pre_header
      _
    $region3: #{tpu_custom_call.1} parent=1 // loop_header
      %s30 = sphi 0, %s34
      %p31 = scmp.ge.s32.totalorder %s30, 4
      %s40 = sphi 0, %s42
      %s43 = sphi 0, %s40
      %s44 = sphi 0, %s43
      %s60 = sphi 0, %s44
      %s66 = sphi 0, %s68
      %s69 = sphi 0, %s66
      %s70 = sphi 0, %s69
      %s86 = sphi 0, %s70
      %s90 = sphi 0, %s90
      %s92 = sphi 0, %s90
      %s93 = sphi 0, %s92
      %s107 = sphi 0, %s93
      %s111 = sphi 0, %s111
      %s113 = sphi 0, %s111
      %s114 = sphi 0, %s113
      %s128 = sphi 0, %s114
      %s132 = sphi 0, %s132
      %s134 = sphi 0, %s132
      %s135 = sphi 0, %s134
      %s149 = sphi 0, %s135
      %s153 = sphi 0, %s153
      %s155 = sphi 0, %s153
      %s156 = sphi 0, %s155
      %s170 = sphi 0, %s156
      %s174 = sphi 0, %s174
      %s176 = sphi 0, %s174
      %s177 = sphi 0, %s176
      %s191 = sphi 0, %s177
      %s195 = sphi 0, %s195
      %s197 = sphi 0, %s195
      %s198 = sphi 0, %s197
      %s212 = sphi 0, %s198
      %s218 = sphi 0, %s220
      %s221 = sphi 0, %s218
      %s222 = sphi 0, %s221
      %s238 = sphi 0, %s222
      %s244 = sphi 0, %s246
      %s247 = sphi 0, %s244
      %s248 = sphi 0, %s247
      %s264 = sphi 0, %s248
    $region4: #{tpu_custom_call.1} parent=1 // loop_header_branch
      %33 = sbr.rel (%p31) target = $region8
    $region5: #{tpu_custom_call.1} parent=1 // loop_body
      %s35 = ssub.s32 %s30, 1
      %s36 = ssub.s32 %s30, 2
      %s37 = sadd.s32 %s30, 1
      %s38 = ssub.s32 %s30, %s37
      %p39 = scmp.eq.s32.totalorder %s38, 0
      %s41 = sadd.s32 %s40, 1
      %s42 = scalar_select %p39, %s40, %s41
      %p45 = pneg %p39
      %p46 = scmp.eq.s32.totalorder %s30, 1
      %p47 = por %p45, %p46
      %p48 = scmp.ne.s32.totalorder %s40, %s43
      %p49 = scmp.eq.s32.totalorder %s30, 0
      %p50 = por %p48, %p49
      %p51 = scmp.ne.s32.totalorder %s40, %s43
      %p52 = scmp.eq.s32.totalorder %s35, 1
      %p53 = por %p51, %p52
      %p54 = scmp.ne.s32.totalorder %s43, %s44
      %p55 = scmp.eq.s32.totalorder %s35, 0
      %p56 = por %p54, %p55
      %p57 = scmp.ne.s32.totalorder %s43, %s44
      %p58 = scmp.eq.s32.totalorder %s36, 1
      %p59 = por %p57, %p58
      %p61 = scmp.ne.s32.totalorder %s44, %s60
      %p62 = scmp.eq.s32.totalorder %s36, 0
      %p63 = por %p61, %p62
      %s64 = ssub.s32 %s30, %s37
      %p65 = scmp.eq.s32.totalorder %s64, 0
      %s67 = sadd.s32 %s66, 1
      %s68 = scalar_select %p65, %s66, %s67
      %p71 = pneg %p65
      %p72 = scmp.eq.s32.totalorder %s30, 1
      %p73 = por %p71, %p72
      %p74 = scmp.ne.s32.totalorder %s66, %s69
      %p75 = scmp.eq.s32.totalorder %s30, 0
      %p76 = por %p74, %p75
      %p77 = scmp.ne.s32.totalorder %s66, %s69
      %p78 = scmp.eq.s32.totalorder %s35, 1
      %p79 = por %p77, %p78
      %p80 = scmp.ne.s32.totalorder %s69, %s70
      %p81 = scmp.eq.s32.totalorder %s35, 0
      %p82 = por %p80, %p81
      %p83 = scmp.ne.s32.totalorder %s69, %s70
      %p84 = scmp.eq.s32.totalorder %s36, 1
      %p85 = por %p83, %p84
      %p87 = scmp.ne.s32.totalorder %s70, %s86
      %p88 = scmp.eq.s32.totalorder %s36, 0
      %p89 = por %p87, %p88
      %s91 = sadd.s32 %s90, 1
      %p94 = scmp.eq.s32.totalorder %s30, 1
      %p95 = scmp.ne.s32.totalorder %s90, %s92
      %p96 = scmp.eq.s32.totalorder %s30, 0
      %p97 = por %p95, %p96
      %p98 = scmp.ne.s32.totalorder %s90, %s92
      %p99 = scmp.eq.s32.totalorder %s35, 1
      %p100 = por %p98, %p99
      %p101 = scmp.ne.s32.totalorder %s92, %s93
      %p102 = scmp.eq.s32.totalorder %s35, 0
      %p103 = por %p101, %p102
      %p104 = scmp.ne.s32.totalorder %s92, %s93
      %p105 = scmp.eq.s32.totalorder %s36, 1
      %p106 = por %p104, %p105
      %p108 = scmp.ne.s32.totalorder %s93, %s107
      %p109 = scmp.eq.s32.totalorder %s36, 0
      %p110 = por %p108, %p109
      %s112 = sadd.s32 %s111, 1
      %p115 = scmp.eq.s32.totalorder %s30, 1
      %p116 = scmp.ne.s32.totalorder %s111, %s113
      %p117 = scmp.eq.s32.totalorder %s30, 0
      %p118 = por %p116, %p117
      %p119 = scmp.ne.s32.totalorder %s111, %s113
      %p120 = scmp.eq.s32.totalorder %s35, 1
      %p121 = por %p119, %p120
      %p122 = scmp.ne.s32.totalorder %s113, %s114
      %p123 = scmp.eq.s32.totalorder %s35, 0
      %p124 = por %p122, %p123
      %p125 = scmp.ne.s32.totalorder %s113, %s114
      %p126 = scmp.eq.s32.totalorder %s36, 1
      %p127 = por %p125, %p126
      %p129 = scmp.ne.s32.totalorder %s114, %s128
      %p130 = scmp.eq.s32.totalorder %s36, 0
      %p131 = por %p129, %p130
      %s133 = sadd.s32 %s132, 1
      %p136 = scmp.eq.s32.totalorder %s30, 1
      %p137 = scmp.ne.s32.totalorder %s132, %s134
      %p138 = scmp.eq.s32.totalorder %s30, 0
      %p139 = por %p137, %p138
      %p140 = scmp.ne.s32.totalorder %s132, %s134
      %p141 = scmp.eq.s32.totalorder %s35, 1
      %p142 = por %p140, %p141
      %p143 = scmp.ne.s32.totalorder %s134, %s135
      %p144 = scmp.eq.s32.totalorder %s35, 0
      %p145 = por %p143, %p144
      %p146 = scmp.ne.s32.totalorder %s134, %s135
      %p147 = scmp.eq.s32.totalorder %s36, 1
      %p148 = por %p146, %p147
      %p150 = scmp.ne.s32.totalorder %s135, %s149
      %p151 = scmp.eq.s32.totalorder %s36, 0
      %p152 = por %p150, %p151
      %s154 = sadd.s32 %s153, 1
      %p157 = scmp.eq.s32.totalorder %s30, 1
      %p158 = scmp.ne.s32.totalorder %s153, %s155
      %p159 = scmp.eq.s32.totalorder %s30, 0
      %p160 = por %p158, %p159
      %p161 = scmp.ne.s32.totalorder %s153, %s155
      %p162 = scmp.eq.s32.totalorder %s35, 1
      %p163 = por %p161, %p162
      %p164 = scmp.ne.s32.totalorder %s155, %s156
      %p165 = scmp.eq.s32.totalorder %s35, 0
      %p166 = por %p164, %p165
      %p167 = scmp.ne.s32.totalorder %s155, %s156
      %p168 = scmp.eq.s32.totalorder %s36, 1
      %p169 = por %p167, %p168
      %p171 = scmp.ne.s32.totalorder %s156, %s170
      %p172 = scmp.eq.s32.totalorder %s36, 0
      %p173 = por %p171, %p172
      %s175 = sadd.s32 %s174, 1
      %p178 = scmp.eq.s32.totalorder %s30, 1
      %p179 = scmp.ne.s32.totalorder %s174, %s176
      %p180 = scmp.eq.s32.totalorder %s30, 0
      %p181 = por %p179, %p180
      %p182 = scmp.ne.s32.totalorder %s174, %s176
      %p183 = scmp.eq.s32.totalorder %s35, 1
      %p184 = por %p182, %p183
      %p185 = scmp.ne.s32.totalorder %s176, %s177
      %p186 = scmp.eq.s32.totalorder %s35, 0
      %p187 = por %p185, %p186
      %p188 = scmp.ne.s32.totalorder %s176, %s177
      %p189 = scmp.eq.s32.totalorder %s36, 1
      %p190 = por %p188, %p189
      %p192 = scmp.ne.s32.totalorder %s177, %s191
      %p193 = scmp.eq.s32.totalorder %s36, 0
      %p194 = por %p192, %p193
      %s196 = sadd.s32 %s195, 1
      %p199 = scmp.eq.s32.totalorder %s30, 1
      %p200 = scmp.ne.s32.totalorder %s195, %s197
      %p201 = scmp.eq.s32.totalorder %s30, 0
      %p202 = por %p200, %p201
      %p203 = scmp.ne.s32.totalorder %s195, %s197
      %p204 = scmp.eq.s32.totalorder %s35, 1
      %p205 = por %p203, %p204
      %p206 = scmp.ne.s32.totalorder %s197, %s198
      %p207 = scmp.eq.s32.totalorder %s35, 0
      %p208 = por %p206, %p207
      %p209 = scmp.ne.s32.totalorder %s197, %s198
      %p210 = scmp.eq.s32.totalorder %s36, 1
      %p211 = por %p209, %p210
      %p213 = scmp.ne.s32.totalorder %s198, %s212
      %p214 = scmp.eq.s32.totalorder %s36, 0
      %p215 = por %p213, %p214
      %s216 = ssub.s32 %s30, %s37
      %p217 = scmp.eq.s32.totalorder %s216, 0
      %s219 = sadd.s32 %s218, 1
      %s220 = scalar_select %p217, %s218, %s219
      %p223 = pneg %p217
      %p224 = scmp.eq.s32.totalorder %s30, 1
      %p225 = por %p223, %p224
      %p226 = scmp.ne.s32.totalorder %s218, %s221
      %p227 = scmp.eq.s32.totalorder %s30, 0
      %p228 = por %p226, %p227
      %p229 = scmp.ne.s32.totalorder %s218, %s221
      %p230 = scmp.eq.s32.totalorder %s35, 1
      %p231 = por %p229, %p230
      %p232 = scmp.ne.s32.totalorder %s221, %s222
      %p233 = scmp.eq.s32.totalorder %s35, 0
      %p234 = por %p232, %p233
      %p235 = scmp.ne.s32.totalorder %s221, %s222
      %p236 = scmp.eq.s32.totalorder %s36, 1
      %p237 = por %p235, %p236
      %p239 = scmp.ne.s32.totalorder %s222, %s238
      %p240 = scmp.eq.s32.totalorder %s36, 0
      %p241 = por %p239, %p240
      %s242 = ssub.s32 %s30, %s37
      %p243 = scmp.eq.s32.totalorder %s242, 0
      %s245 = sadd.s32 %s244, 1
      %s246 = scalar_select %p243, %s244, %s245
      %p249 = pneg %p243
      %p250 = scmp.eq.s32.totalorder %s30, 1
      %p251 = por %p249, %p250
      %p252 = scmp.ne.s32.totalorder %s244, %s247
      %p253 = scmp.eq.s32.totalorder %s30, 0
      %p254 = por %p252, %p253
      %p255 = scmp.ne.s32.totalorder %s244, %s247
      %p256 = scmp.eq.s32.totalorder %s35, 1
      %p257 = por %p255, %p256
      %p258 = scmp.ne.s32.totalorder %s247, %s248
      %p259 = scmp.eq.s32.totalorder %s35, 0
      %p260 = por %p258, %p259
      %p261 = scmp.ne.s32.totalorder %s247, %s248
      %p262 = scmp.eq.s32.totalorder %s36, 1
      %p263 = por %p261, %p262
      %p265 = scmp.ne.s32.totalorder %s248, %s264
      %p266 = scmp.eq.s32.totalorder %s36, 0
      %p267 = por %p265, %p266
      %p268 = scmp.le.s32.totalorder 1, %s30
      %p269 = scmp.lt.s32.totalorder %s30, 3
      %p270 = pnand %p268, %p269
      %p271 = pneg %p270
      // Predicated region
      $region9: #{tpu_custom_call.1} parent=5 // pred_check
        _
      $region10: #{tpu_custom_call.1} parent=5 // pred_check_branch
        %273 = sbr.rel (%p270) target = $region12
      $region11: #{tpu_custom_call.1} parent=5 // pred_region
        %s274 = ssub.s32 %s30, 1
        // Predicated region
        $region13: #{tpu_custom_call.1} parent=11 // pred_check
          %p275 = pneg %p103
        $region14: #{tpu_custom_call.1} parent=11 // pred_check_branch
          %277 = sbr.rel (%p275) target = $region16
        $region15: #{tpu_custom_call.1} parent=11 // pred_region
          %279 = vsyncadd [#allocation6], 0
          %s280 = sshll.u32 %s2, 4
          %s281 = int_to_ptr.hbm [resolvable:$true] %s280
          %s282 = sshll.u32 [#allocation7], 4
          %s283 = int_to_ptr.vmem [resolvable:$true] %s282
          %288 = dma.hbm_to_vmem [thread:$0]  %s281, 2048, %s283, [#allocation6], 128, 128, 8
        $region16: #{tpu_custom_call.1} parent=11 // pred_fallthru
          _
        // Predicated region
        $region17: #{tpu_custom_call.1} parent=11 // pred_check
          %p289 = pneg %p124
        $region18: #{tpu_custom_call.1} parent=11 // pred_check_branch
          %291 = sbr.rel (%p289) target = $region20
        $region19: #{tpu_custom_call.1} parent=11 // pred_region
          _
        $region20: #{tpu_custom_call.1} parent=11 // pred_fallthru
          _
        // Predicated region
        $region21: #{tpu_custom_call.1} parent=11 // pred_check
          %p292 = pneg %p145
        $region22: #{tpu_custom_call.1} parent=11 // pred_check_branch
          %294 = sbr.rel (%p292) target = $region24
        $region23: #{tpu_custom_call.1} parent=11 // pred_region
          %296 = vsyncadd [#allocation9], 0
          %s297 = sshll.u32 %s4, 4
          %s298 = int_to_ptr.hbm [resolvable:$true] %s297
          %s299 = sshll.u32 [#allocation8], 4
          %s300 = int_to_ptr.vmem [resolvable:$true] %s299
          %305 = dma.hbm_to_vmem [thread:$0]  %s298, 2048, %s300, [#allocation9], 64, 64, 4
        $region24: #{tpu_custom_call.1} parent=11 // pred_fallthru
          _
        // Predicated region
        $region25: #{tpu_custom_call.1} parent=11 // pred_check
          %p306 = pneg %p166
        $region26: #{tpu_custom_call.1} parent=11 // pred_check_branch
          %308 = sbr.rel (%p306) target = $region28
        $region27: #{tpu_custom_call.1} parent=11 // pred_region
          %310 = vsyncadd [#allocation9], 0
          %s312 = sshll.u32 %s5, 4
          %s313 = int_to_ptr.hbm [resolvable:$true] %s312
          %s314 = sshll.u32 [#allocation10], 4
          %s315 = int_to_ptr.vmem [resolvable:$true] %s314
          %317 = dma.hbm_to_vmem [thread:$0]  %s313, 16, %s315, [#allocation9]
        $region28: #{tpu_custom_call.1} parent=11 // pred_fallthru
          _
        // Predicated region
        $region29: #{tpu_custom_call.1} parent=11 // pred_check
          %p318 = pneg %p187
        $region30: #{tpu_custom_call.1} parent=11 // pred_check_branch
          %320 = sbr.rel (%p318) target = $region32
        $region31: #{tpu_custom_call.1} parent=11 // pred_region
          %322 = vsyncadd [#allocation12], 0
          %s323 = sshll.u32 %s6, 4
          %s324 = int_to_ptr.hbm [resolvable:$true] %s323
          %s325 = sshll.u32 [#allocation11], 4
          %s326 = int_to_ptr.vmem [resolvable:$true] %s325
          %331 = dma.hbm_to_vmem [thread:$0]  %s324, 3072, %s326, [#allocation12], 192, 192, 12
        $region32: #{tpu_custom_call.1} parent=11 // pred_fallthru
          _
        // Predicated region
        $region33: #{tpu_custom_call.1} parent=11 // pred_check
          %p332 = pneg %p208
        $region34: #{tpu_custom_call.1} parent=11 // pred_check_branch
          %334 = sbr.rel (%p332) target = $region36
        $region35: #{tpu_custom_call.1} parent=11 // pred_region
          _
        $region36: #{tpu_custom_call.1} parent=11 // pred_fallthru
          _
      $region12: #{tpu_custom_call.1} parent=5 // pred_fallthru
        _
      %p335 = scmp.lt.s32.totalorder %s30, 2
      // Predicated region
      $region37: #{tpu_custom_call.1} parent=5 // pred_check
        %p336 = pneg %p335
      $region38: #{tpu_custom_call.1} parent=5 // pred_check_branch
        %338 = sbr.rel (%p336) target = $region40
      $region39: #{tpu_custom_call.1} parent=5 // pred_region
        // Predicated region
        $region41: #{tpu_custom_call.1} parent=39 // pred_check
          %p339 = pneg %p50
        $region42: #{tpu_custom_call.1} parent=39 // pred_check_branch
          %341 = sbr.rel (%p339) target = $region44
        $region43: #{tpu_custom_call.1} parent=39 // pred_region
          %s342 = sand.u32 %s40, 1
          %s343 = scalar_lea.sflag [#allocation3], %s342
          %s344 = sand.u32 %s40, 1
          %s345 = smul.addr %s344, 128
          %s346 = scalar_lea.vmem [#allocation2], %s345
          %s347 = smul.u32 32, %s30
          %349 = vsyncadd %s343, 0
          %s350 = smul.addr %s347, 4
          %s351 = scalar_lea.hbm %s0, %s350
          %s352 = sshll.u32 %s351, 4
          %s353 = int_to_ptr.hbm [resolvable:$true] %s352
          %s354 = sshll.u32 %s346, 4
          %s355 = int_to_ptr.vmem [resolvable:$true] %s354
          %360 = dma.hbm_to_vmem [thread:$0]  %s353, 2048, %s355, %s343, 64, 64, 4
        $region44: #{tpu_custom_call.1} parent=39 // pred_fallthru
          _
        // Predicated region
        $region45: #{tpu_custom_call.1} parent=39 // pred_check
          %p361 = pneg %p76
        $region46: #{tpu_custom_call.1} parent=39 // pred_check_branch
          %363 = sbr.rel (%p361) target = $region48
        $region47: #{tpu_custom_call.1} parent=39 // pred_region
          #allocation17 [shape = 'u32[6]{0}', space=smem, size = 0x18, scoped, tag = 'DMA stride descriptor']
          %s364 = sand.u32 %s30, 1
          %s365 = scalar_lea.sflag [#allocation6], %s364
          %s366 = sand.u32 %s66, 1
          %s367 = smul.addr %s366, 384
          %s368 = scalar_lea.vmem [#allocation5], %s367
          %s369 = smul.u32 32, %s30
          %371 = vsyncadd %s365, 0
          %s372 = smul.addr %s369, 4
          %s373 = scalar_lea.hbm %s1, %s372
          %s375 = sshll.u32 1, 14
          %s376 = sxor.u32 4294967295, %s375
          %s378 = sld [smem:[#allocation0]]
          %s379 = sadd.s32 2, %s378
          %s381 = sshll.u32 7, 26
          %s382 = sxor.u32 4294967295, %s381
          %s383 = sand.u32 0, %s382
          %s384 = sshll.u32 %s379, 26
          %s385 = sor.u32 %s383, %s384
          %s386 = sshll.u32 %s373, 4
          %s387 = int_to_ptr.hbm [resolvable:$true] %s386
          %s388 = sshll.u32 %s368, 4
          %s389 = int_to_ptr.vmem [resolvable:$true] %s388
          %395 = sst [smem:[#allocation17]] 4096
          %s396 = scalar_lea.smem [#allocation17], 1
          %397 = sst [smem:[%s396]] 2048
          %s398 = scalar_lea.smem [#allocation17], 2
          %399 = sst [smem:[%s398]] 32
          %s400 = scalar_lea.smem [#allocation17], 3
          %401 = sst [smem:[%s400]] 64
          %s402 = scalar_lea.smem [#allocation17], 4
          %403 = sst [smem:[%s402]] 64
          %s404 = scalar_lea.smem [#allocation17], 5
          %405 = sst [smem:[%s404]] 4
          %407 = dma.general %s387, 6144, %s389, %s365, [#allocation16], [#allocation17], %s385, 0
        $region48: #{tpu_custom_call.1} parent=39 // pred_fallthru
          _
      $region40: #{tpu_custom_call.1} parent=5 // pred_fallthru
        _
      %p408 = scmp.le.s32.totalorder 1, %s30
      %p409 = scmp.lt.s32.totalorder %s30, 3
      %p410 = pnand %p408, %p409
      %p411 = pneg %p410
      // Predicated region
      $region49: #{tpu_custom_call.1} parent=5 // pred_check
        _
      $region50: #{tpu_custom_call.1} parent=5 // pred_check_branch
        %413 = sbr.rel (%p410) target = $region52
      $region51: #{tpu_custom_call.1} parent=5 // pred_region
        %s414 = ssub.s32 %s30, 1
        %s415 = sand.u32 %s43, 1
        %s416 = scalar_lea.sflag [#allocation3], %s415
        %s417 = sand.u32 %s43, 1
        %s418 = smul.addr %s417, 128
        %s419 = scalar_lea.vmem [#allocation2], %s418
        // Predicated region
        $region53: #{tpu_custom_call.1} parent=51 // pred_check
          %p420 = pneg %p56
        $region54: #{tpu_custom_call.1} parent=51 // pred_check_branch
          %422 = sbr.rel (%p420) target = $region56
        $region55: #{tpu_custom_call.1} parent=51 // pred_region
          %424 = dma.done %s416, 2048
        $region56: #{tpu_custom_call.1} parent=51 // pred_fallthru
          _
        %s425 = sand.u32 %s35, 1
        %s426 = scalar_lea.sflag [#allocation6], %s425
        %s427 = sand.u32 %s69, 1
        %s428 = smul.addr %s427, 384
        %s429 = scalar_lea.vmem [#allocation5], %s428
        // Predicated region
        $region57: #{tpu_custom_call.1} parent=51 // pred_check
          %p430 = pneg %p82
        $region58: #{tpu_custom_call.1} parent=51 // pred_check_branch
          %432 = sbr.rel (%p430) target = $region60
        $region59: #{tpu_custom_call.1} parent=51 // pred_region
          %434 = dma.done %s426, 6144
        $region60: #{tpu_custom_call.1} parent=51 // pred_fallthru
          _
        // Predicated region
        $region61: #{tpu_custom_call.1} parent=51 // pred_check
          %p435 = pneg %p103
        $region62: #{tpu_custom_call.1} parent=51 // pred_check_branch
          %437 = sbr.rel (%p435) target = $region64
        $region63: #{tpu_custom_call.1} parent=51 // pred_region
          %439 = dma.done [#allocation6], 2048
        $region64: #{tpu_custom_call.1} parent=51 // pred_fallthru
          _
        // Predicated region
        $region65: #{tpu_custom_call.1} parent=51 // pred_check
          %p440 = pneg %p145
        $region66: #{tpu_custom_call.1} parent=51 // pred_check_branch
          %442 = sbr.rel (%p440) target = $region68
        $region67: #{tpu_custom_call.1} parent=51 // pred_region
          %444 = dma.done [#allocation9], 2048
        $region68: #{tpu_custom_call.1} parent=51 // pred_fallthru
          _
        // Predicated region
        $region69: #{tpu_custom_call.1} parent=51 // pred_check
          %p445 = pneg %p166
        $region70: #{tpu_custom_call.1} parent=51 // pred_check_branch
          %447 = sbr.rel (%p445) target = $region72
        $region71: #{tpu_custom_call.1} parent=51 // pred_region
          %449 = dma.done [#allocation9], 16
        $region72: #{tpu_custom_call.1} parent=51 // pred_fallthru
          _
        // Predicated region
        $region73: #{tpu_custom_call.1} parent=51 // pred_check
          %p450 = pneg %p187
        $region74: #{tpu_custom_call.1} parent=51 // pred_check_branch
          %452 = sbr.rel (%p450) target = $region76
        $region75: #{tpu_custom_call.1} parent=51 // pred_region
          %454 = dma.done [#allocation12], 3072
        $region76: #{tpu_custom_call.1} parent=51 // pred_fallthru
          _
        %s455 = sand.u32 %s43, 1
        %s456 = scalar_lea.sflag [#allocation3], %s455
        %s457 = sand.u32 %s43, 1
        %s458 = smul.addr %s457, 128
        %s459 = scalar_lea.vmem [#allocation2], %s458
        %p460 = pneg %p56
        %p461 = pneg %p53
        %s462 = sand.u32 %s35, 1
        %s463 = scalar_lea.sflag [#allocation6], %s462
        %s464 = sand.u32 %s69, 1
        %s465 = smul.addr %s464, 384
        %s466 = scalar_lea.vmem [#allocation5], %s465
        %p467 = pneg %p82
        %p468 = pneg %p79
        %p469 = pneg %p103
        %p470 = pneg %p100
        %p471 = pneg %p124
        %p472 = pneg %p121
        %p473 = pneg %p145
        %p474 = pneg %p142
        %p475 = pneg %p166
        %p476 = pneg %p163
        %p477 = pneg %p187
        %p478 = pneg %p184
        %p479 = pneg %p208
        %p480 = pneg %p205
        %p481 = pneg %p234
        %p482 = pneg %p231
        %s483 = sand.u32 %s221, 1
        %s484 = scalar_lea.sflag [#allocation4], %s483
        %s485 = sand.u32 %s221, 1
        %s486 = smul.addr %s485, 128
        %s487 = scalar_lea.vmem [#allocation13], %s486
        %p488 = pneg %p260
        %p489 = pneg %p257
        %s490 = sand.u32 %s247, 1
        %s491 = scalar_lea.sflag [#allocation15], %s490
        %s492 = sand.u32 %s247, 1
        %s493 = smul.addr %s492, 384
        %s494 = scalar_lea.vmem [#allocation14], %s493
        %s495 = smul.u32 32, %s35
        %s496 = smul.u32 32, %s35
        %s497 = smul.u32 32, %s35
        %s498 = smul.u32 32, %s35
        %v499 = vld [vmem:[%s419] sm:$0xf]
        %v500 = vld [vmem:[%s419 + $0x4] sm:$0xf]
        %v501 = vld [vmem:[%s419 + $0x8] sm:$0xf]
        %v502 = vld [vmem:[%s419 + $0xc] sm:$0xf]
        %v503 = vld [vmem:[%s419 + $0x10] sm:$0xf]
        %v504 = vld [vmem:[%s419 + $0x14] sm:$0xf]
        %v505 = vld [vmem:[%s419 + $0x18] sm:$0xf]
        %v506 = vld [vmem:[%s419 + $0x1c] sm:$0xf]
        %v507 = vld [vmem:[%s419 + $0x20] sm:$0xf]
        %v508 = vld [vmem:[%s419 + $0x24] sm:$0xf]
        %v509 = vld [vmem:[%s419 + $0x28] sm:$0xf]
        %v510 = vld [vmem:[%s419 + $0x2c] sm:$0xf]
        %v511 = vld [vmem:[%s419 + $0x30] sm:$0xf]
        %v512 = vld [vmem:[%s419 + $0x34] sm:$0xf]
        %v513 = vld [vmem:[%s419 + $0x38] sm:$0xf]
        %v514 = vld [vmem:[%s419 + $0x3c] sm:$0xf]
        %v515 = vld [vmem:[%s419 + $0x40] sm:$0xf]
        %v516 = vld [vmem:[%s419 + $0x44] sm:$0xf]
        %v517 = vld [vmem:[%s419 + $0x48] sm:$0xf]
        %v518 = vld [vmem:[%s419 + $0x4c] sm:$0xf]
        %v519 = vld [vmem:[%s419 + $0x50] sm:$0xf]
        %v520 = vld [vmem:[%s419 + $0x54] sm:$0xf]
        %v521 = vld [vmem:[%s419 + $0x58] sm:$0xf]
        %v522 = vld [vmem:[%s419 + $0x5c] sm:$0xf]
        %v523 = vld [vmem:[%s419 + $0x60] sm:$0xf]
        %v524 = vld [vmem:[%s419 + $0x64] sm:$0xf]
        %v525 = vld [vmem:[%s419 + $0x68] sm:$0xf]
        %v526 = vld [vmem:[%s419 + $0x6c] sm:$0xf]
        %v527 = vld [vmem:[%s419 + $0x70] sm:$0xf]
        %v528 = vld [vmem:[%s419 + $0x74] sm:$0xf]
        %v529 = vld [vmem:[%s419 + $0x78] sm:$0xf]
        %v530 = vld [vmem:[%s419 + $0x7c] sm:$0xf]
        %v531 = vld [vmem:[%s429] sm:$0xf]
        %v532 = vld [vmem:[%s429 + $0x4] sm:$0xf]
        %v533 = vld [vmem:[%s429 + $0x8] sm:$0xf]
        %v534 = vld [vmem:[%s429 + $0xc] sm:$0xf]
        %v535 = vld [vmem:[%s429 + $0x10] sm:$0xf]
        %v536 = vld [vmem:[%s429 + $0x14] sm:$0xf]
        %v537 = vld [vmem:[%s429 + $0x18] sm:$0xf]
        %v538 = vld [vmem:[%s429 + $0x1c] sm:$0xf]
        %v539 = vld [vmem:[%s429 + $0x20] sm:$0xf]
        %v540 = vld [vmem:[%s429 + $0x24] sm:$0xf]
        %v541 = vld [vmem:[%s429 + $0x28] sm:$0xf]
        %v542 = vld [vmem:[%s429 + $0x2c] sm:$0xf]
        %v543 = vld [vmem:[%s429 + $0x30] sm:$0xf]
        %v544 = vld [vmem:[%s429 + $0x34] sm:$0xf]
        %v545 = vld [vmem:[%s429 + $0x38] sm:$0xf]
        %v546 = vld [vmem:[%s429 + $0x3c] sm:$0xf]
        %v547 = vld [vmem:[%s429 + $0x40] sm:$0xf]
        %v548 = vld [vmem:[%s429 + $0x44] sm:$0xf]
        %v549 = vld [vmem:[%s429 + $0x48] sm:$0xf]
        %v550 = vld [vmem:[%s429 + $0x4c] sm:$0xf]
        %v551 = vld [vmem:[%s429 + $0x50] sm:$0xf]
        %v552 = vld [vmem:[%s429 + $0x54] sm:$0xf]
        %v553 = vld [vmem:[%s429 + $0x58] sm:$0xf]
        %v554 = vld [vmem:[%s429 + $0x5c] sm:$0xf]
        %v555 = vld [vmem:[%s429 + $0x60] sm:$0xf]
        %v556 = vld [vmem:[%s429 + $0x64] sm:$0xf]
        %v557 = vld [vmem:[%s429 + $0x68] sm:$0xf]
        %v558 = vld [vmem:[%s429 + $0x6c] sm:$0xf]
        %v559 = vld [vmem:[%s429 + $0x70] sm:$0xf]
        %v560 = vld [vmem:[%s429 + $0x74] sm:$0xf]
        %v561 = vld [vmem:[%s429 + $0x78] sm:$0xf]
        %v562 = vld [vmem:[%s429 + $0x7c] sm:$0xf]
        %v563 = vld [vmem:[%s429 + $0x80] sm:$0xf]
        %v564 = vld [vmem:[%s429 + $0x84] sm:$0xf]
        %v565 = vld [vmem:[%s429 + $0x88] sm:$0xf]
        %v566 = vld [vmem:[%s429 + $0x8c] sm:$0xf]
        %v567 = vld [vmem:[%s429 + $0x90] sm:$0xf]
        %v568 = vld [vmem:[%s429 + $0x94] sm:$0xf]
        %v569 = vld [vmem:[%s429 + $0x98] sm:$0xf]
        %v570 = vld [vmem:[%s429 + $0x9c] sm:$0xf]
        %v571 = vld [vmem:[%s429 + $0xa0] sm:$0xf]
        %v572 = vld [vmem:[%s429 + $0xa4] sm:$0xf]
        %v573 = vld [vmem:[%s429 + $0xa8] sm:$0xf]
        %v574 = vld [vmem:[%s429 + $0xac] sm:$0xf]
        %v575 = vld [vmem:[%s429 + $0xb0] sm:$0xf]
        %v576 = vld [vmem:[%s429 + $0xb4] sm:$0xf]
        %v577 = vld [vmem:[%s429 + $0xb8] sm:$0xf]
        %v578 = vld [vmem:[%s429 + $0xbc] sm:$0xf]
        %v579 = vld [vmem:[%s429 + $0xc0] sm:$0xf]
        %v580 = vld [vmem:[%s429 + $0xc4] sm:$0xf]
        %v581 = vld [vmem:[%s429 + $0xc8] sm:$0xf]
        %v582 = vld [vmem:[%s429 + $0xcc] sm:$0xf]
        %v583 = vld [vmem:[%s429 + $0xd0] sm:$0xf]
        %v584 = vld [vmem:[%s429 + $0xd4] sm:$0xf]
        %v585 = vld [vmem:[%s429 + $0xd8] sm:$0xf]
        %v586 = vld [vmem:[%s429 + $0xdc] sm:$0xf]
        %v587 = vld [vmem:[%s429 + $0xe0] sm:$0xf]
        %v588 = vld [vmem:[%s429 + $0xe4] sm:$0xf]
        %v589 = vld [vmem:[%s429 + $0xe8] sm:$0xf]
        %v590 = vld [vmem:[%s429 + $0xec] sm:$0xf]
        %v591 = vld [vmem:[%s429 + $0xf0] sm:$0xf]
        %v592 = vld [vmem:[%s429 + $0xf4] sm:$0xf]
        %v593 = vld [vmem:[%s429 + $0xf8] sm:$0xf]
        %v594 = vld [vmem:[%s429 + $0xfc] sm:$0xf]
        %v595 = vld [vmem:[%s429 + $0x100] sm:$0xf]
        %v596 = vld [vmem:[%s429 + $0x104] sm:$0xf]
        %v597 = vld [vmem:[%s429 + $0x108] sm:$0xf]
        %v598 = vld [vmem:[%s429 + $0x10c] sm:$0xf]
        %v599 = vld [vmem:[%s429 + $0x110] sm:$0xf]
        %v600 = vld [vmem:[%s429 + $0x114] sm:$0xf]
        %v601 = vld [vmem:[%s429 + $0x118] sm:$0xf]
        %v602 = vld [vmem:[%s429 + $0x11c] sm:$0xf]
        %v603 = vld [vmem:[%s429 + $0x120] sm:$0xf]
        %v604 = vld [vmem:[%s429 + $0x124] sm:$0xf]
        %v605 = vld [vmem:[%s429 + $0x128] sm:$0xf]
        %v606 = vld [vmem:[%s429 + $0x12c] sm:$0xf]
        %v607 = vld [vmem:[%s429 + $0x130] sm:$0xf]
        %v608 = vld [vmem:[%s429 + $0x134] sm:$0xf]
        %v609 = vld [vmem:[%s429 + $0x138] sm:$0xf]
        %v610 = vld [vmem:[%s429 + $0x13c] sm:$0xf]
        %v611 = vld [vmem:[%s429 + $0x140] sm:$0xf]
        %v612 = vld [vmem:[%s429 + $0x144] sm:$0xf]
        %v613 = vld [vmem:[%s429 + $0x148] sm:$0xf]
        %v614 = vld [vmem:[%s429 + $0x14c] sm:$0xf]
        %v615 = vld [vmem:[%s429 + $0x150] sm:$0xf]
        %v616 = vld [vmem:[%s429 + $0x154] sm:$0xf]
        %v617 = vld [vmem:[%s429 + $0x158] sm:$0xf]
        %v618 = vld [vmem:[%s429 + $0x15c] sm:$0xf]
        %v619 = vld [vmem:[%s429 + $0x160] sm:$0xf]
        %v620 = vld [vmem:[%s429 + $0x164] sm:$0xf]
        %v621 = vld [vmem:[%s429 + $0x168] sm:$0xf]
        %v622 = vld [vmem:[%s429 + $0x16c] sm:$0xf]
        %v623 = vld [vmem:[%s429 + $0x170] sm:$0xf]
        %v624 = vld [vmem:[%s429 + $0x174] sm:$0xf]
        %v625 = vld [vmem:[%s429 + $0x178] sm:$0xf]
        %v626 = vld [vmem:[%s429 + $0x17c] sm:$0xf]
        %v627 = vld [vmem:[#allocation7] sm:$0xff]
        %v628 = vld [vmem:[#allocation7 + $0x8] sm:$0xff]
        %v629 = vld [vmem:[#allocation7 + $0x10] sm:$0xff]
        %v630 = vld [vmem:[#allocation7 + $0x18] sm:$0xff]
        %v631 = vld [vmem:[#allocation7 + $0x20] sm:$0xff]
        %v632 = vld [vmem:[#allocation7 + $0x28] sm:$0xff]
        %v633 = vld [vmem:[#allocation7 + $0x30] sm:$0xff]
        %v634 = vld [vmem:[#allocation7 + $0x38] sm:$0xff]
        %v635 = vld [vmem:[#allocation7 + $0x40] sm:$0xff]
        %v636 = vld [vmem:[#allocation7 + $0x48] sm:$0xff]
        %v637 = vld [vmem:[#allocation7 + $0x50] sm:$0xff]
        %v638 = vld [vmem:[#allocation7 + $0x58] sm:$0xff]
        %v639 = vld [vmem:[#allocation7 + $0x60] sm:$0xff]
        %v640 = vld [vmem:[#allocation7 + $0x68] sm:$0xff]
        %v641 = vld [vmem:[#allocation7 + $0x70] sm:$0xff]
        %v642 = vld [vmem:[#allocation7 + $0x78] sm:$0xff]
        %v643 = vld [vmem:[%s3] sm:$0x3]
        %v645 = vperm.slane %v643, 0
        %v646 = vperm.slane %v643, 1
        %v745 = vunpack.c.l.b16 %v531
        %v746 = vunpack.c.l.b16 %v532
        %v747 = vunpack.c.l.b16 %v533
        %v748 = vunpack.c.l.b16 %v534
        %v749 = vunpack.c.l.b16 %v535
        %v750 = vunpack.c.l.b16 %v536
        %v751 = vunpack.c.l.b16 %v537
        %v752 = vunpack.c.l.b16 %v538
        %v753 = vunpack.c.l.b16 %v539
        %v754 = vunpack.c.l.b16 %v540
        %v755 = vunpack.c.l.b16 %v541
        %v756 = vunpack.c.l.b16 %v542
        %v757 = vunpack.c.l.b16 %v543
        %v758 = vunpack.c.l.b16 %v544
        %v759 = vunpack.c.l.b16 %v545
        %v760 = vunpack.c.l.b16 %v546
        %v761 = vunpack.c.l.b16 %v547
        %v762 = vunpack.c.l.b16 %v548
        %v763 = vunpack.c.l.b16 %v549
        %v764 = vunpack.c.l.b16 %v550
        %v765 = vunpack.c.l.b16 %v551
        %v766 = vunpack.c.l.b16 %v552
        %v767 = vunpack.c.l.b16 %v553
        %v768 = vunpack.c.l.b16 %v554
        %v769 = vunpack.c.l.b16 %v555
        %v770 = vunpack.c.l.b16 %v556
        %v771 = vunpack.c.l.b16 %v557
        %v772 = vunpack.c.l.b16 %v558
        %v773 = vunpack.c.l.b16 %v559
        %v774 = vunpack.c.l.b16 %v560
        %v775 = vunpack.c.l.b16 %v561
        %v776 = vunpack.c.l.b16 %v562
        %v777 = vunpack.c.l.b16 %v563
        %v778 = vunpack.c.l.b16 %v564
        %v779 = vunpack.c.l.b16 %v565
        %v780 = vunpack.c.l.b16 %v566
        %v781 = vunpack.c.l.b16 %v567
        %v782 = vunpack.c.l.b16 %v568
        %v783 = vunpack.c.l.b16 %v569
        %v784 = vunpack.c.l.b16 %v570
        %v785 = vunpack.c.l.b16 %v571
        %v786 = vunpack.c.l.b16 %v572
        %v787 = vunpack.c.l.b16 %v573
        %v788 = vunpack.c.l.b16 %v574
        %v789 = vunpack.c.l.b16 %v575
        %v790 = vunpack.c.l.b16 %v576
        %v791 = vunpack.c.l.b16 %v577
        %v792 = vunpack.c.l.b16 %v578
        %v793 = vunpack.c.l.b16 %v579
        %v794 = vunpack.c.l.b16 %v580
        %v795 = vunpack.c.l.b16 %v581
        %v796 = vunpack.c.l.b16 %v582
        %v797 = vunpack.c.l.b16 %v583
        %v798 = vunpack.c.l.b16 %v584
        %v799 = vunpack.c.l.b16 %v585
        %v800 = vunpack.c.l.b16 %v586
        %v801 = vunpack.c.l.b16 %v587
        %v802 = vunpack.c.l.b16 %v588
        %v803 = vunpack.c.l.b16 %v589
        %v804 = vunpack.c.l.b16 %v590
        %v805 = vunpack.c.l.b16 %v591
        %v806 = vunpack.c.l.b16 %v592
        %v807 = vunpack.c.l.b16 %v593
        %v808 = vunpack.c.l.b16 %v594
        %v809 = vunpack.c.l.b16 %v595
        %v810 = vunpack.c.l.b16 %v596
        %v811 = vunpack.c.l.b16 %v597
        %v812 = vunpack.c.l.b16 %v598
        %v813 = vunpack.c.l.b16 %v599
        %v814 = vunpack.c.l.b16 %v600
        %v815 = vunpack.c.l.b16 %v601
        %v816 = vunpack.c.l.b16 %v602
        %v817 = vunpack.c.l.b16 %v603
        %v818 = vunpack.c.l.b16 %v604
        %v819 = vunpack.c.l.b16 %v605
        %v820 = vunpack.c.l.b16 %v606
        %v821 = vunpack.c.l.b16 %v607
        %v822 = vunpack.c.l.b16 %v608
        %v823 = vunpack.c.l.b16 %v609
        %v824 = vunpack.c.l.b16 %v610
        %v825 = vunpack.c.l.b16 %v611
        %v826 = vunpack.c.l.b16 %v612
        %v827 = vunpack.c.l.b16 %v613
        %v828 = vunpack.c.l.b16 %v614
        %v829 = vunpack.c.l.b16 %v615
        %v830 = vunpack.c.l.b16 %v616
        %v831 = vunpack.c.l.b16 %v617
        %v832 = vunpack.c.l.b16 %v618
        %v833 = vunpack.c.l.b16 %v619
        %v834 = vunpack.c.l.b16 %v620
        %v835 = vunpack.c.l.b16 %v621
        %v836 = vunpack.c.l.b16 %v622
        %v837 = vunpack.c.l.b16 %v623
        %v838 = vunpack.c.l.b16 %v624
        %v839 = vunpack.c.l.b16 %v625
        %v840 = vunpack.c.l.b16 %v626
        %v841 = vpack.c.b16 %v746, %v745
        %v842 = vpack.c.b16 %v748, %v747
        %v843 = vpack.c.b16 %v750, %v749
        %v844 = vpack.c.b16 %v752, %v751
        %v845 = vpack.c.b16 %v754, %v753
        %v846 = vpack.c.b16 %v756, %v755
        %v847 = vpack.c.b16 %v758, %v757
        %v848 = vpack.c.b16 %v760, %v759
        %v849 = vpack.c.b16 %v762, %v761
        %v850 = vpack.c.b16 %v764, %v763
        %v851 = vpack.c.b16 %v766, %v765
        %v852 = vpack.c.b16 %v768, %v767
        %v853 = vpack.c.b16 %v770, %v769
        %v854 = vpack.c.b16 %v772, %v771
        %v855 = vpack.c.b16 %v774, %v773
        %v856 = vpack.c.b16 %v776, %v775
        %v857 = vpack.c.b16 %v778, %v777
        %v858 = vpack.c.b16 %v780, %v779
        %v859 = vpack.c.b16 %v782, %v781
        %v860 = vpack.c.b16 %v784, %v783
        %v861 = vpack.c.b16 %v786, %v785
        %v862 = vpack.c.b16 %v788, %v787
        %v863 = vpack.c.b16 %v790, %v789
        %v864 = vpack.c.b16 %v792, %v791
        %v865 = vpack.c.b16 %v794, %v793
        %v866 = vpack.c.b16 %v796, %v795
        %v867 = vpack.c.b16 %v798, %v797
        %v868 = vpack.c.b16 %v800, %v799
        %v869 = vpack.c.b16 %v802, %v801
        %v870 = vpack.c.b16 %v804, %v803
        %v871 = vpack.c.b16 %v806, %v805
        %v872 = vpack.c.b16 %v808, %v807
        %v873 = vpack.c.b16 %v810, %v809
        %v874 = vpack.c.b16 %v812, %v811
        %v875 = vpack.c.b16 %v814, %v813
        %v876 = vpack.c.b16 %v816, %v815
        %v877 = vpack.c.b16 %v818, %v817
        %v878 = vpack.c.b16 %v820, %v819
        %v879 = vpack.c.b16 %v822, %v821
        %v880 = vpack.c.b16 %v824, %v823
        %v881 = vpack.c.b16 %v826, %v825
        %v882 = vpack.c.b16 %v828, %v827
        %v883 = vpack.c.b16 %v830, %v829
        %v884 = vpack.c.b16 %v832, %v831
        %v885 = vpack.c.b16 %v834, %v833
        %v886 = vpack.c.b16 %v836, %v835
        %v887 = vpack.c.b16 %v838, %v837
        %v888 = vpack.c.b16 %v840, %v839
        %v953 = vunpack.c.l.b16 %v627
        %v954 = vunpack.c.h.b16 %v627
        %v955 = vunpack.c.l.b16 %v628
        %v956 = vunpack.c.h.b16 %v628
        %v957 = vunpack.c.l.b16 %v629
        %v958 = vunpack.c.h.b16 %v629
        %v959 = vunpack.c.l.b16 %v630
        %v960 = vunpack.c.h.b16 %v630
        %v961 = vunpack.c.l.b16 %v631
        %v962 = vunpack.c.h.b16 %v631
        %v963 = vunpack.c.l.b16 %v632
        %v964 = vunpack.c.h.b16 %v632
        %v965 = vunpack.c.l.b16 %v633
        %v966 = vunpack.c.h.b16 %v633
        %v967 = vunpack.c.l.b16 %v634
        %v968 = vunpack.c.h.b16 %v634
        %v969 = vunpack.c.l.b16 %v635
        %v970 = vunpack.c.h.b16 %v635
        %v971 = vunpack.c.l.b16 %v636
        %v972 = vunpack.c.h.b16 %v636
        %v973 = vunpack.c.l.b16 %v637
        %v974 = vunpack.c.h.b16 %v637
        %v975 = vunpack.c.l.b16 %v638
        %v976 = vunpack.c.h.b16 %v638
        %v977 = vunpack.c.l.b16 %v639
        %v978 = vunpack.c.h.b16 %v639
        %v979 = vunpack.c.l.b16 %v640
        %v980 = vunpack.c.h.b16 %v640
        %v981 = vunpack.c.l.b16 %v641
        %v982 = vunpack.c.h.b16 %v641
        %v983 = vunpack.c.l.b16 %v642
        %v984 = vunpack.c.h.b16 %v642
        %v985 = vpack.c.b16 %v955, %v953
        %v986 = vpack.c.b16 %v956, %v954
        %v987 = vpack.c.b16 %v959, %v957
        %v988 = vpack.c.b16 %v960, %v958
        %v989 = vpack.c.b16 %v963, %v961
        %v990 = vpack.c.b16 %v964, %v962
        %v991 = vpack.c.b16 %v967, %v965
        %v992 = vpack.c.b16 %v968, %v966
        %v993 = vpack.c.b16 %v971, %v969
        %v994 = vpack.c.b16 %v972, %v970
        %v995 = vpack.c.b16 %v975, %v973
        %v996 = vpack.c.b16 %v976, %v974
        %v997 = vpack.c.b16 %v979, %v977
        %v998 = vpack.c.b16 %v980, %v978
        %v999 = vpack.c.b16 %v983, %v981
        %v1000 = vpack.c.b16 %v984, %v982
        %1017 = vmatpush.bf16.msra.mxu0 %v999
        %1018 = vmatpush.bf16.msra.mxu0 %v997
        %1019 = vmatpush.bf16.msra.mxu0 %v995
        %1020 = vmatpush.bf16.msra.mxu0 %v993
        %1021 = vmatpush.bf16.msra.mxu0 %v991
        %1022 = vmatpush.bf16.msra.mxu0 %v989
        %1023 = vmatpush.bf16.msra.mxu0 %v987
        %1024 = vmatpush.bf16.msra.mxu0 %v985
        %1025 = vmatmul.bf16.gmra.mxu0 %v841
        %v1026 = vpop.f32.mrf.mxu0
        %v1027 = vadd.f32 %v645, %v1026
        %v1028 = vpop.f32.mrf.mxu0
        %v1029 = vadd.f32 %v645, %v1028
        %1030 = vmatmul.bf16.gmra.mxu0 %v842
        %v1031 = vpop.f32.mrf.mxu0
        %v1032 = vadd.f32 %v645, %v1031
        %v1033 = vpop.f32.mrf.mxu0
        %v1034 = vadd.f32 %v645, %v1033
        %1035 = vmatmul.bf16.gmra.mxu0 %v843
        %v1036 = vpop.f32.mrf.mxu0
        %v1037 = vadd.f32 %v645, %v1036
        %v1038 = vpop.f32.mrf.mxu0
        %v1039 = vadd.f32 %v645, %v1038
        %1040 = vmatmul.bf16.gmra.mxu0 %v844
        %v1041 = vpop.f32.mrf.mxu0
        %v1042 = vadd.f32 %v645, %v1041
        %v1043 = vpop.f32.mrf.mxu0
        %v1044 = vadd.f32 %v645, %v1043
        %1045 = vmatmul.bf16.gmra.mxu0 %v845
        %v1046 = vpop.f32.mrf.mxu0
        %v1047 = vadd.f32 %v645, %v1046
        %v1048 = vpop.f32.mrf.mxu0
        %v1049 = vadd.f32 %v645, %v1048
        %1050 = vmatmul.bf16.gmra.mxu0 %v846
        %v1051 = vpop.f32.mrf.mxu0
        %v1052 = vadd.f32 %v645, %v1051
        %v1053 = vpop.f32.mrf.mxu0
        %v1054 = vadd.f32 %v645, %v1053
        %1055 = vmatmul.bf16.gmra.mxu0 %v847
        %v1056 = vpop.f32.mrf.mxu0
        %v1057 = vadd.f32 %v645, %v1056
        %v1058 = vpop.f32.mrf.mxu0
        %v1059 = vadd.f32 %v645, %v1058
        %1060 = vmatmul.bf16.gmra.mxu0 %v848
        %v1061 = vpop.f32.mrf.mxu0
        %v1062 = vadd.f32 %v645, %v1061
        %v1063 = vpop.f32.mrf.mxu0
        %v1064 = vadd.f32 %v645, %v1063
        %1065 = vmatmul.bf16.gmra.mxu0 %v849
        %v1066 = vpop.f32.mrf.mxu0
        %v1067 = vadd.f32 %v645, %v1066
        %v1068 = vpop.f32.mrf.mxu0
        %v1069 = vadd.f32 %v645, %v1068
        %1070 = vmatmul.bf16.gmra.mxu0 %v850
        %v1071 = vpop.f32.mrf.mxu0
        %v1072 = vadd.f32 %v645, %v1071
        %v1073 = vpop.f32.mrf.mxu0
        %v1074 = vadd.f32 %v645, %v1073
        %1075 = vmatmul.bf16.gmra.mxu0 %v851
        %v1076 = vpop.f32.mrf.mxu0
        %v1077 = vadd.f32 %v645, %v1076
        %v1078 = vpop.f32.mrf.mxu0
        %v1079 = vadd.f32 %v645, %v1078
        %1080 = vmatmul.bf16.gmra.mxu0 %v852
        %v1081 = vpop.f32.mrf.mxu0
        %v1082 = vadd.f32 %v645, %v1081
        %v1083 = vpop.f32.mrf.mxu0
        %v1084 = vadd.f32 %v645, %v1083
        %1085 = vmatmul.bf16.gmra.mxu0 %v853
        %v1086 = vpop.f32.mrf.mxu0
        %v1087 = vadd.f32 %v645, %v1086
        %v1088 = vpop.f32.mrf.mxu0
        %v1089 = vadd.f32 %v645, %v1088
        %1090 = vmatmul.bf16.gmra.mxu0 %v854
        %v1091 = vpop.f32.mrf.mxu0
        %v1092 = vadd.f32 %v645, %v1091
        %v1093 = vpop.f32.mrf.mxu0
        %v1094 = vadd.f32 %v645, %v1093
        %1095 = vmatmul.bf16.gmra.mxu0 %v855
        %v1096 = vpop.f32.mrf.mxu0
        %v1097 = vadd.f32 %v645, %v1096
        %v1098 = vpop.f32.mrf.mxu0
        %v1099 = vadd.f32 %v645, %v1098
        %1100 = vmatmul.bf16.gmra.mxu0 %v856
        %v1101 = vpop.f32.mrf.mxu0
        %v1102 = vadd.f32 %v645, %v1101
        %v1103 = vpop.f32.mrf.mxu0
        %v1104 = vadd.f32 %v645, %v1103
        %1105 = vmatmul.bf16.gmra.mxu0 %v857
        %v1106 = vpop.f32.mrf.mxu0
        %v1107 = vadd.f32 %v645, %v1106
        %v1108 = vpop.f32.mrf.mxu0
        %v1109 = vadd.f32 %v645, %v1108
        %1110 = vmatmul.bf16.gmra.mxu0 %v858
        %v1111 = vpop.f32.mrf.mxu0
        %v1112 = vadd.f32 %v645, %v1111
        %v1113 = vpop.f32.mrf.mxu0
        %v1114 = vadd.f32 %v645, %v1113
        %1115 = vmatmul.bf16.gmra.mxu0 %v859
        %v1116 = vpop.f32.mrf.mxu0
        %v1117 = vadd.f32 %v645, %v1116
        %v1118 = vpop.f32.mrf.mxu0
        %v1119 = vadd.f32 %v645, %v1118
        %1120 = vmatmul.bf16.gmra.mxu0 %v860
        %v1121 = vpop.f32.mrf.mxu0
        %v1122 = vadd.f32 %v645, %v1121
        %v1123 = vpop.f32.mrf.mxu0
        %v1124 = vadd.f32 %v645, %v1123
        %1125 = vmatmul.bf16.gmra.mxu0 %v861
        %v1126 = vpop.f32.mrf.mxu0
        %v1127 = vadd.f32 %v645, %v1126
        %v1128 = vpop.f32.mrf.mxu0
        %v1129 = vadd.f32 %v645, %v1128
        %1130 = vmatmul.bf16.gmra.mxu0 %v862
        %v1131 = vpop.f32.mrf.mxu0
        %v1132 = vadd.f32 %v645, %v1131
        %v1133 = vpop.f32.mrf.mxu0
        %v1134 = vadd.f32 %v645, %v1133
        %1135 = vmatmul.bf16.gmra.mxu0 %v863
        %v1136 = vpop.f32.mrf.mxu0
        %v1137 = vadd.f32 %v645, %v1136
        %v1138 = vpop.f32.mrf.mxu0
        %v1139 = vadd.f32 %v645, %v1138
        %1140 = vmatmul.bf16.gmra.mxu0 %v864
        %v1141 = vpop.f32.mrf.mxu0
        %v1142 = vadd.f32 %v645, %v1141
        %v1143 = vpop.f32.mrf.mxu0
        %v1144 = vadd.f32 %v645, %v1143
        %1145 = vmatmul.bf16.gmra.mxu0 %v865
        %v1146 = vpop.f32.mrf.mxu0
        %v1147 = vadd.f32 %v645, %v1146
        %v1148 = vpop.f32.mrf.mxu0
        %v1149 = vadd.f32 %v645, %v1148
        %1150 = vmatmul.bf16.gmra.mxu0 %v866
        %v1151 = vpop.f32.mrf.mxu0
        %v1152 = vadd.f32 %v645, %v1151
        %v1153 = vpop.f32.mrf.mxu0
        %v1154 = vadd.f32 %v645, %v1153
        %1155 = vmatmul.bf16.gmra.mxu0 %v867
        %v1156 = vpop.f32.mrf.mxu0
        %v1157 = vadd.f32 %v645, %v1156
        %v1158 = vpop.f32.mrf.mxu0
        %v1159 = vadd.f32 %v645, %v1158
        %1160 = vmatmul.bf16.gmra.mxu0 %v868
        %v1161 = vpop.f32.mrf.mxu0
        %v1162 = vadd.f32 %v645, %v1161
        %v1163 = vpop.f32.mrf.mxu0
        %v1164 = vadd.f32 %v645, %v1163
        %1165 = vmatmul.bf16.gmra.mxu0 %v869
        %v1166 = vpop.f32.mrf.mxu0
        %v1167 = vadd.f32 %v645, %v1166
        %v1168 = vpop.f32.mrf.mxu0
        %v1169 = vadd.f32 %v645, %v1168
        %1170 = vmatmul.bf16.gmra.mxu0 %v870
        %v1171 = vpop.f32.mrf.mxu0
        %v1172 = vadd.f32 %v645, %v1171
        %v1173 = vpop.f32.mrf.mxu0
        %v1174 = vadd.f32 %v645, %v1173
        %1175 = vmatmul.bf16.gmra.mxu0 %v871
        %v1176 = vpop.f32.mrf.mxu0
        %v1177 = vadd.f32 %v645, %v1176
        %v1178 = vpop.f32.mrf.mxu0
        %v1179 = vadd.f32 %v645, %v1178
        %1180 = vmatmul.bf16.gmra.mxu0 %v872
        %v1181 = vpop.f32.mrf.mxu0
        %v1182 = vadd.f32 %v645, %v1181
        %v1183 = vpop.f32.mrf.mxu0
        %v1184 = vadd.f32 %v645, %v1183
        %1185 = vmatmul.bf16.gmra.mxu0 %v873
        %v1186 = vpop.f32.mrf.mxu0
        %v1187 = vadd.f32 %v645, %v1186
        %v1188 = vpop.f32.mrf.mxu0
        %v1189 = vadd.f32 %v645, %v1188
        %1190 = vmatmul.bf16.gmra.mxu0 %v874
        %v1191 = vpop.f32.mrf.mxu0
        %v1192 = vadd.f32 %v645, %v1191
        %v1193 = vpop.f32.mrf.mxu0
        %v1194 = vadd.f32 %v645, %v1193
        %1195 = vmatmul.bf16.gmra.mxu0 %v875
        %v1196 = vpop.f32.mrf.mxu0
        %v1197 = vadd.f32 %v645, %v1196
        %v1198 = vpop.f32.mrf.mxu0
        %v1199 = vadd.f32 %v645, %v1198
        %1200 = vmatmul.bf16.gmra.mxu0 %v876
        %v1201 = vpop.f32.mrf.mxu0
        %v1202 = vadd.f32 %v645, %v1201
        %v1203 = vpop.f32.mrf.mxu0
        %v1204 = vadd.f32 %v645, %v1203
        %1205 = vmatmul.bf16.gmra.mxu0 %v877
        %v1206 = vpop.f32.mrf.mxu0
        %v1207 = vadd.f32 %v645, %v1206
        %v1208 = vpop.f32.mrf.mxu0
        %v1209 = vadd.f32 %v645, %v1208
        %1210 = vmatmul.bf16.gmra.mxu0 %v878
        %v1211 = vpop.f32.mrf.mxu0
        %v1212 = vadd.f32 %v645, %v1211
        %v1213 = vpop.f32.mrf.mxu0
        %v1214 = vadd.f32 %v645, %v1213
        %1215 = vmatmul.bf16.gmra.mxu0 %v879
        %v1216 = vpop.f32.mrf.mxu0
        %v1217 = vadd.f32 %v645, %v1216
        %v1218 = vpop.f32.mrf.mxu0
        %v1219 = vadd.f32 %v645, %v1218
        %1220 = vmatmul.bf16.gmra.mxu0 %v880
        %v1221 = vpop.f32.mrf.mxu0
        %v1222 = vadd.f32 %v645, %v1221
        %v1223 = vpop.f32.mrf.mxu0
        %v1224 = vadd.f32 %v645, %v1223
        %1225 = vmatmul.bf16.gmra.mxu0 %v881
        %v1226 = vpop.f32.mrf.mxu0
        %v1227 = vadd.f32 %v645, %v1226
        %v1228 = vpop.f32.mrf.mxu0
        %v1229 = vadd.f32 %v645, %v1228
        %1230 = vmatmul.bf16.gmra.mxu0 %v882
        %v1231 = vpop.f32.mrf.mxu0
        %v1232 = vadd.f32 %v645, %v1231
        %v1233 = vpop.f32.mrf.mxu0
        %v1234 = vadd.f32 %v645, %v1233
        %1235 = vmatmul.bf16.gmra.mxu0 %v883
        %v1236 = vpop.f32.mrf.mxu0
        %v1237 = vadd.f32 %v645, %v1236
        %v1238 = vpop.f32.mrf.mxu0
        %v1239 = vadd.f32 %v645, %v1238
        %1240 = vmatmul.bf16.gmra.mxu0 %v884
        %v1241 = vpop.f32.mrf.mxu0
        %v1242 = vadd.f32 %v645, %v1241
        %v1243 = vpop.f32.mrf.mxu0
        %v1244 = vadd.f32 %v645, %v1243
        %1245 = vmatmul.bf16.gmra.mxu0 %v885
        %v1246 = vpop.f32.mrf.mxu0
        %v1247 = vadd.f32 %v645, %v1246
        %v1248 = vpop.f32.mrf.mxu0
        %v1249 = vadd.f32 %v645, %v1248
        %1250 = vmatmul.bf16.gmra.mxu0 %v886
        %v1251 = vpop.f32.mrf.mxu0
        %v1252 = vadd.f32 %v645, %v1251
        %v1253 = vpop.f32.mrf.mxu0
        %v1254 = vadd.f32 %v645, %v1253
        %1255 = vmatmul.bf16.gmra.mxu0 %v887
        %v1256 = vpop.f32.mrf.mxu0
        %v1257 = vadd.f32 %v645, %v1256
        %v1258 = vpop.f32.mrf.mxu0
        %v1259 = vadd.f32 %v645, %v1258
        %1260 = vmatmul.bf16.gmra.mxu0 %v888
        %v1261 = vpop.f32.mrf.mxu0
        %v1262 = vadd.f32 %v645, %v1261
        %v1263 = vpop.f32.mrf.mxu0
        %v1264 = vadd.f32 %v645, %v1263
        %1265 = vdwg.mxu0
        %1266 = vmatpush.bf16.msra.mxu0 %v1000
        %1267 = vmatpush.bf16.msra.mxu0 %v998
        %1268 = vmatpush.bf16.msra.mxu0 %v996
        %1269 = vmatpush.bf16.msra.mxu0 %v994
        %1270 = vmatpush.bf16.msra.mxu0 %v992
        %1271 = vmatpush.bf16.msra.mxu0 %v990
        %1272 = vmatpush.bf16.msra.mxu0 %v988
        %1273 = vmatpush.bf16.msra.mxu0 %v986
        %1274 = vmatmul.bf16.gmra.mxu0 %v841
        %v1275 = vpop.f32.mrf.mxu0
        %v1276 = vadd.f32 %v646, %v1275
        %v1277 = vpop.f32.mrf.mxu0
        %v1278 = vadd.f32 %v646, %v1277
        %1279 = vmatmul.bf16.gmra.mxu0 %v842
        %v1280 = vpop.f32.mrf.mxu0
        %v1281 = vadd.f32 %v646, %v1280
        %v1282 = vpop.f32.mrf.mxu0
        %v1283 = vadd.f32 %v646, %v1282
        %1284 = vmatmul.bf16.gmra.mxu0 %v843
        %v1285 = vpop.f32.mrf.mxu0
        %v1286 = vadd.f32 %v646, %v1285
        %v1287 = vpop.f32.mrf.mxu0
        %v1288 = vadd.f32 %v646, %v1287
        %1289 = vmatmul.bf16.gmra.mxu0 %v844
        %v1290 = vpop.f32.mrf.mxu0
        %v1291 = vadd.f32 %v646, %v1290
        %v1292 = vpop.f32.mrf.mxu0
        %v1293 = vadd.f32 %v646, %v1292
        %1294 = vmatmul.bf16.gmra.mxu0 %v845
        %v1295 = vpop.f32.mrf.mxu0
        %v1296 = vadd.f32 %v646, %v1295
        %v1297 = vpop.f32.mrf.mxu0
        %v1298 = vadd.f32 %v646, %v1297
        %1299 = vmatmul.bf16.gmra.mxu0 %v846
        %v1300 = vpop.f32.mrf.mxu0
        %v1301 = vadd.f32 %v646, %v1300
        %v1302 = vpop.f32.mrf.mxu0
        %v1303 = vadd.f32 %v646, %v1302
        %1304 = vmatmul.bf16.gmra.mxu0 %v847
        %v1305 = vpop.f32.mrf.mxu0
        %v1306 = vadd.f32 %v646, %v1305
        %v1307 = vpop.f32.mrf.mxu0
        %v1308 = vadd.f32 %v646, %v1307
        %1309 = vmatmul.bf16.gmra.mxu0 %v848
        %v1310 = vpop.f32.mrf.mxu0
        %v1311 = vadd.f32 %v646, %v1310
        %v1312 = vpop.f32.mrf.mxu0
        %v1313 = vadd.f32 %v646, %v1312
        %1314 = vmatmul.bf16.gmra.mxu0 %v849
        %v1315 = vpop.f32.mrf.mxu0
        %v1316 = vadd.f32 %v646, %v1315
        %v1317 = vpop.f32.mrf.mxu0
        %v1318 = vadd.f32 %v646, %v1317
        %1319 = vmatmul.bf16.gmra.mxu0 %v850
        %v1320 = vpop.f32.mrf.mxu0
        %v1321 = vadd.f32 %v646, %v1320
        %v1322 = vpop.f32.mrf.mxu0
        %v1323 = vadd.f32 %v646, %v1322
        %1324 = vmatmul.bf16.gmra.mxu0 %v851
        %v1325 = vpop.f32.mrf.mxu0
        %v1326 = vadd.f32 %v646, %v1325
        %v1327 = vpop.f32.mrf.mxu0
        %v1328 = vadd.f32 %v646, %v1327
        %1329 = vmatmul.bf16.gmra.mxu0 %v852
        %v1330 = vpop.f32.mrf.mxu0
        %v1331 = vadd.f32 %v646, %v1330
        %v1332 = vpop.f32.mrf.mxu0
        %v1333 = vadd.f32 %v646, %v1332
        %1334 = vmatmul.bf16.gmra.mxu0 %v853
        %v1335 = vpop.f32.mrf.mxu0
        %v1336 = vadd.f32 %v646, %v1335
        %v1337 = vpop.f32.mrf.mxu0
        %v1338 = vadd.f32 %v646, %v1337
        %1339 = vmatmul.bf16.gmra.mxu0 %v854
        %v1340 = vpop.f32.mrf.mxu0
        %v1341 = vadd.f32 %v646, %v1340
        %v1342 = vpop.f32.mrf.mxu0
        %v1343 = vadd.f32 %v646, %v1342
        %1344 = vmatmul.bf16.gmra.mxu0 %v855
        %v1345 = vpop.f32.mrf.mxu0
        %v1346 = vadd.f32 %v646, %v1345
        %v1347 = vpop.f32.mrf.mxu0
        %v1348 = vadd.f32 %v646, %v1347
        %1349 = vmatmul.bf16.gmra.mxu0 %v856
        %v1350 = vpop.f32.mrf.mxu0
        %v1351 = vadd.f32 %v646, %v1350
        %v1352 = vpop.f32.mrf.mxu0
        %v1353 = vadd.f32 %v646, %v1352
        %1354 = vmatmul.bf16.gmra.mxu0 %v857
        %v1355 = vpop.f32.mrf.mxu0
        %v1356 = vadd.f32 %v646, %v1355
        %v1357 = vpop.f32.mrf.mxu0
        %v1358 = vadd.f32 %v646, %v1357
        %1359 = vmatmul.bf16.gmra.mxu0 %v858
        %v1360 = vpop.f32.mrf.mxu0
        %v1361 = vadd.f32 %v646, %v1360
        %v1362 = vpop.f32.mrf.mxu0
        %v1363 = vadd.f32 %v646, %v1362
        %1364 = vmatmul.bf16.gmra.mxu0 %v859
        %v1365 = vpop.f32.mrf.mxu0
        %v1366 = vadd.f32 %v646, %v1365
        %v1367 = vpop.f32.mrf.mxu0
        %v1368 = vadd.f32 %v646, %v1367
        %1369 = vmatmul.bf16.gmra.mxu0 %v860
        %v1370 = vpop.f32.mrf.mxu0
        %v1371 = vadd.f32 %v646, %v1370
        %v1372 = vpop.f32.mrf.mxu0
        %v1373 = vadd.f32 %v646, %v1372
        %1374 = vmatmul.bf16.gmra.mxu0 %v861
        %v1375 = vpop.f32.mrf.mxu0
        %v1376 = vadd.f32 %v646, %v1375
        %v1377 = vpop.f32.mrf.mxu0
        %v1378 = vadd.f32 %v646, %v1377
        %1379 = vmatmul.bf16.gmra.mxu0 %v862
        %v1380 = vpop.f32.mrf.mxu0
        %v1381 = vadd.f32 %v646, %v1380
        %v1382 = vpop.f32.mrf.mxu0
        %v1383 = vadd.f32 %v646, %v1382
        %1384 = vmatmul.bf16.gmra.mxu0 %v863
        %v1385 = vpop.f32.mrf.mxu0
        %v1386 = vadd.f32 %v646, %v1385
        %v1387 = vpop.f32.mrf.mxu0
        %v1388 = vadd.f32 %v646, %v1387
        %1389 = vmatmul.bf16.gmra.mxu0 %v864
        %v1390 = vpop.f32.mrf.mxu0
        %v1391 = vadd.f32 %v646, %v1390
        %v1392 = vpop.f32.mrf.mxu0
        %v1393 = vadd.f32 %v646, %v1392
        %1394 = vmatmul.bf16.gmra.mxu0 %v865
        %v1395 = vpop.f32.mrf.mxu0
        %v1396 = vadd.f32 %v646, %v1395
        %v1397 = vpop.f32.mrf.mxu0
        %v1398 = vadd.f32 %v646, %v1397
        %1399 = vmatmul.bf16.gmra.mxu0 %v866
        %v1400 = vpop.f32.mrf.mxu0
        %v1401 = vadd.f32 %v646, %v1400
        %v1402 = vpop.f32.mrf.mxu0
        %v1403 = vadd.f32 %v646, %v1402
        %1404 = vmatmul.bf16.gmra.mxu0 %v867
        %v1405 = vpop.f32.mrf.mxu0
        %v1406 = vadd.f32 %v646, %v1405
        %v1407 = vpop.f32.mrf.mxu0
        %v1408 = vadd.f32 %v646, %v1407
        %1409 = vmatmul.bf16.gmra.mxu0 %v868
        %v1410 = vpop.f32.mrf.mxu0
        %v1411 = vadd.f32 %v646, %v1410
        %v1412 = vpop.f32.mrf.mxu0
        %v1413 = vadd.f32 %v646, %v1412
        %1414 = vmatmul.bf16.gmra.mxu0 %v869
        %v1415 = vpop.f32.mrf.mxu0
        %v1416 = vadd.f32 %v646, %v1415
        %v1417 = vpop.f32.mrf.mxu0
        %v1418 = vadd.f32 %v646, %v1417
        %1419 = vmatmul.bf16.gmra.mxu0 %v870
        %v1420 = vpop.f32.mrf.mxu0
        %v1421 = vadd.f32 %v646, %v1420
        %v1422 = vpop.f32.mrf.mxu0
        %v1423 = vadd.f32 %v646, %v1422
        %1424 = vmatmul.bf16.gmra.mxu0 %v871
        %v1425 = vpop.f32.mrf.mxu0
        %v1426 = vadd.f32 %v646, %v1425
        %v1427 = vpop.f32.mrf.mxu0
        %v1428 = vadd.f32 %v646, %v1427
        %1429 = vmatmul.bf16.gmra.mxu0 %v872
        %v1430 = vpop.f32.mrf.mxu0
        %v1431 = vadd.f32 %v646, %v1430
        %v1432 = vpop.f32.mrf.mxu0
        %v1433 = vadd.f32 %v646, %v1432
        %1434 = vmatmul.bf16.gmra.mxu0 %v873
        %v1435 = vpop.f32.mrf.mxu0
        %v1436 = vadd.f32 %v646, %v1435
        %v1437 = vpop.f32.mrf.mxu0
        %v1438 = vadd.f32 %v646, %v1437
        %1439 = vmatmul.bf16.gmra.mxu0 %v874
        %v1440 = vpop.f32.mrf.mxu0
        %v1441 = vadd.f32 %v646, %v1440
        %v1442 = vpop.f32.mrf.mxu0
        %v1443 = vadd.f32 %v646, %v1442
        %1444 = vmatmul.bf16.gmra.mxu0 %v875
        %v1445 = vpop.f32.mrf.mxu0
        %v1446 = vadd.f32 %v646, %v1445
        %v1447 = vpop.f32.mrf.mxu0
        %v1448 = vadd.f32 %v646, %v1447
        %1449 = vmatmul.bf16.gmra.mxu0 %v876
        %v1450 = vpop.f32.mrf.mxu0
        %v1451 = vadd.f32 %v646, %v1450
        %v1452 = vpop.f32.mrf.mxu0
        %v1453 = vadd.f32 %v646, %v1452
        %1454 = vmatmul.bf16.gmra.mxu0 %v877
        %v1455 = vpop.f32.mrf.mxu0
        %v1456 = vadd.f32 %v646, %v1455
        %v1457 = vpop.f32.mrf.mxu0
        %v1458 = vadd.f32 %v646, %v1457
        %1459 = vmatmul.bf16.gmra.mxu0 %v878
        %v1460 = vpop.f32.mrf.mxu0
        %v1461 = vadd.f32 %v646, %v1460
        %v1462 = vpop.f32.mrf.mxu0
        %v1463 = vadd.f32 %v646, %v1462
        %1464 = vmatmul.bf16.gmra.mxu0 %v879
        %v1465 = vpop.f32.mrf.mxu0
        %v1466 = vadd.f32 %v646, %v1465
        %v1467 = vpop.f32.mrf.mxu0
        %v1468 = vadd.f32 %v646, %v1467
        %1469 = vmatmul.bf16.gmra.mxu0 %v880
        %v1470 = vpop.f32.mrf.mxu0
        %v1471 = vadd.f32 %v646, %v1470
        %v1472 = vpop.f32.mrf.mxu0
        %v1473 = vadd.f32 %v646, %v1472
        %1474 = vmatmul.bf16.gmra.mxu0 %v881
        %v1475 = vpop.f32.mrf.mxu0
        %v1476 = vadd.f32 %v646, %v1475
        %v1477 = vpop.f32.mrf.mxu0
        %v1478 = vadd.f32 %v646, %v1477
        %1479 = vmatmul.bf16.gmra.mxu0 %v882
        %v1480 = vpop.f32.mrf.mxu0
        %v1481 = vadd.f32 %v646, %v1480
        %v1482 = vpop.f32.mrf.mxu0
        %v1483 = vadd.f32 %v646, %v1482
        %1484 = vmatmul.bf16.gmra.mxu0 %v883
        %v1485 = vpop.f32.mrf.mxu0
        %v1486 = vadd.f32 %v646, %v1485
        %v1487 = vpop.f32.mrf.mxu0
        %v1488 = vadd.f32 %v646, %v1487
        %1489 = vmatmul.bf16.gmra.mxu0 %v884
        %v1490 = vpop.f32.mrf.mxu0
        %v1491 = vadd.f32 %v646, %v1490
        %v1492 = vpop.f32.mrf.mxu0
        %v1493 = vadd.f32 %v646, %v1492
        %1494 = vmatmul.bf16.gmra.mxu0 %v885
        %v1495 = vpop.f32.mrf.mxu0
        %v1496 = vadd.f32 %v646, %v1495
        %v1497 = vpop.f32.mrf.mxu0
        %v1498 = vadd.f32 %v646, %v1497
        %1499 = vmatmul.bf16.gmra.mxu0 %v886
        %v1500 = vpop.f32.mrf.mxu0
        %v1501 = vadd.f32 %v646, %v1500
        %v1502 = vpop.f32.mrf.mxu0
        %v1503 = vadd.f32 %v646, %v1502
        %1504 = vmatmul.bf16.gmra.mxu0 %v887
        %v1505 = vpop.f32.mrf.mxu0
        %v1506 = vadd.f32 %v646, %v1505
        %v1507 = vpop.f32.mrf.mxu0
        %v1508 = vadd.f32 %v646, %v1507
        %1509 = vmatmul.bf16.gmra.mxu0 %v888
        %v1510 = vpop.f32.mrf.mxu0
        %v1511 = vadd.f32 %v646, %v1510
        %v1512 = vpop.f32.mrf.mxu0
        %v1513 = vadd.f32 %v646, %v1512
        %1514 = vdwg.mxu0
        %v1515 = vmul.f32 %v1276, %v1276
        %v1516 = vmul.f32 %v1278, %v1278
        %v1517 = vmul.f32 %v1281, %v1281
        %v1518 = vmul.f32 %v1283, %v1283
        %v1519 = vmul.f32 %v1286, %v1286
        %v1520 = vmul.f32 %v1288, %v1288
        %v1521 = vmul.f32 %v1291, %v1291
        %v1522 = vmul.f32 %v1293, %v1293
        %v1523 = vmul.f32 %v1296, %v1296
        %v1524 = vmul.f32 %v1298, %v1298
        %v1525 = vmul.f32 %v1301, %v1301
        %v1526 = vmul.f32 %v1303, %v1303
        %v1527 = vmul.f32 %v1306, %v1306
        %v1528 = vmul.f32 %v1308, %v1308
        %v1529 = vmul.f32 %v1311, %v1311
        %v1530 = vmul.f32 %v1313, %v1313
        %v1531 = vmul.f32 %v1316, %v1316
        %v1532 = vmul.f32 %v1318, %v1318
        %v1533 = vmul.f32 %v1321, %v1321
        %v1534 = vmul.f32 %v1323, %v1323
        %v1535 = vmul.f32 %v1326, %v1326
        %v1536 = vmul.f32 %v1328, %v1328
        %v1537 = vmul.f32 %v1331, %v1331
        %v1538 = vmul.f32 %v1333, %v1333
        %v1539 = vmul.f32 %v1336, %v1336
        %v1540 = vmul.f32 %v1338, %v1338
        %v1541 = vmul.f32 %v1341, %v1341
        %v1542 = vmul.f32 %v1343, %v1343
        %v1543 = vmul.f32 %v1346, %v1346
        %v1544 = vmul.f32 %v1348, %v1348
        %v1545 = vmul.f32 %v1351, %v1351
        %v1546 = vmul.f32 %v1353, %v1353
        %v1547 = vmul.f32 %v1356, %v1356
        %v1548 = vmul.f32 %v1358, %v1358
        %v1549 = vmul.f32 %v1361, %v1361
        %v1550 = vmul.f32 %v1363, %v1363
        %v1551 = vmul.f32 %v1366, %v1366
        %v1552 = vmul.f32 %v1368, %v1368
        %v1553 = vmul.f32 %v1371, %v1371
        %v1554 = vmul.f32 %v1373, %v1373
        %v1555 = vmul.f32 %v1376, %v1376
        %v1556 = vmul.f32 %v1378, %v1378
        %v1557 = vmul.f32 %v1381, %v1381
        %v1558 = vmul.f32 %v1383, %v1383
        %v1559 = vmul.f32 %v1386, %v1386
        %v1560 = vmul.f32 %v1388, %v1388
        %v1561 = vmul.f32 %v1391, %v1391
        %v1562 = vmul.f32 %v1393, %v1393
        %v1563 = vmul.f32 %v1396, %v1396
        %v1564 = vmul.f32 %v1398, %v1398
        %v1565 = vmul.f32 %v1401, %v1401
        %v1566 = vmul.f32 %v1403, %v1403
        %v1567 = vmul.f32 %v1406, %v1406
        %v1568 = vmul.f32 %v1408, %v1408
        %v1569 = vmul.f32 %v1411, %v1411
        %v1570 = vmul.f32 %v1413, %v1413
        %v1571 = vmul.f32 %v1416, %v1416
        %v1572 = vmul.f32 %v1418, %v1418
        %v1573 = vmul.f32 %v1421, %v1421
        %v1574 = vmul.f32 %v1423, %v1423
        %v1575 = vmul.f32 %v1426, %v1426
        %v1576 = vmul.f32 %v1428, %v1428
        %v1577 = vmul.f32 %v1431, %v1431
        %v1578 = vmul.f32 %v1433, %v1433
        %v1579 = vmul.f32 %v1436, %v1436
        %v1580 = vmul.f32 %v1438, %v1438
        %v1581 = vmul.f32 %v1441, %v1441
        %v1582 = vmul.f32 %v1443, %v1443
        %v1583 = vmul.f32 %v1446, %v1446
        %v1584 = vmul.f32 %v1448, %v1448
        %v1585 = vmul.f32 %v1451, %v1451
        %v1586 = vmul.f32 %v1453, %v1453
        %v1587 = vmul.f32 %v1456, %v1456
        %v1588 = vmul.f32 %v1458, %v1458
        %v1589 = vmul.f32 %v1461, %v1461
        %v1590 = vmul.f32 %v1463, %v1463
        %v1591 = vmul.f32 %v1466, %v1466
        %v1592 = vmul.f32 %v1468, %v1468
        %v1593 = vmul.f32 %v1471, %v1471
        %v1594 = vmul.f32 %v1473, %v1473
        %v1595 = vmul.f32 %v1476, %v1476
        %v1596 = vmul.f32 %v1478, %v1478
        %v1597 = vmul.f32 %v1481, %v1481
        %v1598 = vmul.f32 %v1483, %v1483
        %v1599 = vmul.f32 %v1486, %v1486
        %v1600 = vmul.f32 %v1488, %v1488
        %v1601 = vmul.f32 %v1491, %v1491
        %v1602 = vmul.f32 %v1493, %v1493
        %v1603 = vmul.f32 %v1496, %v1496
        %v1604 = vmul.f32 %v1498, %v1498
        %v1605 = vmul.f32 %v1501, %v1501
        %v1606 = vmul.f32 %v1503, %v1503
        %v1607 = vmul.f32 %v1506, %v1506
        %v1608 = vmul.f32 %v1508, %v1508
        %v1609 = vmul.f32 %v1511, %v1511
        %v1610 = vmul.f32 %v1513, %v1513
        %v1611 = vadd.f32 %v1515, %v1547
        %v1612 = vadd.f32 %v1611, %v1579
        %v1613 = vadd.f32 %v1516, %v1548
        %v1614 = vadd.f32 %v1613, %v1580
        %v1615 = vadd.f32 %v1517, %v1549
        %v1616 = vadd.f32 %v1615, %v1581
        %v1617 = vadd.f32 %v1518, %v1550
        %v1618 = vadd.f32 %v1617, %v1582
        %v1619 = vadd.f32 %v1519, %v1551
        %v1620 = vadd.f32 %v1619, %v1583
        %v1621 = vadd.f32 %v1520, %v1552
        %v1622 = vadd.f32 %v1621, %v1584
        %v1623 = vadd.f32 %v1521, %v1553
        %v1624 = vadd.f32 %v1623, %v1585
        %v1625 = vadd.f32 %v1522, %v1554
        %v1626 = vadd.f32 %v1625, %v1586
        %v1627 = vadd.f32 %v1523, %v1555
        %v1628 = vadd.f32 %v1627, %v1587
        %v1629 = vadd.f32 %v1524, %v1556
        %v1630 = vadd.f32 %v1629, %v1588
        %v1631 = vadd.f32 %v1525, %v1557
        %v1632 = vadd.f32 %v1631, %v1589
        %v1633 = vadd.f32 %v1526, %v1558
        %v1634 = vadd.f32 %v1633, %v1590
        %v1635 = vadd.f32 %v1527, %v1559
        %v1636 = vadd.f32 %v1635, %v1591
        %v1637 = vadd.f32 %v1528, %v1560
        %v1638 = vadd.f32 %v1637, %v1592
        %v1639 = vadd.f32 %v1529, %v1561
        %v1640 = vadd.f32 %v1639, %v1593
        %v1641 = vadd.f32 %v1530, %v1562
        %v1642 = vadd.f32 %v1641, %v1594
        %v1643 = vadd.f32 %v1531, %v1563
        %v1644 = vadd.f32 %v1643, %v1595
        %v1645 = vadd.f32 %v1532, %v1564
        %v1646 = vadd.f32 %v1645, %v1596
        %v1647 = vadd.f32 %v1533, %v1565
        %v1648 = vadd.f32 %v1647, %v1597
        %v1649 = vadd.f32 %v1534, %v1566
        %v1650 = vadd.f32 %v1649, %v1598
        %v1651 = vadd.f32 %v1535, %v1567
        %v1652 = vadd.f32 %v1651, %v1599
        %v1653 = vadd.f32 %v1536, %v1568
        %v1654 = vadd.f32 %v1653, %v1600
        %v1655 = vadd.f32 %v1537, %v1569
        %v1656 = vadd.f32 %v1655, %v1601
        %v1657 = vadd.f32 %v1538, %v1570
        %v1658 = vadd.f32 %v1657, %v1602
        %v1659 = vadd.f32 %v1539, %v1571
        %v1660 = vadd.f32 %v1659, %v1603
        %v1661 = vadd.f32 %v1540, %v1572
        %v1662 = vadd.f32 %v1661, %v1604
        %v1663 = vadd.f32 %v1541, %v1573
        %v1664 = vadd.f32 %v1663, %v1605
        %v1665 = vadd.f32 %v1542, %v1574
        %v1666 = vadd.f32 %v1665, %v1606
        %v1667 = vadd.f32 %v1543, %v1575
        %v1668 = vadd.f32 %v1667, %v1607
        %v1669 = vadd.f32 %v1544, %v1576
        %v1670 = vadd.f32 %v1669, %v1608
        %v1671 = vadd.f32 %v1545, %v1577
        %v1672 = vadd.f32 %v1671, %v1609
        %v1673 = vadd.f32 %v1546, %v1578
        %v1674 = vadd.f32 %v1673, %v1610
        %v1675 = vrsqrt.pop %v1612
        %v1676 = vmul.f32 %v1675, %v1612
        %v1677 = vmul.f32 %v1676, %v1675
        %v1678 = vmul.f32 0.5, %v1677
        %v1679 = vsub.f32 1.5, %v1678
        %v1680 = vmul.f32 %v1675, %v1679
        %v1681 = vmul.f32 %v1612, %v1680
        %vm1682 = vcmp.eq.f32.partialorder %v1612, inf
        %v1683 = vsel %vm1682, %v1612, %v1681
        %vm1684 = vcmp.eq.f32.partialorder %v1612, 0.0
        %v1685 = vand.u32 %v1612, 2147483648
        %v1686 = vsel %vm1684, %v1685, %v1683
        %v1687 = vrsqrt.pop %v1614
        %v1688 = vmul.f32 %v1687, %v1614
        %v1689 = vmul.f32 %v1688, %v1687
        %v1690 = vmul.f32 0.5, %v1689
        %v1691 = vsub.f32 1.5, %v1690
        %v1692 = vmul.f32 %v1687, %v1691
        %v1693 = vmul.f32 %v1614, %v1692
        %vm1694 = vcmp.eq.f32.partialorder %v1614, inf
        %v1695 = vsel %vm1694, %v1614, %v1693
        %vm1696 = vcmp.eq.f32.partialorder %v1614, 0.0
        %v1697 = vand.u32 %v1614, 2147483648
        %v1698 = vsel %vm1696, %v1697, %v1695
        %v1699 = vrsqrt.pop %v1616
        %v1700 = vmul.f32 %v1699, %v1616
        %v1701 = vmul.f32 %v1700, %v1699
        %v1702 = vmul.f32 0.5, %v1701
        %v1703 = vsub.f32 1.5, %v1702
        %v1704 = vmul.f32 %v1699, %v1703
        %v1705 = vmul.f32 %v1616, %v1704
        %vm1706 = vcmp.eq.f32.partialorder %v1616, inf
        %v1707 = vsel %vm1706, %v1616, %v1705
        %vm1708 = vcmp.eq.f32.partialorder %v1616, 0.0
        %v1709 = vand.u32 %v1616, 2147483648
        %v1710 = vsel %vm1708, %v1709, %v1707
        %v1711 = vrsqrt.pop %v1618
        %v1712 = vmul.f32 %v1711, %v1618
        %v1713 = vmul.f32 %v1712, %v1711
        %v1714 = vmul.f32 0.5, %v1713
        %v1715 = vsub.f32 1.5, %v1714
        %v1716 = vmul.f32 %v1711, %v1715
        %v1717 = vmul.f32 %v1618, %v1716
        %vm1718 = vcmp.eq.f32.partialorder %v1618, inf
        %v1719 = vsel %vm1718, %v1618, %v1717
        %vm1720 = vcmp.eq.f32.partialorder %v1618, 0.0
        %v1721 = vand.u32 %v1618, 2147483648
        %v1722 = vsel %vm1720, %v1721, %v1719
        %v1723 = vrsqrt.pop %v1620
        %v1724 = vmul.f32 %v1723, %v1620
        %v1725 = vmul.f32 %v1724, %v1723
        %v1726 = vmul.f32 0.5, %v1725
        %v1727 = vsub.f32 1.5, %v1726
        %v1728 = vmul.f32 %v1723, %v1727
        %v1729 = vmul.f32 %v1620, %v1728
        %vm1730 = vcmp.eq.f32.partialorder %v1620, inf
        %v1731 = vsel %vm1730, %v1620, %v1729
        %vm1732 = vcmp.eq.f32.partialorder %v1620, 0.0
        %v1733 = vand.u32 %v1620, 2147483648
        %v1734 = vsel %vm1732, %v1733, %v1731
        %v1735 = vrsqrt.pop %v1622
        %v1736 = vmul.f32 %v1735, %v1622
        %v1737 = vmul.f32 %v1736, %v1735
        %v1738 = vmul.f32 0.5, %v1737
        %v1739 = vsub.f32 1.5, %v1738
        %v1740 = vmul.f32 %v1735, %v1739
        %v1741 = vmul.f32 %v1622, %v1740
        %vm1742 = vcmp.eq.f32.partialorder %v1622, inf
        %v1743 = vsel %vm1742, %v1622, %v1741
        %vm1744 = vcmp.eq.f32.partialorder %v1622, 0.0
        %v1745 = vand.u32 %v1622, 2147483648
        %v1746 = vsel %vm1744, %v1745, %v1743
        %v1747 = vrsqrt.pop %v1624
        %v1748 = vmul.f32 %v1747, %v1624
        %v1749 = vmul.f32 %v1748, %v1747
        %v1750 = vmul.f32 0.5, %v1749
        %v1751 = vsub.f32 1.5, %v1750
        %v1752 = vmul.f32 %v1747, %v1751
        %v1753 = vmul.f32 %v1624, %v1752
        %vm1754 = vcmp.eq.f32.partialorder %v1624, inf
        %v1755 = vsel %vm1754, %v1624, %v1753
        %vm1756 = vcmp.eq.f32.partialorder %v1624, 0.0
        %v1757 = vand.u32 %v1624, 2147483648
        %v1758 = vsel %vm1756, %v1757, %v1755
        %v1759 = vrsqrt.pop %v1626
        %v1760 = vmul.f32 %v1759, %v1626
        %v1761 = vmul.f32 %v1760, %v1759
        %v1762 = vmul.f32 0.5, %v1761
        %v1763 = vsub.f32 1.5, %v1762
        %v1764 = vmul.f32 %v1759, %v1763
        %v1765 = vmul.f32 %v1626, %v1764
        %vm1766 = vcmp.eq.f32.partialorder %v1626, inf
        %v1767 = vsel %vm1766, %v1626, %v1765
        %vm1768 = vcmp.eq.f32.partialorder %v1626, 0.0
        %v1769 = vand.u32 %v1626, 2147483648
        %v1770 = vsel %vm1768, %v1769, %v1767
        %v1771 = vrsqrt.pop %v1628
        %v1772 = vmul.f32 %v1771, %v1628
        %v1773 = vmul.f32 %v1772, %v1771
        %v1774 = vmul.f32 0.5, %v1773
        %v1775 = vsub.f32 1.5, %v1774
        %v1776 = vmul.f32 %v1771, %v1775
        %v1777 = vmul.f32 %v1628, %v1776
        %vm1778 = vcmp.eq.f32.partialorder %v1628, inf
        %v1779 = vsel %vm1778, %v1628, %v1777
        %vm1780 = vcmp.eq.f32.partialorder %v1628, 0.0
        %v1781 = vand.u32 %v1628, 2147483648
        %v1782 = vsel %vm1780, %v1781, %v1779
        %v1783 = vrsqrt.pop %v1630
        %v1784 = vmul.f32 %v1783, %v1630
        %v1785 = vmul.f32 %v1784, %v1783
        %v1786 = vmul.f32 0.5, %v1785
        %v1787 = vsub.f32 1.5, %v1786
        %v1788 = vmul.f32 %v1783, %v1787
        %v1789 = vmul.f32 %v1630, %v1788
        %vm1790 = vcmp.eq.f32.partialorder %v1630, inf
        %v1791 = vsel %vm1790, %v1630, %v1789
        %vm1792 = vcmp.eq.f32.partialorder %v1630, 0.0
        %v1793 = vand.u32 %v1630, 2147483648
        %v1794 = vsel %vm1792, %v1793, %v1791
        %v1795 = vrsqrt.pop %v1632
        %v1796 = vmul.f32 %v1795, %v1632
        %v1797 = vmul.f32 %v1796, %v1795
        %v1798 = vmul.f32 0.5, %v1797
        %v1799 = vsub.f32 1.5, %v1798
        %v1800 = vmul.f32 %v1795, %v1799
        %v1801 = vmul.f32 %v1632, %v1800
        %vm1802 = vcmp.eq.f32.partialorder %v1632, inf
        %v1803 = vsel %vm1802, %v1632, %v1801
        %vm1804 = vcmp.eq.f32.partialorder %v1632, 0.0
        %v1805 = vand.u32 %v1632, 2147483648
        %v1806 = vsel %vm1804, %v1805, %v1803
        %v1807 = vrsqrt.pop %v1634
        %v1808 = vmul.f32 %v1807, %v1634
        %v1809 = vmul.f32 %v1808, %v1807
        %v1810 = vmul.f32 0.5, %v1809
        %v1811 = vsub.f32 1.5, %v1810
        %v1812 = vmul.f32 %v1807, %v1811
        %v1813 = vmul.f32 %v1634, %v1812
        %vm1814 = vcmp.eq.f32.partialorder %v1634, inf
        %v1815 = vsel %vm1814, %v1634, %v1813
        %vm1816 = vcmp.eq.f32.partialorder %v1634, 0.0
        %v1817 = vand.u32 %v1634, 2147483648
        %v1818 = vsel %vm1816, %v1817, %v1815
        %v1819 = vrsqrt.pop %v1636
        %v1820 = vmul.f32 %v1819, %v1636
        %v1821 = vmul.f32 %v1820, %v1819
        %v1822 = vmul.f32 0.5, %v1821
        %v1823 = vsub.f32 1.5, %v1822
        %v1824 = vmul.f32 %v1819, %v1823
        %v1825 = vmul.f32 %v1636, %v1824
        %vm1826 = vcmp.eq.f32.partialorder %v1636, inf
        %v1827 = vsel %vm1826, %v1636, %v1825
        %vm1828 = vcmp.eq.f32.partialorder %v1636, 0.0
        %v1829 = vand.u32 %v1636, 2147483648
        %v1830 = vsel %vm1828, %v1829, %v1827
        %v1831 = vrsqrt.pop %v1638
        %v1832 = vmul.f32 %v1831, %v1638
        %v1833 = vmul.f32 %v1832, %v1831
        %v1834 = vmul.f32 0.5, %v1833
        %v1835 = vsub.f32 1.5, %v1834
        %v1836 = vmul.f32 %v1831, %v1835
        %v1837 = vmul.f32 %v1638, %v1836
        %vm1838 = vcmp.eq.f32.partialorder %v1638, inf
        %v1839 = vsel %vm1838, %v1638, %v1837
        %vm1840 = vcmp.eq.f32.partialorder %v1638, 0.0
        %v1841 = vand.u32 %v1638, 2147483648
        %v1842 = vsel %vm1840, %v1841, %v1839
        %v1843 = vrsqrt.pop %v1640
        %v1844 = vmul.f32 %v1843, %v1640
        %v1845 = vmul.f32 %v1844, %v1843
        %v1846 = vmul.f32 0.5, %v1845
        %v1847 = vsub.f32 1.5, %v1846
        %v1848 = vmul.f32 %v1843, %v1847
        %v1849 = vmul.f32 %v1640, %v1848
        %vm1850 = vcmp.eq.f32.partialorder %v1640, inf
        %v1851 = vsel %vm1850, %v1640, %v1849
        %vm1852 = vcmp.eq.f32.partialorder %v1640, 0.0
        %v1853 = vand.u32 %v1640, 2147483648
        %v1854 = vsel %vm1852, %v1853, %v1851
        %v1855 = vrsqrt.pop %v1642
        %v1856 = vmul.f32 %v1855, %v1642
        %v1857 = vmul.f32 %v1856, %v1855
        %v1858 = vmul.f32 0.5, %v1857
        %v1859 = vsub.f32 1.5, %v1858
        %v1860 = vmul.f32 %v1855, %v1859
        %v1861 = vmul.f32 %v1642, %v1860
        %vm1862 = vcmp.eq.f32.partialorder %v1642, inf
        %v1863 = vsel %vm1862, %v1642, %v1861
        %vm1864 = vcmp.eq.f32.partialorder %v1642, 0.0
        %v1865 = vand.u32 %v1642, 2147483648
        %v1866 = vsel %vm1864, %v1865, %v1863
        %v1867 = vrsqrt.pop %v1644
        %v1868 = vmul.f32 %v1867, %v1644
        %v1869 = vmul.f32 %v1868, %v1867
        %v1870 = vmul.f32 0.5, %v1869
        %v1871 = vsub.f32 1.5, %v1870
        %v1872 = vmul.f32 %v1867, %v1871
        %v1873 = vmul.f32 %v1644, %v1872
        %vm1874 = vcmp.eq.f32.partialorder %v1644, inf
        %v1875 = vsel %vm1874, %v1644, %v1873
        %vm1876 = vcmp.eq.f32.partialorder %v1644, 0.0
        %v1877 = vand.u32 %v1644, 2147483648
        %v1878 = vsel %vm1876, %v1877, %v1875
        %v1879 = vrsqrt.pop %v1646
        %v1880 = vmul.f32 %v1879, %v1646
        %v1881 = vmul.f32 %v1880, %v1879
        %v1882 = vmul.f32 0.5, %v1881
        %v1883 = vsub.f32 1.5, %v1882
        %v1884 = vmul.f32 %v1879, %v1883
        %v1885 = vmul.f32 %v1646, %v1884
        %vm1886 = vcmp.eq.f32.partialorder %v1646, inf
        %v1887 = vsel %vm1886, %v1646, %v1885
        %vm1888 = vcmp.eq.f32.partialorder %v1646, 0.0
        %v1889 = vand.u32 %v1646, 2147483648
        %v1890 = vsel %vm1888, %v1889, %v1887
        %v1891 = vrsqrt.pop %v1648
        %v1892 = vmul.f32 %v1891, %v1648
        %v1893 = vmul.f32 %v1892, %v1891
        %v1894 = vmul.f32 0.5, %v1893
        %v1895 = vsub.f32 1.5, %v1894
        %v1896 = vmul.f32 %v1891, %v1895
        %v1897 = vmul.f32 %v1648, %v1896
        %vm1898 = vcmp.eq.f32.partialorder %v1648, inf
        %v1899 = vsel %vm1898, %v1648, %v1897
        %vm1900 = vcmp.eq.f32.partialorder %v1648, 0.0
        %v1901 = vand.u32 %v1648, 2147483648
        %v1902 = vsel %vm1900, %v1901, %v1899
        %v1903 = vrsqrt.pop %v1650
        %v1904 = vmul.f32 %v1903, %v1650
        %v1905 = vmul.f32 %v1904, %v1903
        %v1906 = vmul.f32 0.5, %v1905
        %v1907 = vsub.f32 1.5, %v1906
        %v1908 = vmul.f32 %v1903, %v1907
        %v1909 = vmul.f32 %v1650, %v1908
        %vm1910 = vcmp.eq.f32.partialorder %v1650, inf
        %v1911 = vsel %vm1910, %v1650, %v1909
        %vm1912 = vcmp.eq.f32.partialorder %v1650, 0.0
        %v1913 = vand.u32 %v1650, 2147483648
        %v1914 = vsel %vm1912, %v1913, %v1911
        %v1915 = vrsqrt.pop %v1652
        %v1916 = vmul.f32 %v1915, %v1652
        %v1917 = vmul.f32 %v1916, %v1915
        %v1918 = vmul.f32 0.5, %v1917
        %v1919 = vsub.f32 1.5, %v1918
        %v1920 = vmul.f32 %v1915, %v1919
        %v1921 = vmul.f32 %v1652, %v1920
        %vm1922 = vcmp.eq.f32.partialorder %v1652, inf
        %v1923 = vsel %vm1922, %v1652, %v1921
        %vm1924 = vcmp.eq.f32.partialorder %v1652, 0.0
        %v1925 = vand.u32 %v1652, 2147483648
        %v1926 = vsel %vm1924, %v1925, %v1923
        %v1927 = vrsqrt.pop %v1654
        %v1928 = vmul.f32 %v1927, %v1654
        %v1929 = vmul.f32 %v1928, %v1927
        %v1930 = vmul.f32 0.5, %v1929
        %v1931 = vsub.f32 1.5, %v1930
        %v1932 = vmul.f32 %v1927, %v1931
        %v1933 = vmul.f32 %v1654, %v1932
        %vm1934 = vcmp.eq.f32.partialorder %v1654, inf
        %v1935 = vsel %vm1934, %v1654, %v1933
        %vm1936 = vcmp.eq.f32.partialorder %v1654, 0.0
        %v1937 = vand.u32 %v1654, 2147483648
        %v1938 = vsel %vm1936, %v1937, %v1935
        %v1939 = vrsqrt.pop %v1656
        %v1940 = vmul.f32 %v1939, %v1656
        %v1941 = vmul.f32 %v1940, %v1939
        %v1942 = vmul.f32 0.5, %v1941
        %v1943 = vsub.f32 1.5, %v1942
        %v1944 = vmul.f32 %v1939, %v1943
        %v1945 = vmul.f32 %v1656, %v1944
        %vm1946 = vcmp.eq.f32.partialorder %v1656, inf
        %v1947 = vsel %vm1946, %v1656, %v1945
        %vm1948 = vcmp.eq.f32.partialorder %v1656, 0.0
        %v1949 = vand.u32 %v1656, 2147483648
        %v1950 = vsel %vm1948, %v1949, %v1947
        %v1951 = vrsqrt.pop %v1658
        %v1952 = vmul.f32 %v1951, %v1658
        %v1953 = vmul.f32 %v1952, %v1951
        %v1954 = vmul.f32 0.5, %v1953
        %v1955 = vsub.f32 1.5, %v1954
        %v1956 = vmul.f32 %v1951, %v1955
        %v1957 = vmul.f32 %v1658, %v1956
        %vm1958 = vcmp.eq.f32.partialorder %v1658, inf
        %v1959 = vsel %vm1958, %v1658, %v1957
        %vm1960 = vcmp.eq.f32.partialorder %v1658, 0.0
        %v1961 = vand.u32 %v1658, 2147483648
        %v1962 = vsel %vm1960, %v1961, %v1959
        %v1963 = vrsqrt.pop %v1660
        %v1964 = vmul.f32 %v1963, %v1660
        %v1965 = vmul.f32 %v1964, %v1963
        %v1966 = vmul.f32 0.5, %v1965
        %v1967 = vsub.f32 1.5, %v1966
        %v1968 = vmul.f32 %v1963, %v1967
        %v1969 = vmul.f32 %v1660, %v1968
        %vm1970 = vcmp.eq.f32.partialorder %v1660, inf
        %v1971 = vsel %vm1970, %v1660, %v1969
        %vm1972 = vcmp.eq.f32.partialorder %v1660, 0.0
        %v1973 = vand.u32 %v1660, 2147483648
        %v1974 = vsel %vm1972, %v1973, %v1971
        %v1975 = vrsqrt.pop %v1662
        %v1976 = vmul.f32 %v1975, %v1662
        %v1977 = vmul.f32 %v1976, %v1975
        %v1978 = vmul.f32 0.5, %v1977
        %v1979 = vsub.f32 1.5, %v1978
        %v1980 = vmul.f32 %v1975, %v1979
        %v1981 = vmul.f32 %v1662, %v1980
        %vm1982 = vcmp.eq.f32.partialorder %v1662, inf
        %v1983 = vsel %vm1982, %v1662, %v1981
        %vm1984 = vcmp.eq.f32.partialorder %v1662, 0.0
        %v1985 = vand.u32 %v1662, 2147483648
        %v1986 = vsel %vm1984, %v1985, %v1983
        %v1987 = vrsqrt.pop %v1664
        %v1988 = vmul.f32 %v1987, %v1664
        %v1989 = vmul.f32 %v1988, %v1987
        %v1990 = vmul.f32 0.5, %v1989
        %v1991 = vsub.f32 1.5, %v1990
        %v1992 = vmul.f32 %v1987, %v1991
        %v1993 = vmul.f32 %v1664, %v1992
        %vm1994 = vcmp.eq.f32.partialorder %v1664, inf
        %v1995 = vsel %vm1994, %v1664, %v1993
        %vm1996 = vcmp.eq.f32.partialorder %v1664, 0.0
        %v1997 = vand.u32 %v1664, 2147483648
        %v1998 = vsel %vm1996, %v1997, %v1995
        %v1999 = vrsqrt.pop %v1666
        %v2000 = vmul.f32 %v1999, %v1666
        %v2001 = vmul.f32 %v2000, %v1999
        %v2002 = vmul.f32 0.5, %v2001
        %v2003 = vsub.f32 1.5, %v2002
        %v2004 = vmul.f32 %v1999, %v2003
        %v2005 = vmul.f32 %v1666, %v2004
        %vm2006 = vcmp.eq.f32.partialorder %v1666, inf
        %v2007 = vsel %vm2006, %v1666, %v2005
        %vm2008 = vcmp.eq.f32.partialorder %v1666, 0.0
        %v2009 = vand.u32 %v1666, 2147483648
        %v2010 = vsel %vm2008, %v2009, %v2007
        %v2011 = vrsqrt.pop %v1668
        %v2012 = vmul.f32 %v2011, %v1668
        %v2013 = vmul.f32 %v2012, %v2011
        %v2014 = vmul.f32 0.5, %v2013
        %v2015 = vsub.f32 1.5, %v2014
        %v2016 = vmul.f32 %v2011, %v2015
        %v2017 = vmul.f32 %v1668, %v2016
        %vm2018 = vcmp.eq.f32.partialorder %v1668, inf
        %v2019 = vsel %vm2018, %v1668, %v2017
        %vm2020 = vcmp.eq.f32.partialorder %v1668, 0.0
        %v2021 = vand.u32 %v1668, 2147483648
        %v2022 = vsel %vm2020, %v2021, %v2019
        %v2023 = vrsqrt.pop %v1670
        %v2024 = vmul.f32 %v2023, %v1670
        %v2025 = vmul.f32 %v2024, %v2023
        %v2026 = vmul.f32 0.5, %v2025
        %v2027 = vsub.f32 1.5, %v2026
        %v2028 = vmul.f32 %v2023, %v2027
        %v2029 = vmul.f32 %v1670, %v2028
        %vm2030 = vcmp.eq.f32.partialorder %v1670, inf
        %v2031 = vsel %vm2030, %v1670, %v2029
        %vm2032 = vcmp.eq.f32.partialorder %v1670, 0.0
        %v2033 = vand.u32 %v1670, 2147483648
        %v2034 = vsel %vm2032, %v2033, %v2031
        %v2035 = vrsqrt.pop %v1672
        %v2036 = vmul.f32 %v2035, %v1672
        %v2037 = vmul.f32 %v2036, %v2035
        %v2038 = vmul.f32 0.5, %v2037
        %v2039 = vsub.f32 1.5, %v2038
        %v2040 = vmul.f32 %v2035, %v2039
        %v2041 = vmul.f32 %v1672, %v2040
        %vm2042 = vcmp.eq.f32.partialorder %v1672, inf
        %v2043 = vsel %vm2042, %v1672, %v2041
        %vm2044 = vcmp.eq.f32.partialorder %v1672, 0.0
        %v2045 = vand.u32 %v1672, 2147483648
        %v2046 = vsel %vm2044, %v2045, %v2043
        %v2047 = vrsqrt.pop %v1674
        %v2048 = vmul.f32 %v2047, %v1674
        %v2049 = vmul.f32 %v2048, %v2047
        %v2050 = vmul.f32 0.5, %v2049
        %v2051 = vsub.f32 1.5, %v2050
        %v2052 = vmul.f32 %v2047, %v2051
        %v2053 = vmul.f32 %v1674, %v2052
        %vm2054 = vcmp.eq.f32.partialorder %v1674, inf
        %v2055 = vsel %vm2054, %v1674, %v2053
        %vm2056 = vcmp.eq.f32.partialorder %v1674, 0.0
        %v2057 = vand.u32 %v1674, 2147483648
        %v2058 = vsel %vm2056, %v2057, %v2055
        %v2059 = vpack.c.bf16 %v1698, %v1686
        %v2060 = vpack.c.bf16 %v1722, %v1710
        %v2061 = vpack.c.bf16 %v1746, %v1734
        %v2062 = vpack.c.bf16 %v1770, %v1758
        %v2063 = vpack.c.bf16 %v1794, %v1782
        %v2064 = vpack.c.bf16 %v1818, %v1806
        %v2065 = vpack.c.bf16 %v1842, %v1830
        %v2066 = vpack.c.bf16 %v1866, %v1854
        %v2067 = vpack.c.bf16 %v1890, %v1878
        %v2068 = vpack.c.bf16 %v1914, %v1902
        %v2069 = vpack.c.bf16 %v1938, %v1926
        %v2070 = vpack.c.bf16 %v1962, %v1950
        %v2071 = vpack.c.bf16 %v1986, %v1974
        %v2072 = vpack.c.bf16 %v2010, %v1998
        %v2073 = vpack.c.bf16 %v2034, %v2022
        %v2074 = vpack.c.bf16 %v2058, %v2046
        %v2075 = vld [vmem:[#allocation8] sm:$0xf]
        %v2076 = vld [vmem:[#allocation8 + $0x4] sm:$0xf]
        %v2077 = vld [vmem:[#allocation8 + $0x8] sm:$0xf]
        %v2078 = vld [vmem:[#allocation8 + $0xc] sm:$0xf]
        %v2079 = vld [vmem:[#allocation8 + $0x10] sm:$0xf]
        %v2080 = vld [vmem:[#allocation8 + $0x14] sm:$0xf]
        %v2081 = vld [vmem:[#allocation8 + $0x18] sm:$0xf]
        %v2082 = vld [vmem:[#allocation8 + $0x1c] sm:$0xf]
        %v2083 = vld [vmem:[#allocation8 + $0x20] sm:$0xf]
        %v2084 = vld [vmem:[#allocation8 + $0x24] sm:$0xf]
        %v2085 = vld [vmem:[#allocation8 + $0x28] sm:$0xf]
        %v2086 = vld [vmem:[#allocation8 + $0x2c] sm:$0xf]
        %v2087 = vld [vmem:[#allocation8 + $0x30] sm:$0xf]
        %v2088 = vld [vmem:[#allocation8 + $0x34] sm:$0xf]
        %v2089 = vld [vmem:[#allocation8 + $0x38] sm:$0xf]
        %v2090 = vld [vmem:[#allocation8 + $0x3c] sm:$0xf]
        %v2091 = vld [vmem:[#allocation8 + $0x40] sm:$0xf]
        %v2092 = vld [vmem:[#allocation8 + $0x44] sm:$0xf]
        %v2093 = vld [vmem:[#allocation8 + $0x48] sm:$0xf]
        %v2094 = vld [vmem:[#allocation8 + $0x4c] sm:$0xf]
        %v2095 = vld [vmem:[#allocation8 + $0x50] sm:$0xf]
        %v2096 = vld [vmem:[#allocation8 + $0x54] sm:$0xf]
        %v2097 = vld [vmem:[#allocation8 + $0x58] sm:$0xf]
        %v2098 = vld [vmem:[#allocation8 + $0x5c] sm:$0xf]
        %v2099 = vld [vmem:[#allocation8 + $0x60] sm:$0xf]
        %v2100 = vld [vmem:[#allocation8 + $0x64] sm:$0xf]
        %v2101 = vld [vmem:[#allocation8 + $0x68] sm:$0xf]
        %v2102 = vld [vmem:[#allocation8 + $0x6c] sm:$0xf]
        %v2103 = vld [vmem:[#allocation8 + $0x70] sm:$0xf]
        %v2104 = vld [vmem:[#allocation8 + $0x74] sm:$0xf]
        %v2105 = vld [vmem:[#allocation8 + $0x78] sm:$0xf]
        %v2106 = vld [vmem:[#allocation8 + $0x7c] sm:$0xf]
        %v2139 = vunpack.c.l.b16 %v499
        %v2140 = vunpack.c.l.b16 %v500
        %v2141 = vunpack.c.l.b16 %v501
        %v2142 = vunpack.c.l.b16 %v502
        %v2143 = vunpack.c.l.b16 %v503
        %v2144 = vunpack.c.l.b16 %v504
        %v2145 = vunpack.c.l.b16 %v505
        %v2146 = vunpack.c.l.b16 %v506
        %v2147 = vunpack.c.l.b16 %v507
        %v2148 = vunpack.c.l.b16 %v508
        %v2149 = vunpack.c.l.b16 %v509
        %v2150 = vunpack.c.l.b16 %v510
        %v2151 = vunpack.c.l.b16 %v511
        %v2152 = vunpack.c.l.b16 %v512
        %v2153 = vunpack.c.l.b16 %v513
        %v2154 = vunpack.c.l.b16 %v514
        %v2155 = vunpack.c.l.b16 %v515
        %v2156 = vunpack.c.l.b16 %v516
        %v2157 = vunpack.c.l.b16 %v517
        %v2158 = vunpack.c.l.b16 %v518
        %v2159 = vunpack.c.l.b16 %v519
        %v2160 = vunpack.c.l.b16 %v520
        %v2161 = vunpack.c.l.b16 %v521
        %v2162 = vunpack.c.l.b16 %v522
        %v2163 = vunpack.c.l.b16 %v523
        %v2164 = vunpack.c.l.b16 %v524
        %v2165 = vunpack.c.l.b16 %v525
        %v2166 = vunpack.c.l.b16 %v526
        %v2167 = vunpack.c.l.b16 %v527
        %v2168 = vunpack.c.l.b16 %v528
        %v2169 = vunpack.c.l.b16 %v529
        %v2170 = vunpack.c.l.b16 %v530
        %v2171 = vpack.c.b16 %v2140, %v2139
        %v2172 = vpack.c.b16 %v2142, %v2141
        %v2173 = vpack.c.b16 %v2144, %v2143
        %v2174 = vpack.c.b16 %v2146, %v2145
        %v2175 = vpack.c.b16 %v2148, %v2147
        %v2176 = vpack.c.b16 %v2150, %v2149
        %v2177 = vpack.c.b16 %v2152, %v2151
        %v2178 = vpack.c.b16 %v2154, %v2153
        %v2179 = vpack.c.b16 %v2156, %v2155
        %v2180 = vpack.c.b16 %v2158, %v2157
        %v2181 = vpack.c.b16 %v2160, %v2159
        %v2182 = vpack.c.b16 %v2162, %v2161
        %v2183 = vpack.c.b16 %v2164, %v2163
        %v2184 = vpack.c.b16 %v2166, %v2165
        %v2185 = vpack.c.b16 %v2168, %v2167
        %v2186 = vpack.c.b16 %v2170, %v2169
        %v2219 = vunpack.c.l.b16 %v2091
        %v2220 = vunpack.c.l.b16 %v2092
        %v2221 = vunpack.c.l.b16 %v2093
        %v2222 = vunpack.c.l.b16 %v2094
        %v2223 = vunpack.c.l.b16 %v2095
        %v2224 = vunpack.c.l.b16 %v2096
        %v2225 = vunpack.c.l.b16 %v2097
        %v2226 = vunpack.c.l.b16 %v2098
        %v2227 = vunpack.c.l.b16 %v2099
        %v2228 = vunpack.c.l.b16 %v2100
        %v2229 = vunpack.c.l.b16 %v2101
        %v2230 = vunpack.c.l.b16 %v2102
        %v2231 = vunpack.c.l.b16 %v2103
        %v2232 = vunpack.c.l.b16 %v2104
        %v2233 = vunpack.c.l.b16 %v2105
        %v2234 = vunpack.c.l.b16 %v2106
        %v2235 = vpack.c.b16 %v2220, %v2219
        %v2236 = vpack.c.b16 %v2222, %v2221
        %v2237 = vpack.c.b16 %v2224, %v2223
        %v2238 = vpack.c.b16 %v2226, %v2225
        %v2239 = vpack.c.b16 %v2228, %v2227
        %v2240 = vpack.c.b16 %v2230, %v2229
        %v2241 = vpack.c.b16 %v2232, %v2231
        %v2242 = vpack.c.b16 %v2234, %v2233
        %2251 = vmatpush.bf16.msra.mxu0 %v2242
        %2252 = vmatpush.bf16.msra.mxu0 %v2241
        %2253 = vmatpush.bf16.msra.mxu0 %v2240
        %2254 = vmatpush.bf16.msra.mxu0 %v2239
        %2255 = vmatpush.bf16.msra.mxu0 %v2238
        %2256 = vmatpush.bf16.msra.mxu0 %v2237
        %2257 = vmatpush.bf16.msra.mxu0 %v2236
        %2258 = vmatpush.bf16.msra.mxu0 %v2235
        %2259 = vmatmul.bf16.gmra.mxu0 %v2171
        %v2260 = vpop.f32.mrf.mxu0
        %v2261 = vadd.f32 0.0, %v2260
        %v2262 = vpop.f32.mrf.mxu0
        %v2263 = vadd.f32 0.0, %v2262
        %2264 = vmatmul.bf16.gmra.mxu0 %v2172
        %v2265 = vpop.f32.mrf.mxu0
        %v2266 = vadd.f32 0.0, %v2265
        %v2267 = vpop.f32.mrf.mxu0
        %v2268 = vadd.f32 0.0, %v2267
        %2269 = vmatmul.bf16.gmra.mxu0 %v2173
        %v2270 = vpop.f32.mrf.mxu0
        %v2271 = vadd.f32 0.0, %v2270
        %v2272 = vpop.f32.mrf.mxu0
        %v2273 = vadd.f32 0.0, %v2272
        %2274 = vmatmul.bf16.gmra.mxu0 %v2174
        %v2275 = vpop.f32.mrf.mxu0
        %v2276 = vadd.f32 0.0, %v2275
        %v2277 = vpop.f32.mrf.mxu0
        %v2278 = vadd.f32 0.0, %v2277
        %2279 = vmatmul.bf16.gmra.mxu0 %v2175
        %v2280 = vpop.f32.mrf.mxu0
        %v2281 = vadd.f32 0.0, %v2280
        %v2282 = vpop.f32.mrf.mxu0
        %v2283 = vadd.f32 0.0, %v2282
        %2284 = vmatmul.bf16.gmra.mxu0 %v2176
        %v2285 = vpop.f32.mrf.mxu0
        %v2286 = vadd.f32 0.0, %v2285
        %v2287 = vpop.f32.mrf.mxu0
        %v2288 = vadd.f32 0.0, %v2287
        %2289 = vmatmul.bf16.gmra.mxu0 %v2177
        %v2290 = vpop.f32.mrf.mxu0
        %v2291 = vadd.f32 0.0, %v2290
        %v2292 = vpop.f32.mrf.mxu0
        %v2293 = vadd.f32 0.0, %v2292
        %2294 = vmatmul.bf16.gmra.mxu0 %v2178
        %v2295 = vpop.f32.mrf.mxu0
        %v2296 = vadd.f32 0.0, %v2295
        %v2297 = vpop.f32.mrf.mxu0
        %v2298 = vadd.f32 0.0, %v2297
        %2299 = vmatmul.bf16.gmra.mxu0 %v2179
        %v2300 = vpop.f32.mrf.mxu0
        %v2301 = vadd.f32 0.0, %v2300
        %v2302 = vpop.f32.mrf.mxu0
        %v2303 = vadd.f32 0.0, %v2302
        %2304 = vmatmul.bf16.gmra.mxu0 %v2180
        %v2305 = vpop.f32.mrf.mxu0
        %v2306 = vadd.f32 0.0, %v2305
        %v2307 = vpop.f32.mrf.mxu0
        %v2308 = vadd.f32 0.0, %v2307
        %2309 = vmatmul.bf16.gmra.mxu0 %v2181
        %v2310 = vpop.f32.mrf.mxu0
        %v2311 = vadd.f32 0.0, %v2310
        %v2312 = vpop.f32.mrf.mxu0
        %v2313 = vadd.f32 0.0, %v2312
        %2314 = vmatmul.bf16.gmra.mxu0 %v2182
        %v2315 = vpop.f32.mrf.mxu0
        %v2316 = vadd.f32 0.0, %v2315
        %v2317 = vpop.f32.mrf.mxu0
        %v2318 = vadd.f32 0.0, %v2317
        %2319 = vmatmul.bf16.gmra.mxu0 %v2183
        %v2320 = vpop.f32.mrf.mxu0
        %v2321 = vadd.f32 0.0, %v2320
        %v2322 = vpop.f32.mrf.mxu0
        %v2323 = vadd.f32 0.0, %v2322
        %2324 = vmatmul.bf16.gmra.mxu0 %v2184
        %v2325 = vpop.f32.mrf.mxu0
        %v2326 = vadd.f32 0.0, %v2325
        %v2327 = vpop.f32.mrf.mxu0
        %v2328 = vadd.f32 0.0, %v2327
        %2329 = vmatmul.bf16.gmra.mxu0 %v2185
        %v2330 = vpop.f32.mrf.mxu0
        %v2331 = vadd.f32 0.0, %v2330
        %v2332 = vpop.f32.mrf.mxu0
        %v2333 = vadd.f32 0.0, %v2332
        %2334 = vmatmul.bf16.gmra.mxu0 %v2186
        %v2335 = vpop.f32.mrf.mxu0
        %v2336 = vadd.f32 0.0, %v2335
        %v2337 = vpop.f32.mrf.mxu0
        %v2338 = vadd.f32 0.0, %v2337
        %2339 = vdwg.mxu0
        %v2356 = vunpack.c.l.b16 %v2075
        %v2357 = vunpack.c.l.b16 %v2076
        %v2358 = vunpack.c.l.b16 %v2077
        %v2359 = vunpack.c.l.b16 %v2078
        %v2360 = vunpack.c.l.b16 %v2079
        %v2361 = vunpack.c.l.b16 %v2080
        %v2362 = vunpack.c.l.b16 %v2081
        %v2363 = vunpack.c.l.b16 %v2082
        %v2364 = vunpack.c.l.b16 %v2083
        %v2365 = vunpack.c.l.b16 %v2084
        %v2366 = vunpack.c.l.b16 %v2085
        %v2367 = vunpack.c.l.b16 %v2086
        %v2368 = vunpack.c.l.b16 %v2087
        %v2369 = vunpack.c.l.b16 %v2088
        %v2370 = vunpack.c.l.b16 %v2089
        %v2371 = vunpack.c.l.b16 %v2090
        %v2372 = vpack.c.b16 %v2357, %v2356
        %v2373 = vpack.c.b16 %v2359, %v2358
        %v2374 = vpack.c.b16 %v2361, %v2360
        %v2375 = vpack.c.b16 %v2363, %v2362
        %v2376 = vpack.c.b16 %v2365, %v2364
        %v2377 = vpack.c.b16 %v2367, %v2366
        %v2378 = vpack.c.b16 %v2369, %v2368
        %v2379 = vpack.c.b16 %v2371, %v2370
        %2388 = vmatpush.bf16.msra.mxu0 %v2379
        %2389 = vmatpush.bf16.msra.mxu0 %v2378
        %2390 = vmatpush.bf16.msra.mxu0 %v2377
        %2391 = vmatpush.bf16.msra.mxu0 %v2376
        %2392 = vmatpush.bf16.msra.mxu0 %v2375
        %2393 = vmatpush.bf16.msra.mxu0 %v2374
        %2394 = vmatpush.bf16.msra.mxu0 %v2373
        %2395 = vmatpush.bf16.msra.mxu0 %v2372
        %2396 = vmatmul.bf16.gmra.mxu0 %v2059
        %v2397 = vpop.f32.mrf.mxu0
        %v2398 = vadd.f32 %v2261, %v2397
        %v2399 = vpop.f32.mrf.mxu0
        %v2400 = vadd.f32 %v2263, %v2399
        %2401 = vmatmul.bf16.gmra.mxu0 %v2060
        %v2402 = vpop.f32.mrf.mxu0
        %v2403 = vadd.f32 %v2266, %v2402
        %v2404 = vpop.f32.mrf.mxu0
        %v2405 = vadd.f32 %v2268, %v2404
        %2406 = vmatmul.bf16.gmra.mxu0 %v2061
        %v2407 = vpop.f32.mrf.mxu0
        %v2408 = vadd.f32 %v2271, %v2407
        %v2409 = vpop.f32.mrf.mxu0
        %v2410 = vadd.f32 %v2273, %v2409
        %2411 = vmatmul.bf16.gmra.mxu0 %v2062
        %v2412 = vpop.f32.mrf.mxu0
        %v2413 = vadd.f32 %v2276, %v2412
        %v2414 = vpop.f32.mrf.mxu0
        %v2415 = vadd.f32 %v2278, %v2414
        %2416 = vmatmul.bf16.gmra.mxu0 %v2063
        %v2417 = vpop.f32.mrf.mxu0
        %v2418 = vadd.f32 %v2281, %v2417
        %v2419 = vpop.f32.mrf.mxu0
        %v2420 = vadd.f32 %v2283, %v2419
        %2421 = vmatmul.bf16.gmra.mxu0 %v2064
        %v2422 = vpop.f32.mrf.mxu0
        %v2423 = vadd.f32 %v2286, %v2422
        %v2424 = vpop.f32.mrf.mxu0
        %v2425 = vadd.f32 %v2288, %v2424
        %2426 = vmatmul.bf16.gmra.mxu0 %v2065
        %v2427 = vpop.f32.mrf.mxu0
        %v2428 = vadd.f32 %v2291, %v2427
        %v2429 = vpop.f32.mrf.mxu0
        %v2430 = vadd.f32 %v2293, %v2429
        %2431 = vmatmul.bf16.gmra.mxu0 %v2066
        %v2432 = vpop.f32.mrf.mxu0
        %v2433 = vadd.f32 %v2296, %v2432
        %v2434 = vpop.f32.mrf.mxu0
        %v2435 = vadd.f32 %v2298, %v2434
        %2436 = vmatmul.bf16.gmra.mxu0 %v2067
        %v2437 = vpop.f32.mrf.mxu0
        %v2438 = vadd.f32 %v2301, %v2437
        %v2439 = vpop.f32.mrf.mxu0
        %v2440 = vadd.f32 %v2303, %v2439
        %2441 = vmatmul.bf16.gmra.mxu0 %v2068
        %v2442 = vpop.f32.mrf.mxu0
        %v2443 = vadd.f32 %v2306, %v2442
        %v2444 = vpop.f32.mrf.mxu0
        %v2445 = vadd.f32 %v2308, %v2444
        %2446 = vmatmul.bf16.gmra.mxu0 %v2069
        %v2447 = vpop.f32.mrf.mxu0
        %v2448 = vadd.f32 %v2311, %v2447
        %v2449 = vpop.f32.mrf.mxu0
        %v2450 = vadd.f32 %v2313, %v2449
        %2451 = vmatmul.bf16.gmra.mxu0 %v2070
        %v2452 = vpop.f32.mrf.mxu0
        %v2453 = vadd.f32 %v2316, %v2452
        %v2454 = vpop.f32.mrf.mxu0
        %v2455 = vadd.f32 %v2318, %v2454
        %2456 = vmatmul.bf16.gmra.mxu0 %v2071
        %v2457 = vpop.f32.mrf.mxu0
        %v2458 = vadd.f32 %v2321, %v2457
        %v2459 = vpop.f32.mrf.mxu0
        %v2460 = vadd.f32 %v2323, %v2459
        %2461 = vmatmul.bf16.gmra.mxu0 %v2072
        %v2462 = vpop.f32.mrf.mxu0
        %v2463 = vadd.f32 %v2326, %v2462
        %v2464 = vpop.f32.mrf.mxu0
        %v2465 = vadd.f32 %v2328, %v2464
        %2466 = vmatmul.bf16.gmra.mxu0 %v2073
        %v2467 = vpop.f32.mrf.mxu0
        %v2468 = vadd.f32 %v2331, %v2467
        %v2469 = vpop.f32.mrf.mxu0
        %v2470 = vadd.f32 %v2333, %v2469
        %2471 = vmatmul.bf16.gmra.mxu0 %v2074
        %v2472 = vpop.f32.mrf.mxu0
        %v2473 = vadd.f32 %v2336, %v2472
        %v2474 = vpop.f32.mrf.mxu0
        %v2475 = vadd.f32 %v2338, %v2474
        %2476 = vdwg.mxu0
        %v2477 = vld [vmem:[#allocation10] sm:$0x1]
        %v2479 = vperm.slane %v2477, 0
        %v2481 = vadd.f32 %v2398, %v2479
        %v2482 = vadd.f32 %v2400, %v2479
        %v2483 = vadd.f32 %v2403, %v2479
        %v2484 = vadd.f32 %v2405, %v2479
        %v2485 = vadd.f32 %v2408, %v2479
        %v2486 = vadd.f32 %v2410, %v2479
        %v2487 = vadd.f32 %v2413, %v2479
        %v2488 = vadd.f32 %v2415, %v2479
        %v2489 = vadd.f32 %v2418, %v2479
        %v2490 = vadd.f32 %v2420, %v2479
        %v2491 = vadd.f32 %v2423, %v2479
        %v2492 = vadd.f32 %v2425, %v2479
        %v2493 = vadd.f32 %v2428, %v2479
        %v2494 = vadd.f32 %v2430, %v2479
        %v2495 = vadd.f32 %v2433, %v2479
        %v2496 = vadd.f32 %v2435, %v2479
        %v2497 = vadd.f32 %v2438, %v2479
        %v2498 = vadd.f32 %v2440, %v2479
        %v2499 = vadd.f32 %v2443, %v2479
        %v2500 = vadd.f32 %v2445, %v2479
        %v2501 = vadd.f32 %v2448, %v2479
        %v2502 = vadd.f32 %v2450, %v2479
        %v2503 = vadd.f32 %v2453, %v2479
        %v2504 = vadd.f32 %v2455, %v2479
        %v2505 = vadd.f32 %v2458, %v2479
        %v2506 = vadd.f32 %v2460, %v2479
        %v2507 = vadd.f32 %v2463, %v2479
        %v2508 = vadd.f32 %v2465, %v2479
        %v2509 = vadd.f32 %v2468, %v2479
        %v2510 = vadd.f32 %v2470, %v2479
        %v2511 = vadd.f32 %v2473, %v2479
        %v2512 = vadd.f32 %v2475, %v2479
        %v2513 = vxor.u32 %v2481, 2147483648
        %v2514 = vxor.u32 %v2482, 2147483648
        %v2515 = vxor.u32 %v2483, 2147483648
        %v2516 = vxor.u32 %v2484, 2147483648
        %v2517 = vxor.u32 %v2485, 2147483648
        %v2518 = vxor.u32 %v2486, 2147483648
        %v2519 = vxor.u32 %v2487, 2147483648
        %v2520 = vxor.u32 %v2488, 2147483648
        %v2521 = vxor.u32 %v2489, 2147483648
        %v2522 = vxor.u32 %v2490, 2147483648
        %v2523 = vxor.u32 %v2491, 2147483648
        %v2524 = vxor.u32 %v2492, 2147483648
        %v2525 = vxor.u32 %v2493, 2147483648
        %v2526 = vxor.u32 %v2494, 2147483648
        %v2527 = vxor.u32 %v2495, 2147483648
        %v2528 = vxor.u32 %v2496, 2147483648
        %v2529 = vxor.u32 %v2497, 2147483648
        %v2530 = vxor.u32 %v2498, 2147483648
        %v2531 = vxor.u32 %v2499, 2147483648
        %v2532 = vxor.u32 %v2500, 2147483648
        %v2533 = vxor.u32 %v2501, 2147483648
        %v2534 = vxor.u32 %v2502, 2147483648
        %v2535 = vxor.u32 %v2503, 2147483648
        %v2536 = vxor.u32 %v2504, 2147483648
        %v2537 = vxor.u32 %v2505, 2147483648
        %v2538 = vxor.u32 %v2506, 2147483648
        %v2539 = vxor.u32 %v2507, 2147483648
        %v2540 = vxor.u32 %v2508, 2147483648
        %v2541 = vxor.u32 %v2509, 2147483648
        %v2542 = vxor.u32 %v2510, 2147483648
        %v2543 = vxor.u32 %v2511, 2147483648
        %v2544 = vxor.u32 %v2512, 2147483648
        %v2545 = vmul.f32 %v2513, 1.442695
        %v2546 = vpow.pop %v2545
        %v2547 = vmul.f32 %v2514, 1.442695
        %v2548 = vpow.pop %v2547
        %v2549 = vmul.f32 %v2515, 1.442695
        %v2550 = vpow.pop %v2549
        %v2551 = vmul.f32 %v2516, 1.442695
        %v2552 = vpow.pop %v2551
        %v2553 = vmul.f32 %v2517, 1.442695
        %v2554 = vpow.pop %v2553
        %v2555 = vmul.f32 %v2518, 1.442695
        %v2556 = vpow.pop %v2555
        %v2557 = vmul.f32 %v2519, 1.442695
        %v2558 = vpow.pop %v2557
        %v2559 = vmul.f32 %v2520, 1.442695
        %v2560 = vpow.pop %v2559
        %v2561 = vmul.f32 %v2521, 1.442695
        %v2562 = vpow.pop %v2561
        %v2563 = vmul.f32 %v2522, 1.442695
        %v2564 = vpow.pop %v2563
        %v2565 = vmul.f32 %v2523, 1.442695
        %v2566 = vpow.pop %v2565
        %v2567 = vmul.f32 %v2524, 1.442695
        %v2568 = vpow.pop %v2567
        %v2569 = vmul.f32 %v2525, 1.442695
        %v2570 = vpow.pop %v2569
        %v2571 = vmul.f32 %v2526, 1.442695
        %v2572 = vpow.pop %v2571
        %v2573 = vmul.f32 %v2527, 1.442695
        %v2574 = vpow.pop %v2573
        %v2575 = vmul.f32 %v2528, 1.442695
        %v2576 = vpow.pop %v2575
        %v2577 = vmul.f32 %v2529, 1.442695
        %v2578 = vpow.pop %v2577
        %v2579 = vmul.f32 %v2530, 1.442695
        %v2580 = vpow.pop %v2579
        %v2581 = vmul.f32 %v2531, 1.442695
        %v2582 = vpow.pop %v2581
        %v2583 = vmul.f32 %v2532, 1.442695
        %v2584 = vpow.pop %v2583
        %v2585 = vmul.f32 %v2533, 1.442695
        %v2586 = vpow.pop %v2585
        %v2587 = vmul.f32 %v2534, 1.442695
        %v2588 = vpow.pop %v2587
        %v2589 = vmul.f32 %v2535, 1.442695
        %v2590 = vpow.pop %v2589
        %v2591 = vmul.f32 %v2536, 1.442695
        %v2592 = vpow.pop %v2591
        %v2593 = vmul.f32 %v2537, 1.442695
        %v2594 = vpow.pop %v2593
        %v2595 = vmul.f32 %v2538, 1.442695
        %v2596 = vpow.pop %v2595
        %v2597 = vmul.f32 %v2539, 1.442695
        %v2598 = vpow.pop %v2597
        %v2599 = vmul.f32 %v2540, 1.442695
        %v2600 = vpow.pop %v2599
        %v2601 = vmul.f32 %v2541, 1.442695
        %v2602 = vpow.pop %v2601
        %v2603 = vmul.f32 %v2542, 1.442695
        %v2604 = vpow.pop %v2603
        %v2605 = vmul.f32 %v2543, 1.442695
        %v2606 = vpow.pop %v2605
        %v2607 = vmul.f32 %v2544, 1.442695
        %v2608 = vpow.pop %v2607
        %v2609 = vadd.f32 %v2546, 1.0
        %v2610 = vadd.f32 %v2548, 1.0
        %v2611 = vadd.f32 %v2550, 1.0
        %v2612 = vadd.f32 %v2552, 1.0
        %v2613 = vadd.f32 %v2554, 1.0
        %v2614 = vadd.f32 %v2556, 1.0
        %v2615 = vadd.f32 %v2558, 1.0
        %v2616 = vadd.f32 %v2560, 1.0
        %v2617 = vadd.f32 %v2562, 1.0
        %v2618 = vadd.f32 %v2564, 1.0
        %v2619 = vadd.f32 %v2566, 1.0
        %v2620 = vadd.f32 %v2568, 1.0
        %v2621 = vadd.f32 %v2570, 1.0
        %v2622 = vadd.f32 %v2572, 1.0
        %v2623 = vadd.f32 %v2574, 1.0
        %v2624 = vadd.f32 %v2576, 1.0
        %v2625 = vadd.f32 %v2578, 1.0
        %v2626 = vadd.f32 %v2580, 1.0
        %v2627 = vadd.f32 %v2582, 1.0
        %v2628 = vadd.f32 %v2584, 1.0
        %v2629 = vadd.f32 %v2586, 1.0
        %v2630 = vadd.f32 %v2588, 1.0
        %v2631 = vadd.f32 %v2590, 1.0
        %v2632 = vadd.f32 %v2592, 1.0
        %v2633 = vadd.f32 %v2594, 1.0
        %v2634 = vadd.f32 %v2596, 1.0
        %v2635 = vadd.f32 %v2598, 1.0
        %v2636 = vadd.f32 %v2600, 1.0
        %v2637 = vadd.f32 %v2602, 1.0
        %v2638 = vadd.f32 %v2604, 1.0
        %v2639 = vadd.f32 %v2606, 1.0
        %v2640 = vadd.f32 %v2608, 1.0
        %v2641 = vrcp.pop %v2609
        %v2642 = vmul.f32 %v2609, %v2641
        %v2643 = vsub.f32 1.0, %v2642
        %v2644 = vmul.f32 %v2641, %v2643
        %v2645 = vadd.f32 %v2641, %v2644
        %vm2646 = vweird.f32 %v2609
        %vm2647 = vweird.f32 %v2641
        %vm2648 = vmor %vm2646, %vm2647
        %v2649 = vsel %vm2648, %v2641, %v2645
        %v2650 = vand.u32 2147483647, %v2609
        %vm2651 = vcmp.eq.f32.partialorder %v2650, 8.507059e+37
        %v2652 = vand.u32 %v2609, 2147483648
        %v2653 = vor.u32 1.1754944e-38, %v2652
        %v2654 = vsel %vm2651, %v2653, %v2649
        %v2655 = vmul.f32 1.0, %v2654
        %v2656 = vrcp.pop %v2610
        %v2657 = vmul.f32 %v2610, %v2656
        %v2658 = vsub.f32 1.0, %v2657
        %v2659 = vmul.f32 %v2656, %v2658
        %v2660 = vadd.f32 %v2656, %v2659
        %vm2661 = vweird.f32 %v2610
        %vm2662 = vweird.f32 %v2656
        %vm2663 = vmor %vm2661, %vm2662
        %v2664 = vsel %vm2663, %v2656, %v2660
        %v2665 = vand.u32 2147483647, %v2610
        %vm2666 = vcmp.eq.f32.partialorder %v2665, 8.507059e+37
        %v2667 = vand.u32 %v2610, 2147483648
        %v2668 = vor.u32 1.1754944e-38, %v2667
        %v2669 = vsel %vm2666, %v2668, %v2664
        %v2670 = vmul.f32 1.0, %v2669
        %v2671 = vrcp.pop %v2611
        %v2672 = vmul.f32 %v2611, %v2671
        %v2673 = vsub.f32 1.0, %v2672
        %v2674 = vmul.f32 %v2671, %v2673
        %v2675 = vadd.f32 %v2671, %v2674
        %vm2676 = vweird.f32 %v2611
        %vm2677 = vweird.f32 %v2671
        %vm2678 = vmor %vm2676, %vm2677
        %v2679 = vsel %vm2678, %v2671, %v2675
        %v2680 = vand.u32 2147483647, %v2611
        %vm2681 = vcmp.eq.f32.partialorder %v2680, 8.507059e+37
        %v2682 = vand.u32 %v2611, 2147483648
        %v2683 = vor.u32 1.1754944e-38, %v2682
        %v2684 = vsel %vm2681, %v2683, %v2679
        %v2685 = vmul.f32 1.0, %v2684
        %v2686 = vrcp.pop %v2612
        %v2687 = vmul.f32 %v2612, %v2686
        %v2688 = vsub.f32 1.0, %v2687
        %v2689 = vmul.f32 %v2686, %v2688
        %v2690 = vadd.f32 %v2686, %v2689
        %vm2691 = vweird.f32 %v2612
        %vm2692 = vweird.f32 %v2686
        %vm2693 = vmor %vm2691, %vm2692
        %v2694 = vsel %vm2693, %v2686, %v2690
        %v2695 = vand.u32 2147483647, %v2612
        %vm2696 = vcmp.eq.f32.partialorder %v2695, 8.507059e+37
        %v2697 = vand.u32 %v2612, 2147483648
        %v2698 = vor.u32 1.1754944e-38, %v2697
        %v2699 = vsel %vm2696, %v2698, %v2694
        %v2700 = vmul.f32 1.0, %v2699
        %v2701 = vrcp.pop %v2613
        %v2702 = vmul.f32 %v2613, %v2701
        %v2703 = vsub.f32 1.0, %v2702
        %v2704 = vmul.f32 %v2701, %v2703
        %v2705 = vadd.f32 %v2701, %v2704
        %vm2706 = vweird.f32 %v2613
        %vm2707 = vweird.f32 %v2701
        %vm2708 = vmor %vm2706, %vm2707
        %v2709 = vsel %vm2708, %v2701, %v2705
        %v2710 = vand.u32 2147483647, %v2613
        %vm2711 = vcmp.eq.f32.partialorder %v2710, 8.507059e+37
        %v2712 = vand.u32 %v2613, 2147483648
        %v2713 = vor.u32 1.1754944e-38, %v2712
        %v2714 = vsel %vm2711, %v2713, %v2709
        %v2715 = vmul.f32 1.0, %v2714
        %v2716 = vrcp.pop %v2614
        %v2717 = vmul.f32 %v2614, %v2716
        %v2718 = vsub.f32 1.0, %v2717
        %v2719 = vmul.f32 %v2716, %v2718
        %v2720 = vadd.f32 %v2716, %v2719
        %vm2721 = vweird.f32 %v2614
        %vm2722 = vweird.f32 %v2716
        %vm2723 = vmor %vm2721, %vm2722
        %v2724 = vsel %vm2723, %v2716, %v2720
        %v2725 = vand.u32 2147483647, %v2614
        %vm2726 = vcmp.eq.f32.partialorder %v2725, 8.507059e+37
        %v2727 = vand.u32 %v2614, 2147483648
        %v2728 = vor.u32 1.1754944e-38, %v2727
        %v2729 = vsel %vm2726, %v2728, %v2724
        %v2730 = vmul.f32 1.0, %v2729
        %v2731 = vrcp.pop %v2615
        %v2732 = vmul.f32 %v2615, %v2731
        %v2733 = vsub.f32 1.0, %v2732
        %v2734 = vmul.f32 %v2731, %v2733
        %v2735 = vadd.f32 %v2731, %v2734
        %vm2736 = vweird.f32 %v2615
        %vm2737 = vweird.f32 %v2731
        %vm2738 = vmor %vm2736, %vm2737
        %v2739 = vsel %vm2738, %v2731, %v2735
        %v2740 = vand.u32 2147483647, %v2615
        %vm2741 = vcmp.eq.f32.partialorder %v2740, 8.507059e+37
        %v2742 = vand.u32 %v2615, 2147483648
        %v2743 = vor.u32 1.1754944e-38, %v2742
        %v2744 = vsel %vm2741, %v2743, %v2739
        %v2745 = vmul.f32 1.0, %v2744
        %v2746 = vrcp.pop %v2616
        %v2747 = vmul.f32 %v2616, %v2746
        %v2748 = vsub.f32 1.0, %v2747
        %v2749 = vmul.f32 %v2746, %v2748
        %v2750 = vadd.f32 %v2746, %v2749
        %vm2751 = vweird.f32 %v2616
        %vm2752 = vweird.f32 %v2746
        %vm2753 = vmor %vm2751, %vm2752
        %v2754 = vsel %vm2753, %v2746, %v2750
        %v2755 = vand.u32 2147483647, %v2616
        %vm2756 = vcmp.eq.f32.partialorder %v2755, 8.507059e+37
        %v2757 = vand.u32 %v2616, 2147483648
        %v2758 = vor.u32 1.1754944e-38, %v2757
        %v2759 = vsel %vm2756, %v2758, %v2754
        %v2760 = vmul.f32 1.0, %v2759
        %v2761 = vrcp.pop %v2617
        %v2762 = vmul.f32 %v2617, %v2761
        %v2763 = vsub.f32 1.0, %v2762
        %v2764 = vmul.f32 %v2761, %v2763
        %v2765 = vadd.f32 %v2761, %v2764
        %vm2766 = vweird.f32 %v2617
        %vm2767 = vweird.f32 %v2761
        %vm2768 = vmor %vm2766, %vm2767
        %v2769 = vsel %vm2768, %v2761, %v2765
        %v2770 = vand.u32 2147483647, %v2617
        %vm2771 = vcmp.eq.f32.partialorder %v2770, 8.507059e+37
        %v2772 = vand.u32 %v2617, 2147483648
        %v2773 = vor.u32 1.1754944e-38, %v2772
        %v2774 = vsel %vm2771, %v2773, %v2769
        %v2775 = vmul.f32 1.0, %v2774
        %v2776 = vrcp.pop %v2618
        %v2777 = vmul.f32 %v2618, %v2776
        %v2778 = vsub.f32 1.0, %v2777
        %v2779 = vmul.f32 %v2776, %v2778
        %v2780 = vadd.f32 %v2776, %v2779
        %vm2781 = vweird.f32 %v2618
        %vm2782 = vweird.f32 %v2776
        %vm2783 = vmor %vm2781, %vm2782
        %v2784 = vsel %vm2783, %v2776, %v2780
        %v2785 = vand.u32 2147483647, %v2618
        %vm2786 = vcmp.eq.f32.partialorder %v2785, 8.507059e+37
        %v2787 = vand.u32 %v2618, 2147483648
        %v2788 = vor.u32 1.1754944e-38, %v2787
        %v2789 = vsel %vm2786, %v2788, %v2784
        %v2790 = vmul.f32 1.0, %v2789
        %v2791 = vrcp.pop %v2619
        %v2792 = vmul.f32 %v2619, %v2791
        %v2793 = vsub.f32 1.0, %v2792
        %v2794 = vmul.f32 %v2791, %v2793
        %v2795 = vadd.f32 %v2791, %v2794
        %vm2796 = vweird.f32 %v2619
        %vm2797 = vweird.f32 %v2791
        %vm2798 = vmor %vm2796, %vm2797
        %v2799 = vsel %vm2798, %v2791, %v2795
        %v2800 = vand.u32 2147483647, %v2619
        %vm2801 = vcmp.eq.f32.partialorder %v2800, 8.507059e+37
        %v2802 = vand.u32 %v2619, 2147483648
        %v2803 = vor.u32 1.1754944e-38, %v2802
        %v2804 = vsel %vm2801, %v2803, %v2799
        %v2805 = vmul.f32 1.0, %v2804
        %v2806 = vrcp.pop %v2620
        %v2807 = vmul.f32 %v2620, %v2806
        %v2808 = vsub.f32 1.0, %v2807
        %v2809 = vmul.f32 %v2806, %v2808
        %v2810 = vadd.f32 %v2806, %v2809
        %vm2811 = vweird.f32 %v2620
        %vm2812 = vweird.f32 %v2806
        %vm2813 = vmor %vm2811, %vm2812
        %v2814 = vsel %vm2813, %v2806, %v2810
        %v2815 = vand.u32 2147483647, %v2620
        %vm2816 = vcmp.eq.f32.partialorder %v2815, 8.507059e+37
        %v2817 = vand.u32 %v2620, 2147483648
        %v2818 = vor.u32 1.1754944e-38, %v2817
        %v2819 = vsel %vm2816, %v2818, %v2814
        %v2820 = vmul.f32 1.0, %v2819
        %v2821 = vrcp.pop %v2621
        %v2822 = vmul.f32 %v2621, %v2821
        %v2823 = vsub.f32 1.0, %v2822
        %v2824 = vmul.f32 %v2821, %v2823
        %v2825 = vadd.f32 %v2821, %v2824
        %vm2826 = vweird.f32 %v2621
        %vm2827 = vweird.f32 %v2821
        %vm2828 = vmor %vm2826, %vm2827
        %v2829 = vsel %vm2828, %v2821, %v2825
        %v2830 = vand.u32 2147483647, %v2621
        %vm2831 = vcmp.eq.f32.partialorder %v2830, 8.507059e+37
        %v2832 = vand.u32 %v2621, 2147483648
        %v2833 = vor.u32 1.1754944e-38, %v2832
        %v2834 = vsel %vm2831, %v2833, %v2829
        %v2835 = vmul.f32 1.0, %v2834
        %v2836 = vrcp.pop %v2622
        %v2837 = vmul.f32 %v2622, %v2836
        %v2838 = vsub.f32 1.0, %v2837
        %v2839 = vmul.f32 %v2836, %v2838
        %v2840 = vadd.f32 %v2836, %v2839
        %vm2841 = vweird.f32 %v2622
        %vm2842 = vweird.f32 %v2836
        %vm2843 = vmor %vm2841, %vm2842
        %v2844 = vsel %vm2843, %v2836, %v2840
        %v2845 = vand.u32 2147483647, %v2622
        %vm2846 = vcmp.eq.f32.partialorder %v2845, 8.507059e+37
        %v2847 = vand.u32 %v2622, 2147483648
        %v2848 = vor.u32 1.1754944e-38, %v2847
        %v2849 = vsel %vm2846, %v2848, %v2844
        %v2850 = vmul.f32 1.0, %v2849
        %v2851 = vrcp.pop %v2623
        %v2852 = vmul.f32 %v2623, %v2851
        %v2853 = vsub.f32 1.0, %v2852
        %v2854 = vmul.f32 %v2851, %v2853
        %v2855 = vadd.f32 %v2851, %v2854
        %vm2856 = vweird.f32 %v2623
        %vm2857 = vweird.f32 %v2851
        %vm2858 = vmor %vm2856, %vm2857
        %v2859 = vsel %vm2858, %v2851, %v2855
        %v2860 = vand.u32 2147483647, %v2623
        %vm2861 = vcmp.eq.f32.partialorder %v2860, 8.507059e+37
        %v2862 = vand.u32 %v2623, 2147483648
        %v2863 = vor.u32 1.1754944e-38, %v2862
        %v2864 = vsel %vm2861, %v2863, %v2859
        %v2865 = vmul.f32 1.0, %v2864
        %v2866 = vrcp.pop %v2624
        %v2867 = vmul.f32 %v2624, %v2866
        %v2868 = vsub.f32 1.0, %v2867
        %v2869 = vmul.f32 %v2866, %v2868
        %v2870 = vadd.f32 %v2866, %v2869
        %vm2871 = vweird.f32 %v2624
        %vm2872 = vweird.f32 %v2866
        %vm2873 = vmor %vm2871, %vm2872
        %v2874 = vsel %vm2873, %v2866, %v2870
        %v2875 = vand.u32 2147483647, %v2624
        %vm2876 = vcmp.eq.f32.partialorder %v2875, 8.507059e+37
        %v2877 = vand.u32 %v2624, 2147483648
        %v2878 = vor.u32 1.1754944e-38, %v2877
        %v2879 = vsel %vm2876, %v2878, %v2874
        %v2880 = vmul.f32 1.0, %v2879
        %v2881 = vrcp.pop %v2625
        %v2882 = vmul.f32 %v2625, %v2881
        %v2883 = vsub.f32 1.0, %v2882
        %v2884 = vmul.f32 %v2881, %v2883
        %v2885 = vadd.f32 %v2881, %v2884
        %vm2886 = vweird.f32 %v2625
        %vm2887 = vweird.f32 %v2881
        %vm2888 = vmor %vm2886, %vm2887
        %v2889 = vsel %vm2888, %v2881, %v2885
        %v2890 = vand.u32 2147483647, %v2625
        %vm2891 = vcmp.eq.f32.partialorder %v2890, 8.507059e+37
        %v2892 = vand.u32 %v2625, 2147483648
        %v2893 = vor.u32 1.1754944e-38, %v2892
        %v2894 = vsel %vm2891, %v2893, %v2889
        %v2895 = vmul.f32 1.0, %v2894
        %v2896 = vrcp.pop %v2626
        %v2897 = vmul.f32 %v2626, %v2896
        %v2898 = vsub.f32 1.0, %v2897
        %v2899 = vmul.f32 %v2896, %v2898
        %v2900 = vadd.f32 %v2896, %v2899
        %vm2901 = vweird.f32 %v2626
        %vm2902 = vweird.f32 %v2896
        %vm2903 = vmor %vm2901, %vm2902
        %v2904 = vsel %vm2903, %v2896, %v2900
        %v2905 = vand.u32 2147483647, %v2626
        %vm2906 = vcmp.eq.f32.partialorder %v2905, 8.507059e+37
        %v2907 = vand.u32 %v2626, 2147483648
        %v2908 = vor.u32 1.1754944e-38, %v2907
        %v2909 = vsel %vm2906, %v2908, %v2904
        %v2910 = vmul.f32 1.0, %v2909
        %v2911 = vrcp.pop %v2627
        %v2912 = vmul.f32 %v2627, %v2911
        %v2913 = vsub.f32 1.0, %v2912
        %v2914 = vmul.f32 %v2911, %v2913
        %v2915 = vadd.f32 %v2911, %v2914
        %vm2916 = vweird.f32 %v2627
        %vm2917 = vweird.f32 %v2911
        %vm2918 = vmor %vm2916, %vm2917
        %v2919 = vsel %vm2918, %v2911, %v2915
        %v2920 = vand.u32 2147483647, %v2627
        %vm2921 = vcmp.eq.f32.partialorder %v2920, 8.507059e+37
        %v2922 = vand.u32 %v2627, 2147483648
        %v2923 = vor.u32 1.1754944e-38, %v2922
        %v2924 = vsel %vm2921, %v2923, %v2919
        %v2925 = vmul.f32 1.0, %v2924
        %v2926 = vrcp.pop %v2628
        %v2927 = vmul.f32 %v2628, %v2926
        %v2928 = vsub.f32 1.0, %v2927
        %v2929 = vmul.f32 %v2926, %v2928
        %v2930 = vadd.f32 %v2926, %v2929
        %vm2931 = vweird.f32 %v2628
        %vm2932 = vweird.f32 %v2926
        %vm2933 = vmor %vm2931, %vm2932
        %v2934 = vsel %vm2933, %v2926, %v2930
        %v2935 = vand.u32 2147483647, %v2628
        %vm2936 = vcmp.eq.f32.partialorder %v2935, 8.507059e+37
        %v2937 = vand.u32 %v2628, 2147483648
        %v2938 = vor.u32 1.1754944e-38, %v2937
        %v2939 = vsel %vm2936, %v2938, %v2934
        %v2940 = vmul.f32 1.0, %v2939
        %v2941 = vrcp.pop %v2629
        %v2942 = vmul.f32 %v2629, %v2941
        %v2943 = vsub.f32 1.0, %v2942
        %v2944 = vmul.f32 %v2941, %v2943
        %v2945 = vadd.f32 %v2941, %v2944
        %vm2946 = vweird.f32 %v2629
        %vm2947 = vweird.f32 %v2941
        %vm2948 = vmor %vm2946, %vm2947
        %v2949 = vsel %vm2948, %v2941, %v2945
        %v2950 = vand.u32 2147483647, %v2629
        %vm2951 = vcmp.eq.f32.partialorder %v2950, 8.507059e+37
        %v2952 = vand.u32 %v2629, 2147483648
        %v2953 = vor.u32 1.1754944e-38, %v2952
        %v2954 = vsel %vm2951, %v2953, %v2949
        %v2955 = vmul.f32 1.0, %v2954
        %v2956 = vrcp.pop %v2630
        %v2957 = vmul.f32 %v2630, %v2956
        %v2958 = vsub.f32 1.0, %v2957
        %v2959 = vmul.f32 %v2956, %v2958
        %v2960 = vadd.f32 %v2956, %v2959
        %vm2961 = vweird.f32 %v2630
        %vm2962 = vweird.f32 %v2956
        %vm2963 = vmor %vm2961, %vm2962
        %v2964 = vsel %vm2963, %v2956, %v2960
        %v2965 = vand.u32 2147483647, %v2630
        %vm2966 = vcmp.eq.f32.partialorder %v2965, 8.507059e+37
        %v2967 = vand.u32 %v2630, 2147483648
        %v2968 = vor.u32 1.1754944e-38, %v2967
        %v2969 = vsel %vm2966, %v2968, %v2964
        %v2970 = vmul.f32 1.0, %v2969
        %v2971 = vrcp.pop %v2631
        %v2972 = vmul.f32 %v2631, %v2971
        %v2973 = vsub.f32 1.0, %v2972
        %v2974 = vmul.f32 %v2971, %v2973
        %v2975 = vadd.f32 %v2971, %v2974
        %vm2976 = vweird.f32 %v2631
        %vm2977 = vweird.f32 %v2971
        %vm2978 = vmor %vm2976, %vm2977
        %v2979 = vsel %vm2978, %v2971, %v2975
        %v2980 = vand.u32 2147483647, %v2631
        %vm2981 = vcmp.eq.f32.partialorder %v2980, 8.507059e+37
        %v2982 = vand.u32 %v2631, 2147483648
        %v2983 = vor.u32 1.1754944e-38, %v2982
        %v2984 = vsel %vm2981, %v2983, %v2979
        %v2985 = vmul.f32 1.0, %v2984
        %v2986 = vrcp.pop %v2632
        %v2987 = vmul.f32 %v2632, %v2986
        %v2988 = vsub.f32 1.0, %v2987
        %v2989 = vmul.f32 %v2986, %v2988
        %v2990 = vadd.f32 %v2986, %v2989
        %vm2991 = vweird.f32 %v2632
        %vm2992 = vweird.f32 %v2986
        %vm2993 = vmor %vm2991, %vm2992
        %v2994 = vsel %vm2993, %v2986, %v2990
        %v2995 = vand.u32 2147483647, %v2632
        %vm2996 = vcmp.eq.f32.partialorder %v2995, 8.507059e+37
        %v2997 = vand.u32 %v2632, 2147483648
        %v2998 = vor.u32 1.1754944e-38, %v2997
        %v2999 = vsel %vm2996, %v2998, %v2994
        %v3000 = vmul.f32 1.0, %v2999
        %v3001 = vrcp.pop %v2633
        %v3002 = vmul.f32 %v2633, %v3001
        %v3003 = vsub.f32 1.0, %v3002
        %v3004 = vmul.f32 %v3001, %v3003
        %v3005 = vadd.f32 %v3001, %v3004
        %vm3006 = vweird.f32 %v2633
        %vm3007 = vweird.f32 %v3001
        %vm3008 = vmor %vm3006, %vm3007
        %v3009 = vsel %vm3008, %v3001, %v3005
        %v3010 = vand.u32 2147483647, %v2633
        %vm3011 = vcmp.eq.f32.partialorder %v3010, 8.507059e+37
        %v3012 = vand.u32 %v2633, 2147483648
        %v3013 = vor.u32 1.1754944e-38, %v3012
        %v3014 = vsel %vm3011, %v3013, %v3009
        %v3015 = vmul.f32 1.0, %v3014
        %v3016 = vrcp.pop %v2634
        %v3017 = vmul.f32 %v2634, %v3016
        %v3018 = vsub.f32 1.0, %v3017
        %v3019 = vmul.f32 %v3016, %v3018
        %v3020 = vadd.f32 %v3016, %v3019
        %vm3021 = vweird.f32 %v2634
        %vm3022 = vweird.f32 %v3016
        %vm3023 = vmor %vm3021, %vm3022
        %v3024 = vsel %vm3023, %v3016, %v3020
        %v3025 = vand.u32 2147483647, %v2634
        %vm3026 = vcmp.eq.f32.partialorder %v3025, 8.507059e+37
        %v3027 = vand.u32 %v2634, 2147483648
        %v3028 = vor.u32 1.1754944e-38, %v3027
        %v3029 = vsel %vm3026, %v3028, %v3024
        %v3030 = vmul.f32 1.0, %v3029
        %v3031 = vrcp.pop %v2635
        %v3032 = vmul.f32 %v2635, %v3031
        %v3033 = vsub.f32 1.0, %v3032
        %v3034 = vmul.f32 %v3031, %v3033
        %v3035 = vadd.f32 %v3031, %v3034
        %vm3036 = vweird.f32 %v2635
        %vm3037 = vweird.f32 %v3031
        %vm3038 = vmor %vm3036, %vm3037
        %v3039 = vsel %vm3038, %v3031, %v3035
        %v3040 = vand.u32 2147483647, %v2635
        %vm3041 = vcmp.eq.f32.partialorder %v3040, 8.507059e+37
        %v3042 = vand.u32 %v2635, 2147483648
        %v3043 = vor.u32 1.1754944e-38, %v3042
        %v3044 = vsel %vm3041, %v3043, %v3039
        %v3045 = vmul.f32 1.0, %v3044
        %v3046 = vrcp.pop %v2636
        %v3047 = vmul.f32 %v2636, %v3046
        %v3048 = vsub.f32 1.0, %v3047
        %v3049 = vmul.f32 %v3046, %v3048
        %v3050 = vadd.f32 %v3046, %v3049
        %vm3051 = vweird.f32 %v2636
        %vm3052 = vweird.f32 %v3046
        %vm3053 = vmor %vm3051, %vm3052
        %v3054 = vsel %vm3053, %v3046, %v3050
        %v3055 = vand.u32 2147483647, %v2636
        %vm3056 = vcmp.eq.f32.partialorder %v3055, 8.507059e+37
        %v3057 = vand.u32 %v2636, 2147483648
        %v3058 = vor.u32 1.1754944e-38, %v3057
        %v3059 = vsel %vm3056, %v3058, %v3054
        %v3060 = vmul.f32 1.0, %v3059
        %v3061 = vrcp.pop %v2637
        %v3062 = vmul.f32 %v2637, %v3061
        %v3063 = vsub.f32 1.0, %v3062
        %v3064 = vmul.f32 %v3061, %v3063
        %v3065 = vadd.f32 %v3061, %v3064
        %vm3066 = vweird.f32 %v2637
        %vm3067 = vweird.f32 %v3061
        %vm3068 = vmor %vm3066, %vm3067
        %v3069 = vsel %vm3068, %v3061, %v3065
        %v3070 = vand.u32 2147483647, %v2637
        %vm3071 = vcmp.eq.f32.partialorder %v3070, 8.507059e+37
        %v3072 = vand.u32 %v2637, 2147483648
        %v3073 = vor.u32 1.1754944e-38, %v3072
        %v3074 = vsel %vm3071, %v3073, %v3069
        %v3075 = vmul.f32 1.0, %v3074
        %v3076 = vrcp.pop %v2638
        %v3077 = vmul.f32 %v2638, %v3076
        %v3078 = vsub.f32 1.0, %v3077
        %v3079 = vmul.f32 %v3076, %v3078
        %v3080 = vadd.f32 %v3076, %v3079
        %vm3081 = vweird.f32 %v2638
        %vm3082 = vweird.f32 %v3076
        %vm3083 = vmor %vm3081, %vm3082
        %v3084 = vsel %vm3083, %v3076, %v3080
        %v3085 = vand.u32 2147483647, %v2638
        %vm3086 = vcmp.eq.f32.partialorder %v3085, 8.507059e+37
        %v3087 = vand.u32 %v2638, 2147483648
        %v3088 = vor.u32 1.1754944e-38, %v3087
        %v3089 = vsel %vm3086, %v3088, %v3084
        %v3090 = vmul.f32 1.0, %v3089
        %v3091 = vrcp.pop %v2639
        %v3092 = vmul.f32 %v2639, %v3091
        %v3093 = vsub.f32 1.0, %v3092
        %v3094 = vmul.f32 %v3091, %v3093
        %v3095 = vadd.f32 %v3091, %v3094
        %vm3096 = vweird.f32 %v2639
        %vm3097 = vweird.f32 %v3091
        %vm3098 = vmor %vm3096, %vm3097
        %v3099 = vsel %vm3098, %v3091, %v3095
        %v3100 = vand.u32 2147483647, %v2639
        %vm3101 = vcmp.eq.f32.partialorder %v3100, 8.507059e+37
        %v3102 = vand.u32 %v2639, 2147483648
        %v3103 = vor.u32 1.1754944e-38, %v3102
        %v3104 = vsel %vm3101, %v3103, %v3099
        %v3105 = vmul.f32 1.0, %v3104
        %v3106 = vrcp.pop %v2640
        %v3107 = vmul.f32 %v2640, %v3106
        %v3108 = vsub.f32 1.0, %v3107
        %v3109 = vmul.f32 %v3106, %v3108
        %v3110 = vadd.f32 %v3106, %v3109
        %vm3111 = vweird.f32 %v2640
        %vm3112 = vweird.f32 %v3106
        %vm3113 = vmor %vm3111, %vm3112
        %v3114 = vsel %vm3113, %v3106, %v3110
        %v3115 = vand.u32 2147483647, %v2640
        %vm3116 = vcmp.eq.f32.partialorder %v3115, 8.507059e+37
        %v3117 = vand.u32 %v2640, 2147483648
        %v3118 = vor.u32 1.1754944e-38, %v3117
        %v3119 = vsel %vm3116, %v3118, %v3114
        %v3120 = vmul.f32 1.0, %v3119
        %v3121 = vmul.f32 %v2481, %v2655
        %v3122 = vmul.f32 %v2482, %v2670
        %v3123 = vmul.f32 %v2483, %v2685
        %v3124 = vmul.f32 %v2484, %v2700
        %v3125 = vmul.f32 %v2485, %v2715
        %v3126 = vmul.f32 %v2486, %v2730
        %v3127 = vmul.f32 %v2487, %v2745
        %v3128 = vmul.f32 %v2488, %v2760
        %v3129 = vmul.f32 %v2489, %v2775
        %v3130 = vmul.f32 %v2490, %v2790
        %v3131 = vmul.f32 %v2491, %v2805
        %v3132 = vmul.f32 %v2492, %v2820
        %v3133 = vmul.f32 %v2493, %v2835
        %v3134 = vmul.f32 %v2494, %v2850
        %v3135 = vmul.f32 %v2495, %v2865
        %v3136 = vmul.f32 %v2496, %v2880
        %v3137 = vmul.f32 %v2497, %v2895
        %v3138 = vmul.f32 %v2498, %v2910
        %v3139 = vmul.f32 %v2499, %v2925
        %v3140 = vmul.f32 %v2500, %v2940
        %v3141 = vmul.f32 %v2501, %v2955
        %v3142 = vmul.f32 %v2502, %v2970
        %v3143 = vmul.f32 %v2503, %v2985
        %v3144 = vmul.f32 %v2504, %v3000
        %v3145 = vmul.f32 %v2505, %v3015
        %v3146 = vmul.f32 %v2506, %v3030
        %v3147 = vmul.f32 %v2507, %v3045
        %v3148 = vmul.f32 %v2508, %v3060
        %v3149 = vmul.f32 %v2509, %v3075
        %v3150 = vmul.f32 %v2510, %v3090
        %v3151 = vmul.f32 %v2511, %v3105
        %v3152 = vmul.f32 %v2512, %v3120
        %v3153 = vpack.c.bf16 %v3122, %v3121
        %v3154 = vpack.c.bf16 %v3124, %v3123
        %v3155 = vpack.c.bf16 %v3126, %v3125
        %v3156 = vpack.c.bf16 %v3128, %v3127
        %v3157 = vpack.c.bf16 %v3130, %v3129
        %v3158 = vpack.c.bf16 %v3132, %v3131
        %v3159 = vpack.c.bf16 %v3134, %v3133
        %v3160 = vpack.c.bf16 %v3136, %v3135
        %v3161 = vpack.c.bf16 %v3138, %v3137
        %v3162 = vpack.c.bf16 %v3140, %v3139
        %v3163 = vpack.c.bf16 %v3142, %v3141
        %v3164 = vpack.c.bf16 %v3144, %v3143
        %v3165 = vpack.c.bf16 %v3146, %v3145
        %v3166 = vpack.c.bf16 %v3148, %v3147
        %v3167 = vpack.c.bf16 %v3150, %v3149
        %v3168 = vpack.c.bf16 %v3152, %v3151
        %v3169 = vld [vmem:[#allocation11] sm:$0xff]
        %v3170 = vld [vmem:[#allocation11 + $0x8] sm:$0xf]
        %v3171 = vld [vmem:[#allocation11 + $0xc] sm:$0xff]
        %v3172 = vld [vmem:[#allocation11 + $0x14] sm:$0xf]
        %v3173 = vld [vmem:[#allocation11 + $0x18] sm:$0xff]
        %v3174 = vld [vmem:[#allocation11 + $0x20] sm:$0xf]
        %v3175 = vld [vmem:[#allocation11 + $0x24] sm:$0xff]
        %v3176 = vld [vmem:[#allocation11 + $0x2c] sm:$0xf]
        %v3177 = vld [vmem:[#allocation11 + $0x30] sm:$0xff]
        %v3178 = vld [vmem:[#allocation11 + $0x38] sm:$0xf]
        %v3179 = vld [vmem:[#allocation11 + $0x3c] sm:$0xff]
        %v3180 = vld [vmem:[#allocation11 + $0x44] sm:$0xf]
        %v3181 = vld [vmem:[#allocation11 + $0x48] sm:$0xff]
        %v3182 = vld [vmem:[#allocation11 + $0x50] sm:$0xf]
        %v3183 = vld [vmem:[#allocation11 + $0x54] sm:$0xff]
        %v3184 = vld [vmem:[#allocation11 + $0x5c] sm:$0xf]
        %v3185 = vld [vmem:[#allocation11 + $0x60] sm:$0xff]
        %v3186 = vld [vmem:[#allocation11 + $0x68] sm:$0xf]
        %v3187 = vld [vmem:[#allocation11 + $0x6c] sm:$0xff]
        %v3188 = vld [vmem:[#allocation11 + $0x74] sm:$0xf]
        %v3189 = vld [vmem:[#allocation11 + $0x78] sm:$0xff]
        %v3190 = vld [vmem:[#allocation11 + $0x80] sm:$0xf]
        %v3191 = vld [vmem:[#allocation11 + $0x84] sm:$0xff]
        %v3192 = vld [vmem:[#allocation11 + $0x8c] sm:$0xf]
        %v3193 = vld [vmem:[#allocation11 + $0x90] sm:$0xff]
        %v3194 = vld [vmem:[#allocation11 + $0x98] sm:$0xf]
        %v3195 = vld [vmem:[#allocation11 + $0x9c] sm:$0xff]
        %v3196 = vld [vmem:[#allocation11 + $0xa4] sm:$0xf]
        %v3197 = vld [vmem:[#allocation11 + $0xa8] sm:$0xff]
        %v3198 = vld [vmem:[#allocation11 + $0xb0] sm:$0xf]
        %v3199 = vld [vmem:[#allocation11 + $0xb4] sm:$0xff]
        %v3200 = vld [vmem:[#allocation11 + $0xbc] sm:$0xf]
        %v3201 = vld [vmem:[%s7] sm:$0x7]
        %v3203 = vperm.slane %v3201, 0
        %v3204 = vperm.slane %v3201, 1
        %v3205 = vperm.slane %v3201, 2
        %v3241 = vunpack.c.l.b16 %v3169
        %v3242 = vunpack.c.h.b16 %v3169
        %v3243 = vunpack.c.l.b16 %v3170
        %v3244 = vunpack.c.l.b16 %v3171
        %v3245 = vunpack.c.h.b16 %v3171
        %v3246 = vunpack.c.l.b16 %v3172
        %v3247 = vunpack.c.l.b16 %v3173
        %v3248 = vunpack.c.h.b16 %v3173
        %v3249 = vunpack.c.l.b16 %v3174
        %v3250 = vunpack.c.l.b16 %v3175
        %v3251 = vunpack.c.h.b16 %v3175
        %v3252 = vunpack.c.l.b16 %v3176
        %v3253 = vunpack.c.l.b16 %v3177
        %v3254 = vunpack.c.h.b16 %v3177
        %v3255 = vunpack.c.l.b16 %v3178
        %v3256 = vunpack.c.l.b16 %v3179
        %v3257 = vunpack.c.h.b16 %v3179
        %v3258 = vunpack.c.l.b16 %v3180
        %v3259 = vunpack.c.l.b16 %v3181
        %v3260 = vunpack.c.h.b16 %v3181
        %v3261 = vunpack.c.l.b16 %v3182
        %v3262 = vunpack.c.l.b16 %v3183
        %v3263 = vunpack.c.h.b16 %v3183
        %v3264 = vunpack.c.l.b16 %v3184
        %v3265 = vunpack.c.l.b16 %v3185
        %v3266 = vunpack.c.h.b16 %v3185
        %v3267 = vunpack.c.l.b16 %v3186
        %v3268 = vunpack.c.l.b16 %v3187
        %v3269 = vunpack.c.h.b16 %v3187
        %v3270 = vunpack.c.l.b16 %v3188
        %v3271 = vunpack.c.l.b16 %v3189
        %v3272 = vunpack.c.h.b16 %v3189
        %v3273 = vunpack.c.l.b16 %v3190
        %v3274 = vunpack.c.l.b16 %v3191
        %v3275 = vunpack.c.h.b16 %v3191
        %v3276 = vunpack.c.l.b16 %v3192
        %v3277 = vunpack.c.l.b16 %v3193
        %v3278 = vunpack.c.h.b16 %v3193
        %v3279 = vunpack.c.l.b16 %v3194
        %v3280 = vunpack.c.l.b16 %v3195
        %v3281 = vunpack.c.h.b16 %v3195
        %v3282 = vunpack.c.l.b16 %v3196
        %v3283 = vunpack.c.l.b16 %v3197
        %v3284 = vunpack.c.h.b16 %v3197
        %v3285 = vunpack.c.l.b16 %v3198
        %v3286 = vunpack.c.l.b16 %v3199
        %v3287 = vunpack.c.h.b16 %v3199
        %v3288 = vunpack.c.l.b16 %v3200
        %v3289 = vpack.c.b16 %v3244, %v3241
        %v3290 = vpack.c.b16 %v3245, %v3242
        %v3291 = vpack.c.b16 %v3246, %v3243
        %v3292 = vpack.c.b16 %v3250, %v3247
        %v3293 = vpack.c.b16 %v3251, %v3248
        %v3294 = vpack.c.b16 %v3252, %v3249
        %v3295 = vpack.c.b16 %v3256, %v3253
        %v3296 = vpack.c.b16 %v3257, %v3254
        %v3297 = vpack.c.b16 %v3258, %v3255
        %v3298 = vpack.c.b16 %v3262, %v3259
        %v3299 = vpack.c.b16 %v3263, %v3260
        %v3300 = vpack.c.b16 %v3264, %v3261
        %v3301 = vpack.c.b16 %v3268, %v3265
        %v3302 = vpack.c.b16 %v3269, %v3266
        %v3303 = vpack.c.b16 %v3270, %v3267
        %v3304 = vpack.c.b16 %v3274, %v3271
        %v3305 = vpack.c.b16 %v3275, %v3272
        %v3306 = vpack.c.b16 %v3276, %v3273
        %v3307 = vpack.c.b16 %v3280, %v3277
        %v3308 = vpack.c.b16 %v3281, %v3278
        %v3309 = vpack.c.b16 %v3282, %v3279
        %v3310 = vpack.c.b16 %v3286, %v3283
        %v3311 = vpack.c.b16 %v3287, %v3284
        %v3312 = vpack.c.b16 %v3288, %v3285
        %3337 = vmatpush.bf16.msra.mxu0 %v3310
        %3338 = vmatpush.bf16.msra.mxu0 %v3307
        %3339 = vmatpush.bf16.msra.mxu0 %v3304
        %3340 = vmatpush.bf16.msra.mxu0 %v3301
        %3341 = vmatpush.bf16.msra.mxu0 %v3298
        %3342 = vmatpush.bf16.msra.mxu0 %v3295
        %3343 = vmatpush.bf16.msra.mxu0 %v3292
        %3344 = vmatpush.bf16.msra.mxu0 %v3289
        %3345 = vmatmul.bf16.gmra.mxu0 %v3153
        %v3346 = vpop.f32.mrf.mxu0
        %v3347 = vadd.f32 %v3203, %v3346
        %v3348 = vpop.f32.mrf.mxu0
        %v3349 = vadd.f32 %v3203, %v3348
        %3350 = vmatmul.bf16.gmra.mxu0 %v3154
        %v3351 = vpop.f32.mrf.mxu0
        %v3352 = vadd.f32 %v3203, %v3351
        %v3353 = vpop.f32.mrf.mxu0
        %v3354 = vadd.f32 %v3203, %v3353
        %3355 = vmatmul.bf16.gmra.mxu0 %v3155
        %v3356 = vpop.f32.mrf.mxu0
        %v3357 = vadd.f32 %v3203, %v3356
        %v3358 = vpop.f32.mrf.mxu0
        %v3359 = vadd.f32 %v3203, %v3358
        %3360 = vmatmul.bf16.gmra.mxu0 %v3156
        %v3361 = vpop.f32.mrf.mxu0
        %v3362 = vadd.f32 %v3203, %v3361
        %v3363 = vpop.f32.mrf.mxu0
        %v3364 = vadd.f32 %v3203, %v3363
        %3365 = vmatmul.bf16.gmra.mxu0 %v3157
        %v3366 = vpop.f32.mrf.mxu0
        %v3367 = vadd.f32 %v3203, %v3366
        %v3368 = vpop.f32.mrf.mxu0
        %v3369 = vadd.f32 %v3203, %v3368
        %3370 = vmatmul.bf16.gmra.mxu0 %v3158
        %v3371 = vpop.f32.mrf.mxu0
        %v3372 = vadd.f32 %v3203, %v3371
        %v3373 = vpop.f32.mrf.mxu0
        %v3374 = vadd.f32 %v3203, %v3373
        %3375 = vmatmul.bf16.gmra.mxu0 %v3159
        %v3376 = vpop.f32.mrf.mxu0
        %v3377 = vadd.f32 %v3203, %v3376
        %v3378 = vpop.f32.mrf.mxu0
        %v3379 = vadd.f32 %v3203, %v3378
        %3380 = vmatmul.bf16.gmra.mxu0 %v3160
        %v3381 = vpop.f32.mrf.mxu0
        %v3382 = vadd.f32 %v3203, %v3381
        %v3383 = vpop.f32.mrf.mxu0
        %v3384 = vadd.f32 %v3203, %v3383
        %3385 = vmatmul.bf16.gmra.mxu0 %v3161
        %v3386 = vpop.f32.mrf.mxu0
        %v3387 = vadd.f32 %v3203, %v3386
        %v3388 = vpop.f32.mrf.mxu0
        %v3389 = vadd.f32 %v3203, %v3388
        %3390 = vmatmul.bf16.gmra.mxu0 %v3162
        %v3391 = vpop.f32.mrf.mxu0
        %v3392 = vadd.f32 %v3203, %v3391
        %v3393 = vpop.f32.mrf.mxu0
        %v3394 = vadd.f32 %v3203, %v3393
        %3395 = vmatmul.bf16.gmra.mxu0 %v3163
        %v3396 = vpop.f32.mrf.mxu0
        %v3397 = vadd.f32 %v3203, %v3396
        %v3398 = vpop.f32.mrf.mxu0
        %v3399 = vadd.f32 %v3203, %v3398
        %3400 = vmatmul.bf16.gmra.mxu0 %v3164
        %v3401 = vpop.f32.mrf.mxu0
        %v3402 = vadd.f32 %v3203, %v3401
        %v3403 = vpop.f32.mrf.mxu0
        %v3404 = vadd.f32 %v3203, %v3403
        %3405 = vmatmul.bf16.gmra.mxu0 %v3165
        %v3406 = vpop.f32.mrf.mxu0
        %v3407 = vadd.f32 %v3203, %v3406
        %v3408 = vpop.f32.mrf.mxu0
        %v3409 = vadd.f32 %v3203, %v3408
        %3410 = vmatmul.bf16.gmra.mxu0 %v3166
        %v3411 = vpop.f32.mrf.mxu0
        %v3412 = vadd.f32 %v3203, %v3411
        %v3413 = vpop.f32.mrf.mxu0
        %v3414 = vadd.f32 %v3203, %v3413
        %3415 = vmatmul.bf16.gmra.mxu0 %v3167
        %v3416 = vpop.f32.mrf.mxu0
        %v3417 = vadd.f32 %v3203, %v3416
        %v3418 = vpop.f32.mrf.mxu0
        %v3419 = vadd.f32 %v3203, %v3418
        %3420 = vmatmul.bf16.gmra.mxu0 %v3168
        %v3421 = vpop.f32.mrf.mxu0
        %v3422 = vadd.f32 %v3203, %v3421
        %v3423 = vpop.f32.mrf.mxu0
        %v3424 = vadd.f32 %v3203, %v3423
        %3425 = vdwg.mxu0
        %3426 = vmatpush.bf16.msra.mxu0 %v3311
        %3427 = vmatpush.bf16.msra.mxu0 %v3308
        %3428 = vmatpush.bf16.msra.mxu0 %v3305
        %3429 = vmatpush.bf16.msra.mxu0 %v3302
        %3430 = vmatpush.bf16.msra.mxu0 %v3299
        %3431 = vmatpush.bf16.msra.mxu0 %v3296
        %3432 = vmatpush.bf16.msra.mxu0 %v3293
        %3433 = vmatpush.bf16.msra.mxu0 %v3290
        %3434 = vmatmul.bf16.gmra.mxu0 %v3153
        %v3435 = vpop.f32.mrf.mxu0
        %v3436 = vadd.f32 %v3204, %v3435
        %v3437 = vpop.f32.mrf.mxu0
        %v3438 = vadd.f32 %v3204, %v3437
        %3439 = vmatmul.bf16.gmra.mxu0 %v3154
        %v3440 = vpop.f32.mrf.mxu0
        %v3441 = vadd.f32 %v3204, %v3440
        %v3442 = vpop.f32.mrf.mxu0
        %v3443 = vadd.f32 %v3204, %v3442
        %3444 = vmatmul.bf16.gmra.mxu0 %v3155
        %v3445 = vpop.f32.mrf.mxu0
        %v3446 = vadd.f32 %v3204, %v3445
        %v3447 = vpop.f32.mrf.mxu0
        %v3448 = vadd.f32 %v3204, %v3447
        %3449 = vmatmul.bf16.gmra.mxu0 %v3156
        %v3450 = vpop.f32.mrf.mxu0
        %v3451 = vadd.f32 %v3204, %v3450
        %v3452 = vpop.f32.mrf.mxu0
        %v3453 = vadd.f32 %v3204, %v3452
        %3454 = vmatmul.bf16.gmra.mxu0 %v3157
        %v3455 = vpop.f32.mrf.mxu0
        %v3456 = vadd.f32 %v3204, %v3455
        %v3457 = vpop.f32.mrf.mxu0
        %v3458 = vadd.f32 %v3204, %v3457
        %3459 = vmatmul.bf16.gmra.mxu0 %v3158
        %v3460 = vpop.f32.mrf.mxu0
        %v3461 = vadd.f32 %v3204, %v3460
        %v3462 = vpop.f32.mrf.mxu0
        %v3463 = vadd.f32 %v3204, %v3462
        %3464 = vmatmul.bf16.gmra.mxu0 %v3159
        %v3465 = vpop.f32.mrf.mxu0
        %v3466 = vadd.f32 %v3204, %v3465
        %v3467 = vpop.f32.mrf.mxu0
        %v3468 = vadd.f32 %v3204, %v3467
        %3469 = vmatmul.bf16.gmra.mxu0 %v3160
        %v3470 = vpop.f32.mrf.mxu0
        %v3471 = vadd.f32 %v3204, %v3470
        %v3472 = vpop.f32.mrf.mxu0
        %v3473 = vadd.f32 %v3204, %v3472
        %3474 = vmatmul.bf16.gmra.mxu0 %v3161
        %v3475 = vpop.f32.mrf.mxu0
        %v3476 = vadd.f32 %v3204, %v3475
        %v3477 = vpop.f32.mrf.mxu0
        %v3478 = vadd.f32 %v3204, %v3477
        %3479 = vmatmul.bf16.gmra.mxu0 %v3162
        %v3480 = vpop.f32.mrf.mxu0
        %v3481 = vadd.f32 %v3204, %v3480
        %v3482 = vpop.f32.mrf.mxu0
        %v3483 = vadd.f32 %v3204, %v3482
        %3484 = vmatmul.bf16.gmra.mxu0 %v3163
        %v3485 = vpop.f32.mrf.mxu0
        %v3486 = vadd.f32 %v3204, %v3485
        %v3487 = vpop.f32.mrf.mxu0
        %v3488 = vadd.f32 %v3204, %v3487
        %3489 = vmatmul.bf16.gmra.mxu0 %v3164
        %v3490 = vpop.f32.mrf.mxu0
        %v3491 = vadd.f32 %v3204, %v3490
        %v3492 = vpop.f32.mrf.mxu0
        %v3493 = vadd.f32 %v3204, %v3492
        %3494 = vmatmul.bf16.gmra.mxu0 %v3165
        %v3495 = vpop.f32.mrf.mxu0
        %v3496 = vadd.f32 %v3204, %v3495
        %v3497 = vpop.f32.mrf.mxu0
        %v3498 = vadd.f32 %v3204, %v3497
        %3499 = vmatmul.bf16.gmra.mxu0 %v3166
        %v3500 = vpop.f32.mrf.mxu0
        %v3501 = vadd.f32 %v3204, %v3500
        %v3502 = vpop.f32.mrf.mxu0
        %v3503 = vadd.f32 %v3204, %v3502
        %3504 = vmatmul.bf16.gmra.mxu0 %v3167
        %v3505 = vpop.f32.mrf.mxu0
        %v3506 = vadd.f32 %v3204, %v3505
        %v3507 = vpop.f32.mrf.mxu0
        %v3508 = vadd.f32 %v3204, %v3507
        %3509 = vmatmul.bf16.gmra.mxu0 %v3168
        %v3510 = vpop.f32.mrf.mxu0
        %v3511 = vadd.f32 %v3204, %v3510
        %v3512 = vpop.f32.mrf.mxu0
        %v3513 = vadd.f32 %v3204, %v3512
        %3514 = vdwg.mxu0
        %3515 = vmatpush.bf16.msra.mxu0 %v3312
        %3516 = vmatpush.bf16.msra.mxu0 %v3309
        %3517 = vmatpush.bf16.msra.mxu0 %v3306
        %3518 = vmatpush.bf16.msra.mxu0 %v3303
        %3519 = vmatpush.bf16.msra.mxu0 %v3300
        %3520 = vmatpush.bf16.msra.mxu0 %v3297
        %3521 = vmatpush.bf16.msra.mxu0 %v3294
        %3522 = vmatpush.bf16.msra.mxu0 %v3291
        %3523 = vmatmul.bf16.gmra.mxu0 %v3153
        %v3524 = vpop.f32.mrf.mxu0
        %v3525 = vadd.f32 %v3205, %v3524
        %v3526 = vpop.f32.mrf.mxu0
        %v3527 = vadd.f32 %v3205, %v3526
        %3528 = vmatmul.bf16.gmra.mxu0 %v3154
        %v3529 = vpop.f32.mrf.mxu0
        %v3530 = vadd.f32 %v3205, %v3529
        %v3531 = vpop.f32.mrf.mxu0
        %v3532 = vadd.f32 %v3205, %v3531
        %3533 = vmatmul.bf16.gmra.mxu0 %v3155
        %v3534 = vpop.f32.mrf.mxu0
        %v3535 = vadd.f32 %v3205, %v3534
        %v3536 = vpop.f32.mrf.mxu0
        %v3537 = vadd.f32 %v3205, %v3536
        %3538 = vmatmul.bf16.gmra.mxu0 %v3156
        %v3539 = vpop.f32.mrf.mxu0
        %v3540 = vadd.f32 %v3205, %v3539
        %v3541 = vpop.f32.mrf.mxu0
        %v3542 = vadd.f32 %v3205, %v3541
        %3543 = vmatmul.bf16.gmra.mxu0 %v3157
        %v3544 = vpop.f32.mrf.mxu0
        %v3545 = vadd.f32 %v3205, %v3544
        %v3546 = vpop.f32.mrf.mxu0
        %v3547 = vadd.f32 %v3205, %v3546
        %3548 = vmatmul.bf16.gmra.mxu0 %v3158
        %v3549 = vpop.f32.mrf.mxu0
        %v3550 = vadd.f32 %v3205, %v3549
        %v3551 = vpop.f32.mrf.mxu0
        %v3552 = vadd.f32 %v3205, %v3551
        %3553 = vmatmul.bf16.gmra.mxu0 %v3159
        %v3554 = vpop.f32.mrf.mxu0
        %v3555 = vadd.f32 %v3205, %v3554
        %v3556 = vpop.f32.mrf.mxu0
        %v3557 = vadd.f32 %v3205, %v3556
        %3558 = vmatmul.bf16.gmra.mxu0 %v3160
        %v3559 = vpop.f32.mrf.mxu0
        %v3560 = vadd.f32 %v3205, %v3559
        %v3561 = vpop.f32.mrf.mxu0
        %v3562 = vadd.f32 %v3205, %v3561
        %3563 = vmatmul.bf16.gmra.mxu0 %v3161
        %v3564 = vpop.f32.mrf.mxu0
        %v3565 = vadd.f32 %v3205, %v3564
        %v3566 = vpop.f32.mrf.mxu0
        %v3567 = vadd.f32 %v3205, %v3566
        %3568 = vmatmul.bf16.gmra.mxu0 %v3162
        %v3569 = vpop.f32.mrf.mxu0
        %v3570 = vadd.f32 %v3205, %v3569
        %v3571 = vpop.f32.mrf.mxu0
        %v3572 = vadd.f32 %v3205, %v3571
        %3573 = vmatmul.bf16.gmra.mxu0 %v3163
        %v3574 = vpop.f32.mrf.mxu0
        %v3575 = vadd.f32 %v3205, %v3574
        %v3576 = vpop.f32.mrf.mxu0
        %v3577 = vadd.f32 %v3205, %v3576
        %3578 = vmatmul.bf16.gmra.mxu0 %v3164
        %v3579 = vpop.f32.mrf.mxu0
        %v3580 = vadd.f32 %v3205, %v3579
        %v3581 = vpop.f32.mrf.mxu0
        %v3582 = vadd.f32 %v3205, %v3581
        %3583 = vmatmul.bf16.gmra.mxu0 %v3165
        %v3584 = vpop.f32.mrf.mxu0
        %v3585 = vadd.f32 %v3205, %v3584
        %v3586 = vpop.f32.mrf.mxu0
        %v3587 = vadd.f32 %v3205, %v3586
        %3588 = vmatmul.bf16.gmra.mxu0 %v3166
        %v3589 = vpop.f32.mrf.mxu0
        %v3590 = vadd.f32 %v3205, %v3589
        %v3591 = vpop.f32.mrf.mxu0
        %v3592 = vadd.f32 %v3205, %v3591
        %3593 = vmatmul.bf16.gmra.mxu0 %v3167
        %v3594 = vpop.f32.mrf.mxu0
        %v3595 = vadd.f32 %v3205, %v3594
        %v3596 = vpop.f32.mrf.mxu0
        %v3597 = vadd.f32 %v3205, %v3596
        %3598 = vmatmul.bf16.gmra.mxu0 %v3168
        %v3599 = vpop.f32.mrf.mxu0
        %v3600 = vadd.f32 %v3205, %v3599
        %v3601 = vpop.f32.mrf.mxu0
        %v3602 = vadd.f32 %v3205, %v3601
        %3603 = vdwg.mxu0
        %v3604 = vmul.f32 %v3347, %v1027
        %v3605 = vmul.f32 %v3349, %v1029
        %v3606 = vmul.f32 %v3352, %v1032
        %v3607 = vmul.f32 %v3354, %v1034
        %v3608 = vmul.f32 %v3357, %v1037
        %v3609 = vmul.f32 %v3359, %v1039
        %v3610 = vmul.f32 %v3362, %v1042
        %v3611 = vmul.f32 %v3364, %v1044
        %v3612 = vmul.f32 %v3367, %v1047
        %v3613 = vmul.f32 %v3369, %v1049
        %v3614 = vmul.f32 %v3372, %v1052
        %v3615 = vmul.f32 %v3374, %v1054
        %v3616 = vmul.f32 %v3377, %v1057
        %v3617 = vmul.f32 %v3379, %v1059
        %v3618 = vmul.f32 %v3382, %v1062
        %v3619 = vmul.f32 %v3384, %v1064
        %v3620 = vmul.f32 %v3387, %v1067
        %v3621 = vmul.f32 %v3389, %v1069
        %v3622 = vmul.f32 %v3392, %v1072
        %v3623 = vmul.f32 %v3394, %v1074
        %v3624 = vmul.f32 %v3397, %v1077
        %v3625 = vmul.f32 %v3399, %v1079
        %v3626 = vmul.f32 %v3402, %v1082
        %v3627 = vmul.f32 %v3404, %v1084
        %v3628 = vmul.f32 %v3407, %v1087
        %v3629 = vmul.f32 %v3409, %v1089
        %v3630 = vmul.f32 %v3412, %v1092
        %v3631 = vmul.f32 %v3414, %v1094
        %v3632 = vmul.f32 %v3417, %v1097
        %v3633 = vmul.f32 %v3419, %v1099
        %v3634 = vmul.f32 %v3422, %v1102
        %v3635 = vmul.f32 %v3424, %v1104
        %v3636 = vmul.f32 %v3347, %v1107
        %v3637 = vmul.f32 %v3349, %v1109
        %v3638 = vmul.f32 %v3352, %v1112
        %v3639 = vmul.f32 %v3354, %v1114
        %v3640 = vmul.f32 %v3357, %v1117
        %v3641 = vmul.f32 %v3359, %v1119
        %v3642 = vmul.f32 %v3362, %v1122
        %v3643 = vmul.f32 %v3364, %v1124
        %v3644 = vmul.f32 %v3367, %v1127
        %v3645 = vmul.f32 %v3369, %v1129
        %v3646 = vmul.f32 %v3372, %v1132
        %v3647 = vmul.f32 %v3374, %v1134
        %v3648 = vmul.f32 %v3377, %v1137
        %v3649 = vmul.f32 %v3379, %v1139
        %v3650 = vmul.f32 %v3382, %v1142
        %v3651 = vmul.f32 %v3384, %v1144
        %v3652 = vmul.f32 %v3387, %v1147
        %v3653 = vmul.f32 %v3389, %v1149
        %v3654 = vmul.f32 %v3392, %v1152
        %v3655 = vmul.f32 %v3394, %v1154
        %v3656 = vmul.f32 %v3397, %v1157
        %v3657 = vmul.f32 %v3399, %v1159
        %v3658 = vmul.f32 %v3402, %v1162
        %v3659 = vmul.f32 %v3404, %v1164
        %v3660 = vmul.f32 %v3407, %v1167
        %v3661 = vmul.f32 %v3409, %v1169
        %v3662 = vmul.f32 %v3412, %v1172
        %v3663 = vmul.f32 %v3414, %v1174
        %v3664 = vmul.f32 %v3417, %v1177
        %v3665 = vmul.f32 %v3419, %v1179
        %v3666 = vmul.f32 %v3422, %v1182
        %v3667 = vmul.f32 %v3424, %v1184
        %v3668 = vmul.f32 %v3347, %v1187
        %v3669 = vmul.f32 %v3349, %v1189
        %v3670 = vmul.f32 %v3352, %v1192
        %v3671 = vmul.f32 %v3354, %v1194
        %v3672 = vmul.f32 %v3357, %v1197
        %v3673 = vmul.f32 %v3359, %v1199
        %v3674 = vmul.f32 %v3362, %v1202
        %v3675 = vmul.f32 %v3364, %v1204
        %v3676 = vmul.f32 %v3367, %v1207
        %v3677 = vmul.f32 %v3369, %v1209
        %v3678 = vmul.f32 %v3372, %v1212
        %v3679 = vmul.f32 %v3374, %v1214
        %v3680 = vmul.f32 %v3377, %v1217
        %v3681 = vmul.f32 %v3379, %v1219
        %v3682 = vmul.f32 %v3382, %v1222
        %v3683 = vmul.f32 %v3384, %v1224
        %v3684 = vmul.f32 %v3387, %v1227
        %v3685 = vmul.f32 %v3389, %v1229
        %v3686 = vmul.f32 %v3392, %v1232
        %v3687 = vmul.f32 %v3394, %v1234
        %v3688 = vmul.f32 %v3397, %v1237
        %v3689 = vmul.f32 %v3399, %v1239
        %v3690 = vmul.f32 %v3402, %v1242
        %v3691 = vmul.f32 %v3404, %v1244
        %v3692 = vmul.f32 %v3407, %v1247
        %v3693 = vmul.f32 %v3409, %v1249
        %v3694 = vmul.f32 %v3412, %v1252
        %v3695 = vmul.f32 %v3414, %v1254
        %v3696 = vmul.f32 %v3417, %v1257
        %v3697 = vmul.f32 %v3419, %v1259
        %v3698 = vmul.f32 %v3422, %v1262
        %v3699 = vmul.f32 %v3424, %v1264
        %v3700 = vmul.f32 %v1027, %v1276
        %v3701 = vmul.f32 %v1029, %v1278
        %v3702 = vmul.f32 %v1032, %v1281
        %v3703 = vmul.f32 %v1034, %v1283
        %v3704 = vmul.f32 %v1037, %v1286
        %v3705 = vmul.f32 %v1039, %v1288
        %v3706 = vmul.f32 %v1042, %v1291
        %v3707 = vmul.f32 %v1044, %v1293
        %v3708 = vmul.f32 %v1047, %v1296
        %v3709 = vmul.f32 %v1049, %v1298
        %v3710 = vmul.f32 %v1052, %v1301
        %v3711 = vmul.f32 %v1054, %v1303
        %v3712 = vmul.f32 %v1057, %v1306
        %v3713 = vmul.f32 %v1059, %v1308
        %v3714 = vmul.f32 %v1062, %v1311
        %v3715 = vmul.f32 %v1064, %v1313
        %v3716 = vmul.f32 %v1067, %v1316
        %v3717 = vmul.f32 %v1069, %v1318
        %v3718 = vmul.f32 %v1072, %v1321
        %v3719 = vmul.f32 %v1074, %v1323
        %v3720 = vmul.f32 %v1077, %v1326
        %v3721 = vmul.f32 %v1079, %v1328
        %v3722 = vmul.f32 %v1082, %v1331
        %v3723 = vmul.f32 %v1084, %v1333
        %v3724 = vmul.f32 %v1087, %v1336
        %v3725 = vmul.f32 %v1089, %v1338
        %v3726 = vmul.f32 %v1092, %v1341
        %v3727 = vmul.f32 %v1094, %v1343
        %v3728 = vmul.f32 %v1097, %v1346
        %v3729 = vmul.f32 %v1099, %v1348
        %v3730 = vmul.f32 %v1102, %v1351
        %v3731 = vmul.f32 %v1104, %v1353
        %v3732 = vmul.f32 %v1107, %v1356
        %v3733 = vmul.f32 %v1109, %v1358
        %v3734 = vmul.f32 %v1112, %v1361
        %v3735 = vmul.f32 %v1114, %v1363
        %v3736 = vmul.f32 %v1117, %v1366
        %v3737 = vmul.f32 %v1119, %v1368
        %v3738 = vmul.f32 %v1122, %v1371
        %v3739 = vmul.f32 %v1124, %v1373
        %v3740 = vmul.f32 %v1127, %v1376
        %v3741 = vmul.f32 %v1129, %v1378
        %v3742 = vmul.f32 %v1132, %v1381
        %v3743 = vmul.f32 %v1134, %v1383
        %v3744 = vmul.f32 %v1137, %v1386
        %v3745 = vmul.f32 %v1139, %v1388
        %v3746 = vmul.f32 %v1142, %v1391
        %v3747 = vmul.f32 %v1144, %v1393
        %v3748 = vmul.f32 %v1147, %v1396
        %v3749 = vmul.f32 %v1149, %v1398
        %v3750 = vmul.f32 %v1152, %v1401
        %v3751 = vmul.f32 %v1154, %v1403
        %v3752 = vmul.f32 %v1157, %v1406
        %v3753 = vmul.f32 %v1159, %v1408
        %v3754 = vmul.f32 %v1162, %v1411
        %v3755 = vmul.f32 %v1164, %v1413
        %v3756 = vmul.f32 %v1167, %v1416
        %v3757 = vmul.f32 %v1169, %v1418
        %v3758 = vmul.f32 %v1172, %v1421
        %v3759 = vmul.f32 %v1174, %v1423
        %v3760 = vmul.f32 %v1177, %v1426
        %v3761 = vmul.f32 %v1179, %v1428
        %v3762 = vmul.f32 %v1182, %v1431
        %v3763 = vmul.f32 %v1184, %v1433
        %v3764 = vmul.f32 %v1187, %v1436
        %v3765 = vmul.f32 %v1189, %v1438
        %v3766 = vmul.f32 %v1192, %v1441
        %v3767 = vmul.f32 %v1194, %v1443
        %v3768 = vmul.f32 %v1197, %v1446
        %v3769 = vmul.f32 %v1199, %v1448
        %v3770 = vmul.f32 %v1202, %v1451
        %v3771 = vmul.f32 %v1204, %v1453
        %v3772 = vmul.f32 %v1207, %v1456
        %v3773 = vmul.f32 %v1209, %v1458
        %v3774 = vmul.f32 %v1212, %v1461
        %v3775 = vmul.f32 %v1214, %v1463
        %v3776 = vmul.f32 %v1217, %v1466
        %v3777 = vmul.f32 %v1219, %v1468
        %v3778 = vmul.f32 %v1222, %v1471
        %v3779 = vmul.f32 %v1224, %v1473
        %v3780 = vmul.f32 %v1227, %v1476
        %v3781 = vmul.f32 %v1229, %v1478
        %v3782 = vmul.f32 %v1232, %v1481
        %v3783 = vmul.f32 %v1234, %v1483
        %v3784 = vmul.f32 %v1237, %v1486
        %v3785 = vmul.f32 %v1239, %v1488
        %v3786 = vmul.f32 %v1242, %v1491
        %v3787 = vmul.f32 %v1244, %v1493
        %v3788 = vmul.f32 %v1247, %v1496
        %v3789 = vmul.f32 %v1249, %v1498
        %v3790 = vmul.f32 %v1252, %v1501
        %v3791 = vmul.f32 %v1254, %v1503
        %v3792 = vmul.f32 %v1257, %v1506
        %v3793 = vmul.f32 %v1259, %v1508
        %v3794 = vmul.f32 %v1262, %v1511
        %v3795 = vmul.f32 %v1264, %v1513
        %v3796 = vadd.f32 %v3700, %v3732
        %v3797 = vadd.f32 %v3796, %v3764
        %v3798 = vadd.f32 %v3701, %v3733
        %v3799 = vadd.f32 %v3798, %v3765
        %v3800 = vadd.f32 %v3702, %v3734
        %v3801 = vadd.f32 %v3800, %v3766
        %v3802 = vadd.f32 %v3703, %v3735
        %v3803 = vadd.f32 %v3802, %v3767
        %v3804 = vadd.f32 %v3704, %v3736
        %v3805 = vadd.f32 %v3804, %v3768
        %v3806 = vadd.f32 %v3705, %v3737
        %v3807 = vadd.f32 %v3806, %v3769
        %v3808 = vadd.f32 %v3706, %v3738
        %v3809 = vadd.f32 %v3808, %v3770
        %v3810 = vadd.f32 %v3707, %v3739
        %v3811 = vadd.f32 %v3810, %v3771
        %v3812 = vadd.f32 %v3708, %v3740
        %v3813 = vadd.f32 %v3812, %v3772
        %v3814 = vadd.f32 %v3709, %v3741
        %v3815 = vadd.f32 %v3814, %v3773
        %v3816 = vadd.f32 %v3710, %v3742
        %v3817 = vadd.f32 %v3816, %v3774
        %v3818 = vadd.f32 %v3711, %v3743
        %v3819 = vadd.f32 %v3818, %v3775
        %v3820 = vadd.f32 %v3712, %v3744
        %v3821 = vadd.f32 %v3820, %v3776
        %v3822 = vadd.f32 %v3713, %v3745
        %v3823 = vadd.f32 %v3822, %v3777
        %v3824 = vadd.f32 %v3714, %v3746
        %v3825 = vadd.f32 %v3824, %v3778
        %v3826 = vadd.f32 %v3715, %v3747
        %v3827 = vadd.f32 %v3826, %v3779
        %v3828 = vadd.f32 %v3716, %v3748
        %v3829 = vadd.f32 %v3828, %v3780
        %v3830 = vadd.f32 %v3717, %v3749
        %v3831 = vadd.f32 %v3830, %v3781
        %v3832 = vadd.f32 %v3718, %v3750
        %v3833 = vadd.f32 %v3832, %v3782
        %v3834 = vadd.f32 %v3719, %v3751
        %v3835 = vadd.f32 %v3834, %v3783
        %v3836 = vadd.f32 %v3720, %v3752
        %v3837 = vadd.f32 %v3836, %v3784
        %v3838 = vadd.f32 %v3721, %v3753
        %v3839 = vadd.f32 %v3838, %v3785
        %v3840 = vadd.f32 %v3722, %v3754
        %v3841 = vadd.f32 %v3840, %v3786
        %v3842 = vadd.f32 %v3723, %v3755
        %v3843 = vadd.f32 %v3842, %v3787
        %v3844 = vadd.f32 %v3724, %v3756
        %v3845 = vadd.f32 %v3844, %v3788
        %v3846 = vadd.f32 %v3725, %v3757
        %v3847 = vadd.f32 %v3846, %v3789
        %v3848 = vadd.f32 %v3726, %v3758
        %v3849 = vadd.f32 %v3848, %v3790
        %v3850 = vadd.f32 %v3727, %v3759
        %v3851 = vadd.f32 %v3850, %v3791
        %v3852 = vadd.f32 %v3728, %v3760
        %v3853 = vadd.f32 %v3852, %v3792
        %v3854 = vadd.f32 %v3729, %v3761
        %v3855 = vadd.f32 %v3854, %v3793
        %v3856 = vadd.f32 %v3730, %v3762
        %v3857 = vadd.f32 %v3856, %v3794
        %v3858 = vadd.f32 %v3731, %v3763
        %v3859 = vadd.f32 %v3858, %v3795
        %v3860 = vmul.f32 %v3436, %v3797
        %v3861 = vmul.f32 %v3438, %v3799
        %v3862 = vmul.f32 %v3441, %v3801
        %v3863 = vmul.f32 %v3443, %v3803
        %v3864 = vmul.f32 %v3446, %v3805
        %v3865 = vmul.f32 %v3448, %v3807
        %v3866 = vmul.f32 %v3451, %v3809
        %v3867 = vmul.f32 %v3453, %v3811
        %v3868 = vmul.f32 %v3456, %v3813
        %v3869 = vmul.f32 %v3458, %v3815
        %v3870 = vmul.f32 %v3461, %v3817
        %v3871 = vmul.f32 %v3463, %v3819
        %v3872 = vmul.f32 %v3466, %v3821
        %v3873 = vmul.f32 %v3468, %v3823
        %v3874 = vmul.f32 %v3471, %v3825
        %v3875 = vmul.f32 %v3473, %v3827
        %v3876 = vmul.f32 %v3476, %v3829
        %v3877 = vmul.f32 %v3478, %v3831
        %v3878 = vmul.f32 %v3481, %v3833
        %v3879 = vmul.f32 %v3483, %v3835
        %v3880 = vmul.f32 %v3486, %v3837
        %v3881 = vmul.f32 %v3488, %v3839
        %v3882 = vmul.f32 %v3491, %v3841
        %v3883 = vmul.f32 %v3493, %v3843
        %v3884 = vmul.f32 %v3496, %v3845
        %v3885 = vmul.f32 %v3498, %v3847
        %v3886 = vmul.f32 %v3501, %v3849
        %v3887 = vmul.f32 %v3503, %v3851
        %v3888 = vmul.f32 %v3506, %v3853
        %v3889 = vmul.f32 %v3508, %v3855
        %v3890 = vmul.f32 %v3511, %v3857
        %v3891 = vmul.f32 %v3513, %v3859
        %v3892 = vadd.f32 %v3860, %v3525
        %v3893 = vadd.f32 %v3861, %v3527
        %v3894 = vadd.f32 %v3862, %v3530
        %v3895 = vadd.f32 %v3863, %v3532
        %v3896 = vadd.f32 %v3864, %v3535
        %v3897 = vadd.f32 %v3865, %v3537
        %v3898 = vadd.f32 %v3866, %v3540
        %v3899 = vadd.f32 %v3867, %v3542
        %v3900 = vadd.f32 %v3868, %v3545
        %v3901 = vadd.f32 %v3869, %v3547
        %v3902 = vadd.f32 %v3870, %v3550
        %v3903 = vadd.f32 %v3871, %v3552
        %v3904 = vadd.f32 %v3872, %v3555
        %v3905 = vadd.f32 %v3873, %v3557
        %v3906 = vadd.f32 %v3874, %v3560
        %v3907 = vadd.f32 %v3875, %v3562
        %v3908 = vadd.f32 %v3876, %v3565
        %v3909 = vadd.f32 %v3877, %v3567
        %v3910 = vadd.f32 %v3878, %v3570
        %v3911 = vadd.f32 %v3879, %v3572
        %v3912 = vadd.f32 %v3880, %v3575
        %v3913 = vadd.f32 %v3881, %v3577
        %v3914 = vadd.f32 %v3882, %v3580
        %v3915 = vadd.f32 %v3883, %v3582
        %v3916 = vadd.f32 %v3884, %v3585
        %v3917 = vadd.f32 %v3885, %v3587
        %v3918 = vadd.f32 %v3886, %v3590
        %v3919 = vadd.f32 %v3887, %v3592
        %v3920 = vadd.f32 %v3888, %v3595
        %v3921 = vadd.f32 %v3889, %v3597
        %v3922 = vadd.f32 %v3890, %v3600
        %v3923 = vadd.f32 %v3891, %v3602
        %v3924 = vunpack.c.l.bf16 %v499
        %v3925 = vunpack.c.l.bf16 %v500
        %v3926 = vunpack.c.l.bf16 %v501
        %v3927 = vunpack.c.l.bf16 %v502
        %v3928 = vunpack.c.l.bf16 %v503
        %v3929 = vunpack.c.l.bf16 %v504
        %v3930 = vunpack.c.l.bf16 %v505
        %v3931 = vunpack.c.l.bf16 %v506
        %v3932 = vunpack.c.l.bf16 %v507
        %v3933 = vunpack.c.l.bf16 %v508
        %v3934 = vunpack.c.l.bf16 %v509
        %v3935 = vunpack.c.l.bf16 %v510
        %v3936 = vunpack.c.l.bf16 %v511
        %v3937 = vunpack.c.l.bf16 %v512
        %v3938 = vunpack.c.l.bf16 %v513
        %v3939 = vunpack.c.l.bf16 %v514
        %v3940 = vunpack.c.l.bf16 %v515
        %v3941 = vunpack.c.l.bf16 %v516
        %v3942 = vunpack.c.l.bf16 %v517
        %v3943 = vunpack.c.l.bf16 %v518
        %v3944 = vunpack.c.l.bf16 %v519
        %v3945 = vunpack.c.l.bf16 %v520
        %v3946 = vunpack.c.l.bf16 %v521
        %v3947 = vunpack.c.l.bf16 %v522
        %v3948 = vunpack.c.l.bf16 %v523
        %v3949 = vunpack.c.l.bf16 %v524
        %v3950 = vunpack.c.l.bf16 %v525
        %v3951 = vunpack.c.l.bf16 %v526
        %v3952 = vunpack.c.l.bf16 %v527
        %v3953 = vunpack.c.l.bf16 %v528
        %v3954 = vunpack.c.l.bf16 %v529
        %v3955 = vunpack.c.l.bf16 %v530
        %v3956 = vadd.f32 %v3924, %v3892
        %v3957 = vadd.f32 %v3925, %v3893
        %v3958 = vadd.f32 %v3926, %v3894
        %v3959 = vadd.f32 %v3927, %v3895
        %v3960 = vadd.f32 %v3928, %v3896
        %v3961 = vadd.f32 %v3929, %v3897
        %v3962 = vadd.f32 %v3930, %v3898
        %v3963 = vadd.f32 %v3931, %v3899
        %v3964 = vadd.f32 %v3932, %v3900
        %v3965 = vadd.f32 %v3933, %v3901
        %v3966 = vadd.f32 %v3934, %v3902
        %v3967 = vadd.f32 %v3935, %v3903
        %v3968 = vadd.f32 %v3936, %v3904
        %v3969 = vadd.f32 %v3937, %v3905
        %v3970 = vadd.f32 %v3938, %v3906
        %v3971 = vadd.f32 %v3939, %v3907
        %v3972 = vadd.f32 %v3940, %v3908
        %v3973 = vadd.f32 %v3941, %v3909
        %v3974 = vadd.f32 %v3942, %v3910
        %v3975 = vadd.f32 %v3943, %v3911
        %v3976 = vadd.f32 %v3944, %v3912
        %v3977 = vadd.f32 %v3945, %v3913
        %v3978 = vadd.f32 %v3946, %v3914
        %v3979 = vadd.f32 %v3947, %v3915
        %v3980 = vadd.f32 %v3948, %v3916
        %v3981 = vadd.f32 %v3949, %v3917
        %v3982 = vadd.f32 %v3950, %v3918
        %v3983 = vadd.f32 %v3951, %v3919
        %v3984 = vadd.f32 %v3952, %v3920
        %v3985 = vadd.f32 %v3953, %v3921
        %v3986 = vadd.f32 %v3954, %v3922
        %v3987 = vadd.f32 %v3955, %v3923
        %v3988 = vpack.c.bf16 %v3956, %v3956
        %v3989 = vpack.c.bf16 %v3957, %v3957
        %v3990 = vpack.c.bf16 %v3958, %v3958
        %v3991 = vpack.c.bf16 %v3959, %v3959
        %v3992 = vpack.c.bf16 %v3960, %v3960
        %v3993 = vpack.c.bf16 %v3961, %v3961
        %v3994 = vpack.c.bf16 %v3962, %v3962
        %v3995 = vpack.c.bf16 %v3963, %v3963
        %v3996 = vpack.c.bf16 %v3964, %v3964
        %v3997 = vpack.c.bf16 %v3965, %v3965
        %v3998 = vpack.c.bf16 %v3966, %v3966
        %v3999 = vpack.c.bf16 %v3967, %v3967
        %v4000 = vpack.c.bf16 %v3968, %v3968
        %v4001 = vpack.c.bf16 %v3969, %v3969
        %v4002 = vpack.c.bf16 %v3970, %v3970
        %v4003 = vpack.c.bf16 %v3971, %v3971
        %v4004 = vpack.c.bf16 %v3972, %v3972
        %v4005 = vpack.c.bf16 %v3973, %v3973
        %v4006 = vpack.c.bf16 %v3974, %v3974
        %v4007 = vpack.c.bf16 %v3975, %v3975
        %v4008 = vpack.c.bf16 %v3976, %v3976
        %v4009 = vpack.c.bf16 %v3977, %v3977
        %v4010 = vpack.c.bf16 %v3978, %v3978
        %v4011 = vpack.c.bf16 %v3979, %v3979
        %v4012 = vpack.c.bf16 %v3980, %v3980
        %v4013 = vpack.c.bf16 %v3981, %v3981
        %v4014 = vpack.c.bf16 %v3982, %v3982
        %v4015 = vpack.c.bf16 %v3983, %v3983
        %v4016 = vpack.c.bf16 %v3984, %v3984
        %v4017 = vpack.c.bf16 %v3985, %v3985
        %v4018 = vpack.c.bf16 %v3986, %v3986
        %v4019 = vpack.c.bf16 %v3987, %v3987
        %4020 = vst [vmem:[%s487] sm:$0xf] %v3988
        %4021 = vst [vmem:[%s487 + $0x4] sm:$0xf] %v3989
        %4022 = vst [vmem:[%s487 + $0x8] sm:$0xf] %v3990
        %4023 = vst [vmem:[%s487 + $0xc] sm:$0xf] %v3991
        %4024 = vst [vmem:[%s487 + $0x10] sm:$0xf] %v3992
        %4025 = vst [vmem:[%s487 + $0x14] sm:$0xf] %v3993
        %4026 = vst [vmem:[%s487 + $0x18] sm:$0xf] %v3994
        %4027 = vst [vmem:[%s487 + $0x1c] sm:$0xf] %v3995
        %4028 = vst [vmem:[%s487 + $0x20] sm:$0xf] %v3996
        %4029 = vst [vmem:[%s487 + $0x24] sm:$0xf] %v3997
        %4030 = vst [vmem:[%s487 + $0x28] sm:$0xf] %v3998
        %4031 = vst [vmem:[%s487 + $0x2c] sm:$0xf] %v3999
        %4032 = vst [vmem:[%s487 + $0x30] sm:$0xf] %v4000
        %4033 = vst [vmem:[%s487 + $0x34] sm:$0xf] %v4001
        %4034 = vst [vmem:[%s487 + $0x38] sm:$0xf] %v4002
        %4035 = vst [vmem:[%s487 + $0x3c] sm:$0xf] %v4003
        %4036 = vst [vmem:[%s487 + $0x40] sm:$0xf] %v4004
        %4037 = vst [vmem:[%s487 + $0x44] sm:$0xf] %v4005
        %4038 = vst [vmem:[%s487 + $0x48] sm:$0xf] %v4006
        %4039 = vst [vmem:[%s487 + $0x4c] sm:$0xf] %v4007
        %4040 = vst [vmem:[%s487 + $0x50] sm:$0xf] %v4008
        %4041 = vst [vmem:[%s487 + $0x54] sm:$0xf] %v4009
        %4042 = vst [vmem:[%s487 + $0x58] sm:$0xf] %v4010
        %4043 = vst [vmem:[%s487 + $0x5c] sm:$0xf] %v4011
        %4044 = vst [vmem:[%s487 + $0x60] sm:$0xf] %v4012
        %4045 = vst [vmem:[%s487 + $0x64] sm:$0xf] %v4013
        %4046 = vst [vmem:[%s487 + $0x68] sm:$0xf] %v4014
        %4047 = vst [vmem:[%s487 + $0x6c] sm:$0xf] %v4015
        %4048 = vst [vmem:[%s487 + $0x70] sm:$0xf] %v4016
        %4049 = vst [vmem:[%s487 + $0x74] sm:$0xf] %v4017
        %4050 = vst [vmem:[%s487 + $0x78] sm:$0xf] %v4018
        %4051 = vst [vmem:[%s487 + $0x7c] sm:$0xf] %v4019
        %v4052 = vunpack.c.l.bf16 %v531
        %v4053 = vunpack.c.l.bf16 %v532
        %v4054 = vunpack.c.l.bf16 %v533
        %v4055 = vunpack.c.l.bf16 %v534
        %v4056 = vunpack.c.l.bf16 %v535
        %v4057 = vunpack.c.l.bf16 %v536
        %v4058 = vunpack.c.l.bf16 %v537
        %v4059 = vunpack.c.l.bf16 %v538
        %v4060 = vunpack.c.l.bf16 %v539
        %v4061 = vunpack.c.l.bf16 %v540
        %v4062 = vunpack.c.l.bf16 %v541
        %v4063 = vunpack.c.l.bf16 %v542
        %v4064 = vunpack.c.l.bf16 %v543
        %v4065 = vunpack.c.l.bf16 %v544
        %v4066 = vunpack.c.l.bf16 %v545
        %v4067 = vunpack.c.l.bf16 %v546
        %v4068 = vunpack.c.l.bf16 %v547
        %v4069 = vunpack.c.l.bf16 %v548
        %v4070 = vunpack.c.l.bf16 %v549
        %v4071 = vunpack.c.l.bf16 %v550
        %v4072 = vunpack.c.l.bf16 %v551
        %v4073 = vunpack.c.l.bf16 %v552
        %v4074 = vunpack.c.l.bf16 %v553
        %v4075 = vunpack.c.l.bf16 %v554
        %v4076 = vunpack.c.l.bf16 %v555
        %v4077 = vunpack.c.l.bf16 %v556
        %v4078 = vunpack.c.l.bf16 %v557
        %v4079 = vunpack.c.l.bf16 %v558
        %v4080 = vunpack.c.l.bf16 %v559
        %v4081 = vunpack.c.l.bf16 %v560
        %v4082 = vunpack.c.l.bf16 %v561
        %v4083 = vunpack.c.l.bf16 %v562
        %v4084 = vunpack.c.l.bf16 %v563
        %v4085 = vunpack.c.l.bf16 %v564
        %v4086 = vunpack.c.l.bf16 %v565
        %v4087 = vunpack.c.l.bf16 %v566
        %v4088 = vunpack.c.l.bf16 %v567
        %v4089 = vunpack.c.l.bf16 %v568
        %v4090 = vunpack.c.l.bf16 %v569
        %v4091 = vunpack.c.l.bf16 %v570
        %v4092 = vunpack.c.l.bf16 %v571
        %v4093 = vunpack.c.l.bf16 %v572
        %v4094 = vunpack.c.l.bf16 %v573
        %v4095 = vunpack.c.l.bf16 %v574
        %v4096 = vunpack.c.l.bf16 %v575
        %v4097 = vunpack.c.l.bf16 %v576
        %v4098 = vunpack.c.l.bf16 %v577
        %v4099 = vunpack.c.l.bf16 %v578
        %v4100 = vunpack.c.l.bf16 %v579
        %v4101 = vunpack.c.l.bf16 %v580
        %v4102 = vunpack.c.l.bf16 %v581
        %v4103 = vunpack.c.l.bf16 %v582
        %v4104 = vunpack.c.l.bf16 %v583
        %v4105 = vunpack.c.l.bf16 %v584
        %v4106 = vunpack.c.l.bf16 %v585
        %v4107 = vunpack.c.l.bf16 %v586
        %v4108 = vunpack.c.l.bf16 %v587
        %v4109 = vunpack.c.l.bf16 %v588
        %v4110 = vunpack.c.l.bf16 %v589
        %v4111 = vunpack.c.l.bf16 %v590
        %v4112 = vunpack.c.l.bf16 %v591
        %v4113 = vunpack.c.l.bf16 %v592
        %v4114 = vunpack.c.l.bf16 %v593
        %v4115 = vunpack.c.l.bf16 %v594
        %v4116 = vunpack.c.l.bf16 %v595
        %v4117 = vunpack.c.l.bf16 %v596
        %v4118 = vunpack.c.l.bf16 %v597
        %v4119 = vunpack.c.l.bf16 %v598
        %v4120 = vunpack.c.l.bf16 %v599
        %v4121 = vunpack.c.l.bf16 %v600
        %v4122 = vunpack.c.l.bf16 %v601
        %v4123 = vunpack.c.l.bf16 %v602
        %v4124 = vunpack.c.l.bf16 %v603
        %v4125 = vunpack.c.l.bf16 %v604
        %v4126 = vunpack.c.l.bf16 %v605
        %v4127 = vunpack.c.l.bf16 %v606
        %v4128 = vunpack.c.l.bf16 %v607
        %v4129 = vunpack.c.l.bf16 %v608
        %v4130 = vunpack.c.l.bf16 %v609
        %v4131 = vunpack.c.l.bf16 %v610
        %v4132 = vunpack.c.l.bf16 %v611
        %v4133 = vunpack.c.l.bf16 %v612
        %v4134 = vunpack.c.l.bf16 %v613
        %v4135 = vunpack.c.l.bf16 %v614
        %v4136 = vunpack.c.l.bf16 %v615
        %v4137 = vunpack.c.l.bf16 %v616
        %v4138 = vunpack.c.l.bf16 %v617
        %v4139 = vunpack.c.l.bf16 %v618
        %v4140 = vunpack.c.l.bf16 %v619
        %v4141 = vunpack.c.l.bf16 %v620
        %v4142 = vunpack.c.l.bf16 %v621
        %v4143 = vunpack.c.l.bf16 %v622
        %v4144 = vunpack.c.l.bf16 %v623
        %v4145 = vunpack.c.l.bf16 %v624
        %v4146 = vunpack.c.l.bf16 %v625
        %v4147 = vunpack.c.l.bf16 %v626
        %v4148 = vadd.f32 %v4052, %v3604
        %v4149 = vadd.f32 %v4053, %v3605
        %v4150 = vadd.f32 %v4054, %v3606
        %v4151 = vadd.f32 %v4055, %v3607
        %v4152 = vadd.f32 %v4056, %v3608
        %v4153 = vadd.f32 %v4057, %v3609
        %v4154 = vadd.f32 %v4058, %v3610
        %v4155 = vadd.f32 %v4059, %v3611
        %v4156 = vadd.f32 %v4060, %v3612
        %v4157 = vadd.f32 %v4061, %v3613
        %v4158 = vadd.f32 %v4062, %v3614
        %v4159 = vadd.f32 %v4063, %v3615
        %v4160 = vadd.f32 %v4064, %v3616
        %v4161 = vadd.f32 %v4065, %v3617
        %v4162 = vadd.f32 %v4066, %v3618
        %v4163 = vadd.f32 %v4067, %v3619
        %v4164 = vadd.f32 %v4068, %v3620
        %v4165 = vadd.f32 %v4069, %v3621
        %v4166 = vadd.f32 %v4070, %v3622
        %v4167 = vadd.f32 %v4071, %v3623
        %v4168 = vadd.f32 %v4072, %v3624
        %v4169 = vadd.f32 %v4073, %v3625
        %v4170 = vadd.f32 %v4074, %v3626
        %v4171 = vadd.f32 %v4075, %v3627
        %v4172 = vadd.f32 %v4076, %v3628
        %v4173 = vadd.f32 %v4077, %v3629
        %v4174 = vadd.f32 %v4078, %v3630
        %v4175 = vadd.f32 %v4079, %v3631
        %v4176 = vadd.f32 %v4080, %v3632
        %v4177 = vadd.f32 %v4081, %v3633
        %v4178 = vadd.f32 %v4082, %v3634
        %v4179 = vadd.f32 %v4083, %v3635
        %v4180 = vadd.f32 %v4084, %v3636
        %v4181 = vadd.f32 %v4085, %v3637
        %v4182 = vadd.f32 %v4086, %v3638
        %v4183 = vadd.f32 %v4087, %v3639
        %v4184 = vadd.f32 %v4088, %v3640
        %v4185 = vadd.f32 %v4089, %v3641
        %v4186 = vadd.f32 %v4090, %v3642
        %v4187 = vadd.f32 %v4091, %v3643
        %v4188 = vadd.f32 %v4092, %v3644
        %v4189 = vadd.f32 %v4093, %v3645
        %v4190 = vadd.f32 %v4094, %v3646
        %v4191 = vadd.f32 %v4095, %v3647
        %v4192 = vadd.f32 %v4096, %v3648
        %v4193 = vadd.f32 %v4097, %v3649
        %v4194 = vadd.f32 %v4098, %v3650
        %v4195 = vadd.f32 %v4099, %v3651
        %v4196 = vadd.f32 %v4100, %v3652
        %v4197 = vadd.f32 %v4101, %v3653
        %v4198 = vadd.f32 %v4102, %v3654
        %v4199 = vadd.f32 %v4103, %v3655
        %v4200 = vadd.f32 %v4104, %v3656
        %v4201 = vadd.f32 %v4105, %v3657
        %v4202 = vadd.f32 %v4106, %v3658
        %v4203 = vadd.f32 %v4107, %v3659
        %v4204 = vadd.f32 %v4108, %v3660
        %v4205 = vadd.f32 %v4109, %v3661
        %v4206 = vadd.f32 %v4110, %v3662
        %v4207 = vadd.f32 %v4111, %v3663
        %v4208 = vadd.f32 %v4112, %v3664
        %v4209 = vadd.f32 %v4113, %v3665
        %v4210 = vadd.f32 %v4114, %v3666
        %v4211 = vadd.f32 %v4115, %v3667
        %v4212 = vadd.f32 %v4116, %v3668
        %v4213 = vadd.f32 %v4117, %v3669
        %v4214 = vadd.f32 %v4118, %v3670
        %v4215 = vadd.f32 %v4119, %v3671
        %v4216 = vadd.f32 %v4120, %v3672
        %v4217 = vadd.f32 %v4121, %v3673
        %v4218 = vadd.f32 %v4122, %v3674
        %v4219 = vadd.f32 %v4123, %v3675
        %v4220 = vadd.f32 %v4124, %v3676
        %v4221 = vadd.f32 %v4125, %v3677
        %v4222 = vadd.f32 %v4126, %v3678
        %v4223 = vadd.f32 %v4127, %v3679
        %v4224 = vadd.f32 %v4128, %v3680
        %v4225 = vadd.f32 %v4129, %v3681
        %v4226 = vadd.f32 %v4130, %v3682
        %v4227 = vadd.f32 %v4131, %v3683
        %v4228 = vadd.f32 %v4132, %v3684
        %v4229 = vadd.f32 %v4133, %v3685
        %v4230 = vadd.f32 %v4134, %v3686
        %v4231 = vadd.f32 %v4135, %v3687
        %v4232 = vadd.f32 %v4136, %v3688
        %v4233 = vadd.f32 %v4137, %v3689
        %v4234 = vadd.f32 %v4138, %v3690
        %v4235 = vadd.f32 %v4139, %v3691
        %v4236 = vadd.f32 %v4140, %v3692
        %v4237 = vadd.f32 %v4141, %v3693
        %v4238 = vadd.f32 %v4142, %v3694
        %v4239 = vadd.f32 %v4143, %v3695
        %v4240 = vadd.f32 %v4144, %v3696
        %v4241 = vadd.f32 %v4145, %v3697
        %v4242 = vadd.f32 %v4146, %v3698
        %v4243 = vadd.f32 %v4147, %v3699
        %v4244 = vpack.c.bf16 %v4148, %v4148
        %v4245 = vpack.c.bf16 %v4149, %v4149
        %v4246 = vpack.c.bf16 %v4150, %v4150
        %v4247 = vpack.c.bf16 %v4151, %v4151
        %v4248 = vpack.c.bf16 %v4152, %v4152
        %v4249 = vpack.c.bf16 %v4153, %v4153
        %v4250 = vpack.c.bf16 %v4154, %v4154
        %v4251 = vpack.c.bf16 %v4155, %v4155
        %v4252 = vpack.c.bf16 %v4156, %v4156
        %v4253 = vpack.c.bf16 %v4157, %v4157
        %v4254 = vpack.c.bf16 %v4158, %v4158
        %v4255 = vpack.c.bf16 %v4159, %v4159
        %v4256 = vpack.c.bf16 %v4160, %v4160
        %v4257 = vpack.c.bf16 %v4161, %v4161
        %v4258 = vpack.c.bf16 %v4162, %v4162
        %v4259 = vpack.c.bf16 %v4163, %v4163
        %v4260 = vpack.c.bf16 %v4164, %v4164
        %v4261 = vpack.c.bf16 %v4165, %v4165
        %v4262 = vpack.c.bf16 %v4166, %v4166
        %v4263 = vpack.c.bf16 %v4167, %v4167
        %v4264 = vpack.c.bf16 %v4168, %v4168
        %v4265 = vpack.c.bf16 %v4169, %v4169
        %v4266 = vpack.c.bf16 %v4170, %v4170
        %v4267 = vpack.c.bf16 %v4171, %v4171
        %v4268 = vpack.c.bf16 %v4172, %v4172
        %v4269 = vpack.c.bf16 %v4173, %v4173
        %v4270 = vpack.c.bf16 %v4174, %v4174
        %v4271 = vpack.c.bf16 %v4175, %v4175
        %v4272 = vpack.c.bf16 %v4176, %v4176
        %v4273 = vpack.c.bf16 %v4177, %v4177
        %v4274 = vpack.c.bf16 %v4178, %v4178
        %v4275 = vpack.c.bf16 %v4179, %v4179
        %v4276 = vpack.c.bf16 %v4180, %v4180
        %v4277 = vpack.c.bf16 %v4181, %v4181
        %v4278 = vpack.c.bf16 %v4182, %v4182
        %v4279 = vpack.c.bf16 %v4183, %v4183
        %v4280 = vpack.c.bf16 %v4184, %v4184
        %v4281 = vpack.c.bf16 %v4185, %v4185
        %v4282 = vpack.c.bf16 %v4186, %v4186
        %v4283 = vpack.c.bf16 %v4187, %v4187
        %v4284 = vpack.c.bf16 %v4188, %v4188
        %v4285 = vpack.c.bf16 %v4189, %v4189
        %v4286 = vpack.c.bf16 %v4190, %v4190
        %v4287 = vpack.c.bf16 %v4191, %v4191
        %v4288 = vpack.c.bf16 %v4192, %v4192
        %v4289 = vpack.c.bf16 %v4193, %v4193
        %v4290 = vpack.c.bf16 %v4194, %v4194
        %v4291 = vpack.c.bf16 %v4195, %v4195
        %v4292 = vpack.c.bf16 %v4196, %v4196
        %v4293 = vpack.c.bf16 %v4197, %v4197
        %v4294 = vpack.c.bf16 %v4198, %v4198
        %v4295 = vpack.c.bf16 %v4199, %v4199
        %v4296 = vpack.c.bf16 %v4200, %v4200
        %v4297 = vpack.c.bf16 %v4201, %v4201
        %v4298 = vpack.c.bf16 %v4202, %v4202
        %v4299 = vpack.c.bf16 %v4203, %v4203
        %v4300 = vpack.c.bf16 %v4204, %v4204
        %v4301 = vpack.c.bf16 %v4205, %v4205
        %v4302 = vpack.c.bf16 %v4206, %v4206
        %v4303 = vpack.c.bf16 %v4207, %v4207
        %v4304 = vpack.c.bf16 %v4208, %v4208
        %v4305 = vpack.c.bf16 %v4209, %v4209
        %v4306 = vpack.c.bf16 %v4210, %v4210
        %v4307 = vpack.c.bf16 %v4211, %v4211
        %v4308 = vpack.c.bf16 %v4212, %v4212
        %v4309 = vpack.c.bf16 %v4213, %v4213
        %v4310 = vpack.c.bf16 %v4214, %v4214
        %v4311 = vpack.c.bf16 %v4215, %v4215
        %v4312 = vpack.c.bf16 %v4216, %v4216
        %v4313 = vpack.c.bf16 %v4217, %v4217
        %v4314 = vpack.c.bf16 %v4218, %v4218
        %v4315 = vpack.c.bf16 %v4219, %v4219
        %v4316 = vpack.c.bf16 %v4220, %v4220
        %v4317 = vpack.c.bf16 %v4221, %v4221
        %v4318 = vpack.c.bf16 %v4222, %v4222
        %v4319 = vpack.c.bf16 %v4223, %v4223
        %v4320 = vpack.c.bf16 %v4224, %v4224
        %v4321 = vpack.c.bf16 %v4225, %v4225
        %v4322 = vpack.c.bf16 %v4226, %v4226
        %v4323 = vpack.c.bf16 %v4227, %v4227
        %v4324 = vpack.c.bf16 %v4228, %v4228
        %v4325 = vpack.c.bf16 %v4229, %v4229
        %v4326 = vpack.c.bf16 %v4230, %v4230
        %v4327 = vpack.c.bf16 %v4231, %v4231
        %v4328 = vpack.c.bf16 %v4232, %v4232
        %v4329 = vpack.c.bf16 %v4233, %v4233
        %v4330 = vpack.c.bf16 %v4234, %v4234
        %v4331 = vpack.c.bf16 %v4235, %v4235
        %v4332 = vpack.c.bf16 %v4236, %v4236
        %v4333 = vpack.c.bf16 %v4237, %v4237
        %v4334 = vpack.c.bf16 %v4238, %v4238
        %v4335 = vpack.c.bf16 %v4239, %v4239
        %v4336 = vpack.c.bf16 %v4240, %v4240
        %v4337 = vpack.c.bf16 %v4241, %v4241
        %v4338 = vpack.c.bf16 %v4242, %v4242
        %v4339 = vpack.c.bf16 %v4243, %v4243
        %4340 = vst [vmem:[%s494] sm:$0xf] %v4244
        %4341 = vst [vmem:[%s494 + $0x4] sm:$0xf] %v4245
        %4342 = vst [vmem:[%s494 + $0x8] sm:$0xf] %v4246
        %4343 = vst [vmem:[%s494 + $0xc] sm:$0xf] %v4247
        %4344 = vst [vmem:[%s494 + $0x10] sm:$0xf] %v4248
        %4345 = vst [vmem:[%s494 + $0x14] sm:$0xf] %v4249
        %4346 = vst [vmem:[%s494 + $0x18] sm:$0xf] %v4250
        %4347 = vst [vmem:[%s494 + $0x1c] sm:$0xf] %v4251
        %4348 = vst [vmem:[%s494 + $0x20] sm:$0xf] %v4252
        %4349 = vst [vmem:[%s494 + $0x24] sm:$0xf] %v4253
        %4350 = vst [vmem:[%s494 + $0x28] sm:$0xf] %v4254
        %4351 = vst [vmem:[%s494 + $0x2c] sm:$0xf] %v4255
        %4352 = vst [vmem:[%s494 + $0x30] sm:$0xf] %v4256
        %4353 = vst [vmem:[%s494 + $0x34] sm:$0xf] %v4257
        %4354 = vst [vmem:[%s494 + $0x38] sm:$0xf] %v4258
        %4355 = vst [vmem:[%s494 + $0x3c] sm:$0xf] %v4259
        %4356 = vst [vmem:[%s494 + $0x40] sm:$0xf] %v4260
        %4357 = vst [vmem:[%s494 + $0x44] sm:$0xf] %v4261
        %4358 = vst [vmem:[%s494 + $0x48] sm:$0xf] %v4262
        %4359 = vst [vmem:[%s494 + $0x4c] sm:$0xf] %v4263
        %4360 = vst [vmem:[%s494 + $0x50] sm:$0xf] %v4264
        %4361 = vst [vmem:[%s494 + $0x54] sm:$0xf] %v4265
        %4362 = vst [vmem:[%s494 + $0x58] sm:$0xf] %v4266
        %4363 = vst [vmem:[%s494 + $0x5c] sm:$0xf] %v4267
        %4364 = vst [vmem:[%s494 + $0x60] sm:$0xf] %v4268
        %4365 = vst [vmem:[%s494 + $0x64] sm:$0xf] %v4269
        %4366 = vst [vmem:[%s494 + $0x68] sm:$0xf] %v4270
        %4367 = vst [vmem:[%s494 + $0x6c] sm:$0xf] %v4271
        %4368 = vst [vmem:[%s494 + $0x70] sm:$0xf] %v4272
        %4369 = vst [vmem:[%s494 + $0x74] sm:$0xf] %v4273
        %4370 = vst [vmem:[%s494 + $0x78] sm:$0xf] %v4274
        %4371 = vst [vmem:[%s494 + $0x7c] sm:$0xf] %v4275
        %4372 = vst [vmem:[%s494 + $0x80] sm:$0xf] %v4276
        %4373 = vst [vmem:[%s494 + $0x84] sm:$0xf] %v4277
        %4374 = vst [vmem:[%s494 + $0x88] sm:$0xf] %v4278
        %4375 = vst [vmem:[%s494 + $0x8c] sm:$0xf] %v4279
        %4376 = vst [vmem:[%s494 + $0x90] sm:$0xf] %v4280
        %4377 = vst [vmem:[%s494 + $0x94] sm:$0xf] %v4281
        %4378 = vst [vmem:[%s494 + $0x98] sm:$0xf] %v4282
        %4379 = vst [vmem:[%s494 + $0x9c] sm:$0xf] %v4283
        %4380 = vst [vmem:[%s494 + $0xa0] sm:$0xf] %v4284
        %4381 = vst [vmem:[%s494 + $0xa4] sm:$0xf] %v4285
        %4382 = vst [vmem:[%s494 + $0xa8] sm:$0xf] %v4286
        %4383 = vst [vmem:[%s494 + $0xac] sm:$0xf] %v4287
        %4384 = vst [vmem:[%s494 + $0xb0] sm:$0xf] %v4288
        %4385 = vst [vmem:[%s494 + $0xb4] sm:$0xf] %v4289
        %4386 = vst [vmem:[%s494 + $0xb8] sm:$0xf] %v4290
        %4387 = vst [vmem:[%s494 + $0xbc] sm:$0xf] %v4291
        %4388 = vst [vmem:[%s494 + $0xc0] sm:$0xf] %v4292
        %4389 = vst [vmem:[%s494 + $0xc4] sm:$0xf] %v4293
        %4390 = vst [vmem:[%s494 + $0xc8] sm:$0xf] %v4294
        %4391 = vst [vmem:[%s494 + $0xcc] sm:$0xf] %v4295
        %4392 = vst [vmem:[%s494 + $0xd0] sm:$0xf] %v4296
        %4393 = vst [vmem:[%s494 + $0xd4] sm:$0xf] %v4297
        %4394 = vst [vmem:[%s494 + $0xd8] sm:$0xf] %v4298
        %4395 = vst [vmem:[%s494 + $0xdc] sm:$0xf] %v4299
        %4396 = vst [vmem:[%s494 + $0xe0] sm:$0xf] %v4300
        %4397 = vst [vmem:[%s494 + $0xe4] sm:$0xf] %v4301
        %4398 = vst [vmem:[%s494 + $0xe8] sm:$0xf] %v4302
        %4399 = vst [vmem:[%s494 + $0xec] sm:$0xf] %v4303
        %4400 = vst [vmem:[%s494 + $0xf0] sm:$0xf] %v4304
        %4401 = vst [vmem:[%s494 + $0xf4] sm:$0xf] %v4305
        %4402 = vst [vmem:[%s494 + $0xf8] sm:$0xf] %v4306
        %4403 = vst [vmem:[%s494 + $0xfc] sm:$0xf] %v4307
        %4404 = vst [vmem:[%s494 + $0x100] sm:$0xf] %v4308
        %4405 = vst [vmem:[%s494 + $0x104] sm:$0xf] %v4309
        %4406 = vst [vmem:[%s494 + $0x108] sm:$0xf] %v4310
        %4407 = vst [vmem:[%s494 + $0x10c] sm:$0xf] %v4311
        %4408 = vst [vmem:[%s494 + $0x110] sm:$0xf] %v4312
        %4409 = vst [vmem:[%s494 + $0x114] sm:$0xf] %v4313
        %4410 = vst [vmem:[%s494 + $0x118] sm:$0xf] %v4314
        %4411 = vst [vmem:[%s494 + $0x11c] sm:$0xf] %v4315
        %4412 = vst [vmem:[%s494 + $0x120] sm:$0xf] %v4316
        %4413 = vst [vmem:[%s494 + $0x124] sm:$0xf] %v4317
        %4414 = vst [vmem:[%s494 + $0x128] sm:$0xf] %v4318
        %4415 = vst [vmem:[%s494 + $0x12c] sm:$0xf] %v4319
        %4416 = vst [vmem:[%s494 + $0x130] sm:$0xf] %v4320
        %4417 = vst [vmem:[%s494 + $0x134] sm:$0xf] %v4321
        %4418 = vst [vmem:[%s494 + $0x138] sm:$0xf] %v4322
        %4419 = vst [vmem:[%s494 + $0x13c] sm:$0xf] %v4323
        %4420 = vst [vmem:[%s494 + $0x140] sm:$0xf] %v4324
        %4421 = vst [vmem:[%s494 + $0x144] sm:$0xf] %v4325
        %4422 = vst [vmem:[%s494 + $0x148] sm:$0xf] %v4326
        %4423 = vst [vmem:[%s494 + $0x14c] sm:$0xf] %v4327
        %4424 = vst [vmem:[%s494 + $0x150] sm:$0xf] %v4328
        %4425 = vst [vmem:[%s494 + $0x154] sm:$0xf] %v4329
        %4426 = vst [vmem:[%s494 + $0x158] sm:$0xf] %v4330
        %4427 = vst [vmem:[%s494 + $0x15c] sm:$0xf] %v4331
        %4428 = vst [vmem:[%s494 + $0x160] sm:$0xf] %v4332
        %4429 = vst [vmem:[%s494 + $0x164] sm:$0xf] %v4333
        %4430 = vst [vmem:[%s494 + $0x168] sm:$0xf] %v4334
        %4431 = vst [vmem:[%s494 + $0x16c] sm:$0xf] %v4335
        %4432 = vst [vmem:[%s494 + $0x170] sm:$0xf] %v4336
        %4433 = vst [vmem:[%s494 + $0x174] sm:$0xf] %v4337
        %4434 = vst [vmem:[%s494 + $0x178] sm:$0xf] %v4338
        %4435 = vst [vmem:[%s494 + $0x17c] sm:$0xf] %v4339
        %s4436 = sand.u32 %s221, 1
        %s4437 = scalar_lea.sflag [#allocation4], %s4436
        %s4438 = sand.u32 %s221, 1
        %s4439 = smul.addr %s4438, 128
        %s4440 = scalar_lea.vmem [#allocation13], %s4439
        %s4441 = sand.u32 %s247, 1
        %s4442 = scalar_lea.sflag [#allocation15], %s4441
        %s4443 = sand.u32 %s247, 1
        %s4444 = smul.addr %s4443, 384
        %s4445 = scalar_lea.vmem [#allocation14], %s4444
        // Predicated region
        $region77: #{tpu_custom_call.1} parent=51 // pred_check
          %p4446 = pneg %p231
        $region78: #{tpu_custom_call.1} parent=51 // pred_check_branch
          %4448 = sbr.rel (%p4446) target = $region80
        $region79: #{tpu_custom_call.1} parent=51 // pred_region
          %s4449 = smul.u32 32, %s35
          %4451 = vsyncadd %s4437, 0
          %s4452 = smul.addr %s4449, 4
          %s4453 = scalar_lea.hbm %s8, %s4452
          %s4454 = sshll.u32 %s4440, 4
          %s4455 = int_to_ptr.vmem [resolvable:$true] %s4454
          %s4456 = sshll.u32 %s4453, 4
          %s4457 = int_to_ptr.hbm [resolvable:$true] %s4456
          %4462 = dma.vmem_to_hbm [thread:$0]  %s4455, 2048, %s4457, %s4437, 64, 64, 4
        $region80: #{tpu_custom_call.1} parent=51 // pred_fallthru
          _
        // Predicated region
        $region81: #{tpu_custom_call.1} parent=51 // pred_check
          %p4463 = pneg %p257
        $region82: #{tpu_custom_call.1} parent=51 // pred_check_branch
          %4465 = sbr.rel (%p4463) target = $region84
        $region83: #{tpu_custom_call.1} parent=51 // pred_region
          #allocation19 [shape = 'u32[6]{0}', space=smem, size = 0x18, scoped, tag = 'DMA stride descriptor']
          %s4466 = smul.u32 32, %s35
          %4468 = vsyncadd %s4442, 0
          %s4469 = smul.addr %s4466, 4
          %s4470 = scalar_lea.hbm %s9, %s4469
          %s4472 = sshll.u32 1, 14
          %s4473 = sxor.u32 4294967295, %s4472
          %s4476 = sshll.u32 7, 18
          %s4477 = sxor.u32 4294967295, %s4476
          %s4478 = sand.u32 0, %s4477
          %s4480 = sor.u32 %s4478, 0
          %s4481 = sshll.u32 %s4445, 4
          %s4482 = int_to_ptr.vmem [resolvable:$true] %s4481
          %s4483 = sshll.u32 %s4470, 4
          %s4484 = int_to_ptr.hbm [resolvable:$true] %s4483
          %4490 = sst [smem:[#allocation19]] 2048
          %s4491 = scalar_lea.smem [#allocation19], 1
          %4492 = sst [smem:[%s4491]] 4096
          %s4493 = scalar_lea.smem [#allocation19], 2
          %4494 = sst [smem:[%s4493]] 32
          %s4495 = scalar_lea.smem [#allocation19], 3
          %4496 = sst [smem:[%s4495]] 64
          %s4497 = scalar_lea.smem [#allocation19], 4
          %4498 = sst [smem:[%s4497]] 64
          %s4499 = scalar_lea.smem [#allocation19], 5
          %4500 = sst [smem:[%s4499]] 4
          %4502 = dma.general %s4482, 6144, %s4484, %s4442, [#allocation18], [#allocation19], %s4480, 0
        $region84: #{tpu_custom_call.1} parent=51 // pred_fallthru
          _
      $region52: #{tpu_custom_call.1} parent=5 // pred_fallthru
        _
      %p4503 = scmp.le.s32.totalorder 2, %s30
      // Predicated region
      $region85: #{tpu_custom_call.1} parent=5 // pred_check
        %p4504 = pneg %p4503
      $region86: #{tpu_custom_call.1} parent=5 // pred_check_branch
        %4506 = sbr.rel (%p4504) target = $region88
      $region87: #{tpu_custom_call.1} parent=5 // pred_region
        %s4507 = ssub.s32 %s30, 2
        // Predicated region
        $region89: #{tpu_custom_call.1} parent=87 // pred_check
          %p4508 = pneg %p237
        $region90: #{tpu_custom_call.1} parent=87 // pred_check_branch
          %4510 = sbr.rel (%p4508) target = $region92
        $region91: #{tpu_custom_call.1} parent=87 // pred_region
          %s4511 = sand.u32 %s222, 1
          %s4512 = scalar_lea.sflag [#allocation4], %s4511
          %s4513 = sand.u32 %s222, 1
          %s4514 = smul.addr %s4513, 128
          %s4515 = scalar_lea.vmem [#allocation13], %s4514
          %4517 = dma.done %s4512, 2048
        $region92: #{tpu_custom_call.1} parent=87 // pred_fallthru
          _
        // Predicated region
        $region93: #{tpu_custom_call.1} parent=87 // pred_check
          %p4518 = pneg %p263
        $region94: #{tpu_custom_call.1} parent=87 // pred_check_branch
          %4520 = sbr.rel (%p4518) target = $region96
        $region95: #{tpu_custom_call.1} parent=87 // pred_region
          %s4521 = sand.u32 %s248, 1
          %s4522 = scalar_lea.sflag [#allocation15], %s4521
          %s4523 = sand.u32 %s248, 1
          %s4524 = smul.addr %s4523, 384
          %s4525 = scalar_lea.vmem [#allocation14], %s4524
          %4527 = dma.done %s4522, 6144
        $region96: #{tpu_custom_call.1} parent=87 // pred_fallthru
          _
      $region88: #{tpu_custom_call.1} parent=5 // pred_fallthru
        _
    $region6: #{tpu_custom_call.1} parent=1 // loop_footer
      %s34 = sadd.s32 1, %s30
    $region7: #{tpu_custom_call.1} parent=1 // loop_footer_branch
      %29 = sbr.rel target = $region3
    $region8: #{tpu_custom_call.1} parent=1 // loop_exit
      _
    %4528 = vsyncpa [#allocation3], 1
    %s4529 = scalar_lea.sflag [#allocation3], 1
    %4530 = vsyncpa %s4529, 1
    %4531 = vsyncpa [#allocation6], 1
    %s4532 = scalar_lea.sflag [#allocation6], 1
    %4533 = vsyncpa %s4532, 1
    %4534 = vsyncpa [#allocation9], 1
    %4535 = vsyncpa [#allocation12], 1
    %4536 = vsyncpa [#allocation4], 1
    %s4537 = scalar_lea.sflag [#allocation4], 1
    %4538 = vsyncpa %s4537, 1
    %4539 = vsyncpa [#allocation15], 1
    %s4540 = scalar_lea.sflag [#allocation15], 1
    %4541 = vsyncpa %s4540, 1

// kernel: tpu_custom_call.1
$region0: #{tpu_custom_call.1}
  #allocation0 [shape = 'u32[]', space=smem, size = 0x4, offset = 0x4, fixed_abs, tag = 'smem constant byte address 0x4 - core index']
  #allocation1 [shape = 'u32[72,128]{1,0:T(1,128)}', space=vmem, size = 0x9000, scoped, tag = 'internal scratch']
  #allocation16 [shape = 's32[]', space=sflag, size = 0x4, offset = 0, fixed_abs, tag = 'sflag constant byte address 0x0 - dummy sync flag']
  #allocation18 [shape = 's32[]', space=sflag, size = 0x4, offset = 0, fixed_abs, tag = 'sflag constant byte address 0x0 - dummy sync flag']
  %s0 = inlined_call_operand.hbm [shape: bf16[512,128], index: 0, kind: input, shape index: {}]
  %s1 = inlined_call_operand.hbm [shape: bf16[3,512,128], index: 1, kind: input, shape index: {}]
  %s2 = inlined_call_operand.hbm [shape: bf16[128,256], index: 2, kind: input, shape index: {}]
  %s3 = inlined_call_operand.vmem [shape: f32[1,256], index: 3, kind: input, shape index: {}]
  %s4 = inlined_call_operand.hbm [shape: bf16[256,128], index: 4, kind: input, shape index: {}]
  %s5 = inlined_call_operand.hbm [shape: f32[1,128], index: 5, kind: input, shape index: {}]
  %s6 = inlined_call_operand.hbm [shape: bf16[128,384], index: 6, kind: input, shape index: {}]
  %s7 = inlined_call_operand.vmem [shape: f32[1,384], index: 7, kind: input, shape index: {}]
  %s8 = inlined_call_operand.hbm [shape: bf16[512,128], index: 8, kind: output, shape index: {0}]
  %s9 = inlined_call_operand.hbm [shape: bf16[3,512,128], index: 9, kind: output, shape index: {1}]
  %10 = xla_tuple %s8, %s9
  %s11 = sld [smem:[#allocation0]]
  $region97: #{tpu_custom_call.1} parent=0
    _
  %s13 = ssub.s32 1, %s11
  %s14 = scalar_select 0, %s13, %s11
  $region1: #{tpu_custom_call.1} parent=0
    #allocation2 [shape = 'u8[131072]{0}', space=vmem, size = 0x20000, scoped, tag = 'input window, operand 0']
    #allocation3 [shape = 's32[2]{0}', space=sflag, size = 0x8, scoped, tag = 'scoped memory for tpu_custom_call.1']
    #allocation4 [shape = 's32[2]{0}', space=sflag, size = 0x8, scoped, tag = 'scoped memory for tpu_custom_call.1']
    #allocation5 [shape = 'u8[393216]{0}', space=vmem, size = 0x60000, scoped, tag = 'input window, operand 1']
    #allocation6 [shape = 's32[2]{0}', space=sflag, size = 0x8, scoped, tag = 'scoped memory for tpu_custom_call.1']
    #allocation7 [shape = 'u8[65536]{0}', space=vmem, size = 0x10000, scoped, tag = 'input window, operand 2, single buffered']
    #allocation8 [shape = 'u8[65536]{0}', space=vmem, size = 0x10000, scoped, tag = 'input window, operand 4, single buffered']
    #allocation9 [shape = 's32[1]{0}', space=sflag, size = 0x4, scoped, tag = 'scoped memory for tpu_custom_call.1']
    #allocation10 [shape = 'u8[512]{0}', space=vmem, size = 0x400, scoped, tag = 'input window, operand 5, single buffered']
    #allocation11 [shape = 'u8[98304]{0}', space=vmem, size = 0x18000, scoped, tag = 'input window, operand 6, single buffered']
    #allocation12 [shape = 's32[1]{0}', space=sflag, size = 0x4, scoped, tag = 'scoped memory for tpu_custom_call.1']
    #allocation13 [shape = 'u8[131072]{0}', space=vmem, size = 0x20000, scoped, tag = 'output window, operand 0']
    #allocation14 [shape = 'u8[393216]{0}', space=vmem, size = 0x60000, scoped, tag = 'output window, operand 1']
    #allocation15 [shape = 's32[2]{0}', space=sflag, size = 0x8, scoped, tag = 'scoped memory for tpu_custom_call.1']
    %15 = vsyncpa [#allocation3], 0
    %s16 = scalar_lea.sflag [#allocation3], 1
    %17 = vsyncpa %s16, 0
    %18 = vsyncpa [#allocation6], 0
    %s19 = scalar_lea.sflag [#allocation6], 1
    %20 = vsyncpa %s19, 0
    %21 = vsyncpa [#allocation9], 0
    %22 = vsyncpa [#allocation12], 0
    %23 = vsyncpa [#allocation4], 0
    %s24 = scalar_lea.sflag [#allocation4], 1
    %25 = vsyncpa %s24, 0
    %26 = vsyncpa [#allocation15], 0
    %s27 = scalar_lea.sflag [#allocation15], 1
    %28 = vsyncpa %s27, 0
    loop: start=0, step=1, limit=4
    $region2: #{tpu_custom_call.1} parent=1 // loop_pre_header
      _
    $region3: #{tpu_custom_call.1} parent=1 // loop_header
      %s30 = sphi 0, %s34
      %p31 = scmp.ge.s32.totalorder %s30, 4
      %s40 = sphi 0, %s42
      %s43 = sphi 0, %s40
      %s44 = sphi 0, %s43
      %s60 = sphi 0, %s44
      %s66 = sphi 0, %s68
      %s69 = sphi 0, %s66
      %s70 = sphi 0, %s69
      %s86 = sphi 0, %s70
      %s90 = sphi 0, %s90
      %s92 = sphi 0, %s90
      %s93 = sphi 0, %s92
      %s107 = sphi 0, %s93
      %s111 = sphi 0, %s111
      %s113 = sphi 0, %s111
      %s114 = sphi 0, %s113
      %s128 = sphi 0, %s114
      %s132 = sphi 0, %s132
      %s134 = sphi 0, %s132
      %s135 = sphi 0, %s134
      %s149 = sphi 0, %s135
      %s153 = sphi 0, %s153
      %s155 = sphi 0, %s153
      %s156 = sphi 0, %s155
      %s170 = sphi 0, %s156
      %s174 = sphi 0, %s174
      %s176 = sphi 0, %s174
      %s177 = sphi 0, %s176
      %s191 = sphi 0, %s177
      %s195 = sphi 0, %s195
      %s197 = sphi 0, %s195
      %s198 = sphi 0, %s197
      %s212 = sphi 0, %s198
      %s218 = sphi 0, %s220
      %s221 = sphi 0, %s218
      %s222 = sphi 0, %s221
      %s238 = sphi 0, %s222
      %s244 = sphi 0, %s246
      %s247 = sphi 0, %s244
      %s248 = sphi 0, %s247
      %s264 = sphi 0, %s248
    $region4: #{tpu_custom_call.1} parent=1 // loop_header_branch
      %33 = sbr.rel (%p31) target = $region8
    $region5: #{tpu_custom_call.1} parent=1 // loop_body
      %s35 = ssub.s32 %s30, 1
      %s36 = ssub.s32 %s30, 2
      %s37 = sadd.s32 %s30, 1
      %s38 = ssub.s32 %s30, %s37
      %p39 = scmp.eq.s32.totalorder %s38, 0
      %s41 = sadd.s32 %s40, 1
      %s42 = scalar_select %p39, %s40, %s41
      %p45 = pneg %p39
      %p46 = scmp.eq.s32.totalorder %s30, 1
      %p47 = por %p45, %p46
      %p48 = scmp.ne.s32.totalorder %s40, %s43
      %p49 = scmp.eq.s32.totalorder %s30, 0
      %p50 = por %p48, %p49
      %p51 = scmp.ne.s32.totalorder %s40, %s43
      %p52 = scmp.eq.s32.totalorder %s35, 1
      %p53 = por %p51, %p52
      %p54 = scmp.ne.s32.totalorder %s43, %s44
      %p55 = scmp.eq.s32.totalorder %s35, 0
      %p56 = por %p54, %p55
      %p57 = scmp.ne.s32.totalorder %s43, %s44
      %p58 = scmp.eq.s32.totalorder %s36, 1
      %p59 = por %p57, %p58
      %p61 = scmp.ne.s32.totalorder %s44, %s60
      %p62 = scmp.eq.s32.totalorder %s36, 0
      %p63 = por %p61, %p62
      %s64 = ssub.s32 %s30, %s37
      %p65 = scmp.eq.s32.totalorder %s64, 0
      %s67 = sadd.s32 %s66, 1
      %s68 = scalar_select %p65, %s66, %s67
      %p71 = pneg %p65
      %p72 = scmp.eq.s32.totalorder %s30, 1
      %p73 = por %p71, %p72
      %p74 = scmp.ne.s32.totalorder %s66, %s69
      %p75 = scmp.eq.s32.totalorder %s30, 0
      %p76 = por %p74, %p75
      %p77 = scmp.ne.s32.totalorder %s66, %s69
      %p78 = scmp.eq.s32.totalorder %s35, 1
      %p79 = por %p77, %p78
      %p80 = scmp.ne.s32.totalorder %s69, %s70
      %p81 = scmp.eq.s32.totalorder %s35, 0
      %p82 = por %p80, %p81
      %p83 = scmp.ne.s32.totalorder %s69, %s70
      %p84 = scmp.eq.s32.totalorder %s36, 1
      %p85 = por %p83, %p84
      %p87 = scmp.ne.s32.totalorder %s70, %s86
      %p88 = scmp.eq.s32.totalorder %s36, 0
      %p89 = por %p87, %p88
      %s91 = sadd.s32 %s90, 1
      %p94 = scmp.eq.s32.totalorder %s30, 1
      %p95 = scmp.ne.s32.totalorder %s90, %s92
      %p96 = scmp.eq.s32.totalorder %s30, 0
      %p97 = por %p95, %p96
      %p98 = scmp.ne.s32.totalorder %s90, %s92
      %p99 = scmp.eq.s32.totalorder %s35, 1
      %p100 = por %p98, %p99
      %p101 = scmp.ne.s32.totalorder %s92, %s93
      %p102 = scmp.eq.s32.totalorder %s35, 0
      %p103 = por %p101, %p102
      %p104 = scmp.ne.s32.totalorder %s92, %s93
      %p105 = scmp.eq.s32.totalorder %s36, 1
      %p106 = por %p104, %p105
      %p108 = scmp.ne.s32.totalorder %s93, %s107
      %p109 = scmp.eq.s32.totalorder %s36, 0
      %p110 = por %p108, %p109
      %s112 = sadd.s32 %s111, 1
      %p115 = scmp.eq.s32.totalorder %s30, 1
      %p116 = scmp.ne.s32.totalorder %s111, %s113
      %p117 = scmp.eq.s32.totalorder %s30, 0
      %p118 = por %p116, %p117
      %p119 = scmp.ne.s32.totalorder %s111, %s113
      %p120 = scmp.eq.s32.totalorder %s35, 1
      %p121 = por %p119, %p120
      %p122 = scmp.ne.s32.totalorder %s113, %s114
      %p123 = scmp.eq.s32.totalorder %s35, 0
      %p124 = por %p122, %p123
      %p125 = scmp.ne.s32.totalorder %s113, %s114
      %p126 = scmp.eq.s32.totalorder %s36, 1
      %p127 = por %p125, %p126
      %p129 = scmp.ne.s32.totalorder %s114, %s128
      %p130 = scmp.eq.s32.totalorder %s36, 0
      %p131 = por %p129, %p130
      %s133 = sadd.s32 %s132, 1
      %p136 = scmp.eq.s32.totalorder %s30, 1
      %p137 = scmp.ne.s32.totalorder %s132, %s134
      %p138 = scmp.eq.s32.totalorder %s30, 0
      %p139 = por %p137, %p138
      %p140 = scmp.ne.s32.totalorder %s132, %s134
      %p141 = scmp.eq.s32.totalorder %s35, 1
      %p142 = por %p140, %p141
      %p143 = scmp.ne.s32.totalorder %s134, %s135
      %p144 = scmp.eq.s32.totalorder %s35, 0
      %p145 = por %p143, %p144
      %p146 = scmp.ne.s32.totalorder %s134, %s135
      %p147 = scmp.eq.s32.totalorder %s36, 1
      %p148 = por %p146, %p147
      %p150 = scmp.ne.s32.totalorder %s135, %s149
      %p151 = scmp.eq.s32.totalorder %s36, 0
      %p152 = por %p150, %p151
      %s154 = sadd.s32 %s153, 1
      %p157 = scmp.eq.s32.totalorder %s30, 1
      %p158 = scmp.ne.s32.totalorder %s153, %s155
      %p159 = scmp.eq.s32.totalorder %s30, 0
      %p160 = por %p158, %p159
      %p161 = scmp.ne.s32.totalorder %s153, %s155
      %p162 = scmp.eq.s32.totalorder %s35, 1
      %p163 = por %p161, %p162
      %p164 = scmp.ne.s32.totalorder %s155, %s156
      %p165 = scmp.eq.s32.totalorder %s35, 0
      %p166 = por %p164, %p165
      %p167 = scmp.ne.s32.totalorder %s155, %s156
      %p168 = scmp.eq.s32.totalorder %s36, 1
      %p169 = por %p167, %p168
      %p171 = scmp.ne.s32.totalorder %s156, %s170
      %p172 = scmp.eq.s32.totalorder %s36, 0
      %p173 = por %p171, %p172
      %s175 = sadd.s32 %s174, 1
      %p178 = scmp.eq.s32.totalorder %s30, 1
      %p179 = scmp.ne.s32.totalorder %s174, %s176
      %p180 = scmp.eq.s32.totalorder %s30, 0
      %p181 = por %p179, %p180
      %p182 = scmp.ne.s32.totalorder %s174, %s176
      %p183 = scmp.eq.s32.totalorder %s35, 1
      %p184 = por %p182, %p183
      %p185 = scmp.ne.s32.totalorder %s176, %s177
      %p186 = scmp.eq.s32.totalorder %s35, 0
      %p187 = por %p185, %p186
      %p188 = scmp.ne.s32.totalorder %s176, %s177
      %p189 = scmp.eq.s32.totalorder %s36, 1
      %p190 = por %p188, %p189
      %p192 = scmp.ne.s32.totalorder %s177, %s191
      %p193 = scmp.eq.s32.totalorder %s36, 0
      %p194 = por %p192, %p193
      %s196 = sadd.s32 %s195, 1
      %p199 = scmp.eq.s32.totalorder %s30, 1
      %p200 = scmp.ne.s32.totalorder %s195, %s197
      %p201 = scmp.eq.s32.totalorder %s30, 0
      %p202 = por %p200, %p201
      %p203 = scmp.ne.s32.totalorder %s195, %s197
      %p204 = scmp.eq.s32.totalorder %s35, 1
      %p205 = por %p203, %p204
      %p206 = scmp.ne.s32.totalorder %s197, %s198
      %p207 = scmp.eq.s32.totalorder %s35, 0
      %p208 = por %p206, %p207
      %p209 = scmp.ne.s32.totalorder %s197, %s198
      %p210 = scmp.eq.s32.totalorder %s36, 1
      %p211 = por %p209, %p210
      %p213 = scmp.ne.s32.totalorder %s198, %s212
      %p214 = scmp.eq.s32.totalorder %s36, 0
      %p215 = por %p213, %p214
      %s216 = ssub.s32 %s30, %s37
      %p217 = scmp.eq.s32.totalorder %s216, 0
      %s219 = sadd.s32 %s218, 1
      %s220 = scalar_select %p217, %s218, %s219
      %p223 = pneg %p217
      %p224 = scmp.eq.s32.totalorder %s30, 1
      %p225 = por %p223, %p224
      %p226 = scmp.ne.s32.totalorder %s218, %s221
      %p227 = scmp.eq.s32.totalorder %s30, 0
      %p228 = por %p226, %p227
      %p229 = scmp.ne.s32.totalorder %s218, %s221
      %p230 = scmp.eq.s32.totalorder %s35, 1
      %p231 = por %p229, %p230
      %p232 = scmp.ne.s32.totalorder %s221, %s222
      %p233 = scmp.eq.s32.totalorder %s35, 0
      %p234 = por %p232, %p233
      %p235 = scmp.ne.s32.totalorder %s221, %s222
      %p236 = scmp.eq.s32.totalorder %s36, 1
      %p237 = por %p235, %p236
      %p239 = scmp.ne.s32.totalorder %s222, %s238
      %p240 = scmp.eq.s32.totalorder %s36, 0
      %p241 = por %p239, %p240
      %s242 = ssub.s32 %s30, %s37
      %p243 = scmp.eq.s32.totalorder %s242, 0
      %s245 = sadd.s32 %s244, 1
      %s246 = scalar_select %p243, %s244, %s245
      %p249 = pneg %p243
      %p250 = scmp.eq.s32.totalorder %s30, 1
      %p251 = por %p249, %p250
      %p252 = scmp.ne.s32.totalorder %s244, %s247
      %p253 = scmp.eq.s32.totalorder %s30, 0
      %p254 = por %p252, %p253
      %p255 = scmp.ne.s32.totalorder %s244, %s247
      %p256 = scmp.eq.s32.totalorder %s35, 1
      %p257 = por %p255, %p256
      %p258 = scmp.ne.s32.totalorder %s247, %s248
      %p259 = scmp.eq.s32.totalorder %s35, 0
      %p260 = por %p258, %p259
      %p261 = scmp.ne.s32.totalorder %s247, %s248
      %p262 = scmp.eq.s32.totalorder %s36, 1
      %p263 = por %p261, %p262
      %p265 = scmp.ne.s32.totalorder %s248, %s264
      %p266 = scmp.eq.s32.totalorder %s36, 0
      %p267 = por %p265, %p266
      %p268 = scmp.le.s32.totalorder 1, %s30
      %p269 = scmp.lt.s32.totalorder %s30, 3
      %p270 = pnand %p268, %p269
      %p271 = pneg %p270
      // Predicated region
      $region9: #{tpu_custom_call.1} parent=5 // pred_check
        _
      $region10: #{tpu_custom_call.1} parent=5 // pred_check_branch
        %273 = sbr.rel (%p270) target = $region12
      $region11: #{tpu_custom_call.1} parent=5 // pred_region
        %s274 = ssub.s32 %s30, 1
        // Predicated region
        $region13: #{tpu_custom_call.1} parent=11 // pred_check
          %p275 = pneg %p103
        $region14: #{tpu_custom_call.1} parent=11 // pred_check_branch
          %277 = sbr.rel (%p275) target = $region16
        $region15: #{tpu_custom_call.1} parent=11 // pred_region
          %279 = vsyncadd [#allocation6], 0
          %s280 = sshll.u32 %s2, 4
          %s281 = int_to_ptr.hbm [resolvable:$true] %s280
          %s282 = sshll.u32 [#allocation7], 4
          %s283 = int_to_ptr.vmem [resolvable:$true] %s282
          %288 = dma.hbm_to_vmem [thread:$0]  %s281, 2048, %s283, [#allocation6], 128, 128, 8
        $region16: #{tpu_custom_call.1} parent=11 // pred_fallthru
          _
        // Predicated region
        $region17: #{tpu_custom_call.1} parent=11 // pred_check
          %p289 = pneg %p124
        $region18: #{tpu_custom_call.1} parent=11 // pred_check_branch
          %291 = sbr.rel (%p289) target = $region20
        $region19: #{tpu_custom_call.1} parent=11 // pred_region
          _
        $region20: #{tpu_custom_call.1} parent=11 // pred_fallthru
          _
        // Predicated region
        $region21: #{tpu_custom_call.1} parent=11 // pred_check
          %p292 = pneg %p145
        $region22: #{tpu_custom_call.1} parent=11 // pred_check_branch
          %294 = sbr.rel (%p292) target = $region24
        $region23: #{tpu_custom_call.1} parent=11 // pred_region
          %296 = vsyncadd [#allocation9], 0
          %s297 = sshll.u32 %s4, 4
          %s298 = int_to_ptr.hbm [resolvable:$true] %s297
          %s299 = sshll.u32 [#allocation8], 4
          %s300 = int_to_ptr.vmem [resolvable:$true] %s299
          %305 = dma.hbm_to_vmem [thread:$0]  %s298, 2048, %s300, [#allocation9], 64, 64, 4
        $region24: #{tpu_custom_call.1} parent=11 // pred_fallthru
          _
        // Predicated region
        $region25: #{tpu_custom_call.1} parent=11 // pred_check
          %p306 = pneg %p166
        $region26: #{tpu_custom_call.1} parent=11 // pred_check_branch
          %308 = sbr.rel (%p306) target = $region28
        $region27: #{tpu_custom_call.1} parent=11 // pred_region
          %310 = vsyncadd [#allocation9], 0
          %s312 = sshll.u32 %s5, 4
          %s313 = int_to_ptr.hbm [resolvable:$true] %s312
          %s314 = sshll.u32 [#allocation10], 4
          %s315 = int_to_ptr.vmem [resolvable:$true] %s314
          %317 = dma.hbm_to_vmem [thread:$0]  %s313, 16, %s315, [#allocation9]
        $region28: #{tpu_custom_call.1} parent=11 // pred_fallthru
          _
        // Predicated region
        $region29: #{tpu_custom_call.1} parent=11 // pred_check
          %p318 = pneg %p187
        $region30: #{tpu_custom_call.1} parent=11 // pred_check_branch
          %320 = sbr.rel (%p318) target = $region32
        $region31: #{tpu_custom_call.1} parent=11 // pred_region
          %322 = vsyncadd [#allocation12], 0
          %s323 = sshll.u32 %s6, 4
          %s324 = int_to_ptr.hbm [resolvable:$true] %s323
          %s325 = sshll.u32 [#allocation11], 4
          %s326 = int_to_ptr.vmem [resolvable:$true] %s325
          %331 = dma.hbm_to_vmem [thread:$0]  %s324, 3072, %s326, [#allocation12], 192, 192, 12
        $region32: #{tpu_custom_call.1} parent=11 // pred_fallthru
          _
        // Predicated region
        $region33: #{tpu_custom_call.1} parent=11 // pred_check
          %p332 = pneg %p208
        $region34: #{tpu_custom_call.1} parent=11 // pred_check_branch
          %334 = sbr.rel (%p332) target = $region36
        $region35: #{tpu_custom_call.1} parent=11 // pred_region
          _
        $region36: #{tpu_custom_call.1} parent=11 // pred_fallthru
          _
      $region12: #{tpu_custom_call.1} parent=5 // pred_fallthru
        _
      %p335 = scmp.lt.s32.totalorder %s30, 2
      // Predicated region
      $region37: #{tpu_custom_call.1} parent=5 // pred_check
        %p336 = pneg %p335
      $region38: #{tpu_custom_call.1} parent=5 // pred_check_branch
        %338 = sbr.rel (%p336) target = $region40
      $region39: #{tpu_custom_call.1} parent=5 // pred_region
        // Predicated region
        $region41: #{tpu_custom_call.1} parent=39 // pred_check
          %p339 = pneg %p50
        $region42: #{tpu_custom_call.1} parent=39 // pred_check_branch
          %341 = sbr.rel (%p339) target = $region44
        $region43: #{tpu_custom_call.1} parent=39 // pred_region
          %s342 = sand.u32 %s40, 1
          %s343 = scalar_lea.sflag [#allocation3], %s342
          %s344 = sand.u32 %s40, 1
          %s345 = smul.addr %s344, 128
          %s346 = scalar_lea.vmem [#allocation2], %s345
          %s347 = smul.u32 32, %s30
          %349 = vsyncadd %s343, 0
          %s350 = smul.addr %s347, 4
          %s351 = scalar_lea.hbm %s0, %s350
          %s352 = sshll.u32 %s351, 4
          %s353 = int_to_ptr.hbm [resolvable:$true] %s352
          %s354 = sshll.u32 %s346, 4
          %s355 = int_to_ptr.vmem [resolvable:$true] %s354
          %360 = dma.hbm_to_vmem [thread:$0]  %s353, 2048, %s355, %s343, 64, 64, 4
        $region44: #{tpu_custom_call.1} parent=39 // pred_fallthru
          _
        // Predicated region
        $region45: #{tpu_custom_call.1} parent=39 // pred_check
          %p361 = pneg %p76
        $region46: #{tpu_custom_call.1} parent=39 // pred_check_branch
          %363 = sbr.rel (%p361) target = $region48
        $region47: #{tpu_custom_call.1} parent=39 // pred_region
          #allocation17 [shape = 'u32[6]{0}', space=smem, size = 0x18, scoped, tag = 'DMA stride descriptor']
          %s364 = sand.u32 %s30, 1
          %s365 = scalar_lea.sflag [#allocation6], %s364
          %s366 = sand.u32 %s66, 1
          %s367 = smul.addr %s366, 384
          %s368 = scalar_lea.vmem [#allocation5], %s367
          %s369 = smul.u32 32, %s30
          %371 = vsyncadd %s365, 0
          %s372 = smul.addr %s369, 4
          %s373 = scalar_lea.hbm %s1, %s372
          %s375 = sshll.u32 1, 14
          %s376 = sxor.u32 4294967295, %s375
          %s378 = sld [smem:[#allocation0]]
          %s379 = sadd.s32 2, %s378
          %s381 = sshll.u32 7, 26
          %s382 = sxor.u32 4294967295, %s381
          %s383 = sand.u32 0, %s382
          %s384 = sshll.u32 %s379, 26
          %s385 = sor.u32 %s383, %s384
          %s386 = sshll.u32 %s373, 4
          %s387 = int_to_ptr.hbm [resolvable:$true] %s386
          %s388 = sshll.u32 %s368, 4
          %s389 = int_to_ptr.vmem [resolvable:$true] %s388
          %395 = sst [smem:[#allocation17]] 4096
          %s396 = scalar_lea.smem [#allocation17], 1
          %397 = sst [smem:[%s396]] 2048
          %s398 = scalar_lea.smem [#allocation17], 2
          %399 = sst [smem:[%s398]] 32
          %s400 = scalar_lea.smem [#allocation17], 3
          %401 = sst [smem:[%s400]] 64
          %s402 = scalar_lea.smem [#allocation17], 4
          %403 = sst [smem:[%s402]] 64
          %s404 = scalar_lea.smem [#allocation17], 5
          %405 = sst [smem:[%s404]] 4
          %407 = dma.general %s387, 6144, %s389, %s365, [#allocation16], [#allocation17], %s385, 0
        $region48: #{tpu_custom_call.1} parent=39 // pred_fallthru
          _
      $region40: #{tpu_custom_call.1} parent=5 // pred_fallthru
        _
      %p408 = scmp.le.s32.totalorder 1, %s30
      %p409 = scmp.lt.s32.totalorder %s30, 3
      %p410 = pnand %p408, %p409
      %p411 = pneg %p410
      // Predicated region
      $region49: #{tpu_custom_call.1} parent=5 // pred_check
        _
      $region50: #{tpu_custom_call.1} parent=5 // pred_check_branch
        %413 = sbr.rel (%p410) target = $region52
      $region51: #{tpu_custom_call.1} parent=5 // pred_region
        %s414 = ssub.s32 %s30, 1
        %s415 = sand.u32 %s43, 1
        %s416 = scalar_lea.sflag [#allocation3], %s415
        %s417 = sand.u32 %s43, 1
        %s418 = smul.addr %s417, 128
        %s419 = scalar_lea.vmem [#allocation2], %s418
        // Predicated region
        $region53: #{tpu_custom_call.1} parent=51 // pred_check
          %p420 = pneg %p56
        $region54: #{tpu_custom_call.1} parent=51 // pred_check_branch
          %422 = sbr.rel (%p420) target = $region56
        $region55: #{tpu_custom_call.1} parent=51 // pred_region
          %424 = dma.done %s416, 2048
        $region56: #{tpu_custom_call.1} parent=51 // pred_fallthru
          _
        %s425 = sand.u32 %s35, 1
        %s426 = scalar_lea.sflag [#allocation6], %s425
        %s427 = sand.u32 %s69, 1
        %s428 = smul.addr %s427, 384
        %s429 = scalar_lea.vmem [#allocation5], %s428
        // Predicated region
        $region57: #{tpu_custom_call.1} parent=51 // pred_check
          %p430 = pneg %p82
        $region58: #{tpu_custom_call.1} parent=51 // pred_check_branch
          %432 = sbr.rel (%p430) target = $region60
        $region59: #{tpu_custom_call.1} parent=51 // pred_region
          %434 = dma.done %s426, 6144
        $region60: #{tpu_custom_call.1} parent=51 // pred_fallthru
          _
        // Predicated region
        $region61: #{tpu_custom_call.1} parent=51 // pred_check
          %p435 = pneg %p103
        $region62: #{tpu_custom_call.1} parent=51 // pred_check_branch
          %437 = sbr.rel (%p435) target = $region64
        $region63: #{tpu_custom_call.1} parent=51 // pred_region
          %439 = dma.done [#allocation6], 2048
        $region64: #{tpu_custom_call.1} parent=51 // pred_fallthru
          _
        // Predicated region
        $region65: #{tpu_custom_call.1} parent=51 // pred_check
          %p440 = pneg %p145
        $region66: #{tpu_custom_call.1} parent=51 // pred_check_branch
          %442 = sbr.rel (%p440) target = $region68
        $region67: #{tpu_custom_call.1} parent=51 // pred_region
          %444 = dma.done [#allocation9], 2048
        $region68: #{tpu_custom_call.1} parent=51 // pred_fallthru
          _
        // Predicated region
        $region69: #{tpu_custom_call.1} parent=51 // pred_check
          %p445 = pneg %p166
        $region70: #{tpu_custom_call.1} parent=51 // pred_check_branch
          %447 = sbr.rel (%p445) target = $region72
        $region71: #{tpu_custom_call.1} parent=51 // pred_region
          %449 = dma.done [#allocation9], 16
        $region72: #{tpu_custom_call.1} parent=51 // pred_fallthru
          _
        // Predicated region
        $region73: #{tpu_custom_call.1} parent=51 // pred_check
          %p450 = pneg %p187
        $region74: #{tpu_custom_call.1} parent=51 // pred_check_branch
          %452 = sbr.rel (%p450) target = $region76
        $region75: #{tpu_custom_call.1} parent=51 // pred_region
          %454 = dma.done [#allocation12], 3072
        $region76: #{tpu_custom_call.1} parent=51 // pred_fallthru
          _
        %s455 = sand.u32 %s43, 1
        %s456 = scalar_lea.sflag [#allocation3], %s455
        %s457 = sand.u32 %s43, 1
        %s458 = smul.addr %s457, 128
        %s459 = scalar_lea.vmem [#allocation2], %s458
        %p460 = pneg %p56
        %p461 = pneg %p53
        %s462 = sand.u32 %s35, 1
        %s463 = scalar_lea.sflag [#allocation6], %s462
        %s464 = sand.u32 %s69, 1
        %s465 = smul.addr %s464, 384
        %s466 = scalar_lea.vmem [#allocation5], %s465
        %p467 = pneg %p82
        %p468 = pneg %p79
        %p469 = pneg %p103
        %p470 = pneg %p100
        %p471 = pneg %p124
        %p472 = pneg %p121
        %p473 = pneg %p145
        %p474 = pneg %p142
        %p475 = pneg %p166
        %p476 = pneg %p163
        %p477 = pneg %p187
        %p478 = pneg %p184
        %p479 = pneg %p208
        %p480 = pneg %p205
        %p481 = pneg %p234
        %p482 = pneg %p231
        %s483 = sand.u32 %s221, 1
        %s484 = scalar_lea.sflag [#allocation4], %s483
        %s485 = sand.u32 %s221, 1
        %s486 = smul.addr %s485, 128
        %s487 = scalar_lea.vmem [#allocation13], %s486
        %p488 = pneg %p260
        %p489 = pneg %p257
        %s490 = sand.u32 %s247, 1
        %s491 = scalar_lea.sflag [#allocation15], %s490
        %s492 = sand.u32 %s247, 1
        %s493 = smul.addr %s492, 384
        %s494 = scalar_lea.vmem [#allocation14], %s493
        %s495 = smul.u32 32, %s35
        %s496 = smul.u32 32, %s35
        %s497 = smul.u32 32, %s35
        %s498 = smul.u32 32, %s35
        %v499 = vld [vmem:[%s419] sm:$0xf]
        %v500 = vld [vmem:[%s419 + $0x4] sm:$0xf]
        %v501 = vld [vmem:[%s419 + $0x8] sm:$0xf]
        %v502 = vld [vmem:[%s419 + $0xc] sm:$0xf]
        %v503 = vld [vmem:[%s419 + $0x10] sm:$0xf]
        %v504 = vld [vmem:[%s419 + $0x14] sm:$0xf]
        %v505 = vld [vmem:[%s419 + $0x18] sm:$0xf]
        %v506 = vld [vmem:[%s419 + $0x1c] sm:$0xf]
        %v507 = vld [vmem:[%s419 + $0x20] sm:$0xf]
        %v508 = vld [vmem:[%s419 + $0x24] sm:$0xf]
        %v509 = vld [vmem:[%s419 + $0x28] sm:$0xf]
        %v510 = vld [vmem:[%s419 + $0x2c] sm:$0xf]
        %v511 = vld [vmem:[%s419 + $0x30] sm:$0xf]
        %v512 = vld [vmem:[%s419 + $0x34] sm:$0xf]
        %v513 = vld [vmem:[%s419 + $0x38] sm:$0xf]
        %v514 = vld [vmem:[%s419 + $0x3c] sm:$0xf]
        %v515 = vld [vmem:[%s419 + $0x40] sm:$0xf]
        %v516 = vld [vmem:[%s419 + $0x44] sm:$0xf]
        %v517 = vld [vmem:[%s419 + $0x48] sm:$0xf]
        %v518 = vld [vmem:[%s419 + $0x4c] sm:$0xf]
        %v519 = vld [vmem:[%s419 + $0x50] sm:$0xf]
        %v520 = vld [vmem:[%s419 + $0x54] sm:$0xf]
        %v521 = vld [vmem:[%s419 + $0x58] sm:$0xf]
        %v522 = vld [vmem:[%s419 + $0x5c] sm:$0xf]
        %v523 = vld [vmem:[%s419 + $0x60] sm:$0xf]
        %v524 = vld [vmem:[%s419 + $0x64] sm:$0xf]
        %v525 = vld [vmem:[%s419 + $0x68] sm:$0xf]
        %v526 = vld [vmem:[%s419 + $0x6c] sm:$0xf]
        %v527 = vld [vmem:[%s419 + $0x70] sm:$0xf]
        %v528 = vld [vmem:[%s419 + $0x74] sm:$0xf]
        %v529 = vld [vmem:[%s419 + $0x78] sm:$0xf]
        %v530 = vld [vmem:[%s419 + $0x7c] sm:$0xf]
        %v531 = vld [vmem:[%s429] sm:$0xf]
        %v532 = vld [vmem:[%s429 + $0x4] sm:$0xf]
        %v533 = vld [vmem:[%s429 + $0x8] sm:$0xf]
        %v534 = vld [vmem:[%s429 + $0xc] sm:$0xf]
        %v535 = vld [vmem:[%s429 + $0x10] sm:$0xf]
        %v536 = vld [vmem:[%s429 + $0x14] sm:$0xf]
        %v537 = vld [vmem:[%s429 + $0x18] sm:$0xf]
        %v538 = vld [vmem:[%s429 + $0x1c] sm:$0xf]
        %v539 = vld [vmem:[%s429 + $0x20] sm:$0xf]
        %v540 = vld [vmem:[%s429 + $0x24] sm:$0xf]
        %v541 = vld [vmem:[%s429 + $0x28] sm:$0xf]
        %v542 = vld [vmem:[%s429 + $0x2c] sm:$0xf]
        %v543 = vld [vmem:[%s429 + $0x30] sm:$0xf]
        %v544 = vld [vmem:[%s429 + $0x34] sm:$0xf]
        %v545 = vld [vmem:[%s429 + $0x38] sm:$0xf]
        %v546 = vld [vmem:[%s429 + $0x3c] sm:$0xf]
        %v547 = vld [vmem:[%s429 + $0x40] sm:$0xf]
        %v548 = vld [vmem:[%s429 + $0x44] sm:$0xf]
        %v549 = vld [vmem:[%s429 + $0x48] sm:$0xf]
        %v550 = vld [vmem:[%s429 + $0x4c] sm:$0xf]
        %v551 = vld [vmem:[%s429 + $0x50] sm:$0xf]
        %v552 = vld [vmem:[%s429 + $0x54] sm:$0xf]
        %v553 = vld [vmem:[%s429 + $0x58] sm:$0xf]
        %v554 = vld [vmem:[%s429 + $0x5c] sm:$0xf]
        %v555 = vld [vmem:[%s429 + $0x60] sm:$0xf]
        %v556 = vld [vmem:[%s429 + $0x64] sm:$0xf]
        %v557 = vld [vmem:[%s429 + $0x68] sm:$0xf]
        %v558 = vld [vmem:[%s429 + $0x6c] sm:$0xf]
        %v559 = vld [vmem:[%s429 + $0x70] sm:$0xf]
        %v560 = vld [vmem:[%s429 + $0x74] sm:$0xf]
        %v561 = vld [vmem:[%s429 + $0x78] sm:$0xf]
        %v562 = vld [vmem:[%s429 + $0x7c] sm:$0xf]
        %v563 = vld [vmem:[%s429 + $0x80] sm:$0xf]
        %v564 = vld [vmem:[%s429 + $0x84] sm:$0xf]
        %v565 = vld [vmem:[%s429 + $0x88] sm:$0xf]
        %v566 = vld [vmem:[%s429 + $0x8c] sm:$0xf]
        %v567 = vld [vmem:[%s429 + $0x90] sm:$0xf]
        %v568 = vld [vmem:[%s429 + $0x94] sm:$0xf]
        %v569 = vld [vmem:[%s429 + $0x98] sm:$0xf]
        %v570 = vld [vmem:[%s429 + $0x9c] sm:$0xf]
        %v571 = vld [vmem:[%s429 + $0xa0] sm:$0xf]
        %v572 = vld [vmem:[%s429 + $0xa4] sm:$0xf]
        %v573 = vld [vmem:[%s429 + $0xa8] sm:$0xf]
        %v574 = vld [vmem:[%s429 + $0xac] sm:$0xf]
        %v575 = vld [vmem:[%s429 + $0xb0] sm:$0xf]
        %v576 = vld [vmem:[%s429 + $0xb4] sm:$0xf]
        %v577 = vld [vmem:[%s429 + $0xb8] sm:$0xf]
        %v578 = vld [vmem:[%s429 + $0xbc] sm:$0xf]
        %v579 = vld [vmem:[%s429 + $0xc0] sm:$0xf]
        %v580 = vld [vmem:[%s429 + $0xc4] sm:$0xf]
        %v581 = vld [vmem:[%s429 + $0xc8] sm:$0xf]
        %v582 = vld [vmem:[%s429 + $0xcc] sm:$0xf]
        %v583 = vld [vmem:[%s429 + $0xd0] sm:$0xf]
        %v584 = vld [vmem:[%s429 + $0xd4] sm:$0xf]
        %v585 = vld [vmem:[%s429 + $0xd8] sm:$0xf]
        %v586 = vld [vmem:[%s429 + $0xdc] sm:$0xf]
        %v587 = vld [vmem:[%s429 + $0xe0] sm:$0xf]
        %v588 = vld [vmem:[%s429 + $0xe4] sm:$0xf]
        %v589 = vld [vmem:[%s429 + $0xe8] sm:$0xf]
        %v590 = vld [vmem:[%s429 + $0xec] sm:$0xf]
        %v591 = vld [vmem:[%s429 + $0xf0] sm:$0xf]
        %v592 = vld [vmem:[%s429 + $0xf4] sm:$0xf]
        %v593 = vld [vmem:[%s429 + $0xf8] sm:$0xf]
        %v594 = vld [vmem:[%s429 + $0xfc] sm:$0xf]
        %v595 = vld [vmem:[%s429 + $0x100] sm:$0xf]
        %v596 = vld [vmem:[%s429 + $0x104] sm:$0xf]
        %v597 = vld [vmem:[%s429 + $0x108] sm:$0xf]
        %v598 = vld [vmem:[%s429 + $0x10c] sm:$0xf]
        %v599 = vld [vmem:[%s429 + $0x110] sm:$0xf]
        %v600 = vld [vmem:[%s429 + $0x114] sm:$0xf]
        %v601 = vld [vmem:[%s429 + $0x118] sm:$0xf]
        %v602 = vld [vmem:[%s429 + $0x11c] sm:$0xf]
        %v603 = vld [vmem:[%s429 + $0x120] sm:$0xf]
        %v604 = vld [vmem:[%s429 + $0x124] sm:$0xf]
        %v605 = vld [vmem:[%s429 + $0x128] sm:$0xf]
        %v606 = vld [vmem:[%s429 + $0x12c] sm:$0xf]
        %v607 = vld [vmem:[%s429 + $0x130] sm:$0xf]
        %v608 = vld [vmem:[%s429 + $0x134] sm:$0xf]
        %v609 = vld [vmem:[%s429 + $0x138] sm:$0xf]
        %v610 = vld [vmem:[%s429 + $0x13c] sm:$0xf]
        %v611 = vld [vmem:[%s429 + $0x140] sm:$0xf]
        %v612 = vld [vmem:[%s429 + $0x144] sm:$0xf]
        %v613 = vld [vmem:[%s429 + $0x148] sm:$0xf]
        %v614 = vld [vmem:[%s429 + $0x14c] sm:$0xf]
        %v615 = vld [vmem:[%s429 + $0x150] sm:$0xf]
        %v616 = vld [vmem:[%s429 + $0x154] sm:$0xf]
        %v617 = vld [vmem:[%s429 + $0x158] sm:$0xf]
        %v618 = vld [vmem:[%s429 + $0x15c] sm:$0xf]
        %v619 = vld [vmem:[%s429 + $0x160] sm:$0xf]
        %v620 = vld [vmem:[%s429 + $0x164] sm:$0xf]
        %v621 = vld [vmem:[%s429 + $0x168] sm:$0xf]
        %v622 = vld [vmem:[%s429 + $0x16c] sm:$0xf]
        %v623 = vld [vmem:[%s429 + $0x170] sm:$0xf]
        %v624 = vld [vmem:[%s429 + $0x174] sm:$0xf]
        %v625 = vld [vmem:[%s429 + $0x178] sm:$0xf]
        %v626 = vld [vmem:[%s429 + $0x17c] sm:$0xf]
        %v627 = vld [vmem:[#allocation7] sm:$0xff]
        %v628 = vld [vmem:[#allocation7 + $0x8] sm:$0xff]
        %v629 = vld [vmem:[#allocation7 + $0x10] sm:$0xff]
        %v630 = vld [vmem:[#allocation7 + $0x18] sm:$0xff]
        %v631 = vld [vmem:[#allocation7 + $0x20] sm:$0xff]
        %v632 = vld [vmem:[#allocation7 + $0x28] sm:$0xff]
        %v633 = vld [vmem:[#allocation7 + $0x30] sm:$0xff]
        %v634 = vld [vmem:[#allocation7 + $0x38] sm:$0xff]
        %v635 = vld [vmem:[#allocation7 + $0x40] sm:$0xff]
        %v636 = vld [vmem:[#allocation7 + $0x48] sm:$0xff]
        %v637 = vld [vmem:[#allocation7 + $0x50] sm:$0xff]
        %v638 = vld [vmem:[#allocation7 + $0x58] sm:$0xff]
        %v639 = vld [vmem:[#allocation7 + $0x60] sm:$0xff]
        %v640 = vld [vmem:[#allocation7 + $0x68] sm:$0xff]
        %v641 = vld [vmem:[#allocation7 + $0x70] sm:$0xff]
        %v642 = vld [vmem:[#allocation7 + $0x78] sm:$0xff]
        %v643 = vld [vmem:[%s3] sm:$0x3]
        %v645 = vperm.slane %v643, 0
        %v646 = vperm.slane %v643, 1
        %v745 = vunpack.c.l.b16 %v531
        %v746 = vunpack.c.l.b16 %v532
        %v747 = vunpack.c.l.b16 %v533
        %v748 = vunpack.c.l.b16 %v534
        %v749 = vunpack.c.l.b16 %v535
        %v750 = vunpack.c.l.b16 %v536
        %v751 = vunpack.c.l.b16 %v537
        %v752 = vunpack.c.l.b16 %v538
        %v753 = vunpack.c.l.b16 %v539
        %v754 = vunpack.c.l.b16 %v540
        %v755 = vunpack.c.l.b16 %v541
        %v756 = vunpack.c.l.b16 %v542
        %v757 = vunpack.c.l.b16 %v543
        %v758 = vunpack.c.l.b16 %v544
        %v759 = vunpack.c.l.b16 %v545
        %v760 = vunpack.c.l.b16 %v546
        %v761 = vunpack.c.l.b16 %v547
        %v762 = vunpack.c.l.b16 %v548
        %v763 = vunpack.c.l.b16 %v549
        %v764 = vunpack.c.l.b16 %v550
        %v765 = vunpack.c.l.b16 %v551
        %v766 = vunpack.c.l.b16 %v552
        %v767 = vunpack.c.l.b16 %v553
        %v768 = vunpack.c.l.b16 %v554
        %v769 = vunpack.c.l.b16 %v555
        %v770 = vunpack.c.l.b16 %v556
        %v771 = vunpack.c.l.b16 %v557
        %v772 = vunpack.c.l.b16 %v558
        %v773 = vunpack.c.l.b16 %v559
        %v774 = vunpack.c.l.b16 %v560
        %v775 = vunpack.c.l.b16 %v561
        %v776 = vunpack.c.l.b16 %v562
        %v777 = vunpack.c.l.b16 %v563
        %v778 = vunpack.c.l.b16 %v564
        %v779 = vunpack.c.l.b16 %v565
        %v780 = vunpack.c.l.b16 %v566
        %v781 = vunpack.c.l.b16 %v567
        %v782 = vunpack.c.l.b16 %v568
        %v783 = vunpack.c.l.b16 %v569
        %v784 = vunpack.c.l.b16 %v570
        %v785 = vunpack.c.l.b16 %v571
        %v786 = vunpack.c.l.b16 %v572
        %v787 = vunpack.c.l.b16 %v573
        %v788 = vunpack.c.l.b16 %v574
        %v789 = vunpack.c.l.b16 %v575
        %v790 = vunpack.c.l.b16 %v576
        %v791 = vunpack.c.l.b16 %v577
        %v792 = vunpack.c.l.b16 %v578
        %v793 = vunpack.c.l.b16 %v579
        %v794 = vunpack.c.l.b16 %v580
        %v795 = vunpack.c.l.b16 %v581
        %v796 = vunpack.c.l.b16 %v582
        %v797 = vunpack.c.l.b16 %v583
        %v798 = vunpack.c.l.b16 %v584
        %v799 = vunpack.c.l.b16 %v585
        %v800 = vunpack.c.l.b16 %v586
        %v801 = vunpack.c.l.b16 %v587
        %v802 = vunpack.c.l.b16 %v588
        %v803 = vunpack.c.l.b16 %v589
        %v804 = vunpack.c.l.b16 %v590
        %v805 = vunpack.c.l.b16 %v591
        %v806 = vunpack.c.l.b16 %v592
        %v807 = vunpack.c.l.b16 %v593
        %v808 = vunpack.c.l.b16 %v594
        %v809 = vunpack.c.l.b16 %v595
        %v810 = vunpack.c.l.b16 %v596
        %v811 = vunpack.c.l.b16 %v597
        %v812 = vunpack.c.l.b16 %v598
        %v813 = vunpack.c.l.b16 %v599
        %v814 = vunpack.c.l.b16 %v600
        %v815 = vunpack.c.l.b16 %v601
        %v816 = vunpack.c.l.b16 %v602
        %v817 = vunpack.c.l.b16 %v603
        %v818 = vunpack.c.l.b16 %v604
        %v819 = vunpack.c.l.b16 %v605
        %v820 = vunpack.c.l.b16 %v606
        %v821 = vunpack.c.l.b16 %v607
        %v822 = vunpack.c.l.b16 %v608
        %v823 = vunpack.c.l.b16 %v609
        %v824 = vunpack.c.l.b16 %v610
        %v825 = vunpack.c.l.b16 %v611
        %v826 = vunpack.c.l.b16 %v612
        %v827 = vunpack.c.l.b16 %v613
        %v828 = vunpack.c.l.b16 %v614
        %v829 = vunpack.c.l.b16 %v615
        %v830 = vunpack.c.l.b16 %v616
        %v831 = vunpack.c.l.b16 %v617
        %v832 = vunpack.c.l.b16 %v618
        %v833 = vunpack.c.l.b16 %v619
        %v834 = vunpack.c.l.b16 %v620
        %v835 = vunpack.c.l.b16 %v621
        %v836 = vunpack.c.l.b16 %v622
        %v837 = vunpack.c.l.b16 %v623
        %v838 = vunpack.c.l.b16 %v624
        %v839 = vunpack.c.l.b16 %v625
        %v840 = vunpack.c.l.b16 %v626
        %v841 = vpack.c.b16 %v746, %v745
        %v842 = vpack.c.b16 %v748, %v747
        %v843 = vpack.c.b16 %v750, %v749
        %v844 = vpack.c.b16 %v752, %v751
        %v845 = vpack.c.b16 %v754, %v753
        %v846 = vpack.c.b16 %v756, %v755
        %v847 = vpack.c.b16 %v758, %v757
        %v848 = vpack.c.b16 %v760, %v759
        %v849 = vpack.c.b16 %v762, %v761
        %v850 = vpack.c.b16 %v764, %v763
        %v851 = vpack.c.b16 %v766, %v765
        %v852 = vpack.c.b16 %v768, %v767
        %v853 = vpack.c.b16 %v770, %v769
        %v854 = vpack.c.b16 %v772, %v771
        %v855 = vpack.c.b16 %v774, %v773
        %v856 = vpack.c.b16 %v776, %v775
        %v857 = vpack.c.b16 %v778, %v777
        %v858 = vpack.c.b16 %v780, %v779
        %v859 = vpack.c.b16 %v782, %v781
        %v860 = vpack.c.b16 %v784, %v783
        %v861 = vpack.c.b16 %v786, %v785
        %v862 = vpack.c.b16 %v788, %v787
        %v863 = vpack.c.b16 %v790, %v789
        %v864 = vpack.c.b16 %v792, %v791
        %v865 = vpack.c.b16 %v794, %v793
        %v866 = vpack.c.b16 %v796, %v795
        %v867 = vpack.c.b16 %v798, %v797
        %v868 = vpack.c.b16 %v800, %v799
        %v869 = vpack.c.b16 %v802, %v801
        %v870 = vpack.c.b16 %v804, %v803
        %v871 = vpack.c.b16 %v806, %v805
        %v872 = vpack.c.b16 %v808, %v807
        %v873 = vpack.c.b16 %v810, %v809
        %v874 = vpack.c.b16 %v812, %v811
        %v875 = vpack.c.b16 %v814, %v813
        %v876 = vpack.c.b16 %v816, %v815
        %v877 = vpack.c.b16 %v818, %v817
        %v878 = vpack.c.b16 %v820, %v819
        %v879 = vpack.c.b16 %v822, %v821
        %v880 = vpack.c.b16 %v824, %v823
        %v881 = vpack.c.b16 %v826, %v825
        %v882 = vpack.c.b16 %v828, %v827
        %v883 = vpack.c.b16 %v830, %v829
        %v884 = vpack.c.b16 %v832, %v831
        %v885 = vpack.c.b16 %v834, %v833
        %v886 = vpack.c.b16 %v836, %v835
        %v887 = vpack.c.b16 %v838, %v837
        %v888 = vpack.c.b16 %v840, %v839
        %v953 = vunpack.c.l.b16 %v627
        %v954 = vunpack.c.h.b16 %v627
        %v955 = vunpack.c.l.b16 %v628
        %v956 = vunpack.c.h.b16 %v628
        %v957 = vunpack.c.l.b16 %v629
        %v958 = vunpack.c.h.b16 %v629
        %v959 = vunpack.c.l.b16 %v630
        %v960 = vunpack.c.h.b16 %v630
        %v961 = vunpack.c.l.b16 %v631
        %v962 = vunpack.c.h.b16 %v631
        %v963 = vunpack.c.l.b16 %v632
        %v964 = vunpack.c.h.b16 %v632
        %v965 = vunpack.c.l.b16 %v633
        %v966 = vunpack.c.h.b16 %v633
        %v967 = vunpack.c.l.b16 %v634
        %v968 = vunpack.c.h.b16 %v634
        %v969 = vunpack.c.l.b16 %v635
        %v970 = vunpack.c.h.b16 %v635
        %v971 = vunpack.c.l.b16 %v636
        %v972 = vunpack.c.h.b16 %v636
        %v973 = vunpack.c.l.b16 %v637
        %v974 = vunpack.c.h.b16 %v637
        %v975 = vunpack.c.l.b16 %v638
        %v976 = vunpack.c.h.b16 %v638
        %v977 = vunpack.c.l.b16 %v639
        %v978 = vunpack.c.h.b16 %v639
        %v979 = vunpack.c.l.b16 %v640
        %v980 = vunpack.c.h.b16 %v640
        %v981 = vunpack.c.l.b16 %v641
        %v982 = vunpack.c.h.b16 %v641
        %v983 = vunpack.c.l.b16 %v642
        %v984 = vunpack.c.h.b16 %v642
        %v985 = vpack.c.b16 %v955, %v953
        %v986 = vpack.c.b16 %v956, %v954
        %v987 = vpack.c.b16 %v959, %v957
        %v988 = vpack.c.b16 %v960, %v958
        %v989 = vpack.c.b16 %v963, %v961
        %v990 = vpack.c.b16 %v964, %v962
        %v991 = vpack.c.b16 %v967, %v965
        %v992 = vpack.c.b16 %v968, %v966
        %v993 = vpack.c.b16 %v971, %v969
        %v994 = vpack.c.b16 %v972, %v970
        %v995 = vpack.c.b16 %v975, %v973
        %v996 = vpack.c.b16 %v976, %v974
        %v997 = vpack.c.b16 %v979, %v977
        %v998 = vpack.c.b16 %v980, %v978
        %v999 = vpack.c.b16 %v983, %v981
        %v1000 = vpack.c.b16 %v984, %v982
        %1017 = vmatpush.bf16.msra.mxu0 %v999
        %1018 = vmatpush.bf16.msra.mxu0 %v997
        %1019 = vmatpush.bf16.msra.mxu0 %v995
        %1020 = vmatpush.bf16.msra.mxu0 %v993
        %1021 = vmatpush.bf16.msra.mxu0 %v991
        %1022 = vmatpush.bf16.msra.mxu0 %v989
        %1023 = vmatpush.bf16.msra.mxu0 %v987
        %1024 = vmatpush.bf16.msra.mxu0 %v985
        %1025 = vmatmul.bf16.gmra.mxu0 %v841
        %v1026 = vpop.f32.mrf.mxu0
        %v1027 = vadd.f32 %v645, %v1026
        %v1028 = vpop.f32.mrf.mxu0
        %v1029 = vadd.f32 %v645, %v1028
        %1030 = vmatmul.bf16.gmra.mxu0 %v842
        %v1031 = vpop.f32.mrf.mxu0
        %v1032 = vadd.f32 %v645, %v1031
        %v1033 = vpop.f32.mrf.mxu0
        %v1034 = vadd.f32 %v645, %v1033
        %1035 = vmatmul.bf16.gmra.mxu0 %v843
        %v1036 = vpop.f32.mrf.mxu0
        %v1037 = vadd.f32 %v645, %v1036
        %v1038 = vpop.f32.mrf.mxu0
        %v1039 = vadd.f32 %v645, %v1038
        %1040 = vmatmul.bf16.gmra.mxu0 %v844
        %v1041 = vpop.f32.mrf.mxu0
        %v1042 = vadd.f32 %v645, %v1041
        %v1043 = vpop.f32.mrf.mxu0
        %v1044 = vadd.f32 %v645, %v1043
        %1045 = vmatmul.bf16.gmra.mxu0 %v845
        %v1046 = vpop.f32.mrf.mxu0
        %v1047 = vadd.f32 %v645, %v1046
        %v1048 = vpop.f32.mrf.mxu0
        %v1049 = vadd.f32 %v645, %v1048
        %1050 = vmatmul.bf16.gmra.mxu0 %v846
        %v1051 = vpop.f32.mrf.mxu0
        %v1052 = vadd.f32 %v645, %v1051
        %v1053 = vpop.f32.mrf.mxu0
        %v1054 = vadd.f32 %v645, %v1053
        %1055 = vmatmul.bf16.gmra.mxu0 %v847
        %v1056 = vpop.f32.mrf.mxu0
        %v1057 = vadd.f32 %v645, %v1056
        %v1058 = vpop.f32.mrf.mxu0
        %v1059 = vadd.f32 %v645, %v1058
        %1060 = vmatmul.bf16.gmra.mxu0 %v848
        %v1061 = vpop.f32.mrf.mxu0
        %v1062 = vadd.f32 %v645, %v1061
        %v1063 = vpop.f32.mrf.mxu0
        %v1064 = vadd.f32 %v645, %v1063
        %1065 = vmatmul.bf16.gmra.mxu0 %v849
        %v1066 = vpop.f32.mrf.mxu0
        %v1067 = vadd.f32 %v645, %v1066
        %v1068 = vpop.f32.mrf.mxu0
        %v1069 = vadd.f32 %v645, %v1068
        %1070 = vmatmul.bf16.gmra.mxu0 %v850
        %v1071 = vpop.f32.mrf.mxu0
        %v1072 = vadd.f32 %v645, %v1071
        %v1073 = vpop.f32.mrf.mxu0
        %v1074 = vadd.f32 %v645, %v1073
        %1075 = vmatmul.bf16.gmra.mxu0 %v851
        %v1076 = vpop.f32.mrf.mxu0
        %v1077 = vadd.f32 %v645, %v1076
        %v1078 = vpop.f32.mrf.mxu0
        %v1079 = vadd.f32 %v645, %v1078
        %1080 = vmatmul.bf16.gmra.mxu0 %v852
        %v1081 = vpop.f32.mrf.mxu0
        %v1082 = vadd.f32 %v645, %v1081
        %v1083 = vpop.f32.mrf.mxu0
        %v1084 = vadd.f32 %v645, %v1083
        %1085 = vmatmul.bf16.gmra.mxu0 %v853
        %v1086 = vpop.f32.mrf.mxu0
        %v1087 = vadd.f32 %v645, %v1086
        %v1088 = vpop.f32.mrf.mxu0
        %v1089 = vadd.f32 %v645, %v1088
        %1090 = vmatmul.bf16.gmra.mxu0 %v854
        %v1091 = vpop.f32.mrf.mxu0
        %v1092 = vadd.f32 %v645, %v1091
        %v1093 = vpop.f32.mrf.mxu0
        %v1094 = vadd.f32 %v645, %v1093
        %1095 = vmatmul.bf16.gmra.mxu0 %v855
        %v1096 = vpop.f32.mrf.mxu0
        %v1097 = vadd.f32 %v645, %v1096
        %v1098 = vpop.f32.mrf.mxu0
        %v1099 = vadd.f32 %v645, %v1098
        %1100 = vmatmul.bf16.gmra.mxu0 %v856
        %v1101 = vpop.f32.mrf.mxu0
        %v1102 = vadd.f32 %v645, %v1101
        %v1103 = vpop.f32.mrf.mxu0
        %v1104 = vadd.f32 %v645, %v1103
        %1105 = vmatmul.bf16.gmra.mxu0 %v857
        %v1106 = vpop.f32.mrf.mxu0
        %v1107 = vadd.f32 %v645, %v1106
        %v1108 = vpop.f32.mrf.mxu0
        %v1109 = vadd.f32 %v645, %v1108
        %1110 = vmatmul.bf16.gmra.mxu0 %v858
        %v1111 = vpop.f32.mrf.mxu0
        %v1112 = vadd.f32 %v645, %v1111
        %v1113 = vpop.f32.mrf.mxu0
        %v1114 = vadd.f32 %v645, %v1113
        %1115 = vmatmul.bf16.gmra.mxu0 %v859
        %v1116 = vpop.f32.mrf.mxu0
        %v1117 = vadd.f32 %v645, %v1116
        %v1118 = vpop.f32.mrf.mxu0
        %v1119 = vadd.f32 %v645, %v1118
        %1120 = vmatmul.bf16.gmra.mxu0 %v860
        %v1121 = vpop.f32.mrf.mxu0
        %v1122 = vadd.f32 %v645, %v1121
        %v1123 = vpop.f32.mrf.mxu0
        %v1124 = vadd.f32 %v645, %v1123
        %1125 = vmatmul.bf16.gmra.mxu0 %v861
        %v1126 = vpop.f32.mrf.mxu0
        %v1127 = vadd.f32 %v645, %v1126
        %v1128 = vpop.f32.mrf.mxu0
        %v1129 = vadd.f32 %v645, %v1128
        %1130 = vmatmul.bf16.gmra.mxu0 %v862
        %v1131 = vpop.f32.mrf.mxu0
        %v1132 = vadd.f32 %v645, %v1131
        %v1133 = vpop.f32.mrf.mxu0
        %v1134 = vadd.f32 %v645, %v1133
        %1135 = vmatmul.bf16.gmra.mxu0 %v863
        %v1136 = vpop.f32.mrf.mxu0
        %v1137 = vadd.f32 %v645, %v1136
        %v1138 = vpop.f32.mrf.mxu0
        %v1139 = vadd.f32 %v645, %v1138
        %1140 = vmatmul.bf16.gmra.mxu0 %v864
        %v1141 = vpop.f32.mrf.mxu0
        %v1142 = vadd.f32 %v645, %v1141
        %v1143 = vpop.f32.mrf.mxu0
        %v1144 = vadd.f32 %v645, %v1143
        %1145 = vmatmul.bf16.gmra.mxu0 %v865
        %v1146 = vpop.f32.mrf.mxu0
        %v1147 = vadd.f32 %v645, %v1146
        %v1148 = vpop.f32.mrf.mxu0
        %v1149 = vadd.f32 %v645, %v1148
        %1150 = vmatmul.bf16.gmra.mxu0 %v866
        %v1151 = vpop.f32.mrf.mxu0
        %v1152 = vadd.f32 %v645, %v1151
        %v1153 = vpop.f32.mrf.mxu0
        %v1154 = vadd.f32 %v645, %v1153
        %1155 = vmatmul.bf16.gmra.mxu0 %v867
        %v1156 = vpop.f32.mrf.mxu0
        %v1157 = vadd.f32 %v645, %v1156
        %v1158 = vpop.f32.mrf.mxu0
        %v1159 = vadd.f32 %v645, %v1158
        %1160 = vmatmul.bf16.gmra.mxu0 %v868
        %v1161 = vpop.f32.mrf.mxu0
        %v1162 = vadd.f32 %v645, %v1161
        %v1163 = vpop.f32.mrf.mxu0
        %v1164 = vadd.f32 %v645, %v1163
        %1165 = vmatmul.bf16.gmra.mxu0 %v869
        %v1166 = vpop.f32.mrf.mxu0
        %v1167 = vadd.f32 %v645, %v1166
        %v1168 = vpop.f32.mrf.mxu0
        %v1169 = vadd.f32 %v645, %v1168
        %1170 = vmatmul.bf16.gmra.mxu0 %v870
        %v1171 = vpop.f32.mrf.mxu0
        %v1172 = vadd.f32 %v645, %v1171
        %v1173 = vpop.f32.mrf.mxu0
        %v1174 = vadd.f32 %v645, %v1173
        %1175 = vmatmul.bf16.gmra.mxu0 %v871
        %v1176 = vpop.f32.mrf.mxu0
        %v1177 = vadd.f32 %v645, %v1176
        %v1178 = vpop.f32.mrf.mxu0
        %v1179 = vadd.f32 %v645, %v1178
        %1180 = vmatmul.bf16.gmra.mxu0 %v872
        %v1181 = vpop.f32.mrf.mxu0
        %v1182 = vadd.f32 %v645, %v1181
        %v1183 = vpop.f32.mrf.mxu0
        %v1184 = vadd.f32 %v645, %v1183
        %1185 = vmatmul.bf16.gmra.mxu0 %v873
        %v1186 = vpop.f32.mrf.mxu0
        %v1187 = vadd.f32 %v645, %v1186
        %v1188 = vpop.f32.mrf.mxu0
        %v1189 = vadd.f32 %v645, %v1188
        %1190 = vmatmul.bf16.gmra.mxu0 %v874
        %v1191 = vpop.f32.mrf.mxu0
        %v1192 = vadd.f32 %v645, %v1191
        %v1193 = vpop.f32.mrf.mxu0
        %v1194 = vadd.f32 %v645, %v1193
        %1195 = vmatmul.bf16.gmra.mxu0 %v875
        %v1196 = vpop.f32.mrf.mxu0
        %v1197 = vadd.f32 %v645, %v1196
        %v1198 = vpop.f32.mrf.mxu0
        %v1199 = vadd.f32 %v645, %v1198
        %1200 = vmatmul.bf16.gmra.mxu0 %v876
        %v1201 = vpop.f32.mrf.mxu0
        %v1202 = vadd.f32 %v645, %v1201
        %v1203 = vpop.f32.mrf.mxu0
        %v1204 = vadd.f32 %v645, %v1203
        %1205 = vmatmul.bf16.gmra.mxu0 %v877
        %v1206 = vpop.f32.mrf.mxu0
        %v1207 = vadd.f32 %v645, %v1206
        %v1208 = vpop.f32.mrf.mxu0
        %v1209 = vadd.f32 %v645, %v1208
        %1210 = vmatmul.bf16.gmra.mxu0 %v878
        %v1211 = vpop.f32.mrf.mxu0
        %v1212 = vadd.f32 %v645, %v1211
        %v1213 = vpop.f32.mrf.mxu0
        %v1214 = vadd.f32 %v645, %v1213
        %1215 = vmatmul.bf16.gmra.mxu0 %v879
        %v1216 = vpop.f32.mrf.mxu0
        %v1217 = vadd.f32 %v645, %v1216
        %v1218 = vpop.f32.mrf.mxu0
        %v1219 = vadd.f32 %v645, %v1218
        %1220 = vmatmul.bf16.gmra.mxu0 %v880
        %v1221 = vpop.f32.mrf.mxu0
        %v1222 = vadd.f32 %v645, %v1221
        %v1223 = vpop.f32.mrf.mxu0
        %v1224 = vadd.f32 %v645, %v1223
        %1225 = vmatmul.bf16.gmra.mxu0 %v881
        %v1226 = vpop.f32.mrf.mxu0
        %v1227 = vadd.f32 %v645, %v1226
        %v1228 = vpop.f32.mrf.mxu0
        %v1229 = vadd.f32 %v645, %v1228
        %1230 = vmatmul.bf16.gmra.mxu0 %v882
        %v1231 = vpop.f32.mrf.mxu0
        %v1232 = vadd.f32 %v645, %v1231
        %v1233 = vpop.f32.mrf.mxu0
        %v1234 = vadd.f32 %v645, %v1233
        %1235 = vmatmul.bf16.gmra.mxu0 %v883
        %v1236 = vpop.f32.mrf.mxu0
        %v1237 = vadd.f32 %v645, %v1236
        %v1238 = vpop.f32.mrf.mxu0
        %v1239 = vadd.f32 %v645, %v1238
        %1240 = vmatmul.bf16.gmra.mxu0 %v884
        %v1241 = vpop.f32.mrf.mxu0
        %v1242 = vadd.f32 %v645, %v1241
        %v1243 = vpop.f32.mrf.mxu0
        %v1244 = vadd.f32 %v645, %v1243
        %1245 = vmatmul.bf16.gmra.mxu0 %v885
        %v1246 = vpop.f32.mrf.mxu0
        %v1247 = vadd.f32 %v645, %v1246
        %v1248 = vpop.f32.mrf.mxu0
        %v1249 = vadd.f32 %v645, %v1248
        %1250 = vmatmul.bf16.gmra.mxu0 %v886
        %v1251 = vpop.f32.mrf.mxu0
        %v1252 = vadd.f32 %v645, %v1251
        %v1253 = vpop.f32.mrf.mxu0
        %v1254 = vadd.f32 %v645, %v1253
        %1255 = vmatmul.bf16.gmra.mxu0 %v887
        %v1256 = vpop.f32.mrf.mxu0
        %v1257 = vadd.f32 %v645, %v1256
        %v1258 = vpop.f32.mrf.mxu0
        %v1259 = vadd.f32 %v645, %v1258
        %1260 = vmatmul.bf16.gmra.mxu0 %v888
        %v1261 = vpop.f32.mrf.mxu0
        %v1262 = vadd.f32 %v645, %v1261
        %v1263 = vpop.f32.mrf.mxu0
        %v1264 = vadd.f32 %v645, %v1263
        %1265 = vdwg.mxu0
        %1266 = vmatpush.bf16.msra.mxu0 %v1000
        %1267 = vmatpush.bf16.msra.mxu0 %v998
        %1268 = vmatpush.bf16.msra.mxu0 %v996
        %1269 = vmatpush.bf16.msra.mxu0 %v994
        %1270 = vmatpush.bf16.msra.mxu0 %v992
        %1271 = vmatpush.bf16.msra.mxu0 %v990
        %1272 = vmatpush.bf16.msra.mxu0 %v988
        %1273 = vmatpush.bf16.msra.mxu0 %v986
        %1274 = vmatmul.bf16.gmra.mxu0 %v841
        %v1275 = vpop.f32.mrf.mxu0
        %v1276 = vadd.f32 %v646, %v1275
        %v1277 = vpop.f32.mrf.mxu0
        %v1278 = vadd.f32 %v646, %v1277
        %1279 = vmatmul.bf16.gmra.mxu0 %v842
        %v1280 = vpop.f32.mrf.mxu0
        %v1281 = vadd.f32 %v646, %v1280
        %v1282 = vpop.f32.mrf.mxu0
        %v1283 = vadd.f32 %v646, %v1282
        %1284 = vmatmul.bf16.gmra.mxu0 %v843
        %v1285 = vpop.f32.mrf.mxu0
        %v1286 = vadd.f32 %v646, %v1285
        %v1287 = vpop.f32.mrf.mxu0
        %v1288 = vadd.f32 %v646, %v1287
        %1289 = vmatmul.bf16.gmra.mxu0 %v844
        %v1290 = vpop.f32.mrf.mxu0
        %v1291 = vadd.f32 %v646, %v1290
        %v1292 = vpop.f32.mrf.mxu0
        %v1293 = vadd.f32 %v646, %v1292
        %1294 = vmatmul.bf16.gmra.mxu0 %v845
        %v1295 = vpop.f32.mrf.mxu0
        %v1296 = vadd.f32 %v646, %v1295
        %v1297 = vpop.f32.mrf.mxu0
        %v1298 = vadd.f32 %v646, %v1297
        %1299 = vmatmul.bf16.gmra.mxu0 %v846
        %v1300 = vpop.f32.mrf.mxu0
        %v1301 = vadd.f32 %v646, %v1300
        %v1302 = vpop.f32.mrf.mxu0
        %v1303 = vadd.f32 %v646, %v1302
        %1304 = vmatmul.bf16.gmra.mxu0 %v847
        %v1305 = vpop.f32.mrf.mxu0
        %v1306 = vadd.f32 %v646, %v1305
        %v1307 = vpop.f32.mrf.mxu0
        %v1308 = vadd.f32 %v646, %v1307
        %1309 = vmatmul.bf16.gmra.mxu0 %v848
        %v1310 = vpop.f32.mrf.mxu0
        %v1311 = vadd.f32 %v646, %v1310
        %v1312 = vpop.f32.mrf.mxu0
        %v1313 = vadd.f32 %v646, %v1312
        %1314 = vmatmul.bf16.gmra.mxu0 %v849
        %v1315 = vpop.f32.mrf.mxu0
        %v1316 = vadd.f32 %v646, %v1315
        %v1317 = vpop.f32.mrf.mxu0
        %v1318 = vadd.f32 %v646, %v1317
        %1319 = vmatmul.bf16.gmra.mxu0 %v850
        %v1320 = vpop.f32.mrf.mxu0
        %v1321 = vadd.f32 %v646, %v1320
        %v1322 = vpop.f32.mrf.mxu0
        %v1323 = vadd.f32 %v646, %v1322
        %1324 = vmatmul.bf16.gmra.mxu0 %v851
        %v1325 = vpop.f32.mrf.mxu0
        %v1326 = vadd.f32 %v646, %v1325
        %v1327 = vpop.f32.mrf.mxu0
        %v1328 = vadd.f32 %v646, %v1327
        %1329 = vmatmul.bf16.gmra.mxu0 %v852
        %v1330 = vpop.f32.mrf.mxu0
        %v1331 = vadd.f32 %v646, %v1330
        %v1332 = vpop.f32.mrf.mxu0
        %v1333 = vadd.f32 %v646, %v1332
        %1334 = vmatmul.bf16.gmra.mxu0 %v853
        %v1335 = vpop.f32.mrf.mxu0
        %v1336 = vadd.f32 %v646, %v1335
        %v1337 = vpop.f32.mrf.mxu0
        %v1338 = vadd.f32 %v646, %v1337
        %1339 = vmatmul.bf16.gmra.mxu0 %v854
        %v1340 = vpop.f32.mrf.mxu0
        %v1341 = vadd.f32 %v646, %v1340
        %v1342 = vpop.f32.mrf.mxu0
        %v1343 = vadd.f32 %v646, %v1342
        %1344 = vmatmul.bf16.gmra.mxu0 %v855
        %v1345 = vpop.f32.mrf.mxu0
        %v1346 = vadd.f32 %v646, %v1345
        %v1347 = vpop.f32.mrf.mxu0
        %v1348 = vadd.f32 %v646, %v1347
        %1349 = vmatmul.bf16.gmra.mxu0 %v856
        %v1350 = vpop.f32.mrf.mxu0
        %v1351 = vadd.f32 %v646, %v1350
        %v1352 = vpop.f32.mrf.mxu0
        %v1353 = vadd.f32 %v646, %v1352
        %1354 = vmatmul.bf16.gmra.mxu0 %v857
        %v1355 = vpop.f32.mrf.mxu0
        %v1356 = vadd.f32 %v646, %v1355
        %v1357 = vpop.f32.mrf.mxu0
        %v1358 = vadd.f32 %v646, %v1357
        %1359 = vmatmul.bf16.gmra.mxu0 %v858
        %v1360 = vpop.f32.mrf.mxu0
        %v1361 = vadd.f32 %v646, %v1360
        %v1362 = vpop.f32.mrf.mxu0
        %v1363 = vadd.f32 %v646, %v1362
        %1364 = vmatmul.bf16.gmra.mxu0 %v859
        %v1365 = vpop.f32.mrf.mxu0
        %v1366 = vadd.f32 %v646, %v1365
        %v1367 = vpop.f32.mrf.mxu0
        %v1368 = vadd.f32 %v646, %v1367
        %1369 = vmatmul.bf16.gmra.mxu0 %v860
        %v1370 = vpop.f32.mrf.mxu0
        %v1371 = vadd.f32 %v646, %v1370
        %v1372 = vpop.f32.mrf.mxu0
        %v1373 = vadd.f32 %v646, %v1372
        %1374 = vmatmul.bf16.gmra.mxu0 %v861
        %v1375 = vpop.f32.mrf.mxu0
        %v1376 = vadd.f32 %v646, %v1375
        %v1377 = vpop.f32.mrf.mxu0
        %v1378 = vadd.f32 %v646, %v1377
        %1379 = vmatmul.bf16.gmra.mxu0 %v862
        %v1380 = vpop.f32.mrf.mxu0
        %v1381 = vadd.f32 %v646, %v1380
        %v1382 = vpop.f32.mrf.mxu0
        %v1383 = vadd.f32 %v646, %v1382
        %1384 = vmatmul.bf16.gmra.mxu0 %v863
        %v1385 = vpop.f32.mrf.mxu0
        %v1386 = vadd.f32 %v646, %v1385
        %v1387 = vpop.f32.mrf.mxu0
        %v1388 = vadd.f32 %v646, %v1387
        %1389 = vmatmul.bf16.gmra.mxu0 %v864
        %v1390 = vpop.f32.mrf.mxu0
        %v1391 = vadd.f32 %v646, %v1390
        %v1392 = vpop.f32.mrf.mxu0
        %v1393 = vadd.f32 %v646, %v1392
        %1394 = vmatmul.bf16.gmra.mxu0 %v865
        %v1395 = vpop.f32.mrf.mxu0
        %v1396 = vadd.f32 %v646, %v1395
        %v1397 = vpop.f32.mrf.mxu0
        %v1398 = vadd.f32 %v646, %v1397
        %1399 = vmatmul.bf16.gmra.mxu0 %v866
        %v1400 = vpop.f32.mrf.mxu0
        %v1401 = vadd.f32 %v646, %v1400
        %v1402 = vpop.f32.mrf.mxu0
        %v1403 = vadd.f32 %v646, %v1402
        %1404 = vmatmul.bf16.gmra.mxu0 %v867
        %v1405 = vpop.f32.mrf.mxu0
        %v1406 = vadd.f32 %v646, %v1405
        %v1407 = vpop.f32.mrf.mxu0
        %v1408 = vadd.f32 %v646, %v1407
        %1409 = vmatmul.bf16.gmra.mxu0 %v868
        %v1410 = vpop.f32.mrf.mxu0
        %v1411 = vadd.f32 %v646, %v1410
        %v1412 = vpop.f32.mrf.mxu0
        %v1413 = vadd.f32 %v646, %v1412
        %1414 = vmatmul.bf16.gmra.mxu0 %v869
        %v1415 = vpop.f32.mrf.mxu0
        %v1416 = vadd.f32 %v646, %v1415
        %v1417 = vpop.f32.mrf.mxu0
        %v1418 = vadd.f32 %v646, %v1417
        %1419 = vmatmul.bf16.gmra.mxu0 %v870
        %v1420 = vpop.f32.mrf.mxu0
        %v1421 = vadd.f32 %v646, %v1420
        %v1422 = vpop.f32.mrf.mxu0
        %v1423 = vadd.f32 %v646, %v1422
        %1424 = vmatmul.bf16.gmra.mxu0 %v871
        %v1425 = vpop.f32.mrf.mxu0
        %v1426 = vadd.f32 %v646, %v1425
        %v1427 = vpop.f32.mrf.mxu0
        %v1428 = vadd.f32 %v646, %v1427
        %1429 = vmatmul.bf16.gmra.mxu0 %v872
        %v1430 = vpop.f32.mrf.mxu0
        %v1431 = vadd.f32 %v646, %v1430
        %v1432 = vpop.f32.mrf.mxu0
        %v1433 = vadd.f32 %v646, %v1432
        %1434 = vmatmul.bf16.gmra.mxu0 %v873
        %v1435 = vpop.f32.mrf.mxu0
        %v1436 = vadd.f32 %v646, %v1435
        %v1437 = vpop.f32.mrf.mxu0
        %v1438 = vadd.f32 %v646, %v1437
        %1439 = vmatmul.bf16.gmra.mxu0 %v874
        %v1440 = vpop.f32.mrf.mxu0
        %v1441 = vadd.f32 %v646, %v1440
        %v1442 = vpop.f32.mrf.mxu0
        %v1443 = vadd.f32 %v646, %v1442
        %1444 = vmatmul.bf16.gmra.mxu0 %v875
        %v1445 = vpop.f32.mrf.mxu0
        %v1446 = vadd.f32 %v646, %v1445
        %v1447 = vpop.f32.mrf.mxu0
        %v1448 = vadd.f32 %v646, %v1447
        %1449 = vmatmul.bf16.gmra.mxu0 %v876
        %v1450 = vpop.f32.mrf.mxu0
        %v1451 = vadd.f32 %v646, %v1450
        %v1452 = vpop.f32.mrf.mxu0
        %v1453 = vadd.f32 %v646, %v1452
        %1454 = vmatmul.bf16.gmra.mxu0 %v877
        %v1455 = vpop.f32.mrf.mxu0
        %v1456 = vadd.f32 %v646, %v1455
        %v1457 = vpop.f32.mrf.mxu0
        %v1458 = vadd.f32 %v646, %v1457
        %1459 = vmatmul.bf16.gmra.mxu0 %v878
        %v1460 = vpop.f32.mrf.mxu0
        %v1461 = vadd.f32 %v646, %v1460
        %v1462 = vpop.f32.mrf.mxu0
        %v1463 = vadd.f32 %v646, %v1462
        %1464 = vmatmul.bf16.gmra.mxu0 %v879
        %v1465 = vpop.f32.mrf.mxu0
        %v1466 = vadd.f32 %v646, %v1465
        %v1467 = vpop.f32.mrf.mxu0
        %v1468 = vadd.f32 %v646, %v1467
        %1469 = vmatmul.bf16.gmra.mxu0 %v880
        %v1470 = vpop.f32.mrf.mxu0
        %v1471 = vadd.f32 %v646, %v1470
        %v1472 = vpop.f32.mrf.mxu0
        %v1473 = vadd.f32 %v646, %v1472
        %1474 = vmatmul.bf16.gmra.mxu0 %v881
        %v1475 = vpop.f32.mrf.mxu0
        %v1476 = vadd.f32 %v646, %v1475
        %v1477 = vpop.f32.mrf.mxu0
        %v1478 = vadd.f32 %v646, %v1477
        %1479 = vmatmul.bf16.gmra.mxu0 %v882
        %v1480 = vpop.f32.mrf.mxu0
        %v1481 = vadd.f32 %v646, %v1480
        %v1482 = vpop.f32.mrf.mxu0
        %v1483 = vadd.f32 %v646, %v1482
        %1484 = vmatmul.bf16.gmra.mxu0 %v883
        %v1485 = vpop.f32.mrf.mxu0
        %v1486 = vadd.f32 %v646, %v1485
        %v1487 = vpop.f32.mrf.mxu0
        %v1488 = vadd.f32 %v646, %v1487
        %1489 = vmatmul.bf16.gmra.mxu0 %v884
        %v1490 = vpop.f32.mrf.mxu0
        %v1491 = vadd.f32 %v646, %v1490
        %v1492 = vpop.f32.mrf.mxu0
        %v1493 = vadd.f32 %v646, %v1492
        %1494 = vmatmul.bf16.gmra.mxu0 %v885
        %v1495 = vpop.f32.mrf.mxu0
        %v1496 = vadd.f32 %v646, %v1495
        %v1497 = vpop.f32.mrf.mxu0
        %v1498 = vadd.f32 %v646, %v1497
        %1499 = vmatmul.bf16.gmra.mxu0 %v886
        %v1500 = vpop.f32.mrf.mxu0
        %v1501 = vadd.f32 %v646, %v1500
        %v1502 = vpop.f32.mrf.mxu0
        %v1503 = vadd.f32 %v646, %v1502
        %1504 = vmatmul.bf16.gmra.mxu0 %v887
        %v1505 = vpop.f32.mrf.mxu0
        %v1506 = vadd.f32 %v646, %v1505
        %v1507 = vpop.f32.mrf.mxu0
        %v1508 = vadd.f32 %v646, %v1507
        %1509 = vmatmul.bf16.gmra.mxu0 %v888
        %v1510 = vpop.f32.mrf.mxu0
        %v1511 = vadd.f32 %v646, %v1510
        %v1512 = vpop.f32.mrf.mxu0
        %v1513 = vadd.f32 %v646, %v1512
        %1514 = vdwg.mxu0
        %v1515 = vmul.f32 %v1276, %v1276
        %v1516 = vmul.f32 %v1278, %v1278
        %v1517 = vmul.f32 %v1281, %v1281
        %v1518 = vmul.f32 %v1283, %v1283
        %v1519 = vmul.f32 %v1286, %v1286
        %v1520 = vmul.f32 %v1288, %v1288
        %v1521 = vmul.f32 %v1291, %v1291
        %v1522 = vmul.f32 %v1293, %v1293
        %v1523 = vmul.f32 %v1296, %v1296
        %v1524 = vmul.f32 %v1298, %v1298
        %v1525 = vmul.f32 %v1301, %v1301
        %v1526 = vmul.f32 %v1303, %v1303
        %v1527 = vmul.f32 %v1306, %v1306
        %v1528 = vmul.f32 %v1308, %v1308
        %v1529 = vmul.f32 %v1311, %v1311
        %v1530 = vmul.f32 %v1313, %v1313
        %v1531 = vmul.f32 %v1316, %v1316
        %v1532 = vmul.f32 %v1318, %v1318
        %v1533 = vmul.f32 %v1321, %v1321
        %v1534 = vmul.f32 %v1323, %v1323
        %v1535 = vmul.f32 %v1326, %v1326
        %v1536 = vmul.f32 %v1328, %v1328
        %v1537 = vmul.f32 %v1331, %v1331
        %v1538 = vmul.f32 %v1333, %v1333
        %v1539 = vmul.f32 %v1336, %v1336
        %v1540 = vmul.f32 %v1338, %v1338
        %v1541 = vmul.f32 %v1341, %v1341
        %v1542 = vmul.f32 %v1343, %v1343
        %v1543 = vmul.f32 %v1346, %v1346
        %v1544 = vmul.f32 %v1348, %v1348
        %v1545 = vmul.f32 %v1351, %v1351
        %v1546 = vmul.f32 %v1353, %v1353
        %v1547 = vmul.f32 %v1356, %v1356
        %v1548 = vmul.f32 %v1358, %v1358
        %v1549 = vmul.f32 %v1361, %v1361
        %v1550 = vmul.f32 %v1363, %v1363
        %v1551 = vmul.f32 %v1366, %v1366
        %v1552 = vmul.f32 %v1368, %v1368
        %v1553 = vmul.f32 %v1371, %v1371
        %v1554 = vmul.f32 %v1373, %v1373
        %v1555 = vmul.f32 %v1376, %v1376
        %v1556 = vmul.f32 %v1378, %v1378
        %v1557 = vmul.f32 %v1381, %v1381
        %v1558 = vmul.f32 %v1383, %v1383
        %v1559 = vmul.f32 %v1386, %v1386
        %v1560 = vmul.f32 %v1388, %v1388
        %v1561 = vmul.f32 %v1391, %v1391
        %v1562 = vmul.f32 %v1393, %v1393
        %v1563 = vmul.f32 %v1396, %v1396
        %v1564 = vmul.f32 %v1398, %v1398
        %v1565 = vmul.f32 %v1401, %v1401
        %v1566 = vmul.f32 %v1403, %v1403
        %v1567 = vmul.f32 %v1406, %v1406
        %v1568 = vmul.f32 %v1408, %v1408
        %v1569 = vmul.f32 %v1411, %v1411
        %v1570 = vmul.f32 %v1413, %v1413
        %v1571 = vmul.f32 %v1416, %v1416
        %v1572 = vmul.f32 %v1418, %v1418
        %v1573 = vmul.f32 %v1421, %v1421
        %v1574 = vmul.f32 %v1423, %v1423
        %v1575 = vmul.f32 %v1426, %v1426
        %v1576 = vmul.f32 %v1428, %v1428
        %v1577 = vmul.f32 %v1431, %v1431
        %v1578 = vmul.f32 %v1433, %v1433
        %v1579 = vmul.f32 %v1436, %v1436
        %v1580 = vmul.f32 %v1438, %v1438
        %v1581 = vmul.f32 %v1441, %v1441
        %v1582 = vmul.f32 %v1443, %v1443
        %v1583 = vmul.f32 %v1446, %v1446
        %v1584 = vmul.f32 %v1448, %v1448
        %v1585 = vmul.f32 %v1451, %v1451
        %v1586 = vmul.f32 %v1453, %v1453
        %v1587 = vmul.f32 %v1456, %v1456
        %v1588 = vmul.f32 %v1458, %v1458
        %v1589 = vmul.f32 %v1461, %v1461
        %v1590 = vmul.f32 %v1463, %v1463
        %v1591 = vmul.f32 %v1466, %v1466
        %v1592 = vmul.f32 %v1468, %v1468
        %v1593 = vmul.f32 %v1471, %v1471
        %v1594 = vmul.f32 %v1473, %v1473
        %v1595 = vmul.f32 %v1476, %v1476
        %v1596 = vmul.f32 %v1478, %v1478
        %v1597 = vmul.f32 %v1481, %v1481
        %v1598 = vmul.f32 %v1483, %v1483
        %v1599 = vmul.f32 %v1486, %v1486
        %v1600 = vmul.f32 %v1488, %v1488
        %v1601 = vmul.f32 %v1491, %v1491
        %v1602 = vmul.f32 %v1493, %v1493
        %v1603 = vmul.f32 %v1496, %v1496
        %v1604 = vmul.f32 %v1498, %v1498
        %v1605 = vmul.f32 %v1501, %v1501
        %v1606 = vmul.f32 %v1503, %v1503
        %v1607 = vmul.f32 %v1506, %v1506
        %v1608 = vmul.f32 %v1508, %v1508
        %v1609 = vmul.f32 %v1511, %v1511
        %v1610 = vmul.f32 %v1513, %v1513
        %v1611 = vadd.f32 %v1515, %v1547
        %v1612 = vadd.f32 %v1611, %v1579
        %v1613 = vadd.f32 %v1516, %v1548
        %v1614 = vadd.f32 %v1613, %v1580
        %v1615 = vadd.f32 %v1517, %v1549
        %v1616 = vadd.f32 %v1615, %v1581
        %v1617 = vadd.f32 %v1518, %v1550
        %v1618 = vadd.f32 %v1617, %v1582
        %v1619 = vadd.f32 %v1519, %v1551
        %v1620 = vadd.f32 %v1619, %v1583
        %v1621 = vadd.f32 %v1520, %v1552
        %v1622 = vadd.f32 %v1621, %v1584
        %v1623 = vadd.f32 %v1521, %v1553
        %v1624 = vadd.f32 %v1623, %v1585
        %v1625 = vadd.f32 %v1522, %v1554
        %v1626 = vadd.f32 %v1625, %v1586
        %v1627 = vadd.f32 %v1523, %v1555
        %v1628 = vadd.f32 %v1627, %v1587
        %v1629 = vadd.f32 %v1524, %v1556
        %v1630 = vadd.f32 %v1629, %v1588
        %v1631 = vadd.f32 %v1525, %v1557
        %v1632 = vadd.f32 %v1631, %v1589
        %v1633 = vadd.f32 %v1526, %v1558
        %v1634 = vadd.f32 %v1633, %v1590
        %v1635 = vadd.f32 %v1527, %v1559
        %v1636 = vadd.f32 %v1635, %v1591
        %v1637 = vadd.f32 %v1528, %v1560
        %v1638 = vadd.f32 %v1637, %v1592
        %v1639 = vadd.f32 %v1529, %v1561
        %v1640 = vadd.f32 %v1639, %v1593
        %v1641 = vadd.f32 %v1530, %v1562
        %v1642 = vadd.f32 %v1641, %v1594
        %v1643 = vadd.f32 %v1531, %v1563
        %v1644 = vadd.f32 %v1643, %v1595
        %v1645 = vadd.f32 %v1532, %v1564
        %v1646 = vadd.f32 %v1645, %v1596
        %v1647 = vadd.f32 %v1533, %v1565
        %v1648 = vadd.f32 %v1647, %v1597
        %v1649 = vadd.f32 %v1534, %v1566
        %v1650 = vadd.f32 %v1649, %v1598
        %v1651 = vadd.f32 %v1535, %v1567
        %v1652 = vadd.f32 %v1651, %v1599
        %v1653 = vadd.f32 %v1536, %v1568
        %v1654 = vadd.f32 %v1653, %v1600
        %v1655 = vadd.f32 %v1537, %v1569
        %v1656 = vadd.f32 %v1655, %v1601
        %v1657 = vadd.f32 %v1538, %v1570
        %v1658 = vadd.f32 %v1657, %v1602
        %v1659 = vadd.f32 %v1539, %v1571
        %v1660 = vadd.f32 %v1659, %v1603
        %v1661 = vadd.f32 %v1540, %v1572
        %v1662 = vadd.f32 %v1661, %v1604
        %v1663 = vadd.f32 %v1541, %v1573
        %v1664 = vadd.f32 %v1663, %v1605
        %v1665 = vadd.f32 %v1542, %v1574
        %v1666 = vadd.f32 %v1665, %v1606
        %v1667 = vadd.f32 %v1543, %v1575
        %v1668 = vadd.f32 %v1667, %v1607
        %v1669 = vadd.f32 %v1544, %v1576
        %v1670 = vadd.f32 %v1669, %v1608
        %v1671 = vadd.f32 %v1545, %v1577
        %v1672 = vadd.f32 %v1671, %v1609
        %v1673 = vadd.f32 %v1546, %v1578
        %v1674 = vadd.f32 %v1673, %v1610
        %v1675 = vrsqrt.pop %v1612
        %v1676 = vmul.f32 %v1675, %v1612
        %v1677 = vmul.f32 %v1676, %v1675
        %v1678 = vmul.f32 0.5, %v1677
        %v1679 = vsub.f32 1.5, %v1678
        %v1680 = vmul.f32 %v1675, %v1679
        %v1681 = vmul.f32 %v1612, %v1680
        %vm1682 = vcmp.eq.f32.partialorder %v1612, inf
        %v1683 = vsel %vm1682, %v1612, %v1681
        %vm1684 = vcmp.eq.f32.partialorder %v1612, 0.0
        %v1685 = vand.u32 %v1612, 2147483648
        %v1686 = vsel %vm1684, %v1685, %v1683
        %v1687 = vrsqrt.pop %v1614
        %v1688 = vmul.f32 %v1687, %v1614
        %v1689 = vmul.f32 %v1688, %v1687
        %v1690 = vmul.f32 0.5, %v1689
        %v1691 = vsub.f32 1.5, %v1690
        %v1692 = vmul.f32 %v1687, %v1691
        %v1693 = vmul.f32 %v1614, %v1692
        %vm1694 = vcmp.eq.f32.partialorder %v1614, inf
        %v1695 = vsel %vm1694, %v1614, %v1693
        %vm1696 = vcmp.eq.f32.partialorder %v1614, 0.0
        %v1697 = vand.u32 %v1614, 2147483648
        %v1698 = vsel %vm1696, %v1697, %v1695
        %v1699 = vrsqrt.pop %v1616
        %v1700 = vmul.f32 %v1699, %v1616
        %v1701 = vmul.f32 %v1700, %v1699
        %v1702 = vmul.f32 0.5, %v1701
        %v1703 = vsub.f32 1.5, %v1702
        %v1704 = vmul.f32 %v1699, %v1703
        %v1705 = vmul.f32 %v1616, %v1704
        %vm1706 = vcmp.eq.f32.partialorder %v1616, inf
        %v1707 = vsel %vm1706, %v1616, %v1705
        %vm1708 = vcmp.eq.f32.partialorder %v1616, 0.0
        %v1709 = vand.u32 %v1616, 2147483648
        %v1710 = vsel %vm1708, %v1709, %v1707
        %v1711 = vrsqrt.pop %v1618
        %v1712 = vmul.f32 %v1711, %v1618
        %v1713 = vmul.f32 %v1712, %v1711
        %v1714 = vmul.f32 0.5, %v1713
        %v1715 = vsub.f32 1.5, %v1714
        %v1716 = vmul.f32 %v1711, %v1715
        %v1717 = vmul.f32 %v1618, %v1716
        %vm1718 = vcmp.eq.f32.partialorder %v1618, inf
        %v1719 = vsel %vm1718, %v1618, %v1717
        %vm1720 = vcmp.eq.f32.partialorder %v1618, 0.0
        %v1721 = vand.u32 %v1618, 2147483648
        %v1722 = vsel %vm1720, %v1721, %v1719
        %v1723 = vrsqrt.pop %v1620
        %v1724 = vmul.f32 %v1723, %v1620
        %v1725 = vmul.f32 %v1724, %v1723
        %v1726 = vmul.f32 0.5, %v1725
        %v1727 = vsub.f32 1.5, %v1726
        %v1728 = vmul.f32 %v1723, %v1727
        %v1729 = vmul.f32 %v1620, %v1728
        %vm1730 = vcmp.eq.f32.partialorder %v1620, inf
        %v1731 = vsel %vm1730, %v1620, %v1729
        %vm1732 = vcmp.eq.f32.partialorder %v1620, 0.0
        %v1733 = vand.u32 %v1620, 2147483648
        %v1734 = vsel %vm1732, %v1733, %v1731
        %v1735 = vrsqrt.pop %v1622
        %v1736 = vmul.f32 %v1735, %v1622
        %v1737 = vmul.f32 %v1736, %v1735
        %v1738 = vmul.f32 0.5, %v1737
        %v1739 = vsub.f32 1.5, %v1738
        %v1740 = vmul.f32 %v1735, %v1739
        %v1741 = vmul.f32 %v1622, %v1740
        %vm1742 = vcmp.eq.f32.partialorder %v1622, inf
        %v1743 = vsel %vm1742, %v1622, %v1741
        %vm1744 = vcmp.eq.f32.partialorder %v1622, 0.0
        %v1745 = vand.u32 %v1622, 2147483648
        %v1746 = vsel %vm1744, %v1745, %v1743
        %v1747 = vrsqrt.pop %v1624
        %v1748 = vmul.f32 %v1747, %v1624
        %v1749 = vmul.f32 %v1748, %v1747
        %v1750 = vmul.f32 0.5, %v1749
        %v1751 = vsub.f32 1.5, %v1750
        %v1752 = vmul.f32 %v1747, %v1751
        %v1753 = vmul.f32 %v1624, %v1752
        %vm1754 = vcmp.eq.f32.partialorder %v1624, inf
        %v1755 = vsel %vm1754, %v1624, %v1753
        %vm1756 = vcmp.eq.f32.partialorder %v1624, 0.0
        %v1757 = vand.u32 %v1624, 2147483648
        %v1758 = vsel %vm1756, %v1757, %v1755
        %v1759 = vrsqrt.pop %v1626
        %v1760 = vmul.f32 %v1759, %v1626
        %v1761 = vmul.f32 %v1760, %v1759
        %v1762 = vmul.f32 0.5, %v1761
        %v1763 = vsub.f32 1.5, %v1762
        %v1764 = vmul.f32 %v1759, %v1763
        %v1765 = vmul.f32 %v1626, %v1764
        %vm1766 = vcmp.eq.f32.partialorder %v1626, inf
        %v1767 = vsel %vm1766, %v1626, %v1765
        %vm1768 = vcmp.eq.f32.partialorder %v1626, 0.0
        %v1769 = vand.u32 %v1626, 2147483648
        %v1770 = vsel %vm1768, %v1769, %v1767
        %v1771 = vrsqrt.pop %v1628
        %v1772 = vmul.f32 %v1771, %v1628
        %v1773 = vmul.f32 %v1772, %v1771
        %v1774 = vmul.f32 0.5, %v1773
        %v1775 = vsub.f32 1.5, %v1774
        %v1776 = vmul.f32 %v1771, %v1775
        %v1777 = vmul.f32 %v1628, %v1776
        %vm1778 = vcmp.eq.f32.partialorder %v1628, inf
        %v1779 = vsel %vm1778, %v1628, %v1777
        %vm1780 = vcmp.eq.f32.partialorder %v1628, 0.0
        %v1781 = vand.u32 %v1628, 2147483648
        %v1782 = vsel %vm1780, %v1781, %v1779
        %v1783 = vrsqrt.pop %v1630
        %v1784 = vmul.f32 %v1783, %v1630
        %v1785 = vmul.f32 %v1784, %v1783
        %v1786 = vmul.f32 0.5, %v1785
        %v1787 = vsub.f32 1.5, %v1786
        %v1788 = vmul.f32 %v1783, %v1787
        %v1789 = vmul.f32 %v1630, %v1788
        %vm1790 = vcmp.eq.f32.partialorder %v1630, inf
        %v1791 = vsel %vm1790, %v1630, %v1789
        %vm1792 = vcmp.eq.f32.partialorder %v1630, 0.0
        %v1793 = vand.u32 %v1630, 2147483648
        %v1794 = vsel %vm1792, %v1793, %v1791
        %v1795 = vrsqrt.pop %v1632
        %v1796 = vmul.f32 %v1795, %v1632
        %v1797 = vmul.f32 %v1796, %v1795
        %v1798 = vmul.f32 0.5, %v1797
        %v1799 = vsub.f32 1.5, %v1798
        %v1800 = vmul.f32 %v1795, %v1799
        %v1801 = vmul.f32 %v1632, %v1800
        %vm1802 = vcmp.eq.f32.partialorder %v1632, inf
        %v1803 = vsel %vm1802, %v1632, %v1801
        %vm1804 = vcmp.eq.f32.partialorder %v1632, 0.0
        %v1805 = vand.u32 %v1632, 2147483648
        %v1806 = vsel %vm1804, %v1805, %v1803
        %v1807 = vrsqrt.pop %v1634
        %v1808 = vmul.f32 %v1807, %v1634
        %v1809 = vmul.f32 %v1808, %v1807
        %v1810 = vmul.f32 0.5, %v1809
        %v1811 = vsub.f32 1.5, %v1810
        %v1812 = vmul.f32 %v1807, %v1811
        %v1813 = vmul.f32 %v1634, %v1812
        %vm1814 = vcmp.eq.f32.partialorder %v1634, inf
        %v1815 = vsel %vm1814, %v1634, %v1813
        %vm1816 = vcmp.eq.f32.partialorder %v1634, 0.0
        %v1817 = vand.u32 %v1634, 2147483648
        %v1818 = vsel %vm1816, %v1817, %v1815
        %v1819 = vrsqrt.pop %v1636
        %v1820 = vmul.f32 %v1819, %v1636
        %v1821 = vmul.f32 %v1820, %v1819
        %v1822 = vmul.f32 0.5, %v1821
        %v1823 = vsub.f32 1.5, %v1822
        %v1824 = vmul.f32 %v1819, %v1823
        %v1825 = vmul.f32 %v1636, %v1824
        %vm1826 = vcmp.eq.f32.partialorder %v1636, inf
        %v1827 = vsel %vm1826, %v1636, %v1825
        %vm1828 = vcmp.eq.f32.partialorder %v1636, 0.0
        %v1829 = vand.u32 %v1636, 2147483648
        %v1830 = vsel %vm1828, %v1829, %v1827
        %v1831 = vrsqrt.pop %v1638
        %v1832 = vmul.f32 %v1831, %v1638
        %v1833 = vmul.f32 %v1832, %v1831
        %v1834 = vmul.f32 0.5, %v1833
        %v1835 = vsub.f32 1.5, %v1834
        %v1836 = vmul.f32 %v1831, %v1835
        %v1837 = vmul.f32 %v1638, %v1836
        %vm1838 = vcmp.eq.f32.partialorder %v1638, inf
        %v1839 = vsel %vm1838, %v1638, %v1837
        %vm1840 = vcmp.eq.f32.partialorder %v1638, 0.0
        %v1841 = vand.u32 %v1638, 2147483648
        %v1842 = vsel %vm1840, %v1841, %v1839
        %v1843 = vrsqrt.pop %v1640
        %v1844 = vmul.f32 %v1843, %v1640
        %v1845 = vmul.f32 %v1844, %v1843
        %v1846 = vmul.f32 0.5, %v1845
        %v1847 = vsub.f32 1.5, %v1846
        %v1848 = vmul.f32 %v1843, %v1847
        %v1849 = vmul.f32 %v1640, %v1848
        %vm1850 = vcmp.eq.f32.partialorder %v1640, inf
        %v1851 = vsel %vm1850, %v1640, %v1849
        %vm1852 = vcmp.eq.f32.partialorder %v1640, 0.0
        %v1853 = vand.u32 %v1640, 2147483648
        %v1854 = vsel %vm1852, %v1853, %v1851
        %v1855 = vrsqrt.pop %v1642
        %v1856 = vmul.f32 %v1855, %v1642
        %v1857 = vmul.f32 %v1856, %v1855
        %v1858 = vmul.f32 0.5, %v1857
        %v1859 = vsub.f32 1.5, %v1858
        %v1860 = vmul.f32 %v1855, %v1859
        %v1861 = vmul.f32 %v1642, %v1860
        %vm1862 = vcmp.eq.f32.partialorder %v1642, inf
        %v1863 = vsel %vm1862, %v1642, %v1861
        %vm1864 = vcmp.eq.f32.partialorder %v1642, 0.0
        %v1865 = vand.u32 %v1642, 2147483648
        %v1866 = vsel %vm1864, %v1865, %v1863
        %v1867 = vrsqrt.pop %v1644
        %v1868 = vmul.f32 %v1867, %v1644
        %v1869 = vmul.f32 %v1868, %v1867
        %v1870 = vmul.f32 0.5, %v1869
        %v1871 = vsub.f32 1.5, %v1870
        %v1872 = vmul.f32 %v1867, %v1871
        %v1873 = vmul.f32 %v1644, %v1872
        %vm1874 = vcmp.eq.f32.partialorder %v1644, inf
        %v1875 = vsel %vm1874, %v1644, %v1873
        %vm1876 = vcmp.eq.f32.partialorder %v1644, 0.0
        %v1877 = vand.u32 %v1644, 2147483648
        %v1878 = vsel %vm1876, %v1877, %v1875
        %v1879 = vrsqrt.pop %v1646
        %v1880 = vmul.f32 %v1879, %v1646
        %v1881 = vmul.f32 %v1880, %v1879
        %v1882 = vmul.f32 0.5, %v1881
        %v1883 = vsub.f32 1.5, %v1882
        %v1884 = vmul.f32 %v1879, %v1883
        %v1885 = vmul.f32 %v1646, %v1884
        %vm1886 = vcmp.eq.f32.partialorder %v1646, inf
        %v1887 = vsel %vm1886, %v1646, %v1885
        %vm1888 = vcmp.eq.f32.partialorder %v1646, 0.0
        %v1889 = vand.u32 %v1646, 2147483648
        %v1890 = vsel %vm1888, %v1889, %v1887
        %v1891 = vrsqrt.pop %v1648
        %v1892 = vmul.f32 %v1891, %v1648
        %v1893 = vmul.f32 %v1892, %v1891
        %v1894 = vmul.f32 0.5, %v1893
        %v1895 = vsub.f32 1.5, %v1894
        %v1896 = vmul.f32 %v1891, %v1895
        %v1897 = vmul.f32 %v1648, %v1896
        %vm1898 = vcmp.eq.f32.partialorder %v1648, inf
        %v1899 = vsel %vm1898, %v1648, %v1897
        %vm1900 = vcmp.eq.f32.partialorder %v1648, 0.0
        %v1901 = vand.u32 %v1648, 2147483648
        %v1902 = vsel %vm1900, %v1901, %v1899
        %v1903 = vrsqrt.pop %v1650
        %v1904 = vmul.f32 %v1903, %v1650
        %v1905 = vmul.f32 %v1904, %v1903
        %v1906 = vmul.f32 0.5, %v1905
        %v1907 = vsub.f32 1.5, %v1906
        %v1908 = vmul.f32 %v1903, %v1907
        %v1909 = vmul.f32 %v1650, %v1908
        %vm1910 = vcmp.eq.f32.partialorder %v1650, inf
        %v1911 = vsel %vm1910, %v1650, %v1909
        %vm1912 = vcmp.eq.f32.partialorder %v1650, 0.0
        %v1913 = vand.u32 %v1650, 2147483648
        %v1914 = vsel %vm1912, %v1913, %v1911
        %v1915 = vrsqrt.pop %v1652
        %v1916 = vmul.f32 %v1915, %v1652
        %v1917 = vmul.f32 %v1916, %v1915
        %v1918 = vmul.f32 0.5, %v1917
        %v1919 = vsub.f32 1.5, %v1918
        %v1920 = vmul.f32 %v1915, %v1919
        %v1921 = vmul.f32 %v1652, %v1920
        %vm1922 = vcmp.eq.f32.partialorder %v1652, inf
        %v1923 = vsel %vm1922, %v1652, %v1921
        %vm1924 = vcmp.eq.f32.partialorder %v1652, 0.0
        %v1925 = vand.u32 %v1652, 2147483648
        %v1926 = vsel %vm1924, %v1925, %v1923
        %v1927 = vrsqrt.pop %v1654
        %v1928 = vmul.f32 %v1927, %v1654
        %v1929 = vmul.f32 %v1928, %v1927
        %v1930 = vmul.f32 0.5, %v1929
        %v1931 = vsub.f32 1.5, %v1930
        %v1932 = vmul.f32 %v1927, %v1931
        %v1933 = vmul.f32 %v1654, %v1932
        %vm1934 = vcmp.eq.f32.partialorder %v1654, inf
        %v1935 = vsel %vm1934, %v1654, %v1933
        %vm1936 = vcmp.eq.f32.partialorder %v1654, 0.0
        %v1937 = vand.u32 %v1654, 2147483648
        %v1938 = vsel %vm1936, %v1937, %v1935
        %v1939 = vrsqrt.pop %v1656
        %v1940 = vmul.f32 %v1939, %v1656
        %v1941 = vmul.f32 %v1940, %v1939
        %v1942 = vmul.f32 0.5, %v1941
        %v1943 = vsub.f32 1.5, %v1942
        %v1944 = vmul.f32 %v1939, %v1943
        %v1945 = vmul.f32 %v1656, %v1944
        %vm1946 = vcmp.eq.f32.partialorder %v1656, inf
        %v1947 = vsel %vm1946, %v1656, %v1945
        %vm1948 = vcmp.eq.f32.partialorder %v1656, 0.0
        %v1949 = vand.u32 %v1656, 2147483648
        %v1950 = vsel %vm1948, %v1949, %v1947
        %v1951 = vrsqrt.pop %v1658
        %v1952 = vmul.f32 %v1951, %v1658
        %v1953 = vmul.f32 %v1952, %v1951
        %v1954 = vmul.f32 0.5, %v1953
        %v1955 = vsub.f32 1.5, %v1954
        %v1956 = vmul.f32 %v1951, %v1955
        %v1957 = vmul.f32 %v1658, %v1956
        %vm1958 = vcmp.eq.f32.partialorder %v1658, inf
        %v1959 = vsel %vm1958, %v1658, %v1957
        %vm1960 = vcmp.eq.f32.partialorder %v1658, 0.0
        %v1961 = vand.u32 %v1658, 2147483648
        %v1962 = vsel %vm1960, %v1961, %v1959
        %v1963 = vrsqrt.pop %v1660
        %v1964 = vmul.f32 %v1963, %v1660
        %v1965 = vmul.f32 %v1964, %v1963
        %v1966 = vmul.f32 0.5, %v1965
        %v1967 = vsub.f32 1.5, %v1966
        %v1968 = vmul.f32 %v1963, %v1967
        %v1969 = vmul.f32 %v1660, %v1968
        %vm1970 = vcmp.eq.f32.partialorder %v1660, inf
        %v1971 = vsel %vm1970, %v1660, %v1969
        %vm1972 = vcmp.eq.f32.partialorder %v1660, 0.0
        %v1973 = vand.u32 %v1660, 2147483648
        %v1974 = vsel %vm1972, %v1973, %v1971
        %v1975 = vrsqrt.pop %v1662
        %v1976 = vmul.f32 %v1975, %v1662
        %v1977 = vmul.f32 %v1976, %v1975
        %v1978 = vmul.f32 0.5, %v1977
        %v1979 = vsub.f32 1.5, %v1978
        %v1980 = vmul.f32 %v1975, %v1979
        %v1981 = vmul.f32 %v1662, %v1980
        %vm1982 = vcmp.eq.f32.partialorder %v1662, inf
        %v1983 = vsel %vm1982, %v1662, %v1981
        %vm1984 = vcmp.eq.f32.partialorder %v1662, 0.0
        %v1985 = vand.u32 %v1662, 2147483648
        %v1986 = vsel %vm1984, %v1985, %v1983
        %v1987 = vrsqrt.pop %v1664
        %v1988 = vmul.f32 %v1987, %v1664
        %v1989 = vmul.f32 %v1988, %v1987
        %v1990 = vmul.f32 0.5, %v1989
        %v1991 = vsub.f32 1.5, %v1990
        %v1992 = vmul.f32 %v1987, %v1991
        %v1993 = vmul.f32 %v1664, %v1992
        %vm1994 = vcmp.eq.f32.partialorder %v1664, inf
        %v1995 = vsel %vm1994, %v1664, %v1993
        %vm1996 = vcmp.eq.f32.partialorder %v1664, 0.0
        %v1997 = vand.u32 %v1664, 2147483648
        %v1998 = vsel %vm1996, %v1997, %v1995
        %v1999 = vrsqrt.pop %v1666
        %v2000 = vmul.f32 %v1999, %v1666
        %v2001 = vmul.f32 %v2000, %v1999
        %v2002 = vmul.f32 0.5, %v2001
        %v2003 = vsub.f32 1.5, %v2002
        %v2004 = vmul.f32 %v1999, %v2003
        %v2005 = vmul.f32 %v1666, %v2004
        %vm2006 = vcmp.eq.f32.partialorder %v1666, inf
        %v2007 = vsel %vm2006, %v1666, %v2005
        %vm2008 = vcmp.eq.f32.partialorder %v1666, 0.0
        %v2009 = vand.u32 %v1666, 2147483648
        %v2010 = vsel %vm2008, %v2009, %v2007
        %v2011 = vrsqrt.pop %v1668
        %v2012 = vmul.f32 %v2011, %v1668
        %v2013 = vmul.f32 %v2012, %v2011
        %v2014 = vmul.f32 0.5, %v2013
        %v2015 = vsub.f32 1.5, %v2014
        %v2016 = vmul.f32 %v2011, %v2015
        %v2017 = vmul.f32 %v1668, %v2016
        %vm2018 = vcmp.eq.f32.partialorder %v1668, inf
        %v2019 = vsel %vm2018, %v1668, %v2017
        %vm2020 = vcmp.eq.f32.partialorder %v1668, 0.0
        %v2021 = vand.u32 %v1668, 2147483648
        %v2022 = vsel %vm2020, %v2021, %v2019
        %v2023 = vrsqrt.pop %v1670
        %v2024 = vmul.f32 %v2023, %v1670
        %v2025 = vmul.f32 %v2024, %v2023
        %v2026 = vmul.f32 0.5, %v2025
        %v2027 = vsub.f32 1.5, %v2026
        %v2028 = vmul.f32 %v2023, %v2027
        %v2029 = vmul.f32 %v1670, %v2028
        %vm2030 = vcmp.eq.f32.partialorder %v1670, inf
        %v2031 = vsel %vm2030, %v1670, %v2029
        %vm2032 = vcmp.eq.f32.partialorder %v1670, 0.0
        %v2033 = vand.u32 %v1670, 2147483648
        %v2034 = vsel %vm2032, %v2033, %v2031
        %v2035 = vrsqrt.pop %v1672
        %v2036 = vmul.f32 %v2035, %v1672
        %v2037 = vmul.f32 %v2036, %v2035
        %v2038 = vmul.f32 0.5, %v2037
        %v2039 = vsub.f32 1.5, %v2038
        %v2040 = vmul.f32 %v2035, %v2039
        %v2041 = vmul.f32 %v1672, %v2040
        %vm2042 = vcmp.eq.f32.partialorder %v1672, inf
        %v2043 = vsel %vm2042, %v1672, %v2041
        %vm2044 = vcmp.eq.f32.partialorder %v1672, 0.0
        %v2045 = vand.u32 %v1672, 2147483648
        %v2046 = vsel %vm2044, %v2045, %v2043
        %v2047 = vrsqrt.pop %v1674
        %v2048 = vmul.f32 %v2047, %v1674
        %v2049 = vmul.f32 %v2048, %v2047
        %v2050 = vmul.f32 0.5, %v2049
        %v2051 = vsub.f32 1.5, %v2050
        %v2052 = vmul.f32 %v2047, %v2051
        %v2053 = vmul.f32 %v1674, %v2052
        %vm2054 = vcmp.eq.f32.partialorder %v1674, inf
        %v2055 = vsel %vm2054, %v1674, %v2053
        %vm2056 = vcmp.eq.f32.partialorder %v1674, 0.0
        %v2057 = vand.u32 %v1674, 2147483648
        %v2058 = vsel %vm2056, %v2057, %v2055
        %v2059 = vpack.c.bf16 %v1698, %v1686
        %v2060 = vpack.c.bf16 %v1722, %v1710
        %v2061 = vpack.c.bf16 %v1746, %v1734
        %v2062 = vpack.c.bf16 %v1770, %v1758
        %v2063 = vpack.c.bf16 %v1794, %v1782
        %v2064 = vpack.c.bf16 %v1818, %v1806
        %v2065 = vpack.c.bf16 %v1842, %v1830
        %v2066 = vpack.c.bf16 %v1866, %v1854
        %v2067 = vpack.c.bf16 %v1890, %v1878
        %v2068 = vpack.c.bf16 %v1914, %v1902
        %v2069 = vpack.c.bf16 %v1938, %v1926
        %v2070 = vpack.c.bf16 %v1962, %v1950
        %v2071 = vpack.c.bf16 %v1986, %v1974
        %v2072 = vpack.c.bf16 %v2010, %v1998
        %v2073 = vpack.c.bf16 %v2034, %v2022
        %v2074 = vpack.c.bf16 %v2058, %v2046
        %v2075 = vld [vmem:[#allocation8] sm:$0xf]
        %v2076 = vld [vmem:[#allocation8 + $0x4] sm:$0xf]
        %v2077 = vld [vmem:[#allocation8 + $0x8] sm:$0xf]
        %v2078 = vld [vmem:[#allocation8 + $0xc] sm:$0xf]
        %v2079 = vld [vmem:[#allocation8 + $0x10] sm:$0xf]
        %v2080 = vld [vmem:[#allocation8 + $0x14] sm:$0xf]
        %v2081 = vld [vmem:[#allocation8 + $0x18] sm:$0xf]
        %v2082 = vld [vmem:[#allocation8 + $0x1c] sm:$0xf]
        %v2083 = vld [vmem:[#allocation8 + $0x20] sm:$0xf]
        %v2084 = vld [vmem:[#allocation8 + $0x24] sm:$0xf]
        %v2085 = vld [vmem:[#allocation8 + $0x28] sm:$0xf]
        %v2086 = vld [vmem:[#allocation8 + $0x2c] sm:$0xf]
        %v2087 = vld [vmem:[#allocation8 + $0x30] sm:$0xf]
        %v2088 = vld [vmem:[#allocation8 + $0x34] sm:$0xf]
        %v2089 = vld [vmem:[#allocation8 + $0x38] sm:$0xf]
        %v2090 = vld [vmem:[#allocation8 + $0x3c] sm:$0xf]
        %v2091 = vld [vmem:[#allocation8 + $0x40] sm:$0xf]
        %v2092 = vld [vmem:[#allocation8 + $0x44] sm:$0xf]
        %v2093 = vld [vmem:[#allocation8 + $0x48] sm:$0xf]
        %v2094 = vld [vmem:[#allocation8 + $0x4c] sm:$0xf]
        %v2095 = vld [vmem:[#allocation8 + $0x50] sm:$0xf]
        %v2096 = vld [vmem:[#allocation8 + $0x54] sm:$0xf]
        %v2097 = vld [vmem:[#allocation8 + $0x58] sm:$0xf]
        %v2098 = vld [vmem:[#allocation8 + $0x5c] sm:$0xf]
        %v2099 = vld [vmem:[#allocation8 + $0x60] sm:$0xf]
        %v2100 = vld [vmem:[#allocation8 + $0x64] sm:$0xf]
        %v2101 = vld [vmem:[#allocation8 + $0x68] sm:$0xf]
        %v2102 = vld [vmem:[#allocation8 + $0x6c] sm:$0xf]
        %v2103 = vld [vmem:[#allocation8 + $0x70] sm:$0xf]
        %v2104 = vld [vmem:[#allocation8 + $0x74] sm:$0xf]
        %v2105 = vld [vmem:[#allocation8 + $0x78] sm:$0xf]
        %v2106 = vld [vmem:[#allocation8 + $0x7c] sm:$0xf]
        %v2139 = vunpack.c.l.b16 %v499
        %v2140 = vunpack.c.l.b16 %v500
        %v2141 = vunpack.c.l.b16 %v501
        %v2142 = vunpack.c.l.b16 %v502
        %v2143 = vunpack.c.l.b16 %v503
        %v2144 = vunpack.c.l.b16 %v504
        %v2145 = vunpack.c.l.b16 %v505
        %v2146 = vunpack.c.l.b16 %v506
        %v2147 = vunpack.c.l.b16 %v507
        %v2148 = vunpack.c.l.b16 %v508
        %v2149 = vunpack.c.l.b16 %v509
        %v2150 = vunpack.c.l.b16 %v510
        %v2151 = vunpack.c.l.b16 %v511
        %v2152 = vunpack.c.l.b16 %v512
        %v2153 = vunpack.c.l.b16 %v513
        %v2154 = vunpack.c.l.b16 %v514
        %v2155 = vunpack.c.l.b16 %v515
        %v2156 = vunpack.c.l.b16 %v516
        %v2157 = vunpack.c.l.b16 %v517
        %v2158 = vunpack.c.l.b16 %v518
        %v2159 = vunpack.c.l.b16 %v519
        %v2160 = vunpack.c.l.b16 %v520
        %v2161 = vunpack.c.l.b16 %v521
        %v2162 = vunpack.c.l.b16 %v522
        %v2163 = vunpack.c.l.b16 %v523
        %v2164 = vunpack.c.l.b16 %v524
        %v2165 = vunpack.c.l.b16 %v525
        %v2166 = vunpack.c.l.b16 %v526
        %v2167 = vunpack.c.l.b16 %v527
        %v2168 = vunpack.c.l.b16 %v528
        %v2169 = vunpack.c.l.b16 %v529
        %v2170 = vunpack.c.l.b16 %v530
        %v2171 = vpack.c.b16 %v2140, %v2139
        %v2172 = vpack.c.b16 %v2142, %v2141
        %v2173 = vpack.c.b16 %v2144, %v2143
        %v2174 = vpack.c.b16 %v2146, %v2145
        %v2175 = vpack.c.b16 %v2148, %v2147
        %v2176 = vpack.c.b16 %v2150, %v2149
        %v2177 = vpack.c.b16 %v2152, %v2151
        %v2178 = vpack.c.b16 %v2154, %v2153
        %v2179 = vpack.c.b16 %v2156, %v2155
        %v2180 = vpack.c.b16 %v2158, %v2157
        %v2181 = vpack.c.b16 %v2160, %v2159
        %v2182 = vpack.c.b16 %v2162, %v2161
        %v2183 = vpack.c.b16 %v2164, %v2163
        %v2184 = vpack.c.b16 %v2166, %v2165
        %v2185 = vpack.c.b16 %v2168, %v2167
        %v2186 = vpack.c.b16 %v2170, %v2169
        %v2219 = vunpack.c.l.b16 %v2091
        %v2220 = vunpack.c.l.b16 %v2092
        %v2221 = vunpack.c.l.b16 %v2093
        %v2222 = vunpack.c.l.b16 %v2094
        %v2223 = vunpack.c.l.b16 %v2095
        %v2224 = vunpack.c.l.b16 %v2096
        %v2225 = vunpack.c.l.b16 %v2097
        %v2226 = vunpack.c.l.b16 %v2098
        %v2227 = vunpack.c.l.b16 %v2099
        %v2228 = vunpack.c.l.b16 %v2100
        %v2229 = vunpack.c.l.b16 %v2101
        %v2230 = vunpack.c.l.b16 %v2102
        %v2231 = vunpack.c.l.b16 %v2103
        %v2232 = vunpack.c.l.b16 %v2104
        %v2233 = vunpack.c.l.b16 %v2105
        %v2234 = vunpack.c.l.b16 %v2106
        %v2235 = vpack.c.b16 %v2220, %v2219
        %v2236 = vpack.c.b16 %v2222, %v2221
        %v2237 = vpack.c.b16 %v2224, %v2223
        %v2238 = vpack.c.b16 %v2226, %v2225
        %v2239 = vpack.c.b16 %v2228, %v2227
        %v2240 = vpack.c.b16 %v2230, %v2229
        %v2241 = vpack.c.b16 %v2232, %v2231
        %v2242 = vpack.c.b16 %v2234, %v2233
        %2251 = vmatpush.bf16.msra.mxu0 %v2242
        %2252 = vmatpush.bf16.msra.mxu0 %v2241
        %2253 = vmatpush.bf16.msra.mxu0 %v2240
        %2254 = vmatpush.bf16.msra.mxu0 %v2239
        %2255 = vmatpush.bf16.msra.mxu0 %v2238
        %2256 = vmatpush.bf16.msra.mxu0 %v2237
        %2257 = vmatpush.bf16.msra.mxu0 %v2236
        %2258 = vmatpush.bf16.msra.mxu0 %v2235
        %2259 = vmatmul.bf16.gmra.mxu0 %v2171
        %v2260 = vpop.f32.mrf.mxu0
        %v2261 = vadd.f32 0.0, %v2260
        %v2262 = vpop.f32.mrf.mxu0
        %v2263 = vadd.f32 0.0, %v2262
        %2264 = vmatmul.bf16.gmra.mxu0 %v2172
        %v2265 = vpop.f32.mrf.mxu0
        %v2266 = vadd.f32 0.0, %v2265
        %v2267 = vpop.f32.mrf.mxu0
        %v2268 = vadd.f32 0.0, %v2267
        %2269 = vmatmul.bf16.gmra.mxu0 %v2173
        %v2270 = vpop.f32.mrf.mxu0
        %v2271 = vadd.f32 0.0, %v2270
        %v2272 = vpop.f32.mrf.mxu0
        %v2273 = vadd.f32 0.0, %v2272
        %2274 = vmatmul.bf16.gmra.mxu0 %v2174
        %v2275 = vpop.f32.mrf.mxu0
        %v2276 = vadd.f32 0.0, %v2275
        %v2277 = vpop.f32.mrf.mxu0
        %v2278 = vadd.f32 0.0, %v2277
        %2279 = vmatmul.bf16.gmra.mxu0 %v2175
        %v2280 = vpop.f32.mrf.mxu0
        %v2281 = vadd.f32 0.0, %v2280
        %v2282 = vpop.f32.mrf.mxu0
        %v2283 = vadd.f32 0.0, %v2282
        %2284 = vmatmul.bf16.gmra.mxu0 %v2176
        %v2285 = vpop.f32.mrf.mxu0
        %v2286 = vadd.f32 0.0, %v2285
        %v2287 = vpop.f32.mrf.mxu0
        %v2288 = vadd.f32 0.0, %v2287
        %2289 = vmatmul.bf16.gmra.mxu0 %v2177
        %v2290 = vpop.f32.mrf.mxu0
        %v2291 = vadd.f32 0.0, %v2290
        %v2292 = vpop.f32.mrf.mxu0
        %v2293 = vadd.f32 0.0, %v2292
        %2294 = vmatmul.bf16.gmra.mxu0 %v2178
        %v2295 = vpop.f32.mrf.mxu0
        %v2296 = vadd.f32 0.0, %v2295
        %v2297 = vpop.f32.mrf.mxu0
        %v2298 = vadd.f32 0.0, %v2297
        %2299 = vmatmul.bf16.gmra.mxu0 %v2179
        %v2300 = vpop.f32.mrf.mxu0
        %v2301 = vadd.f32 0.0, %v2300
        %v2302 = vpop.f32.mrf.mxu0
        %v2303 = vadd.f32 0.0, %v2302
        %2304 = vmatmul.bf16.gmra.mxu0 %v2180
        %v2305 = vpop.f32.mrf.mxu0
        %v2306 = vadd.f32 0.0, %v2305
        %v2307 = vpop.f32.mrf.mxu0
        %v2308 = vadd.f32 0.0, %v2307
        %2309 = vmatmul.bf16.gmra.mxu0 %v2181
        %v2310 = vpop.f32.mrf.mxu0
        %v2311 = vadd.f32 0.0, %v2310
        %v2312 = vpop.f32.mrf.mxu0
        %v2313 = vadd.f32 0.0, %v2312
        %2314 = vmatmul.bf16.gmra.mxu0 %v2182
        %v2315 = vpop.f32.mrf.mxu0
        %v2316 = vadd.f32 0.0, %v2315
        %v2317 = vpop.f32.mrf.mxu0
        %v2318 = vadd.f32 0.0, %v2317
        %2319 = vmatmul.bf16.gmra.mxu0 %v2183
        %v2320 = vpop.f32.mrf.mxu0
        %v2321 = vadd.f32 0.0, %v2320
        %v2322 = vpop.f32.mrf.mxu0
        %v2323 = vadd.f32 0.0, %v2322
        %2324 = vmatmul.bf16.gmra.mxu0 %v2184
        %v2325 = vpop.f32.mrf.mxu0
        %v2326 = vadd.f32 0.0, %v2325
        %v2327 = vpop.f32.mrf.mxu0
        %v2328 = vadd.f32 0.0, %v2327
        %2329 = vmatmul.bf16.gmra.mxu0 %v2185
        %v2330 = vpop.f32.mrf.mxu0
        %v2331 = vadd.f32 0.0, %v2330
        %v2332 = vpop.f32.mrf.mxu0
        %v2333 = vadd.f32 0.0, %v2332
        %2334 = vmatmul.bf16.gmra.mxu0 %v2186
        %v2335 = vpop.f32.mrf.mxu0
        %v2336 = vadd.f32 0.0, %v2335
        %v2337 = vpop.f32.mrf.mxu0
        %v2338 = vadd.f32 0.0, %v2337
        %2339 = vdwg.mxu0
        %v2356 = vunpack.c.l.b16 %v2075
        %v2357 = vunpack.c.l.b16 %v2076
        %v2358 = vunpack.c.l.b16 %v2077
        %v2359 = vunpack.c.l.b16 %v2078
        %v2360 = vunpack.c.l.b16 %v2079
        %v2361 = vunpack.c.l.b16 %v2080
        %v2362 = vunpack.c.l.b16 %v2081
        %v2363 = vunpack.c.l.b16 %v2082
        %v2364 = vunpack.c.l.b16 %v2083
        %v2365 = vunpack.c.l.b16 %v2084
        %v2366 = vunpack.c.l.b16 %v2085
        %v2367 = vunpack.c.l.b16 %v2086
        %v2368 = vunpack.c.l.b16 %v2087
        %v2369 = vunpack.c.l.b16 %v2088
        %v2370 = vunpack.c.l.b16 %v2089
        %v2371 = vunpack.c.l.b16 %v2090
        %v2372 = vpack.c.b16 %v2357, %v2356
        %v2373 = vpack.c.b16 %v2359, %v2358
        %v2374 = vpack.c.b16 %v2361, %v2360
        %v2375 = vpack.c.b16 %v2363, %v2362
        %v2376 = vpack.c.b16 %v2365, %v2364
        %v2377 = vpack.c.b16 %v2367, %v2366
        %v2378 = vpack.c.b16 %v2369, %v2368
        %v2379 = vpack.c.b16 %v2371, %v2370
        %2388 = vmatpush.bf16.msra.mxu0 %v2379
        %2389 = vmatpush.bf16.msra.mxu0 %v2378
        %2390 = vmatpush.bf16.msra.mxu0 %v2377
        %2391 = vmatpush.bf16.msra.mxu0 %v2376
        %2392 = vmatpush.bf16.msra.mxu0 %v2375
        %2393 = vmatpush.bf16.msra.mxu0 %v2374
        %2394 = vmatpush.bf16.msra.mxu0 %v2373
        %2395 = vmatpush.bf16.msra.mxu0 %v2372
        %2396 = vmatmul.bf16.gmra.mxu0 %v2059
        %v2397 = vpop.f32.mrf.mxu0
        %v2398 = vadd.f32 %v2261, %v2397
        %v2399 = vpop.f32.mrf.mxu0
        %v2400 = vadd.f32 %v2263, %v2399
        %2401 = vmatmul.bf16.gmra.mxu0 %v2060
        %v2402 = vpop.f32.mrf.mxu0
        %v2403 = vadd.f32 %v2266, %v2402
        %v2404 = vpop.f32.mrf.mxu0
        %v2405 = vadd.f32 %v2268, %v2404
        %2406 = vmatmul.bf16.gmra.mxu0 %v2061
        %v2407 = vpop.f32.mrf.mxu0
        %v2408 = vadd.f32 %v2271, %v2407
        %v2409 = vpop.f32.mrf.mxu0
        %v2410 = vadd.f32 %v2273, %v2409
        %2411 = vmatmul.bf16.gmra.mxu0 %v2062
        %v2412 = vpop.f32.mrf.mxu0
        %v2413 = vadd.f32 %v2276, %v2412
        %v2414 = vpop.f32.mrf.mxu0
        %v2415 = vadd.f32 %v2278, %v2414
        %2416 = vmatmul.bf16.gmra.mxu0 %v2063
        %v2417 = vpop.f32.mrf.mxu0
        %v2418 = vadd.f32 %v2281, %v2417
        %v2419 = vpop.f32.mrf.mxu0
        %v2420 = vadd.f32 %v2283, %v2419
        %2421 = vmatmul.bf16.gmra.mxu0 %v2064
        %v2422 = vpop.f32.mrf.mxu0
        %v2423 = vadd.f32 %v2286, %v2422
        %v2424 = vpop.f32.mrf.mxu0
        %v2425 = vadd.f32 %v2288, %v2424
        %2426 = vmatmul.bf16.gmra.mxu0 %v2065
        %v2427 = vpop.f32.mrf.mxu0
        %v2428 = vadd.f32 %v2291, %v2427
        %v2429 = vpop.f32.mrf.mxu0
        %v2430 = vadd.f32 %v2293, %v2429
        %2431 = vmatmul.bf16.gmra.mxu0 %v2066
        %v2432 = vpop.f32.mrf.mxu0
        %v2433 = vadd.f32 %v2296, %v2432
        %v2434 = vpop.f32.mrf.mxu0
        %v2435 = vadd.f32 %v2298, %v2434
        %2436 = vmatmul.bf16.gmra.mxu0 %v2067
        %v2437 = vpop.f32.mrf.mxu0
        %v2438 = vadd.f32 %v2301, %v2437
        %v2439 = vpop.f32.mrf.mxu0
        %v2440 = vadd.f32 %v2303, %v2439
        %2441 = vmatmul.bf16.gmra.mxu0 %v2068
        %v2442 = vpop.f32.mrf.mxu0
        %v2443 = vadd.f32 %v2306, %v2442
        %v2444 = vpop.f32.mrf.mxu0
        %v2445 = vadd.f32 %v2308, %v2444
        %2446 = vmatmul.bf16.gmra.mxu0 %v2069
        %v2447 = vpop.f32.mrf.mxu0
        %v2448 = vadd.f32 %v2311, %v2447
        %v2449 = vpop.f32.mrf.mxu0
        %v2450 = vadd.f32 %v2313, %v2449
        %2451 = vmatmul.bf16.gmra.mxu0 %v2070
        %v2452 = vpop.f32.mrf.mxu0
        %v2453 = vadd.f32 %v2316, %v2452
        %v2454 = vpop.f32.mrf.mxu0
        %v2455 = vadd.f32 %v2318, %v2454
        %2456 = vmatmul.bf16.gmra.mxu0 %v2071
        %v2457 = vpop.f32.mrf.mxu0
        %v2458 = vadd.f32 %v2321, %v2457
        %v2459 = vpop.f32.mrf.mxu0
        %v2460 = vadd.f32 %v2323, %v2459
        %2461 = vmatmul.bf16.gmra.mxu0 %v2072
        %v2462 = vpop.f32.mrf.mxu0
        %v2463 = vadd.f32 %v2326, %v2462
        %v2464 = vpop.f32.mrf.mxu0
        %v2465 = vadd.f32 %v2328, %v2464
        %2466 = vmatmul.bf16.gmra.mxu0 %v2073
        %v2467 = vpop.f32.mrf.mxu0
        %v2468 = vadd.f32 %v2331, %v2467
        %v2469 = vpop.f32.mrf.mxu0
        %v2470 = vadd.f32 %v2333, %v2469
        %2471 = vmatmul.bf16.gmra.mxu0 %v2074
        %v2472 = vpop.f32.mrf.mxu0
        %v2473 = vadd.f32 %v2336, %v2472
        %v2474 = vpop.f32.mrf.mxu0
        %v2475 = vadd.f32 %v2338, %v2474
        %2476 = vdwg.mxu0
        %v2477 = vld [vmem:[#allocation10] sm:$0x1]
        %v2479 = vperm.slane %v2477, 0
        %v2481 = vadd.f32 %v2398, %v2479
        %v2482 = vadd.f32 %v2400, %v2479
        %v2483 = vadd.f32 %v2403, %v2479
        %v2484 = vadd.f32 %v2405, %v2479
        %v2485 = vadd.f32 %v2408, %v2479
        %v2486 = vadd.f32 %v2410, %v2479
        %v2487 = vadd.f32 %v2413, %v2479
        %v2488 = vadd.f32 %v2415, %v2479
        %v2489 = vadd.f32 %v2418, %v2479
        %v2490 = vadd.f32 %v2420, %v2479
        %v2491 = vadd.f32 %v2423, %v2479
        %v2492 = vadd.f32 %v2425, %v2479
        %v2493 = vadd.f32 %v2428, %v2479
        %v2494 = vadd.f32 %v2430, %v2479
        %v2495 = vadd.f32 %v2433, %v2479
        %v2496 = vadd.f32 %v2435, %v2479
        %v2497 = vadd.f32 %v2438, %v2479
        %v2498 = vadd.f32 %v2440, %v2479
        %v2499 = vadd.f32 %v2443, %v2479
        %v2500 = vadd.f32 %v2445, %v2479
        %v2501 = vadd.f32 %v2448, %v2479
        %v2502 = vadd.f32 %v2450, %v2479
        %v2503 = vadd.f32 %v2453, %v2479
        %v2504 = vadd.f32 %v2455, %v2479
        %v2505 = vadd.f32 %v2458, %v2479
        %v2506 = vadd.f32 %v2460, %v2479
        %v2507 = vadd.f32 %v2463, %v2479
        %v2508 = vadd.f32 %v2465, %v2479
        %v2509 = vadd.f32 %v2468, %v2479
        %v2510 = vadd.f32 %v2470, %v2479
        %v2511 = vadd.f32 %v2473, %v2479
        %v2512 = vadd.f32 %v2475, %v2479
        %v2513 = vxor.u32 %v2481, 2147483648
        %v2514 = vxor.u32 %v2482, 2147483648
        %v2515 = vxor.u32 %v2483, 2147483648
        %v2516 = vxor.u32 %v2484, 2147483648
        %v2517 = vxor.u32 %v2485, 2147483648
        %v2518 = vxor.u32 %v2486, 2147483648
        %v2519 = vxor.u32 %v2487, 2147483648
        %v2520 = vxor.u32 %v2488, 2147483648
        %v2521 = vxor.u32 %v2489, 2147483648
        %v2522 = vxor.u32 %v2490, 2147483648
        %v2523 = vxor.u32 %v2491, 2147483648
        %v2524 = vxor.u32 %v2492, 2147483648
        %v2525 = vxor.u32 %v2493, 2147483648
        %v2526 = vxor.u32 %v2494, 2147483648
        %v2527 = vxor.u32 %v2495, 2147483648
        %v2528 = vxor.u32 %v2496, 2147483648
        %v2529 = vxor.u32 %v2497, 2147483648
        %v2530 = vxor.u32 %v2498, 2147483648
        %v2531 = vxor.u32 %v2499, 2147483648
        %v2532 = vxor.u32 %v2500, 2147483648
        %v2533 = vxor.u32 %v2501, 2147483648
        %v2534 = vxor.u32 %v2502, 2147483648
        %v2535 = vxor.u32 %v2503, 2147483648
        %v2536 = vxor.u32 %v2504, 2147483648
        %v2537 = vxor.u32 %v2505, 2147483648
        %v2538 = vxor.u32 %v2506, 2147483648
        %v2539 = vxor.u32 %v2507, 2147483648
        %v2540 = vxor.u32 %v2508, 2147483648
        %v2541 = vxor.u32 %v2509, 2147483648
        %v2542 = vxor.u32 %v2510, 2147483648
        %v2543 = vxor.u32 %v2511, 2147483648
        %v2544 = vxor.u32 %v2512, 2147483648
        %v2545 = vmul.f32 %v2513, 1.442695
        %v2546 = vpow.pop %v2545
        %v2547 = vmul.f32 %v2514, 1.442695
        %v2548 = vpow.pop %v2547
        %v2549 = vmul.f32 %v2515, 1.442695
        %v2550 = vpow.pop %v2549
        %v2551 = vmul.f32 %v2516, 1.442695
        %v2552 = vpow.pop %v2551
        %v2553 = vmul.f32 %v2517, 1.442695
        %v2554 = vpow.pop %v2553
        %v2555 = vmul.f32 %v2518, 1.442695
        %v2556 = vpow.pop %v2555
        %v2557 = vmul.f32 %v2519, 1.442695
        %v2558 = vpow.pop %v2557
        %v2559 = vmul.f32 %v2520, 1.442695
        %v2560 = vpow.pop %v2559
        %v2561 = vmul.f32 %v2521, 1.442695
        %v2562 = vpow.pop %v2561
        %v2563 = vmul.f32 %v2522, 1.442695
        %v2564 = vpow.pop %v2563
        %v2565 = vmul.f32 %v2523, 1.442695
        %v2566 = vpow.pop %v2565
        %v2567 = vmul.f32 %v2524, 1.442695
        %v2568 = vpow.pop %v2567
        %v2569 = vmul.f32 %v2525, 1.442695
        %v2570 = vpow.pop %v2569
        %v2571 = vmul.f32 %v2526, 1.442695
        %v2572 = vpow.pop %v2571
        %v2573 = vmul.f32 %v2527, 1.442695
        %v2574 = vpow.pop %v2573
        %v2575 = vmul.f32 %v2528, 1.442695
        %v2576 = vpow.pop %v2575
        %v2577 = vmul.f32 %v2529, 1.442695
        %v2578 = vpow.pop %v2577
        %v2579 = vmul.f32 %v2530, 1.442695
        %v2580 = vpow.pop %v2579
        %v2581 = vmul.f32 %v2531, 1.442695
        %v2582 = vpow.pop %v2581
        %v2583 = vmul.f32 %v2532, 1.442695
        %v2584 = vpow.pop %v2583
        %v2585 = vmul.f32 %v2533, 1.442695
        %v2586 = vpow.pop %v2585
        %v2587 = vmul.f32 %v2534, 1.442695
        %v2588 = vpow.pop %v2587
        %v2589 = vmul.f32 %v2535, 1.442695
        %v2590 = vpow.pop %v2589
        %v2591 = vmul.f32 %v2536, 1.442695
        %v2592 = vpow.pop %v2591
        %v2593 = vmul.f32 %v2537, 1.442695
        %v2594 = vpow.pop %v2593
        %v2595 = vmul.f32 %v2538, 1.442695
        %v2596 = vpow.pop %v2595
        %v2597 = vmul.f32 %v2539, 1.442695
        %v2598 = vpow.pop %v2597
        %v2599 = vmul.f32 %v2540, 1.442695
        %v2600 = vpow.pop %v2599
        %v2601 = vmul.f32 %v2541, 1.442695
        %v2602 = vpow.pop %v2601
        %v2603 = vmul.f32 %v2542, 1.442695
        %v2604 = vpow.pop %v2603
        %v2605 = vmul.f32 %v2543, 1.442695
        %v2606 = vpow.pop %v2605
        %v2607 = vmul.f32 %v2544, 1.442695
        %v2608 = vpow.pop %v2607
        %v2609 = vadd.f32 %v2546, 1.0
        %v2610 = vadd.f32 %v2548, 1.0
        %v2611 = vadd.f32 %v2550, 1.0
        %v2612 = vadd.f32 %v2552, 1.0
        %v2613 = vadd.f32 %v2554, 1.0
        %v2614 = vadd.f32 %v2556, 1.0
        %v2615 = vadd.f32 %v2558, 1.0
        %v2616 = vadd.f32 %v2560, 1.0
        %v2617 = vadd.f32 %v2562, 1.0
        %v2618 = vadd.f32 %v2564, 1.0
        %v2619 = vadd.f32 %v2566, 1.0
        %v2620 = vadd.f32 %v2568, 1.0
        %v2621 = vadd.f32 %v2570, 1.0
        %v2622 = vadd.f32 %v2572, 1.0
        %v2623 = vadd.f32 %v2574, 1.0
        %v2624 = vadd.f32 %v2576, 1.0
        %v2625 = vadd.f32 %v2578, 1.0
        %v2626 = vadd.f32 %v2580, 1.0
        %v2627 = vadd.f32 %v2582, 1.0
        %v2628 = vadd.f32 %v2584, 1.0
        %v2629 = vadd.f32 %v2586, 1.0
        %v2630 = vadd.f32 %v2588, 1.0
        %v2631 = vadd.f32 %v2590, 1.0
        %v2632 = vadd.f32 %v2592, 1.0
        %v2633 = vadd.f32 %v2594, 1.0
        %v2634 = vadd.f32 %v2596, 1.0
        %v2635 = vadd.f32 %v2598, 1.0
        %v2636 = vadd.f32 %v2600, 1.0
        %v2637 = vadd.f32 %v2602, 1.0
        %v2638 = vadd.f32 %v2604, 1.0
        %v2639 = vadd.f32 %v2606, 1.0
        %v2640 = vadd.f32 %v2608, 1.0
        %v2641 = vrcp.pop %v2609
        %v2642 = vmul.f32 %v2609, %v2641
        %v2643 = vsub.f32 1.0, %v2642
        %v2644 = vmul.f32 %v2641, %v2643
        %v2645 = vadd.f32 %v2641, %v2644
        %vm2646 = vweird.f32 %v2609
        %vm2647 = vweird.f32 %v2641
        %vm2648 = vmor %vm2646, %vm2647
        %v2649 = vsel %vm2648, %v2641, %v2645
        %v2650 = vand.u32 2147483647, %v2609
        %vm2651 = vcmp.eq.f32.partialorder %v2650, 8.507059e+37
        %v2652 = vand.u32 %v2609, 2147483648
        %v2653 = vor.u32 1.1754944e-38, %v2652
        %v2654 = vsel %vm2651, %v2653, %v2649
        %v2655 = vmul.f32 1.0, %v2654
        %v2656 = vrcp.pop %v2610
        %v2657 = vmul.f32 %v2610, %v2656
        %v2658 = vsub.f32 1.0, %v2657
        %v2659 = vmul.f32 %v2656, %v2658
        %v2660 = vadd.f32 %v2656, %v2659
        %vm2661 = vweird.f32 %v2610
        %vm2662 = vweird.f32 %v2656
        %vm2663 = vmor %vm2661, %vm2662
        %v2664 = vsel %vm2663, %v2656, %v2660
        %v2665 = vand.u32 2147483647, %v2610
        %vm2666 = vcmp.eq.f32.partialorder %v2665, 8.507059e+37
        %v2667 = vand.u32 %v2610, 2147483648
        %v2668 = vor.u32 1.1754944e-38, %v2667
        %v2669 = vsel %vm2666, %v2668, %v2664
        %v2670 = vmul.f32 1.0, %v2669
        %v2671 = vrcp.pop %v2611
        %v2672 = vmul.f32 %v2611, %v2671
        %v2673 = vsub.f32 1.0, %v2672
        %v2674 = vmul.f32 %v2671, %v2673
        %v2675 = vadd.f32 %v2671, %v2674
        %vm2676 = vweird.f32 %v2611
        %vm2677 = vweird.f32 %v2671
        %vm2678 = vmor %vm2676, %vm2677
        %v2679 = vsel %vm2678, %v2671, %v2675
        %v2680 = vand.u32 2147483647, %v2611
        %vm2681 = vcmp.eq.f32.partialorder %v2680, 8.507059e+37
        %v2682 = vand.u32 %v2611, 2147483648
        %v2683 = vor.u32 1.1754944e-38, %v2682
        %v2684 = vsel %vm2681, %v2683, %v2679
        %v2685 = vmul.f32 1.0, %v2684
        %v2686 = vrcp.pop %v2612
        %v2687 = vmul.f32 %v2612, %v2686
        %v2688 = vsub.f32 1.0, %v2687
        %v2689 = vmul.f32 %v2686, %v2688
        %v2690 = vadd.f32 %v2686, %v2689
        %vm2691 = vweird.f32 %v2612
        %vm2692 = vweird.f32 %v2686
        %vm2693 = vmor %vm2691, %vm2692
        %v2694 = vsel %vm2693, %v2686, %v2690
        %v2695 = vand.u32 2147483647, %v2612
        %vm2696 = vcmp.eq.f32.partialorder %v2695, 8.507059e+37
        %v2697 = vand.u32 %v2612, 2147483648
        %v2698 = vor.u32 1.1754944e-38, %v2697
        %v2699 = vsel %vm2696, %v2698, %v2694
        %v2700 = vmul.f32 1.0, %v2699
        %v2701 = vrcp.pop %v2613
        %v2702 = vmul.f32 %v2613, %v2701
        %v2703 = vsub.f32 1.0, %v2702
        %v2704 = vmul.f32 %v2701, %v2703
        %v2705 = vadd.f32 %v2701, %v2704
        %vm2706 = vweird.f32 %v2613
        %vm2707 = vweird.f32 %v2701
        %vm2708 = vmor %vm2706, %vm2707
        %v2709 = vsel %vm2708, %v2701, %v2705
        %v2710 = vand.u32 2147483647, %v2613
        %vm2711 = vcmp.eq.f32.partialorder %v2710, 8.507059e+37
        %v2712 = vand.u32 %v2613, 2147483648
        %v2713 = vor.u32 1.1754944e-38, %v2712
        %v2714 = vsel %vm2711, %v2713, %v2709
        %v2715 = vmul.f32 1.0, %v2714
        %v2716 = vrcp.pop %v2614
        %v2717 = vmul.f32 %v2614, %v2716
        %v2718 = vsub.f32 1.0, %v2717
        %v2719 = vmul.f32 %v2716, %v2718
        %v2720 = vadd.f32 %v2716, %v2719
        %vm2721 = vweird.f32 %v2614
        %vm2722 = vweird.f32 %v2716
        %vm2723 = vmor %vm2721, %vm2722
        %v2724 = vsel %vm2723, %v2716, %v2720
        %v2725 = vand.u32 2147483647, %v2614
        %vm2726 = vcmp.eq.f32.partialorder %v2725, 8.507059e+37
        %v2727 = vand.u32 %v2614, 2147483648
        %v2728 = vor.u32 1.1754944e-38, %v2727
        %v2729 = vsel %vm2726, %v2728, %v2724
        %v2730 = vmul.f32 1.0, %v2729
        %v2731 = vrcp.pop %v2615
        %v2732 = vmul.f32 %v2615, %v2731
        %v2733 = vsub.f32 1.0, %v2732
        %v2734 = vmul.f32 %v2731, %v2733
        %v2735 = vadd.f32 %v2731, %v2734
        %vm2736 = vweird.f32 %v2615
        %vm2737 = vweird.f32 %v2731
        %vm2738 = vmor %vm2736, %vm2737
        %v2739 = vsel %vm2738, %v2731, %v2735
        %v2740 = vand.u32 2147483647, %v2615
        %vm2741 = vcmp.eq.f32.partialorder %v2740, 8.507059e+37
        %v2742 = vand.u32 %v2615, 2147483648
        %v2743 = vor.u32 1.1754944e-38, %v2742
        %v2744 = vsel %vm2741, %v2743, %v2739
        %v2745 = vmul.f32 1.0, %v2744
        %v2746 = vrcp.pop %v2616
        %v2747 = vmul.f32 %v2616, %v2746
        %v2748 = vsub.f32 1.0, %v2747
        %v2749 = vmul.f32 %v2746, %v2748
        %v2750 = vadd.f32 %v2746, %v2749
        %vm2751 = vweird.f32 %v2616
        %vm2752 = vweird.f32 %v2746
        %vm2753 = vmor %vm2751, %vm2752
        %v2754 = vsel %vm2753, %v2746, %v2750
        %v2755 = vand.u32 2147483647, %v2616
        %vm2756 = vcmp.eq.f32.partialorder %v2755, 8.507059e+37
        %v2757 = vand.u32 %v2616, 2147483648
        %v2758 = vor.u32 1.1754944e-38, %v2757
        %v2759 = vsel %vm2756, %v2758, %v2754
        %v2760 = vmul.f32 1.0, %v2759
        %v2761 = vrcp.pop %v2617
        %v2762 = vmul.f32 %v2617, %v2761
        %v2763 = vsub.f32 1.0, %v2762
        %v2764 = vmul.f32 %v2761, %v2763
        %v2765 = vadd.f32 %v2761, %v2764
        %vm2766 = vweird.f32 %v2617
        %vm2767 = vweird.f32 %v2761
        %vm2768 = vmor %vm2766, %vm2767
        %v2769 = vsel %vm2768, %v2761, %v2765
        %v2770 = vand.u32 2147483647, %v2617
        %vm2771 = vcmp.eq.f32.partialorder %v2770, 8.507059e+37
        %v2772 = vand.u32 %v2617, 2147483648
        %v2773 = vor.u32 1.1754944e-38, %v2772
        %v2774 = vsel %vm2771, %v2773, %v2769
        %v2775 = vmul.f32 1.0, %v2774
        %v2776 = vrcp.pop %v2618
        %v2777 = vmul.f32 %v2618, %v2776
        %v2778 = vsub.f32 1.0, %v2777
        %v2779 = vmul.f32 %v2776, %v2778
        %v2780 = vadd.f32 %v2776, %v2779
        %vm2781 = vweird.f32 %v2618
        %vm2782 = vweird.f32 %v2776
        %vm2783 = vmor %vm2781, %vm2782
        %v2784 = vsel %vm2783, %v2776, %v2780
        %v2785 = vand.u32 2147483647, %v2618
        %vm2786 = vcmp.eq.f32.partialorder %v2785, 8.507059e+37
        %v2787 = vand.u32 %v2618, 2147483648
        %v2788 = vor.u32 1.1754944e-38, %v2787
        %v2789 = vsel %vm2786, %v2788, %v2784
        %v2790 = vmul.f32 1.0, %v2789
        %v2791 = vrcp.pop %v2619
        %v2792 = vmul.f32 %v2619, %v2791
        %v2793 = vsub.f32 1.0, %v2792
        %v2794 = vmul.f32 %v2791, %v2793
        %v2795 = vadd.f32 %v2791, %v2794
        %vm2796 = vweird.f32 %v2619
        %vm2797 = vweird.f32 %v2791
        %vm2798 = vmor %vm2796, %vm2797
        %v2799 = vsel %vm2798, %v2791, %v2795
        %v2800 = vand.u32 2147483647, %v2619
        %vm2801 = vcmp.eq.f32.partialorder %v2800, 8.507059e+37
        %v2802 = vand.u32 %v2619, 2147483648
        %v2803 = vor.u32 1.1754944e-38, %v2802
        %v2804 = vsel %vm2801, %v2803, %v2799
        %v2805 = vmul.f32 1.0, %v2804
        %v2806 = vrcp.pop %v2620
        %v2807 = vmul.f32 %v2620, %v2806
        %v2808 = vsub.f32 1.0, %v2807
        %v2809 = vmul.f32 %v2806, %v2808
        %v2810 = vadd.f32 %v2806, %v2809
        %vm2811 = vweird.f32 %v2620
        %vm2812 = vweird.f32 %v2806
        %vm2813 = vmor %vm2811, %vm2812
        %v2814 = vsel %vm2813, %v2806, %v2810
        %v2815 = vand.u32 2147483647, %v2620
        %vm2816 = vcmp.eq.f32.partialorder %v2815, 8.507059e+37
        %v2817 = vand.u32 %v2620, 2147483648
        %v2818 = vor.u32 1.1754944e-38, %v2817
        %v2819 = vsel %vm2816, %v2818, %v2814
        %v2820 = vmul.f32 1.0, %v2819
        %v2821 = vrcp.pop %v2621
        %v2822 = vmul.f32 %v2621, %v2821
        %v2823 = vsub.f32 1.0, %v2822
        %v2824 = vmul.f32 %v2821, %v2823
        %v2825 = vadd.f32 %v2821, %v2824
        %vm2826 = vweird.f32 %v2621
        %vm2827 = vweird.f32 %v2821
        %vm2828 = vmor %vm2826, %vm2827
        %v2829 = vsel %vm2828, %v2821, %v2825
        %v2830 = vand.u32 2147483647, %v2621
        %vm2831 = vcmp.eq.f32.partialorder %v2830, 8.507059e+37
        %v2832 = vand.u32 %v2621, 2147483648
        %v2833 = vor.u32 1.1754944e-38, %v2832
        %v2834 = vsel %vm2831, %v2833, %v2829
        %v2835 = vmul.f32 1.0, %v2834
        %v2836 = vrcp.pop %v2622
        %v2837 = vmul.f32 %v2622, %v2836
        %v2838 = vsub.f32 1.0, %v2837
        %v2839 = vmul.f32 %v2836, %v2838
        %v2840 = vadd.f32 %v2836, %v2839
        %vm2841 = vweird.f32 %v2622
        %vm2842 = vweird.f32 %v2836
        %vm2843 = vmor %vm2841, %vm2842
        %v2844 = vsel %vm2843, %v2836, %v2840
        %v2845 = vand.u32 2147483647, %v2622
        %vm2846 = vcmp.eq.f32.partialorder %v2845, 8.507059e+37
        %v2847 = vand.u32 %v2622, 2147483648
        %v2848 = vor.u32 1.1754944e-38, %v2847
        %v2849 = vsel %vm2846, %v2848, %v2844
        %v2850 = vmul.f32 1.0, %v2849
        %v2851 = vrcp.pop %v2623
        %v2852 = vmul.f32 %v2623, %v2851
        %v2853 = vsub.f32 1.0, %v2852
        %v2854 = vmul.f32 %v2851, %v2853
        %v2855 = vadd.f32 %v2851, %v2854
        %vm2856 = vweird.f32 %v2623
        %vm2857 = vweird.f32 %v2851
        %vm2858 = vmor %vm2856, %vm2857
        %v2859 = vsel %vm2858, %v2851, %v2855
        %v2860 = vand.u32 2147483647, %v2623
        %vm2861 = vcmp.eq.f32.partialorder %v2860, 8.507059e+37
        %v2862 = vand.u32 %v2623, 2147483648
        %v2863 = vor.u32 1.1754944e-38, %v2862
        %v2864 = vsel %vm2861, %v2863, %v2859
        %v2865 = vmul.f32 1.0, %v2864
        %v2866 = vrcp.pop %v2624
        %v2867 = vmul.f32 %v2624, %v2866
        %v2868 = vsub.f32 1.0, %v2867
        %v2869 = vmul.f32 %v2866, %v2868
        %v2870 = vadd.f32 %v2866, %v2869
        %vm2871 = vweird.f32 %v2624
        %vm2872 = vweird.f32 %v2866
        %vm2873 = vmor %vm2871, %vm2872
        %v2874 = vsel %vm2873, %v2866, %v2870
        %v2875 = vand.u32 2147483647, %v2624
        %vm2876 = vcmp.eq.f32.partialorder %v2875, 8.507059e+37
        %v2877 = vand.u32 %v2624, 2147483648
        %v2878 = vor.u32 1.1754944e-38, %v2877
        %v2879 = vsel %vm2876, %v2878, %v2874
        %v2880 = vmul.f32 1.0, %v2879
        %v2881 = vrcp.pop %v2625
        %v2882 = vmul.f32 %v2625, %v2881
        %v2883 = vsub.f32 1.0, %v2882
        %v2884 = vmul.f32 %v2881, %v2883
        %v2885 = vadd.f32 %v2881, %v2884
        %vm2886 = vweird.f32 %v2625
        %vm2887 = vweird.f32 %v2881
        %vm2888 = vmor %vm2886, %vm2887
        %v2889 = vsel %vm2888, %v2881, %v2885
        %v2890 = vand.u32 2147483647, %v2625
        %vm2891 = vcmp.eq.f32.partialorder %v2890, 8.507059e+37
        %v2892 = vand.u32 %v2625, 2147483648
        %v2893 = vor.u32 1.1754944e-38, %v2892
        %v2894 = vsel %vm2891, %v2893, %v2889
        %v2895 = vmul.f32 1.0, %v2894
        %v2896 = vrcp.pop %v2626
        %v2897 = vmul.f32 %v2626, %v2896
        %v2898 = vsub.f32 1.0, %v2897
        %v2899 = vmul.f32 %v2896, %v2898
        %v2900 = vadd.f32 %v2896, %v2899
        %vm2901 = vweird.f32 %v2626
        %vm2902 = vweird.f32 %v2896
        %vm2903 = vmor %vm2901, %vm2902
        %v2904 = vsel %vm2903, %v2896, %v2900
        %v2905 = vand.u32 2147483647, %v2626
        %vm2906 = vcmp.eq.f32.partialorder %v2905, 8.507059e+37
        %v2907 = vand.u32 %v2626, 2147483648
        %v2908 = vor.u32 1.1754944e-38, %v2907
        %v2909 = vsel %vm2906, %v2908, %v2904
        %v2910 = vmul.f32 1.0, %v2909
        %v2911 = vrcp.pop %v2627
        %v2912 = vmul.f32 %v2627, %v2911
        %v2913 = vsub.f32 1.0, %v2912
        %v2914 = vmul.f32 %v2911, %v2913
        %v2915 = vadd.f32 %v2911, %v2914
        %vm2916 = vweird.f32 %v2627
        %vm2917 = vweird.f32 %v2911
        %vm2918 = vmor %vm2916, %vm2917
        %v2919 = vsel %vm2918, %v2911, %v2915
        %v2920 = vand.u32 2147483647, %v2627
        %vm2921 = vcmp.eq.f32.partialorder %v2920, 8.507059e+37
        %v2922 = vand.u32 %v2627, 2147483648
        %v2923 = vor.u32 1.1754944e-38, %v2922
        %v2924 = vsel %vm2921, %v2923, %v2919
        %v2925 = vmul.f32 1.0, %v2924
        %v2926 = vrcp.pop %v2628
        %v2927 = vmul.f32 %v2628, %v2926
        %v2928 = vsub.f32 1.0, %v2927
        %v2929 = vmul.f32 %v2926, %v2928
        %v2930 = vadd.f32 %v2926, %v2929
        %vm2931 = vweird.f32 %v2628
        %vm2932 = vweird.f32 %v2926
        %vm2933 = vmor %vm2931, %vm2932
        %v2934 = vsel %vm2933, %v2926, %v2930
        %v2935 = vand.u32 2147483647, %v2628
        %vm2936 = vcmp.eq.f32.partialorder %v2935, 8.507059e+37
        %v2937 = vand.u32 %v2628, 2147483648
        %v2938 = vor.u32 1.1754944e-38, %v2937
        %v2939 = vsel %vm2936, %v2938, %v2934
        %v2940 = vmul.f32 1.0, %v2939
        %v2941 = vrcp.pop %v2629
        %v2942 = vmul.f32 %v2629, %v2941
        %v2943 = vsub.f32 1.0, %v2942
        %v2944 = vmul.f32 %v2941, %v2943
        %v2945 = vadd.f32 %v2941, %v2944
        %vm2946 = vweird.f32 %v2629
        %vm2947 = vweird.f32 %v2941
        %vm2948 = vmor %vm2946, %vm2947
        %v2949 = vsel %vm2948, %v2941, %v2945
        %v2950 = vand.u32 2147483647, %v2629
        %vm2951 = vcmp.eq.f32.partialorder %v2950, 8.507059e+37
        %v2952 = vand.u32 %v2629, 2147483648
        %v2953 = vor.u32 1.1754944e-38, %v2952
        %v2954 = vsel %vm2951, %v2953, %v2949
        %v2955 = vmul.f32 1.0, %v2954
        %v2956 = vrcp.pop %v2630
        %v2957 = vmul.f32 %v2630, %v2956
        %v2958 = vsub.f32 1.0, %v2957
        %v2959 = vmul.f32 %v2956, %v2958
        %v2960 = vadd.f32 %v2956, %v2959
        %vm2961 = vweird.f32 %v2630
        %vm2962 = vweird.f32 %v2956
        %vm2963 = vmor %vm2961, %vm2962
        %v2964 = vsel %vm2963, %v2956, %v2960
        %v2965 = vand.u32 2147483647, %v2630
        %vm2966 = vcmp.eq.f32.partialorder %v2965, 8.507059e+37
        %v2967 = vand.u32 %v2630, 2147483648
        %v2968 = vor.u32 1.1754944e-38, %v2967
        %v2969 = vsel %vm2966, %v2968, %v2964
        %v2970 = vmul.f32 1.0, %v2969
        %v2971 = vrcp.pop %v2631
        %v2972 = vmul.f32 %v2631, %v2971
        %v2973 = vsub.f32 1.0, %v2972
        %v2974 = vmul.f32 %v2971, %v2973
        %v2975 = vadd.f32 %v2971, %v2974
        %vm2976 = vweird.f32 %v2631
        %vm2977 = vweird.f32 %v2971
        %vm2978 = vmor %vm2976, %vm2977
        %v2979 = vsel %vm2978, %v2971, %v2975
        %v2980 = vand.u32 2147483647, %v2631
        %vm2981 = vcmp.eq.f32.partialorder %v2980, 8.507059e+37
        %v2982 = vand.u32 %v2631, 2147483648
        %v2983 = vor.u32 1.1754944e-38, %v2982
        %v2984 = vsel %vm2981, %v2983, %v2979
        %v2985 = vmul.f32 1.0, %v2984
        %v2986 = vrcp.pop %v2632
        %v2987 = vmul.f32 %v2632, %v2986
        %v2988 = vsub.f32 1.0, %v2987
        %v2989 = vmul.f32 %v2986, %v2988
        %v2990 = vadd.f32 %v2986, %v2989
        %vm2991 = vweird.f32 %v2632
        %vm2992 = vweird.f32 %v2986
        %vm2993 = vmor %vm2991, %vm2992
        %v2994 = vsel %vm2993, %v2986, %v2990
        %v2995 = vand.u32 2147483647, %v2632
        %vm2996 = vcmp.eq.f32.partialorder %v2995, 8.507059e+37
        %v2997 = vand.u32 %v2632, 2147483648
        %v2998 = vor.u32 1.1754944e-38, %v2997
        %v2999 = vsel %vm2996, %v2998, %v2994
        %v3000 = vmul.f32 1.0, %v2999
        %v3001 = vrcp.pop %v2633
        %v3002 = vmul.f32 %v2633, %v3001
        %v3003 = vsub.f32 1.0, %v3002
        %v3004 = vmul.f32 %v3001, %v3003
        %v3005 = vadd.f32 %v3001, %v3004
        %vm3006 = vweird.f32 %v2633
        %vm3007 = vweird.f32 %v3001
        %vm3008 = vmor %vm3006, %vm3007
        %v3009 = vsel %vm3008, %v3001, %v3005
        %v3010 = vand.u32 2147483647, %v2633
        %vm3011 = vcmp.eq.f32.partialorder %v3010, 8.507059e+37
        %v3012 = vand.u32 %v2633, 2147483648
        %v3013 = vor.u32 1.1754944e-38, %v3012
        %v3014 = vsel %vm3011, %v3013, %v3009
        %v3015 = vmul.f32 1.0, %v3014
        %v3016 = vrcp.pop %v2634
        %v3017 = vmul.f32 %v2634, %v3016
        %v3018 = vsub.f32 1.0, %v3017
        %v3019 = vmul.f32 %v3016, %v3018
        %v3020 = vadd.f32 %v3016, %v3019
        %vm3021 = vweird.f32 %v2634
        %vm3022 = vweird.f32 %v3016
        %vm3023 = vmor %vm3021, %vm3022
        %v3024 = vsel %vm3023, %v3016, %v3020
        %v3025 = vand.u32 2147483647, %v2634
        %vm3026 = vcmp.eq.f32.partialorder %v3025, 8.507059e+37
        %v3027 = vand.u32 %v2634, 2147483648
        %v3028 = vor.u32 1.1754944e-38, %v3027
        %v3029 = vsel %vm3026, %v3028, %v3024
        %v3030 = vmul.f32 1.0, %v3029
        %v3031 = vrcp.pop %v2635
        %v3032 = vmul.f32 %v2635, %v3031
        %v3033 = vsub.f32 1.0, %v3032
        %v3034 = vmul.f32 %v3031, %v3033
        %v3035 = vadd.f32 %v3031, %v3034
        %vm3036 = vweird.f32 %v2635
        %vm3037 = vweird.f32 %v3031
        %vm3038 = vmor %vm3036, %vm3037
        %v3039 = vsel %vm3038, %v3031, %v3035
        %v3040 = vand.u32 2147483647, %v2635
        %vm3041 = vcmp.eq.f32.partialorder %v3040, 8.507059e+37
        %v3042 = vand.u32 %v2635, 2147483648
        %v3043 = vor.u32 1.1754944e-38, %v3042
        %v3044 = vsel %vm3041, %v3043, %v3039
        %v3045 = vmul.f32 1.0, %v3044
        %v3046 = vrcp.pop %v2636
        %v3047 = vmul.f32 %v2636, %v3046
        %v3048 = vsub.f32 1.0, %v3047
        %v3049 = vmul.f32 %v3046, %v3048
        %v3050 = vadd.f32 %v3046, %v3049
        %vm3051 = vweird.f32 %v2636
        %vm3052 = vweird.f32 %v3046
        %vm3053 = vmor %vm3051, %vm3052
        %v3054 = vsel %vm3053, %v3046, %v3050
        %v3055 = vand.u32 2147483647, %v2636
        %vm3056 = vcmp.eq.f32.partialorder %v3055, 8.507059e+37
        %v3057 = vand.u32 %v2636, 2147483648
        %v3058 = vor.u32 1.1754944e-38, %v3057
        %v3059 = vsel %vm3056, %v3058, %v3054
        %v3060 = vmul.f32 1.0, %v3059
        %v3061 = vrcp.pop %v2637
        %v3062 = vmul.f32 %v2637, %v3061
        %v3063 = vsub.f32 1.0, %v3062
        %v3064 = vmul.f32 %v3061, %v3063
        %v3065 = vadd.f32 %v3061, %v3064
        %vm3066 = vweird.f32 %v2637
        %vm3067 = vweird.f32 %v3061
        %vm3068 = vmor %vm3066, %vm3067
        %v3069 = vsel %vm3068, %v3061, %v3065
        %v3070 = vand.u32 2147483647, %v2637
        %vm3071 = vcmp.eq.f32.partialorder %v3070, 8.507059e+37
        %v3072 = vand.u32 %v2637, 2147483648
        %v3073 = vor.u32 1.1754944e-38, %v3072
        %v3074 = vsel %vm3071, %v3073, %v3069
        %v3075 = vmul.f32 1.0, %v3074
        %v3076 = vrcp.pop %v2638
        %v3077 = vmul.f32 %v2638, %v3076
        %v3078 = vsub.f32 1.0, %v3077
        %v3079 = vmul.f32 %v3076, %v3078
        %v3080 = vadd.f32 %v3076, %v3079
        %vm3081 = vweird.f32 %v2638
        %vm3082 = vweird.f32 %v3076
        %vm3083 = vmor %vm3081, %vm3082
        %v3084 = vsel %vm3083, %v3076, %v3080
        %v3085 = vand.u32 2147483647, %v2638
        %vm3086 = vcmp.eq.f32.partialorder %v3085, 8.507059e+37
        %v3087 = vand.u32 %v2638, 2147483648
        %v3088 = vor.u32 1.1754944e-38, %v3087
        %v3089 = vsel %vm3086, %v3088, %v3084
        %v3090 = vmul.f32 1.0, %v3089
        %v3091 = vrcp.pop %v2639
        %v3092 = vmul.f32 %v2639, %v3091
        %v3093 = vsub.f32 1.0, %v3092
        %v3094 = vmul.f32 %v3091, %v3093
        %v3095 = vadd.f32 %v3091, %v3094
        %vm3096 = vweird.f32 %v2639
        %vm3097 = vweird.f32 %v3091
        %vm3098 = vmor %vm3096, %vm3097
        %v3099 = vsel %vm3098, %v3091, %v3095
        %v3100 = vand.u32 2147483647, %v2639
        %vm3101 = vcmp.eq.f32.partialorder %v3100, 8.507059e+37
        %v3102 = vand.u32 %v2639, 2147483648
        %v3103 = vor.u32 1.1754944e-38, %v3102
        %v3104 = vsel %vm3101, %v3103, %v3099
        %v3105 = vmul.f32 1.0, %v3104
        %v3106 = vrcp.pop %v2640
        %v3107 = vmul.f32 %v2640, %v3106
        %v3108 = vsub.f32 1.0, %v3107
        %v3109 = vmul.f32 %v3106, %v3108
        %v3110 = vadd.f32 %v3106, %v3109
        %vm3111 = vweird.f32 %v2640
        %vm3112 = vweird.f32 %v3106
        %vm3113 = vmor %vm3111, %vm3112
        %v3114 = vsel %vm3113, %v3106, %v3110
        %v3115 = vand.u32 2147483647, %v2640
        %vm3116 = vcmp.eq.f32.partialorder %v3115, 8.507059e+37
        %v3117 = vand.u32 %v2640, 2147483648
        %v3118 = vor.u32 1.1754944e-38, %v3117
        %v3119 = vsel %vm3116, %v3118, %v3114
        %v3120 = vmul.f32 1.0, %v3119
        %v3121 = vmul.f32 %v2481, %v2655
        %v3122 = vmul.f32 %v2482, %v2670
        %v3123 = vmul.f32 %v2483, %v2685
        %v3124 = vmul.f32 %v2484, %v2700
        %v3125 = vmul.f32 %v2485, %v2715
        %v3126 = vmul.f32 %v2486, %v2730
        %v3127 = vmul.f32 %v2487, %v2745
        %v3128 = vmul.f32 %v2488, %v2760
        %v3129 = vmul.f32 %v2489, %v2775
        %v3130 = vmul.f32 %v2490, %v2790
        %v3131 = vmul.f32 %v2491, %v2805
        %v3132 = vmul.f32 %v2492, %v2820
        %v3133 = vmul.f32 %v2493, %v2835
        %v3134 = vmul.f32 %v2494, %v2850
        %v3135 = vmul.f32 %v2495, %v2865
        %v3136 = vmul.f32 %v2496, %v2880
        %v3137 = vmul.f32 %v2497, %v2895
        %v3138 = vmul.f32 %v2498, %v2910
        %v3139 = vmul.f32 %v2499, %v2925
        %v3140 = vmul.f32 %v2500, %v2940
        %v3141 = vmul.f32 %v2501, %v2955
        %v3142 = vmul.f32 %v2502, %v2970
        %v3143 = vmul.f32 %v2503, %v2985
        %v3144 = vmul.f32 %v2504, %v3000
        %v3145 = vmul.f32 %v2505, %v3015
        %v3146 = vmul.f32 %v2506, %v3030
        %v3147 = vmul.f32 %v2507, %v3045
        %v3148 = vmul.f32 %v2508, %v3060
        %v3149 = vmul.f32 %v2509, %v3075
        %v3150 = vmul.f32 %v2510, %v3090
        %v3151 = vmul.f32 %v2511, %v3105
        %v3152 = vmul.f32 %v2512, %v3120
        %v3153 = vpack.c.bf16 %v3122, %v3121
        %v3154 = vpack.c.bf16 %v3124, %v3123
        %v3155 = vpack.c.bf16 %v3126, %v3125
        %v3156 = vpack.c.bf16 %v3128, %v3127
        %v3157 = vpack.c.bf16 %v3130, %v3129
        %v3158 = vpack.c.bf16 %v3132, %v3131
        %v3159 = vpack.c.bf16 %v3134, %v3133
        %v3160 = vpack.c.bf16 %v3136, %v3135
        %v3161 = vpack.c.bf16 %v3138, %v3137
        %v3162 = vpack.c.bf16 %v3140, %v3139
        %v3163 = vpack.c.bf16 %v3142, %v3141
        %v3164 = vpack.c.bf16 %v3144, %v3143
        %v3165 = vpack.c.bf16 %v3146, %v3145
        %v3166 = vpack.c.bf16 %v3148, %v3147
        %v3167 = vpack.c.bf16 %v3150, %v3149
        %v3168 = vpack.c.bf16 %v3152, %v3151
        %v3169 = vld [vmem:[#allocation11] sm:$0xff]
        %v3170 = vld [vmem:[#allocation11 + $0x8] sm:$0xf]
        %v3171 = vld [vmem:[#allocation11 + $0xc] sm:$0xff]
        %v3172 = vld [vmem:[#allocation11 + $0x14] sm:$0xf]
        %v3173 = vld [vmem:[#allocation11 + $0x18] sm:$0xff]
        %v3174 = vld [vmem:[#allocation11 + $0x20] sm:$0xf]
        %v3175 = vld [vmem:[#allocation11 + $0x24] sm:$0xff]
        %v3176 = vld [vmem:[#allocation11 + $0x2c] sm:$0xf]
        %v3177 = vld [vmem:[#allocation11 + $0x30] sm:$0xff]
        %v3178 = vld [vmem:[#allocation11 + $0x38] sm:$0xf]
        %v3179 = vld [vmem:[#allocation11 + $0x3c] sm:$0xff]
        %v3180 = vld [vmem:[#allocation11 + $0x44] sm:$0xf]
        %v3181 = vld [vmem:[#allocation11 + $0x48] sm:$0xff]
        %v3182 = vld [vmem:[#allocation11 + $0x50] sm:$0xf]
        %v3183 = vld [vmem:[#allocation11 + $0x54] sm:$0xff]
        %v3184 = vld [vmem:[#allocation11 + $0x5c] sm:$0xf]
        %v3185 = vld [vmem:[#allocation11 + $0x60] sm:$0xff]
        %v3186 = vld [vmem:[#allocation11 + $0x68] sm:$0xf]
        %v3187 = vld [vmem:[#allocation11 + $0x6c] sm:$0xff]
        %v3188 = vld [vmem:[#allocation11 + $0x74] sm:$0xf]
        %v3189 = vld [vmem:[#allocation11 + $0x78] sm:$0xff]
        %v3190 = vld [vmem:[#allocation11 + $0x80] sm:$0xf]
        %v3191 = vld [vmem:[#allocation11 + $0x84] sm:$0xff]
        %v3192 = vld [vmem:[#allocation11 + $0x8c] sm:$0xf]
        %v3193 = vld [vmem:[#allocation11 + $0x90] sm:$0xff]
        %v3194 = vld [vmem:[#allocation11 + $0x98] sm:$0xf]
        %v3195 = vld [vmem:[#allocation11 + $0x9c] sm:$0xff]
        %v3196 = vld [vmem:[#allocation11 + $0xa4] sm:$0xf]
        %v3197 = vld [vmem:[#allocation11 + $0xa8] sm:$0xff]
        %v3198 = vld [vmem:[#allocation11 + $0xb0] sm:$0xf]
        %v3199 = vld [vmem:[#allocation11 + $0xb4] sm:$0xff]
        %v3200 = vld [vmem:[#allocation11 + $0xbc] sm:$0xf]
        %v3201 = vld [vmem:[%s7] sm:$0x7]
        %v3203 = vperm.slane %v3201, 0
        %v3204 = vperm.slane %v3201, 1
        %v3205 = vperm.slane %v3201, 2
        %v3241 = vunpack.c.l.b16 %v3169
        %v3242 = vunpack.c.h.b16 %v3169
        %v3243 = vunpack.c.l.b16 %v3170
        %v3244 = vunpack.c.l.b16 %v3171
        %v3245 = vunpack.c.h.b16 %v3171
        %v3246 = vunpack.c.l.b16 %v3172
        %v3247 = vunpack.c.l.b16 %v3173
        %v3248 = vunpack.c.h.b16 %v3173
        %v3249 = vunpack.c.l.b16 %v3174
        %v3250 = vunpack.c.l.b16 %v3175
        %v3251 = vunpack.c.h.b16 %v3175
        %v3252 = vunpack.c.l.b16 %v3176
        %v3253 = vunpack.c.l.b16 %v3177
        %v3254 = vunpack.c.h.b16 %v3177
        %v3255 = vunpack.c.l.b16 %v3178
        %v3256 = vunpack.c.l.b16 %v3179
        %v3257 = vunpack.c.h.b16 %v3179
        %v3258 = vunpack.c.l.b16 %v3180
        %v3259 = vunpack.c.l.b16 %v3181
        %v3260 = vunpack.c.h.b16 %v3181
        %v3261 = vunpack.c.l.b16 %v3182
        %v3262 = vunpack.c.l.b16 %v3183
        %v3263 = vunpack.c.h.b16 %v3183
        %v3264 = vunpack.c.l.b16 %v3184
        %v3265 = vunpack.c.l.b16 %v3185
        %v3266 = vunpack.c.h.b16 %v3185
        %v3267 = vunpack.c.l.b16 %v3186
        %v3268 = vunpack.c.l.b16 %v3187
        %v3269 = vunpack.c.h.b16 %v3187
        %v3270 = vunpack.c.l.b16 %v3188
        %v3271 = vunpack.c.l.b16 %v3189
        %v3272 = vunpack.c.h.b16 %v3189
        %v3273 = vunpack.c.l.b16 %v3190
        %v3274 = vunpack.c.l.b16 %v3191
        %v3275 = vunpack.c.h.b16 %v3191
        %v3276 = vunpack.c.l.b16 %v3192
        %v3277 = vunpack.c.l.b16 %v3193
        %v3278 = vunpack.c.h.b16 %v3193
        %v3279 = vunpack.c.l.b16 %v3194
        %v3280 = vunpack.c.l.b16 %v3195
        %v3281 = vunpack.c.h.b16 %v3195
        %v3282 = vunpack.c.l.b16 %v3196
        %v3283 = vunpack.c.l.b16 %v3197
        %v3284 = vunpack.c.h.b16 %v3197
        %v3285 = vunpack.c.l.b16 %v3198
        %v3286 = vunpack.c.l.b16 %v3199
        %v3287 = vunpack.c.h.b16 %v3199
        %v3288 = vunpack.c.l.b16 %v3200
        %v3289 = vpack.c.b16 %v3244, %v3241
        %v3290 = vpack.c.b16 %v3245, %v3242
        %v3291 = vpack.c.b16 %v3246, %v3243
        %v3292 = vpack.c.b16 %v3250, %v3247
        %v3293 = vpack.c.b16 %v3251, %v3248
        %v3294 = vpack.c.b16 %v3252, %v3249
        %v3295 = vpack.c.b16 %v3256, %v3253
        %v3296 = vpack.c.b16 %v3257, %v3254
        %v3297 = vpack.c.b16 %v3258, %v3255
        %v3298 = vpack.c.b16 %v3262, %v3259
        %v3299 = vpack.c.b16 %v3263, %v3260
        %v3300 = vpack.c.b16 %v3264, %v3261
        %v3301 = vpack.c.b16 %v3268, %v3265
        %v3302 = vpack.c.b16 %v3269, %v3266
        %v3303 = vpack.c.b16 %v3270, %v3267
        %v3304 = vpack.c.b16 %v3274, %v3271
        %v3305 = vpack.c.b16 %v3275, %v3272
        %v3306 = vpack.c.b16 %v3276, %v3273
        %v3307 = vpack.c.b16 %v3280, %v3277
        %v3308 = vpack.c.b16 %v3281, %v3278
        %v3309 = vpack.c.b16 %v3282, %v3279
        %v3310 = vpack.c.b16 %v3286, %v3283
        %v3311 = vpack.c.b16 %v3287, %v3284
        %v3312 = vpack.c.b16 %v3288, %v3285
        %3337 = vmatpush.bf16.msra.mxu0 %v3310
        %3338 = vmatpush.bf16.msra.mxu0 %v3307
        %3339 = vmatpush.bf16.msra.mxu0 %v3304
        %3340 = vmatpush.bf16.msra.mxu0 %v3301
        %3341 = vmatpush.bf16.msra.mxu0 %v3298
        %3342 = vmatpush.bf16.msra.mxu0 %v3295
        %3343 = vmatpush.bf16.msra.mxu0 %v3292
        %3344 = vmatpush.bf16.msra.mxu0 %v3289
        %3345 = vmatmul.bf16.gmra.mxu0 %v3153
        %v3346 = vpop.f32.mrf.mxu0
        %v3347 = vadd.f32 %v3203, %v3346
        %v3348 = vpop.f32.mrf.mxu0
        %v3349 = vadd.f32 %v3203, %v3348
        %3350 = vmatmul.bf16.gmra.mxu0 %v3154
        %v3351 = vpop.f32.mrf.mxu0
        %v3352 = vadd.f32 %v3203, %v3351
        %v3353 = vpop.f32.mrf.mxu0
        %v3354 = vadd.f32 %v3203, %v3353
        %3355 = vmatmul.bf16.gmra.mxu0 %v3155
        %v3356 = vpop.f32.mrf.mxu0
        %v3357 = vadd.f32 %v3203, %v3356
        %v3358 = vpop.f32.mrf.mxu0
        %v3359 = vadd.f32 %v3203, %v3358
        %3360 = vmatmul.bf16.gmra.mxu0 %v3156
        %v3361 = vpop.f32.mrf.mxu0
        %v3362 = vadd.f32 %v3203, %v3361
        %v3363 = vpop.f32.mrf.mxu0
        %v3364 = vadd.f32 %v3203, %v3363
        %3365 = vmatmul.bf16.gmra.mxu0 %v3157
        %v3366 = vpop.f32.mrf.mxu0
        %v3367 = vadd.f32 %v3203, %v3366
        %v3368 = vpop.f32.mrf.mxu0
        %v3369 = vadd.f32 %v3203, %v3368
        %3370 = vmatmul.bf16.gmra.mxu0 %v3158
        %v3371 = vpop.f32.mrf.mxu0
        %v3372 = vadd.f32 %v3203, %v3371
        %v3373 = vpop.f32.mrf.mxu0
        %v3374 = vadd.f32 %v3203, %v3373
        %3375 = vmatmul.bf16.gmra.mxu0 %v3159
        %v3376 = vpop.f32.mrf.mxu0
        %v3377 = vadd.f32 %v3203, %v3376
        %v3378 = vpop.f32.mrf.mxu0
        %v3379 = vadd.f32 %v3203, %v3378
        %3380 = vmatmul.bf16.gmra.mxu0 %v3160
        %v3381 = vpop.f32.mrf.mxu0
        %v3382 = vadd.f32 %v3203, %v3381
        %v3383 = vpop.f32.mrf.mxu0
        %v3384 = vadd.f32 %v3203, %v3383
        %3385 = vmatmul.bf16.gmra.mxu0 %v3161
        %v3386 = vpop.f32.mrf.mxu0
        %v3387 = vadd.f32 %v3203, %v3386
        %v3388 = vpop.f32.mrf.mxu0
        %v3389 = vadd.f32 %v3203, %v3388
        %3390 = vmatmul.bf16.gmra.mxu0 %v3162
        %v3391 = vpop.f32.mrf.mxu0
        %v3392 = vadd.f32 %v3203, %v3391
        %v3393 = vpop.f32.mrf.mxu0
        %v3394 = vadd.f32 %v3203, %v3393
        %3395 = vmatmul.bf16.gmra.mxu0 %v3163
        %v3396 = vpop.f32.mrf.mxu0
        %v3397 = vadd.f32 %v3203, %v3396
        %v3398 = vpop.f32.mrf.mxu0
        %v3399 = vadd.f32 %v3203, %v3398
        %3400 = vmatmul.bf16.gmra.mxu0 %v3164
        %v3401 = vpop.f32.mrf.mxu0
        %v3402 = vadd.f32 %v3203, %v3401
        %v3403 = vpop.f32.mrf.mxu0
        %v3404 = vadd.f32 %v3203, %v3403
        %3405 = vmatmul.bf16.gmra.mxu0 %v3165
        %v3406 = vpop.f32.mrf.mxu0
        %v3407 = vadd.f32 %v3203, %v3406
        %v3408 = vpop.f32.mrf.mxu0
        %v3409 = vadd.f32 %v3203, %v3408
        %3410 = vmatmul.bf16.gmra.mxu0 %v3166
        %v3411 = vpop.f32.mrf.mxu0
        %v3412 = vadd.f32 %v3203, %v3411
        %v3413 = vpop.f32.mrf.mxu0
        %v3414 = vadd.f32 %v3203, %v3413
        %3415 = vmatmul.bf16.gmra.mxu0 %v3167
        %v3416 = vpop.f32.mrf.mxu0
        %v3417 = vadd.f32 %v3203, %v3416
        %v3418 = vpop.f32.mrf.mxu0
        %v3419 = vadd.f32 %v3203, %v3418
        %3420 = vmatmul.bf16.gmra.mxu0 %v3168
        %v3421 = vpop.f32.mrf.mxu0
        %v3422 = vadd.f32 %v3203, %v3421
        %v3423 = vpop.f32.mrf.mxu0
        %v3424 = vadd.f32 %v3203, %v3423
        %3425 = vdwg.mxu0
        %3426 = vmatpush.bf16.msra.mxu0 %v3311
        %3427 = vmatpush.bf16.msra.mxu0 %v3308
        %3428 = vmatpush.bf16.msra.mxu0 %v3305
        %3429 = vmatpush.bf16.msra.mxu0 %v3302
        %3430 = vmatpush.bf16.msra.mxu0 %v3299
        %3431 = vmatpush.bf16.msra.mxu0 %v3296
        %3432 = vmatpush.bf16.msra.mxu0 %v3293
        %3433 = vmatpush.bf16.msra.mxu0 %v3290
        %3434 = vmatmul.bf16.gmra.mxu0 %v3153
        %v3435 = vpop.f32.mrf.mxu0
        %v3436 = vadd.f32 %v3204, %v3435
        %v3437 = vpop.f32.mrf.mxu0
        %v3438 = vadd.f32 %v3204, %v3437
        %3439 = vmatmul.bf16.gmra.mxu0 %v3154
        %v3440 = vpop.f32.mrf.mxu0
        %v3441 = vadd.f32 %v3204, %v3440
        %v3442 = vpop.f32.mrf.mxu0
        %v3443 = vadd.f32 %v3204, %v3442
        %3444 = vmatmul.bf16.gmra.mxu0 %v3155
        %v3445 = vpop.f32.mrf.mxu0
        %v3446 = vadd.f32 %v3204, %v3445
        %v3447 = vpop.f32.mrf.mxu0
        %v3448 = vadd.f32 %v3204, %v3447
        %3449 = vmatmul.bf16.gmra.mxu0 %v3156
        %v3450 = vpop.f32.mrf.mxu0
        %v3451 = vadd.f32 %v3204, %v3450
        %v3452 = vpop.f32.mrf.mxu0
        %v3453 = vadd.f32 %v3204, %v3452
        %3454 = vmatmul.bf16.gmra.mxu0 %v3157
        %v3455 = vpop.f32.mrf.mxu0
        %v3456 = vadd.f32 %v3204, %v3455
        %v3457 = vpop.f32.mrf.mxu0
        %v3458 = vadd.f32 %v3204, %v3457
        %3459 = vmatmul.bf16.gmra.mxu0 %v3158
        %v3460 = vpop.f32.mrf.mxu0
        %v3461 = vadd.f32 %v3204, %v3460
        %v3462 = vpop.f32.mrf.mxu0
        %v3463 = vadd.f32 %v3204, %v3462
        %3464 = vmatmul.bf16.gmra.mxu0 %v3159
        %v3465 = vpop.f32.mrf.mxu0
        %v3466 = vadd.f32 %v3204, %v3465
        %v3467 = vpop.f32.mrf.mxu0
        %v3468 = vadd.f32 %v3204, %v3467
        %3469 = vmatmul.bf16.gmra.mxu0 %v3160
        %v3470 = vpop.f32.mrf.mxu0
        %v3471 = vadd.f32 %v3204, %v3470
        %v3472 = vpop.f32.mrf.mxu0
        %v3473 = vadd.f32 %v3204, %v3472
        %3474 = vmatmul.bf16.gmra.mxu0 %v3161
        %v3475 = vpop.f32.mrf.mxu0
        %v3476 = vadd.f32 %v3204, %v3475
        %v3477 = vpop.f32.mrf.mxu0
        %v3478 = vadd.f32 %v3204, %v3477
        %3479 = vmatmul.bf16.gmra.mxu0 %v3162
        %v3480 = vpop.f32.mrf.mxu0
        %v3481 = vadd.f32 %v3204, %v3480
        %v3482 = vpop.f32.mrf.mxu0
        %v3483 = vadd.f32 %v3204, %v3482
        %3484 = vmatmul.bf16.gmra.mxu0 %v3163
        %v3485 = vpop.f32.mrf.mxu0
        %v3486 = vadd.f32 %v3204, %v3485
        %v3487 = vpop.f32.mrf.mxu0
        %v3488 = vadd.f32 %v3204, %v3487
        %3489 = vmatmul.bf16.gmra.mxu0 %v3164
        %v3490 = vpop.f32.mrf.mxu0
        %v3491 = vadd.f32 %v3204, %v3490
        %v3492 = vpop.f32.mrf.mxu0
        %v3493 = vadd.f32 %v3204, %v3492
        %3494 = vmatmul.bf16.gmra.mxu0 %v3165
        %v3495 = vpop.f32.mrf.mxu0
        %v3496 = vadd.f32 %v3204, %v3495
        %v3497 = vpop.f32.mrf.mxu0
        %v3498 = vadd.f32 %v3204, %v3497
        %3499 = vmatmul.bf16.gmra.mxu0 %v3166
        %v3500 = vpop.f32.mrf.mxu0
        %v3501 = vadd.f32 %v3204, %v3500
        %v3502 = vpop.f32.mrf.mxu0
        %v3503 = vadd.f32 %v3204, %v3502
        %3504 = vmatmul.bf16.gmra.mxu0 %v3167
        %v3505 = vpop.f32.mrf.mxu0
        %v3506 = vadd.f32 %v3204, %v3505
        %v3507 = vpop.f32.mrf.mxu0
        %v3508 = vadd.f32 %v3204, %v3507
        %3509 = vmatmul.bf16.gmra.mxu0 %v3168
        %v3510 = vpop.f32.mrf.mxu0
        %v3511 = vadd.f32 %v3204, %v3510
        %v3512 = vpop.f32.mrf.mxu0
        %v3513 = vadd.f32 %v3204, %v3512
        %3514 = vdwg.mxu0
        %3515 = vmatpush.bf16.msra.mxu0 %v3312
        %3516 = vmatpush.bf16.msra.mxu0 %v3309
        %3517 = vmatpush.bf16.msra.mxu0 %v3306
        %3518 = vmatpush.bf16.msra.mxu0 %v3303
        %3519 = vmatpush.bf16.msra.mxu0 %v3300
        %3520 = vmatpush.bf16.msra.mxu0 %v3297
        %3521 = vmatpush.bf16.msra.mxu0 %v3294
        %3522 = vmatpush.bf16.msra.mxu0 %v3291
        %3523 = vmatmul.bf16.gmra.mxu0 %v3153
        %v3524 = vpop.f32.mrf.mxu0
        %v3525 = vadd.f32 %v3205, %v3524
        %v3526 = vpop.f32.mrf.mxu0
        %v3527 = vadd.f32 %v3205, %v3526
        %3528 = vmatmul.bf16.gmra.mxu0 %v3154
        %v3529 = vpop.f32.mrf.mxu0
        %v3530 = vadd.f32 %v3205, %v3529
        %v3531 = vpop.f32.mrf.mxu0
        %v3532 = vadd.f32 %v3205, %v3531
        %3533 = vmatmul.bf16.gmra.mxu0 %v3155
        %v3534 = vpop.f32.mrf.mxu0
        %v3535 = vadd.f32 %v3205, %v3534
        %v3536 = vpop.f32.mrf.mxu0
        %v3537 = vadd.f32 %v3205, %v3536
        %3538 = vmatmul.bf16.gmra.mxu0 %v3156
        %v3539 = vpop.f32.mrf.mxu0
        %v3540 = vadd.f32 %v3205, %v3539
        %v3541 = vpop.f32.mrf.mxu0
        %v3542 = vadd.f32 %v3205, %v3541
        %3543 = vmatmul.bf16.gmra.mxu0 %v3157
        %v3544 = vpop.f32.mrf.mxu0
        %v3545 = vadd.f32 %v3205, %v3544
        %v3546 = vpop.f32.mrf.mxu0
        %v3547 = vadd.f32 %v3205, %v3546
        %3548 = vmatmul.bf16.gmra.mxu0 %v3158
        %v3549 = vpop.f32.mrf.mxu0
        %v3550 = vadd.f32 %v3205, %v3549
        %v3551 = vpop.f32.mrf.mxu0
        %v3552 = vadd.f32 %v3205, %v3551
        %3553 = vmatmul.bf16.gmra.mxu0 %v3159
        %v3554 = vpop.f32.mrf.mxu0
        %v3555 = vadd.f32 %v3205, %v3554
        %v3556 = vpop.f32.mrf.mxu0
        %v3557 = vadd.f32 %v3205, %v3556
        %3558 = vmatmul.bf16.gmra.mxu0 %v3160
        %v3559 = vpop.f32.mrf.mxu0
        %v3560 = vadd.f32 %v3205, %v3559
        %v3561 = vpop.f32.mrf.mxu0
        %v3562 = vadd.f32 %v3205, %v3561
        %3563 = vmatmul.bf16.gmra.mxu0 %v3161
        %v3564 = vpop.f32.mrf.mxu0
        %v3565 = vadd.f32 %v3205, %v3564
        %v3566 = vpop.f32.mrf.mxu0
        %v3567 = vadd.f32 %v3205, %v3566
        %3568 = vmatmul.bf16.gmra.mxu0 %v3162
        %v3569 = vpop.f32.mrf.mxu0
        %v3570 = vadd.f32 %v3205, %v3569
        %v3571 = vpop.f32.mrf.mxu0
        %v3572 = vadd.f32 %v3205, %v3571
        %3573 = vmatmul.bf16.gmra.mxu0 %v3163
        %v3574 = vpop.f32.mrf.mxu0
        %v3575 = vadd.f32 %v3205, %v3574
        %v3576 = vpop.f32.mrf.mxu0
        %v3577 = vadd.f32 %v3205, %v3576
        %3578 = vmatmul.bf16.gmra.mxu0 %v3164
        %v3579 = vpop.f32.mrf.mxu0
        %v3580 = vadd.f32 %v3205, %v3579
        %v3581 = vpop.f32.mrf.mxu0
        %v3582 = vadd.f32 %v3205, %v3581
        %3583 = vmatmul.bf16.gmra.mxu0 %v3165
        %v3584 = vpop.f32.mrf.mxu0
        %v3585 = vadd.f32 %v3205, %v3584
        %v3586 = vpop.f32.mrf.mxu0
        %v3587 = vadd.f32 %v3205, %v3586
        %3588 = vmatmul.bf16.gmra.mxu0 %v3166
        %v3589 = vpop.f32.mrf.mxu0
        %v3590 = vadd.f32 %v3205, %v3589
        %v3591 = vpop.f32.mrf.mxu0
        %v3592 = vadd.f32 %v3205, %v3591
        %3593 = vmatmul.bf16.gmra.mxu0 %v3167
        %v3594 = vpop.f32.mrf.mxu0
        %v3595 = vadd.f32 %v3205, %v3594
        %v3596 = vpop.f32.mrf.mxu0
        %v3597 = vadd.f32 %v3205, %v3596
        %3598 = vmatmul.bf16.gmra.mxu0 %v3168
        %v3599 = vpop.f32.mrf.mxu0
        %v3600 = vadd.f32 %v3205, %v3599
        %v3601 = vpop.f32.mrf.mxu0
        %v3602 = vadd.f32 %v3205, %v3601
        %3603 = vdwg.mxu0
        %v3604 = vmul.f32 %v3347, %v1027
        %v3605 = vmul.f32 %v3349, %v1029
        %v3606 = vmul.f32 %v3352, %v1032
        %v3607 = vmul.f32 %v3354, %v1034
        %v3608 = vmul.f32 %v3357, %v1037
        %v3609 = vmul.f32 %v3359, %v1039
        %v3610 = vmul.f32 %v3362, %v1042
        %v3611 = vmul.f32 %v3364, %v1044
        %v3612 = vmul.f32 %v3367, %v1047
        %v3613 = vmul.f32 %v3369, %v1049
        %v3614 = vmul.f32 %v3372, %v1052
        %v3615 = vmul.f32 %v3374, %v1054
        %v3616 = vmul.f32 %v3377, %v1057
        %v3617 = vmul.f32 %v3379, %v1059
        %v3618 = vmul.f32 %v3382, %v1062
        %v3619 = vmul.f32 %v3384, %v1064
        %v3620 = vmul.f32 %v3387, %v1067
        %v3621 = vmul.f32 %v3389, %v1069
        %v3622 = vmul.f32 %v3392, %v1072
        %v3623 = vmul.f32 %v3394, %v1074
        %v3624 = vmul.f32 %v3397, %v1077
        %v3625 = vmul.f32 %v3399, %v1079
        %v3626 = vmul.f32 %v3402, %v1082
        %v3627 = vmul.f32 %v3404, %v1084
        %v3628 = vmul.f32 %v3407, %v1087
        %v3629 = vmul.f32 %v3409, %v1089
        %v3630 = vmul.f32 %v3412, %v1092
        %v3631 = vmul.f32 %v3414, %v1094
        %v3632 = vmul.f32 %v3417, %v1097
        %v3633 = vmul.f32 %v3419, %v1099
        %v3634 = vmul.f32 %v3422, %v1102
        %v3635 = vmul.f32 %v3424, %v1104
        %v3636 = vmul.f32 %v3347, %v1107
        %v3637 = vmul.f32 %v3349, %v1109
        %v3638 = vmul.f32 %v3352, %v1112
        %v3639 = vmul.f32 %v3354, %v1114
        %v3640 = vmul.f32 %v3357, %v1117
        %v3641 = vmul.f32 %v3359, %v1119
        %v3642 = vmul.f32 %v3362, %v1122
        %v3643 = vmul.f32 %v3364, %v1124
        %v3644 = vmul.f32 %v3367, %v1127
        %v3645 = vmul.f32 %v3369, %v1129
        %v3646 = vmul.f32 %v3372, %v1132
        %v3647 = vmul.f32 %v3374, %v1134
        %v3648 = vmul.f32 %v3377, %v1137
        %v3649 = vmul.f32 %v3379, %v1139
        %v3650 = vmul.f32 %v3382, %v1142
        %v3651 = vmul.f32 %v3384, %v1144
        %v3652 = vmul.f32 %v3387, %v1147
        %v3653 = vmul.f32 %v3389, %v1149
        %v3654 = vmul.f32 %v3392, %v1152
        %v3655 = vmul.f32 %v3394, %v1154
        %v3656 = vmul.f32 %v3397, %v1157
        %v3657 = vmul.f32 %v3399, %v1159
        %v3658 = vmul.f32 %v3402, %v1162
        %v3659 = vmul.f32 %v3404, %v1164
        %v3660 = vmul.f32 %v3407, %v1167
        %v3661 = vmul.f32 %v3409, %v1169
        %v3662 = vmul.f32 %v3412, %v1172
        %v3663 = vmul.f32 %v3414, %v1174
        %v3664 = vmul.f32 %v3417, %v1177
        %v3665 = vmul.f32 %v3419, %v1179
        %v3666 = vmul.f32 %v3422, %v1182
        %v3667 = vmul.f32 %v3424, %v1184
        %v3668 = vmul.f32 %v3347, %v1187
        %v3669 = vmul.f32 %v3349, %v1189
        %v3670 = vmul.f32 %v3352, %v1192
        %v3671 = vmul.f32 %v3354, %v1194
        %v3672 = vmul.f32 %v3357, %v1197
        %v3673 = vmul.f32 %v3359, %v1199
        %v3674 = vmul.f32 %v3362, %v1202
        %v3675 = vmul.f32 %v3364, %v1204
        %v3676 = vmul.f32 %v3367, %v1207
        %v3677 = vmul.f32 %v3369, %v1209
        %v3678 = vmul.f32 %v3372, %v1212
        %v3679 = vmul.f32 %v3374, %v1214
        %v3680 = vmul.f32 %v3377, %v1217
        %v3681 = vmul.f32 %v3379, %v1219
        %v3682 = vmul.f32 %v3382, %v1222
        %v3683 = vmul.f32 %v3384, %v1224
        %v3684 = vmul.f32 %v3387, %v1227
        %v3685 = vmul.f32 %v3389, %v1229
        %v3686 = vmul.f32 %v3392, %v1232
        %v3687 = vmul.f32 %v3394, %v1234
        %v3688 = vmul.f32 %v3397, %v1237
        %v3689 = vmul.f32 %v3399, %v1239
        %v3690 = vmul.f32 %v3402, %v1242
        %v3691 = vmul.f32 %v3404, %v1244
        %v3692 = vmul.f32 %v3407, %v1247
        %v3693 = vmul.f32 %v3409, %v1249
        %v3694 = vmul.f32 %v3412, %v1252
        %v3695 = vmul.f32 %v3414, %v1254
        %v3696 = vmul.f32 %v3417, %v1257
        %v3697 = vmul.f32 %v3419, %v1259
        %v3698 = vmul.f32 %v3422, %v1262
        %v3699 = vmul.f32 %v3424, %v1264
        %v3700 = vmul.f32 %v1027, %v1276
        %v3701 = vmul.f32 %v1029, %v1278
        %v3702 = vmul.f32 %v1032, %v1281
        %v3703 = vmul.f32 %v1034, %v1283
        %v3704 = vmul.f32 %v1037, %v1286
        %v3705 = vmul.f32 %v1039, %v1288
        %v3706 = vmul.f32 %v1042, %v1291
        %v3707 = vmul.f32 %v1044, %v1293
        %v3708 = vmul.f32 %v1047, %v1296
        %v3709 = vmul.f32 %v1049, %v1298
        %v3710 = vmul.f32 %v1052, %v1301
        %v3711 = vmul.f32 %v1054, %v1303
        %v3712 = vmul.f32 %v1057, %v1306
        %v3713 = vmul.f32 %v1059, %v1308
        %v3714 = vmul.f32 %v1062, %v1311
        %v3715 = vmul.f32 %v1064, %v1313
        %v3716 = vmul.f32 %v1067, %v1316
        %v3717 = vmul.f32 %v1069, %v1318
        %v3718 = vmul.f32 %v1072, %v1321
        %v3719 = vmul.f32 %v1074, %v1323
        %v3720 = vmul.f32 %v1077, %v1326
        %v3721 = vmul.f32 %v1079, %v1328
        %v3722 = vmul.f32 %v1082, %v1331
        %v3723 = vmul.f32 %v1084, %v1333
        %v3724 = vmul.f32 %v1087, %v1336
        %v3725 = vmul.f32 %v1089, %v1338
        %v3726 = vmul.f32 %v1092, %v1341
        %v3727 = vmul.f32 %v1094, %v1343
        %v3728 = vmul.f32 %v1097, %v1346
        %v3729 = vmul.f32 %v1099, %v1348
        %v3730 = vmul.f32 %v1102, %v1351
        %v3731 = vmul.f32 %v1104, %v1353
        %v3732 = vmul.f32 %v1107, %v1356
        %v3733 = vmul.f32 %v1109, %v1358
        %v3734 = vmul.f32 %v1112, %v1361
        %v3735 = vmul.f32 %v1114, %v1363
        %v3736 = vmul.f32 %v1117, %v1366
        %v3737 = vmul.f32 %v1119, %v1368
        %v3738 = vmul.f32 %v1122, %v1371
        %v3739 = vmul.f32 %v1124, %v1373
        %v3740 = vmul.f32 %v1127, %v1376
        %v3741 = vmul.f32 %v1129, %v1378
        %v3742 = vmul.f32 %v1132, %v1381
        %v3743 = vmul.f32 %v1134, %v1383
        %v3744 = vmul.f32 %v1137, %v1386
        %v3745 = vmul.f32 %v1139, %v1388
        %v3746 = vmul.f32 %v1142, %v1391
        %v3747 = vmul.f32 %v1144, %v1393
        %v3748 = vmul.f32 %v1147, %v1396
        %v3749 = vmul.f32 %v1149, %v1398
        %v3750 = vmul.f32 %v1152, %v1401
        %v3751 = vmul.f32 %v1154, %v1403
        %v3752 = vmul.f32 %v1157, %v1406
        %v3753 = vmul.f32 %v1159, %v1408
        %v3754 = vmul.f32 %v1162, %v1411
        %v3755 = vmul.f32 %v1164, %v1413
        %v3756 = vmul.f32 %v1167, %v1416
        %v3757 = vmul.f32 %v1169, %v1418
        %v3758 = vmul.f32 %v1172, %v1421
        %v3759 = vmul.f32 %v1174, %v1423
        %v3760 = vmul.f32 %v1177, %v1426
        %v3761 = vmul.f32 %v1179, %v1428
        %v3762 = vmul.f32 %v1182, %v1431
        %v3763 = vmul.f32 %v1184, %v1433
        %v3764 = vmul.f32 %v1187, %v1436
        %v3765 = vmul.f32 %v1189, %v1438
        %v3766 = vmul.f32 %v1192, %v1441
        %v3767 = vmul.f32 %v1194, %v1443
        %v3768 = vmul.f32 %v1197, %v1446
        %v3769 = vmul.f32 %v1199, %v1448
        %v3770 = vmul.f32 %v1202, %v1451
        %v3771 = vmul.f32 %v1204, %v1453
        %v3772 = vmul.f32 %v1207, %v1456
        %v3773 = vmul.f32 %v1209, %v1458
        %v3774 = vmul.f32 %v1212, %v1461
        %v3775 = vmul.f32 %v1214, %v1463
        %v3776 = vmul.f32 %v1217, %v1466
        %v3777 = vmul.f32 %v1219, %v1468
        %v3778 = vmul.f32 %v1222, %v1471
        %v3779 = vmul.f32 %v1224, %v1473
        %v3780 = vmul.f32 %v1227, %v1476
        %v3781 = vmul.f32 %v1229, %v1478
        %v3782 = vmul.f32 %v1232, %v1481
        %v3783 = vmul.f32 %v1234, %v1483
        %v3784 = vmul.f32 %v1237, %v1486
        %v3785 = vmul.f32 %v1239, %v1488
        %v3786 = vmul.f32 %v1242, %v1491
        %v3787 = vmul.f32 %v1244, %v1493
        %v3788 = vmul.f32 %v1247, %v1496
        %v3789 = vmul.f32 %v1249, %v1498
        %v3790 = vmul.f32 %v1252, %v1501
        %v3791 = vmul.f32 %v1254, %v1503
        %v3792 = vmul.f32 %v1257, %v1506
        %v3793 = vmul.f32 %v1259, %v1508
        %v3794 = vmul.f32 %v1262, %v1511
        %v3795 = vmul.f32 %v1264, %v1513
        %v3796 = vadd.f32 %v3700, %v3732
        %v3797 = vadd.f32 %v3796, %v3764
        %v3798 = vadd.f32 %v3701, %v3733
        %v3799 = vadd.f32 %v3798, %v3765
        %v3800 = vadd.f32 %v3702, %v3734
        %v3801 = vadd.f32 %v3800, %v3766
        %v3802 = vadd.f32 %v3703, %v3735
        %v3803 = vadd.f32 %v3802, %v3767
        %v3804 = vadd.f32 %v3704, %v3736
        %v3805 = vadd.f32 %v3804, %v3768
        %v3806 = vadd.f32 %v3705, %v3737
        %v3807 = vadd.f32 %v3806, %v3769
        %v3808 = vadd.f32 %v3706, %v3738
        %v3809 = vadd.f32 %v3808, %v3770
        %v3810 = vadd.f32 %v3707, %v3739
        %v3811 = vadd.f32 %v3810, %v3771
        %v3812 = vadd.f32 %v3708, %v3740
        %v3813 = vadd.f32 %v3812, %v3772
        %v3814 = vadd.f32 %v3709, %v3741
        %v3815 = vadd.f32 %v3814, %v3773
        %v3816 = vadd.f32 %v3710, %v3742
        %v3817 = vadd.f32 %v3816, %v3774
        %v3818 = vadd.f32 %v3711, %v3743
        %v3819 = vadd.f32 %v3818, %v3775
        %v3820 = vadd.f32 %v3712, %v3744
        %v3821 = vadd.f32 %v3820, %v3776
        %v3822 = vadd.f32 %v3713, %v3745
        %v3823 = vadd.f32 %v3822, %v3777
        %v3824 = vadd.f32 %v3714, %v3746
        %v3825 = vadd.f32 %v3824, %v3778
        %v3826 = vadd.f32 %v3715, %v3747
        %v3827 = vadd.f32 %v3826, %v3779
        %v3828 = vadd.f32 %v3716, %v3748
        %v3829 = vadd.f32 %v3828, %v3780
        %v3830 = vadd.f32 %v3717, %v3749
        %v3831 = vadd.f32 %v3830, %v3781
        %v3832 = vadd.f32 %v3718, %v3750
        %v3833 = vadd.f32 %v3832, %v3782
        %v3834 = vadd.f32 %v3719, %v3751
        %v3835 = vadd.f32 %v3834, %v3783
        %v3836 = vadd.f32 %v3720, %v3752
        %v3837 = vadd.f32 %v3836, %v3784
        %v3838 = vadd.f32 %v3721, %v3753
        %v3839 = vadd.f32 %v3838, %v3785
        %v3840 = vadd.f32 %v3722, %v3754
        %v3841 = vadd.f32 %v3840, %v3786
        %v3842 = vadd.f32 %v3723, %v3755
        %v3843 = vadd.f32 %v3842, %v3787
        %v3844 = vadd.f32 %v3724, %v3756
        %v3845 = vadd.f32 %v3844, %v3788
        %v3846 = vadd.f32 %v3725, %v3757
        %v3847 = vadd.f32 %v3846, %v3789
        %v3848 = vadd.f32 %v3726, %v3758
        %v3849 = vadd.f32 %v3848, %v3790
        %v3850 = vadd.f32 %v3727, %v3759
        %v3851 = vadd.f32 %v3850, %v3791
        %v3852 = vadd.f32 %v3728, %v3760
        %v3853 = vadd.f32 %v3852, %v3792
        %v3854 = vadd.f32 %v3729, %v3761
        %v3855 = vadd.f32 %v3854, %v3793
        %v3856 = vadd.f32 %v3730, %v3762
        %v3857 = vadd.f32 %v3856, %v3794
        %v3858 = vadd.f32 %v3731, %v3763
        %v3859 = vadd.f32 %v3858, %v3795
        %v3860 = vmul.f32 %v3436, %v3797
        %v3861 = vmul.f32 %v3438, %v3799
        %v3862 = vmul.f32 %v3441, %v3801
        %v3863 = vmul.f32 %v3443, %v3803
        %v3864 = vmul.f32 %v3446, %v3805
        %v3865 = vmul.f32 %v3448, %v3807
        %v3866 = vmul.f32 %v3451, %v3809
        %v3867 = vmul.f32 %v3453, %v3811
        %v3868 = vmul.f32 %v3456, %v3813
        %v3869 = vmul.f32 %v3458, %v3815
        %v3870 = vmul.f32 %v3461, %v3817
        %v3871 = vmul.f32 %v3463, %v3819
        %v3872 = vmul.f32 %v3466, %v3821
        %v3873 = vmul.f32 %v3468, %v3823
        %v3874 = vmul.f32 %v3471, %v3825
        %v3875 = vmul.f32 %v3473, %v3827
        %v3876 = vmul.f32 %v3476, %v3829
        %v3877 = vmul.f32 %v3478, %v3831
        %v3878 = vmul.f32 %v3481, %v3833
        %v3879 = vmul.f32 %v3483, %v3835
        %v3880 = vmul.f32 %v3486, %v3837
        %v3881 = vmul.f32 %v3488, %v3839
        %v3882 = vmul.f32 %v3491, %v3841
        %v3883 = vmul.f32 %v3493, %v3843
        %v3884 = vmul.f32 %v3496, %v3845
        %v3885 = vmul.f32 %v3498, %v3847
        %v3886 = vmul.f32 %v3501, %v3849
        %v3887 = vmul.f32 %v3503, %v3851
        %v3888 = vmul.f32 %v3506, %v3853
        %v3889 = vmul.f32 %v3508, %v3855
        %v3890 = vmul.f32 %v3511, %v3857
        %v3891 = vmul.f32 %v3513, %v3859
        %v3892 = vadd.f32 %v3860, %v3525
        %v3893 = vadd.f32 %v3861, %v3527
        %v3894 = vadd.f32 %v3862, %v3530
        %v3895 = vadd.f32 %v3863, %v3532
        %v3896 = vadd.f32 %v3864, %v3535
        %v3897 = vadd.f32 %v3865, %v3537
        %v3898 = vadd.f32 %v3866, %v3540
        %v3899 = vadd.f32 %v3867, %v3542
        %v3900 = vadd.f32 %v3868, %v3545
        %v3901 = vadd.f32 %v3869, %v3547
        %v3902 = vadd.f32 %v3870, %v3550
        %v3903 = vadd.f32 %v3871, %v3552
        %v3904 = vadd.f32 %v3872, %v3555
        %v3905 = vadd.f32 %v3873, %v3557
        %v3906 = vadd.f32 %v3874, %v3560
        %v3907 = vadd.f32 %v3875, %v3562
        %v3908 = vadd.f32 %v3876, %v3565
        %v3909 = vadd.f32 %v3877, %v3567
        %v3910 = vadd.f32 %v3878, %v3570
        %v3911 = vadd.f32 %v3879, %v3572
        %v3912 = vadd.f32 %v3880, %v3575
        %v3913 = vadd.f32 %v3881, %v3577
        %v3914 = vadd.f32 %v3882, %v3580
        %v3915 = vadd.f32 %v3883, %v3582
        %v3916 = vadd.f32 %v3884, %v3585
        %v3917 = vadd.f32 %v3885, %v3587
        %v3918 = vadd.f32 %v3886, %v3590
        %v3919 = vadd.f32 %v3887, %v3592
        %v3920 = vadd.f32 %v3888, %v3595
        %v3921 = vadd.f32 %v3889, %v3597
        %v3922 = vadd.f32 %v3890, %v3600
        %v3923 = vadd.f32 %v3891, %v3602
        %v3924 = vunpack.c.l.bf16 %v499
        %v3925 = vunpack.c.l.bf16 %v500
        %v3926 = vunpack.c.l.bf16 %v501
        %v3927 = vunpack.c.l.bf16 %v502
        %v3928 = vunpack.c.l.bf16 %v503
        %v3929 = vunpack.c.l.bf16 %v504
        %v3930 = vunpack.c.l.bf16 %v505
        %v3931 = vunpack.c.l.bf16 %v506
        %v3932 = vunpack.c.l.bf16 %v507
        %v3933 = vunpack.c.l.bf16 %v508
        %v3934 = vunpack.c.l.bf16 %v509
        %v3935 = vunpack.c.l.bf16 %v510
        %v3936 = vunpack.c.l.bf16 %v511
        %v3937 = vunpack.c.l.bf16 %v512
        %v3938 = vunpack.c.l.bf16 %v513
        %v3939 = vunpack.c.l.bf16 %v514
        %v3940 = vunpack.c.l.bf16 %v515
        %v3941 = vunpack.c.l.bf16 %v516
        %v3942 = vunpack.c.l.bf16 %v517
        %v3943 = vunpack.c.l.bf16 %v518
        %v3944 = vunpack.c.l.bf16 %v519
        %v3945 = vunpack.c.l.bf16 %v520
        %v3946 = vunpack.c.l.bf16 %v521
        %v3947 = vunpack.c.l.bf16 %v522
        %v3948 = vunpack.c.l.bf16 %v523
        %v3949 = vunpack.c.l.bf16 %v524
        %v3950 = vunpack.c.l.bf16 %v525
        %v3951 = vunpack.c.l.bf16 %v526
        %v3952 = vunpack.c.l.bf16 %v527
        %v3953 = vunpack.c.l.bf16 %v528
        %v3954 = vunpack.c.l.bf16 %v529
        %v3955 = vunpack.c.l.bf16 %v530
        %v3956 = vadd.f32 %v3924, %v3892
        %v3957 = vadd.f32 %v3925, %v3893
        %v3958 = vadd.f32 %v3926, %v3894
        %v3959 = vadd.f32 %v3927, %v3895
        %v3960 = vadd.f32 %v3928, %v3896
        %v3961 = vadd.f32 %v3929, %v3897
        %v3962 = vadd.f32 %v3930, %v3898
        %v3963 = vadd.f32 %v3931, %v3899
        %v3964 = vadd.f32 %v3932, %v3900
        %v3965 = vadd.f32 %v3933, %v3901
        %v3966 = vadd.f32 %v3934, %v3902
        %v3967 = vadd.f32 %v3935, %v3903
        %v3968 = vadd.f32 %v3936, %v3904
        %v3969 = vadd.f32 %v3937, %v3905
        %v3970 = vadd.f32 %v3938, %v3906
        %v3971 = vadd.f32 %v3939, %v3907
        %v3972 = vadd.f32 %v3940, %v3908
        %v3973 = vadd.f32 %v3941, %v3909
        %v3974 = vadd.f32 %v3942, %v3910
        %v3975 = vadd.f32 %v3943, %v3911
        %v3976 = vadd.f32 %v3944, %v3912
        %v3977 = vadd.f32 %v3945, %v3913
        %v3978 = vadd.f32 %v3946, %v3914
        %v3979 = vadd.f32 %v3947, %v3915
        %v3980 = vadd.f32 %v3948, %v3916
        %v3981 = vadd.f32 %v3949, %v3917
        %v3982 = vadd.f32 %v3950, %v3918
        %v3983 = vadd.f32 %v3951, %v3919
        %v3984 = vadd.f32 %v3952, %v3920
        %v3985 = vadd.f32 %v3953, %v3921
        %v3986 = vadd.f32 %v3954, %v3922
        %v3987 = vadd.f32 %v3955, %v3923
        %v3988 = vpack.c.bf16 %v3956, %v3956
        %v3989 = vpack.c.bf16 %v3957, %v3957
        %v3990 = vpack.c.bf16 %v3958, %v3958
        %v3991 = vpack.c.bf16 %v3959, %v3959
        %v3992 = vpack.c.bf16 %v3960, %v3960
        %v3993 = vpack.c.bf16 %v3961, %v3961
        %v3994 = vpack.c.bf16 %v3962, %v3962
        %v3995 = vpack.c.bf16 %v3963, %v3963
        %v3996 = vpack.c.bf16 %v3964, %v3964
        %v3997 = vpack.c.bf16 %v3965, %v3965
        %v3998 = vpack.c.bf16 %v3966, %v3966
        %v3999 = vpack.c.bf16 %v3967, %v3967
        %v4000 = vpack.c.bf16 %v3968, %v3968
        %v4001 = vpack.c.bf16 %v3969, %v3969
        %v4002 = vpack.c.bf16 %v3970, %v3970
        %v4003 = vpack.c.bf16 %v3971, %v3971
        %v4004 = vpack.c.bf16 %v3972, %v3972
        %v4005 = vpack.c.bf16 %v3973, %v3973
        %v4006 = vpack.c.bf16 %v3974, %v3974
        %v4007 = vpack.c.bf16 %v3975, %v3975
        %v4008 = vpack.c.bf16 %v3976, %v3976
        %v4009 = vpack.c.bf16 %v3977, %v3977
        %v4010 = vpack.c.bf16 %v3978, %v3978
        %v4011 = vpack.c.bf16 %v3979, %v3979
        %v4012 = vpack.c.bf16 %v3980, %v3980
        %v4013 = vpack.c.bf16 %v3981, %v3981
        %v4014 = vpack.c.bf16 %v3982, %v3982
        %v4015 = vpack.c.bf16 %v3983, %v3983
        %v4016 = vpack.c.bf16 %v3984, %v3984
        %v4017 = vpack.c.bf16 %v3985, %v3985
        %v4018 = vpack.c.bf16 %v3986, %v3986
        %v4019 = vpack.c.bf16 %v3987, %v3987
        %4020 = vst [vmem:[%s487] sm:$0xf] %v3988
        %4021 = vst [vmem:[%s487 + $0x4] sm:$0xf] %v3989
        %4022 = vst [vmem:[%s487 + $0x8] sm:$0xf] %v3990
        %4023 = vst [vmem:[%s487 + $0xc] sm:$0xf] %v3991
        %4024 = vst [vmem:[%s487 + $0x10] sm:$0xf] %v3992
        %4025 = vst [vmem:[%s487 + $0x14] sm:$0xf] %v3993
        %4026 = vst [vmem:[%s487 + $0x18] sm:$0xf] %v3994
        %4027 = vst [vmem:[%s487 + $0x1c] sm:$0xf] %v3995
        %4028 = vst [vmem:[%s487 + $0x20] sm:$0xf] %v3996
        %4029 = vst [vmem:[%s487 + $0x24] sm:$0xf] %v3997
        %4030 = vst [vmem:[%s487 + $0x28] sm:$0xf] %v3998
        %4031 = vst [vmem:[%s487 + $0x2c] sm:$0xf] %v3999
        %4032 = vst [vmem:[%s487 + $0x30] sm:$0xf] %v4000
        %4033 = vst [vmem:[%s487 + $0x34] sm:$0xf] %v4001
        %4034 = vst [vmem:[%s487 + $0x38] sm:$0xf] %v4002
        %4035 = vst [vmem:[%s487 + $0x3c] sm:$0xf] %v4003
        %4036 = vst [vmem:[%s487 + $0x40] sm:$0xf] %v4004
        %4037 = vst [vmem:[%s487 + $0x44] sm:$0xf] %v4005
        %4038 = vst [vmem:[%s487 + $0x48] sm:$0xf] %v4006
        %4039 = vst [vmem:[%s487 + $0x4c] sm:$0xf] %v4007
        %4040 = vst [vmem:[%s487 + $0x50] sm:$0xf] %v4008
        %4041 = vst [vmem:[%s487 + $0x54] sm:$0xf] %v4009
        %4042 = vst [vmem:[%s487 + $0x58] sm:$0xf] %v4010
        %4043 = vst [vmem:[%s487 + $0x5c] sm:$0xf] %v4011
        %4044 = vst [vmem:[%s487 + $0x60] sm:$0xf] %v4012
        %4045 = vst [vmem:[%s487 + $0x64] sm:$0xf] %v4013
        %4046 = vst [vmem:[%s487 + $0x68] sm:$0xf] %v4014
        %4047 = vst [vmem:[%s487 + $0x6c] sm:$0xf] %v4015
        %4048 = vst [vmem:[%s487 + $0x70] sm:$0xf] %v4016
        %4049 = vst [vmem:[%s487 + $0x74] sm:$0xf] %v4017
        %4050 = vst [vmem:[%s487 + $0x78] sm:$0xf] %v4018
        %4051 = vst [vmem:[%s487 + $0x7c] sm:$0xf] %v4019
        %v4052 = vunpack.c.l.bf16 %v531
        %v4053 = vunpack.c.l.bf16 %v532
        %v4054 = vunpack.c.l.bf16 %v533
        %v4055 = vunpack.c.l.bf16 %v534
        %v4056 = vunpack.c.l.bf16 %v535
        %v4057 = vunpack.c.l.bf16 %v536
        %v4058 = vunpack.c.l.bf16 %v537
        %v4059 = vunpack.c.l.bf16 %v538
        %v4060 = vunpack.c.l.bf16 %v539
        %v4061 = vunpack.c.l.bf16 %v540
        %v4062 = vunpack.c.l.bf16 %v541
        %v4063 = vunpack.c.l.bf16 %v542
        %v4064 = vunpack.c.l.bf16 %v543
        %v4065 = vunpack.c.l.bf16 %v544
        %v4066 = vunpack.c.l.bf16 %v545
        %v4067 = vunpack.c.l.bf16 %v546
        %v4068 = vunpack.c.l.bf16 %v547
        %v4069 = vunpack.c.l.bf16 %v548
        %v4070 = vunpack.c.l.bf16 %v549
        %v4071 = vunpack.c.l.bf16 %v550
        %v4072 = vunpack.c.l.bf16 %v551
        %v4073 = vunpack.c.l.bf16 %v552
        %v4074 = vunpack.c.l.bf16 %v553
        %v4075 = vunpack.c.l.bf16 %v554
        %v4076 = vunpack.c.l.bf16 %v555
        %v4077 = vunpack.c.l.bf16 %v556
        %v4078 = vunpack.c.l.bf16 %v557
        %v4079 = vunpack.c.l.bf16 %v558
        %v4080 = vunpack.c.l.bf16 %v559
        %v4081 = vunpack.c.l.bf16 %v560
        %v4082 = vunpack.c.l.bf16 %v561
        %v4083 = vunpack.c.l.bf16 %v562
        %v4084 = vunpack.c.l.bf16 %v563
        %v4085 = vunpack.c.l.bf16 %v564
        %v4086 = vunpack.c.l.bf16 %v565
        %v4087 = vunpack.c.l.bf16 %v566
        %v4088 = vunpack.c.l.bf16 %v567
        %v4089 = vunpack.c.l.bf16 %v568
        %v4090 = vunpack.c.l.bf16 %v569
        %v4091 = vunpack.c.l.bf16 %v570
        %v4092 = vunpack.c.l.bf16 %v571
        %v4093 = vunpack.c.l.bf16 %v572
        %v4094 = vunpack.c.l.bf16 %v573
        %v4095 = vunpack.c.l.bf16 %v574
        %v4096 = vunpack.c.l.bf16 %v575
        %v4097 = vunpack.c.l.bf16 %v576
        %v4098 = vunpack.c.l.bf16 %v577
        %v4099 = vunpack.c.l.bf16 %v578
        %v4100 = vunpack.c.l.bf16 %v579
        %v4101 = vunpack.c.l.bf16 %v580
        %v4102 = vunpack.c.l.bf16 %v581
        %v4103 = vunpack.c.l.bf16 %v582
        %v4104 = vunpack.c.l.bf16 %v583
        %v4105 = vunpack.c.l.bf16 %v584
        %v4106 = vunpack.c.l.bf16 %v585
        %v4107 = vunpack.c.l.bf16 %v586
        %v4108 = vunpack.c.l.bf16 %v587
        %v4109 = vunpack.c.l.bf16 %v588
        %v4110 = vunpack.c.l.bf16 %v589
        %v4111 = vunpack.c.l.bf16 %v590
        %v4112 = vunpack.c.l.bf16 %v591
        %v4113 = vunpack.c.l.bf16 %v592
        %v4114 = vunpack.c.l.bf16 %v593
        %v4115 = vunpack.c.l.bf16 %v594
        %v4116 = vunpack.c.l.bf16 %v595
        %v4117 = vunpack.c.l.bf16 %v596
        %v4118 = vunpack.c.l.bf16 %v597
        %v4119 = vunpack.c.l.bf16 %v598
        %v4120 = vunpack.c.l.bf16 %v599
        %v4121 = vunpack.c.l.bf16 %v600
        %v4122 = vunpack.c.l.bf16 %v601
        %v4123 = vunpack.c.l.bf16 %v602
        %v4124 = vunpack.c.l.bf16 %v603
        %v4125 = vunpack.c.l.bf16 %v604
        %v4126 = vunpack.c.l.bf16 %v605
        %v4127 = vunpack.c.l.bf16 %v606
        %v4128 = vunpack.c.l.bf16 %v607
        %v4129 = vunpack.c.l.bf16 %v608
        %v4130 = vunpack.c.l.bf16 %v609
        %v4131 = vunpack.c.l.bf16 %v610
        %v4132 = vunpack.c.l.bf16 %v611
        %v4133 = vunpack.c.l.bf16 %v612
        %v4134 = vunpack.c.l.bf16 %v613
        %v4135 = vunpack.c.l.bf16 %v614
        %v4136 = vunpack.c.l.bf16 %v615
        %v4137 = vunpack.c.l.bf16 %v616
        %v4138 = vunpack.c.l.bf16 %v617
        %v4139 = vunpack.c.l.bf16 %v618
        %v4140 = vunpack.c.l.bf16 %v619
        %v4141 = vunpack.c.l.bf16 %v620
        %v4142 = vunpack.c.l.bf16 %v621
        %v4143 = vunpack.c.l.bf16 %v622
        %v4144 = vunpack.c.l.bf16 %v623
        %v4145 = vunpack.c.l.bf16 %v624
        %v4146 = vunpack.c.l.bf16 %v625
        %v4147 = vunpack.c.l.bf16 %v626
        %v4148 = vadd.f32 %v4052, %v3604
        %v4149 = vadd.f32 %v4053, %v3605
        %v4150 = vadd.f32 %v4054, %v3606
        %v4151 = vadd.f32 %v4055, %v3607
        %v4152 = vadd.f32 %v4056, %v3608
        %v4153 = vadd.f32 %v4057, %v3609
        %v4154 = vadd.f32 %v4058, %v3610
        %v4155 = vadd.f32 %v4059, %v3611
        %v4156 = vadd.f32 %v4060, %v3612
        %v4157 = vadd.f32 %v4061, %v3613
        %v4158 = vadd.f32 %v4062, %v3614
        %v4159 = vadd.f32 %v4063, %v3615
        %v4160 = vadd.f32 %v4064, %v3616
        %v4161 = vadd.f32 %v4065, %v3617
        %v4162 = vadd.f32 %v4066, %v3618
        %v4163 = vadd.f32 %v4067, %v3619
        %v4164 = vadd.f32 %v4068, %v3620
        %v4165 = vadd.f32 %v4069, %v3621
        %v4166 = vadd.f32 %v4070, %v3622
        %v4167 = vadd.f32 %v4071, %v3623
        %v4168 = vadd.f32 %v4072, %v3624
        %v4169 = vadd.f32 %v4073, %v3625
        %v4170 = vadd.f32 %v4074, %v3626
        %v4171 = vadd.f32 %v4075, %v3627
        %v4172 = vadd.f32 %v4076, %v3628
        %v4173 = vadd.f32 %v4077, %v3629
        %v4174 = vadd.f32 %v4078, %v3630
        %v4175 = vadd.f32 %v4079, %v3631
        %v4176 = vadd.f32 %v4080, %v3632
        %v4177 = vadd.f32 %v4081, %v3633
        %v4178 = vadd.f32 %v4082, %v3634
        %v4179 = vadd.f32 %v4083, %v3635
        %v4180 = vadd.f32 %v4084, %v3636
        %v4181 = vadd.f32 %v4085, %v3637
        %v4182 = vadd.f32 %v4086, %v3638
        %v4183 = vadd.f32 %v4087, %v3639
        %v4184 = vadd.f32 %v4088, %v3640
        %v4185 = vadd.f32 %v4089, %v3641
        %v4186 = vadd.f32 %v4090, %v3642
        %v4187 = vadd.f32 %v4091, %v3643
        %v4188 = vadd.f32 %v4092, %v3644
        %v4189 = vadd.f32 %v4093, %v3645
        %v4190 = vadd.f32 %v4094, %v3646
        %v4191 = vadd.f32 %v4095, %v3647
        %v4192 = vadd.f32 %v4096, %v3648
        %v4193 = vadd.f32 %v4097, %v3649
        %v4194 = vadd.f32 %v4098, %v3650
        %v4195 = vadd.f32 %v4099, %v3651
        %v4196 = vadd.f32 %v4100, %v3652
        %v4197 = vadd.f32 %v4101, %v3653
        %v4198 = vadd.f32 %v4102, %v3654
        %v4199 = vadd.f32 %v4103, %v3655
        %v4200 = vadd.f32 %v4104, %v3656
        %v4201 = vadd.f32 %v4105, %v3657
        %v4202 = vadd.f32 %v4106, %v3658
        %v4203 = vadd.f32 %v4107, %v3659
        %v4204 = vadd.f32 %v4108, %v3660
        %v4205 = vadd.f32 %v4109, %v3661
        %v4206 = vadd.f32 %v4110, %v3662
        %v4207 = vadd.f32 %v4111, %v3663
        %v4208 = vadd.f32 %v4112, %v3664
        %v4209 = vadd.f32 %v4113, %v3665
        %v4210 = vadd.f32 %v4114, %v3666
        %v4211 = vadd.f32 %v4115, %v3667
        %v4212 = vadd.f32 %v4116, %v3668
        %v4213 = vadd.f32 %v4117, %v3669
        %v4214 = vadd.f32 %v4118, %v3670
        %v4215 = vadd.f32 %v4119, %v3671
        %v4216 = vadd.f32 %v4120, %v3672
        %v4217 = vadd.f32 %v4121, %v3673
        %v4218 = vadd.f32 %v4122, %v3674
        %v4219 = vadd.f32 %v4123, %v3675
        %v4220 = vadd.f32 %v4124, %v3676
        %v4221 = vadd.f32 %v4125, %v3677
        %v4222 = vadd.f32 %v4126, %v3678
        %v4223 = vadd.f32 %v4127, %v3679
        %v4224 = vadd.f32 %v4128, %v3680
        %v4225 = vadd.f32 %v4129, %v3681
        %v4226 = vadd.f32 %v4130, %v3682
        %v4227 = vadd.f32 %v4131, %v3683
        %v4228 = vadd.f32 %v4132, %v3684
        %v4229 = vadd.f32 %v4133, %v3685
        %v4230 = vadd.f32 %v4134, %v3686
        %v4231 = vadd.f32 %v4135, %v3687
        %v4232 = vadd.f32 %v4136, %v3688
        %v4233 = vadd.f32 %v4137, %v3689
        %v4234 = vadd.f32 %v4138, %v3690
        %v4235 = vadd.f32 %v4139, %v3691
        %v4236 = vadd.f32 %v4140, %v3692
        %v4237 = vadd.f32 %v4141, %v3693
        %v4238 = vadd.f32 %v4142, %v3694
        %v4239 = vadd.f32 %v4143, %v3695
        %v4240 = vadd.f32 %v4144, %v3696
        %v4241 = vadd.f32 %v4145, %v3697
        %v4242 = vadd.f32 %v4146, %v3698
        %v4243 = vadd.f32 %v4147, %v3699
        %v4244 = vpack.c.bf16 %v4148, %v4148
        %v4245 = vpack.c.bf16 %v4149, %v4149
        %v4246 = vpack.c.bf16 %v4150, %v4150
        %v4247 = vpack.c.bf16 %v4151, %v4151
        %v4248 = vpack.c.bf16 %v4152, %v4152
        %v4249 = vpack.c.bf16 %v4153, %v4153
        %v4250 = vpack.c.bf16 %v4154, %v4154
        %v4251 = vpack.c.bf16 %v4155, %v4155
        %v4252 = vpack.c.bf16 %v4156, %v4156
        %v4253 = vpack.c.bf16 %v4157, %v4157
        %v4254 = vpack.c.bf16 %v4158, %v4158
        %v4255 = vpack.c.bf16 %v4159, %v4159
        %v4256 = vpack.c.bf16 %v4160, %v4160
        %v4257 = vpack.c.bf16 %v4161, %v4161
        %v4258 = vpack.c.bf16 %v4162, %v4162
        %v4259 = vpack.c.bf16 %v4163, %v4163
        %v4260 = vpack.c.bf16 %v4164, %v4164
        %v4261 = vpack.c.bf16 %v4165, %v4165
        %v4262 = vpack.c.bf16 %v4166, %v4166
        %v4263 = vpack.c.bf16 %v4167, %v4167
        %v4264 = vpack.c.bf16 %v4168, %v4168
        %v4265 = vpack.c.bf16 %v4169, %v4169
        %v4266 = vpack.c.bf16 %v4170, %v4170
        %v4267 = vpack.c.bf16 %v4171, %v4171
        %v4268 = vpack.c.bf16 %v4172, %v4172
        %v4269 = vpack.c.bf16 %v4173, %v4173
        %v4270 = vpack.c.bf16 %v4174, %v4174
        %v4271 = vpack.c.bf16 %v4175, %v4175
        %v4272 = vpack.c.bf16 %v4176, %v4176
        %v4273 = vpack.c.bf16 %v4177, %v4177
        %v4274 = vpack.c.bf16 %v4178, %v4178
        %v4275 = vpack.c.bf16 %v4179, %v4179
        %v4276 = vpack.c.bf16 %v4180, %v4180
        %v4277 = vpack.c.bf16 %v4181, %v4181
        %v4278 = vpack.c.bf16 %v4182, %v4182
        %v4279 = vpack.c.bf16 %v4183, %v4183
        %v4280 = vpack.c.bf16 %v4184, %v4184
        %v4281 = vpack.c.bf16 %v4185, %v4185
        %v4282 = vpack.c.bf16 %v4186, %v4186
        %v4283 = vpack.c.bf16 %v4187, %v4187
        %v4284 = vpack.c.bf16 %v4188, %v4188
        %v4285 = vpack.c.bf16 %v4189, %v4189
        %v4286 = vpack.c.bf16 %v4190, %v4190
        %v4287 = vpack.c.bf16 %v4191, %v4191
        %v4288 = vpack.c.bf16 %v4192, %v4192
        %v4289 = vpack.c.bf16 %v4193, %v4193
        %v4290 = vpack.c.bf16 %v4194, %v4194
        %v4291 = vpack.c.bf16 %v4195, %v4195
        %v4292 = vpack.c.bf16 %v4196, %v4196
        %v4293 = vpack.c.bf16 %v4197, %v4197
        %v4294 = vpack.c.bf16 %v4198, %v4198
        %v4295 = vpack.c.bf16 %v4199, %v4199
        %v4296 = vpack.c.bf16 %v4200, %v4200
        %v4297 = vpack.c.bf16 %v4201, %v4201
        %v4298 = vpack.c.bf16 %v4202, %v4202
        %v4299 = vpack.c.bf16 %v4203, %v4203
        %v4300 = vpack.c.bf16 %v4204, %v4204
        %v4301 = vpack.c.bf16 %v4205, %v4205
        %v4302 = vpack.c.bf16 %v4206, %v4206
        %v4303 = vpack.c.bf16 %v4207, %v4207
        %v4304 = vpack.c.bf16 %v4208, %v4208
        %v4305 = vpack.c.bf16 %v4209, %v4209
        %v4306 = vpack.c.bf16 %v4210, %v4210
        %v4307 = vpack.c.bf16 %v4211, %v4211
        %v4308 = vpack.c.bf16 %v4212, %v4212
        %v4309 = vpack.c.bf16 %v4213, %v4213
        %v4310 = vpack.c.bf16 %v4214, %v4214
        %v4311 = vpack.c.bf16 %v4215, %v4215
        %v4312 = vpack.c.bf16 %v4216, %v4216
        %v4313 = vpack.c.bf16 %v4217, %v4217
        %v4314 = vpack.c.bf16 %v4218, %v4218
        %v4315 = vpack.c.bf16 %v4219, %v4219
        %v4316 = vpack.c.bf16 %v4220, %v4220
        %v4317 = vpack.c.bf16 %v4221, %v4221
        %v4318 = vpack.c.bf16 %v4222, %v4222
        %v4319 = vpack.c.bf16 %v4223, %v4223
        %v4320 = vpack.c.bf16 %v4224, %v4224
        %v4321 = vpack.c.bf16 %v4225, %v4225
        %v4322 = vpack.c.bf16 %v4226, %v4226
        %v4323 = vpack.c.bf16 %v4227, %v4227
        %v4324 = vpack.c.bf16 %v4228, %v4228
        %v4325 = vpack.c.bf16 %v4229, %v4229
        %v4326 = vpack.c.bf16 %v4230, %v4230
        %v4327 = vpack.c.bf16 %v4231, %v4231
        %v4328 = vpack.c.bf16 %v4232, %v4232
        %v4329 = vpack.c.bf16 %v4233, %v4233
        %v4330 = vpack.c.bf16 %v4234, %v4234
        %v4331 = vpack.c.bf16 %v4235, %v4235
        %v4332 = vpack.c.bf16 %v4236, %v4236
        %v4333 = vpack.c.bf16 %v4237, %v4237
        %v4334 = vpack.c.bf16 %v4238, %v4238
        %v4335 = vpack.c.bf16 %v4239, %v4239
        %v4336 = vpack.c.bf16 %v4240, %v4240
        %v4337 = vpack.c.bf16 %v4241, %v4241
        %v4338 = vpack.c.bf16 %v4242, %v4242
        %v4339 = vpack.c.bf16 %v4243, %v4243
        %4340 = vst [vmem:[%s494] sm:$0xf] %v4244
        %4341 = vst [vmem:[%s494 + $0x4] sm:$0xf] %v4245
        %4342 = vst [vmem:[%s494 + $0x8] sm:$0xf] %v4246
        %4343 = vst [vmem:[%s494 + $0xc] sm:$0xf] %v4247
        %4344 = vst [vmem:[%s494 + $0x10] sm:$0xf] %v4248
        %4345 = vst [vmem:[%s494 + $0x14] sm:$0xf] %v4249
        %4346 = vst [vmem:[%s494 + $0x18] sm:$0xf] %v4250
        %4347 = vst [vmem:[%s494 + $0x1c] sm:$0xf] %v4251
        %4348 = vst [vmem:[%s494 + $0x20] sm:$0xf] %v4252
        %4349 = vst [vmem:[%s494 + $0x24] sm:$0xf] %v4253
        %4350 = vst [vmem:[%s494 + $0x28] sm:$0xf] %v4254
        %4351 = vst [vmem:[%s494 + $0x2c] sm:$0xf] %v4255
        %4352 = vst [vmem:[%s494 + $0x30] sm:$0xf] %v4256
        %4353 = vst [vmem:[%s494 + $0x34] sm:$0xf] %v4257
        %4354 = vst [vmem:[%s494 + $0x38] sm:$0xf] %v4258
        %4355 = vst [vmem:[%s494 + $0x3c] sm:$0xf] %v4259
        %4356 = vst [vmem:[%s494 + $0x40] sm:$0xf] %v4260
        %4357 = vst [vmem:[%s494 + $0x44] sm:$0xf] %v4261
        %4358 = vst [vmem:[%s494 + $0x48] sm:$0xf] %v4262
        %4359 = vst [vmem:[%s494 + $0x4c] sm:$0xf] %v4263
        %4360 = vst [vmem:[%s494 + $0x50] sm:$0xf] %v4264
        %4361 = vst [vmem:[%s494 + $0x54] sm:$0xf] %v4265
        %4362 = vst [vmem:[%s494 + $0x58] sm:$0xf] %v4266
        %4363 = vst [vmem:[%s494 + $0x5c] sm:$0xf] %v4267
        %4364 = vst [vmem:[%s494 + $0x60] sm:$0xf] %v4268
        %4365 = vst [vmem:[%s494 + $0x64] sm:$0xf] %v4269
        %4366 = vst [vmem:[%s494 + $0x68] sm:$0xf] %v4270
        %4367 = vst [vmem:[%s494 + $0x6c] sm:$0xf] %v4271
        %4368 = vst [vmem:[%s494 + $0x70] sm:$0xf] %v4272
        %4369 = vst [vmem:[%s494 + $0x74] sm:$0xf] %v4273
        %4370 = vst [vmem:[%s494 + $0x78] sm:$0xf] %v4274
        %4371 = vst [vmem:[%s494 + $0x7c] sm:$0xf] %v4275
        %4372 = vst [vmem:[%s494 + $0x80] sm:$0xf] %v4276
        %4373 = vst [vmem:[%s494 + $0x84] sm:$0xf] %v4277
        %4374 = vst [vmem:[%s494 + $0x88] sm:$0xf] %v4278
        %4375 = vst [vmem:[%s494 + $0x8c] sm:$0xf] %v4279
        %4376 = vst [vmem:[%s494 + $0x90] sm:$0xf] %v4280
        %4377 = vst [vmem:[%s494 + $0x94] sm:$0xf] %v4281
        %4378 = vst [vmem:[%s494 + $0x98] sm:$0xf] %v4282
        %4379 = vst [vmem:[%s494 + $0x9c] sm:$0xf] %v4283
        %4380 = vst [vmem:[%s494 + $0xa0] sm:$0xf] %v4284
        %4381 = vst [vmem:[%s494 + $0xa4] sm:$0xf] %v4285
        %4382 = vst [vmem:[%s494 + $0xa8] sm:$0xf] %v4286
        %4383 = vst [vmem:[%s494 + $0xac] sm:$0xf] %v4287
        %4384 = vst [vmem:[%s494 + $0xb0] sm:$0xf] %v4288
        %4385 = vst [vmem:[%s494 + $0xb4] sm:$0xf] %v4289
        %4386 = vst [vmem:[%s494 + $0xb8] sm:$0xf] %v4290
        %4387 = vst [vmem:[%s494 + $0xbc] sm:$0xf] %v4291
        %4388 = vst [vmem:[%s494 + $0xc0] sm:$0xf] %v4292
        %4389 = vst [vmem:[%s494 + $0xc4] sm:$0xf] %v4293
        %4390 = vst [vmem:[%s494 + $0xc8] sm:$0xf] %v4294
        %4391 = vst [vmem:[%s494 + $0xcc] sm:$0xf] %v4295
        %4392 = vst [vmem:[%s494 + $0xd0] sm:$0xf] %v4296
        %4393 = vst [vmem:[%s494 + $0xd4] sm:$0xf] %v4297
        %4394 = vst [vmem:[%s494 + $0xd8] sm:$0xf] %v4298
        %4395 = vst [vmem:[%s494 + $0xdc] sm:$0xf] %v4299
        %4396 = vst [vmem:[%s494 + $0xe0] sm:$0xf] %v4300
        %4397 = vst [vmem:[%s494 + $0xe4] sm:$0xf] %v4301
        %4398 = vst [vmem:[%s494 + $0xe8] sm:$0xf] %v4302
        %4399 = vst [vmem:[%s494 + $0xec] sm:$0xf] %v4303
        %4400 = vst [vmem:[%s494 + $0xf0] sm:$0xf] %v4304
        %4401 = vst [vmem:[%s494 + $0xf4] sm:$0xf] %v4305
        %4402 = vst [vmem:[%s494 + $0xf8] sm:$0xf] %v4306
        %4403 = vst [vmem:[%s494 + $0xfc] sm:$0xf] %v4307
        %4404 = vst [vmem:[%s494 + $0x100] sm:$0xf] %v4308
        %4405 = vst [vmem:[%s494 + $0x104] sm:$0xf] %v4309
        %4406 = vst [vmem:[%s494 + $0x108] sm:$0xf] %v4310
        %4407 = vst [vmem:[%s494 + $0x10c] sm:$0xf] %v4311
        %4408 = vst [vmem:[%s494 + $0x110] sm:$0xf] %v4312
        %4409 = vst [vmem:[%s494 + $0x114] sm:$0xf] %v4313
        %4410 = vst [vmem:[%s494 + $0x118] sm:$0xf] %v4314
        %4411 = vst [vmem:[%s494 + $0x11c] sm:$0xf] %v4315
        %4412 = vst [vmem:[%s494 + $0x120] sm:$0xf] %v4316
        %4413 = vst [vmem:[%s494 + $0x124] sm:$0xf] %v4317
        %4414 = vst [vmem:[%s494 + $0x128] sm:$0xf] %v4318
        %4415 = vst [vmem:[%s494 + $0x12c] sm:$0xf] %v4319
        %4416 = vst [vmem:[%s494 + $0x130] sm:$0xf] %v4320
        %4417 = vst [vmem:[%s494 + $0x134] sm:$0xf] %v4321
        %4418 = vst [vmem:[%s494 + $0x138] sm:$0xf] %v4322
        %4419 = vst [vmem:[%s494 + $0x13c] sm:$0xf] %v4323
        %4420 = vst [vmem:[%s494 + $0x140] sm:$0xf] %v4324
        %4421 = vst [vmem:[%s494 + $0x144] sm:$0xf] %v4325
        %4422 = vst [vmem:[%s494 + $0x148] sm:$0xf] %v4326
        %4423 = vst [vmem:[%s494 + $0x14c] sm:$0xf] %v4327
        %4424 = vst [vmem:[%s494 + $0x150] sm:$0xf] %v4328
        %4425 = vst [vmem:[%s494 + $0x154] sm:$0xf] %v4329
        %4426 = vst [vmem:[%s494 + $0x158] sm:$0xf] %v4330
        %4427 = vst [vmem:[%s494 + $0x15c] sm:$0xf] %v4331
        %4428 = vst [vmem:[%s494 + $0x160] sm:$0xf] %v4332
        %4429 = vst [vmem:[%s494 + $0x164] sm:$0xf] %v4333
        %4430 = vst [vmem:[%s494 + $0x168] sm:$0xf] %v4334
        %4431 = vst [vmem:[%s494 + $0x16c] sm:$0xf] %v4335
        %4432 = vst [vmem:[%s494 + $0x170] sm:$0xf] %v4336
        %4433 = vst [vmem:[%s494 + $0x174] sm:$0xf] %v4337
        %4434 = vst [vmem:[%s494 + $0x178] sm:$0xf] %v4338
        %4435 = vst [vmem:[%s494 + $0x17c] sm:$0xf] %v4339
        %s4436 = sand.u32 %s221, 1
        %s4437 = scalar_lea.sflag [#allocation4], %s4436
        %s4438 = sand.u32 %s221, 1
        %s4439 = smul.addr %s4438, 128
        %s4440 = scalar_lea.vmem [#allocation13], %s4439
        %s4441 = sand.u32 %s247, 1
        %s4442 = scalar_lea.sflag [#allocation15], %s4441
        %s4443 = sand.u32 %s247, 1
        %s4444 = smul.addr %s4443, 384
        %s4445 = scalar_lea.vmem [#allocation14], %s4444
        // Predicated region
        $region77: #{tpu_custom_call.1} parent=51 // pred_check
          %p4446 = pneg %p231
        $region78: #{tpu_custom_call.1} parent=51 // pred_check_branch
          %4448 = sbr.rel (%p4446) target = $region80
        $region79: #{tpu_custom_call.1} parent=51 // pred_region
          %s4449 = smul.u32 32, %s35
          %4451 = vsyncadd %s4437, 0
          %s4452 = smul.addr %s4449, 4
          %s4453 = scalar_lea.hbm %s8, %s4452
          %s4454 = sshll.u32 %s4440, 4
          %s4455 = int_to_ptr.vmem [resolvable:$true] %s4454
          %s4456 = sshll.u32 %s4453, 4
          %s4457 = int_to_ptr.hbm [resolvable:$true] %s4456
          %4462 = dma.vmem_to_hbm [thread:$0]  %s4455, 2048, %s4457, %s4437, 64, 64, 4
        $region80: #{tpu_custom_call.1} parent=51 // pred_fallthru
          _
        // Predicated region
        $region81: #{tpu_custom_call.1} parent=51 // pred_check
          %p4463 = pneg %p257
        $region82: #{tpu_custom_call.1} parent=51 // pred_check_branch
          %4465 = sbr.rel (%p4463) target = $region84
        $region83: #{tpu_custom_call.1} parent=51 // pred_region
          #allocation19 [shape = 'u32[6]{0}', space=smem, size = 0x18, scoped, tag = 'DMA stride descriptor']
          %s4466 = smul.u32 32, %s35
          %4468 = vsyncadd %s4442, 0
          %s4469 = smul.addr %s4466, 4
          %s4470 = scalar_lea.hbm %s9, %s4469
          %s4472 = sshll.u32 1, 14
          %s4473 = sxor.u32 4294967295, %s4472
          %s4476 = sshll.u32 7, 18
          %s4477 = sxor.u32 4294967295, %s4476
          %s4478 = sand.u32 0, %s4477
          %s4480 = sor.u32 %s4478, 0
          %s4481 = sshll.u32 %s4445, 4
          %s4482 = int_to_ptr.vmem [resolvable:$true] %s4481
          %s4483 = sshll.u32 %s4470, 4
          %s4484 = int_to_ptr.hbm [resolvable:$true] %s4483
          %4490 = sst [smem:[#allocation19]] 2048
          %s4491 = scalar_lea.smem [#allocation19], 1
          %4492 = sst [smem:[%s4491]] 4096
          %s4493 = scalar_lea.smem [#allocation19], 2
          %4494 = sst [smem:[%s4493]] 32
          %s4495 = scalar_lea.smem [#allocation19], 3
          %4496 = sst [smem:[%s4495]] 64
          %s4497 = scalar_lea.smem [#allocation19], 4
          %4498 = sst [smem:[%s4497]] 64
          %s4499 = scalar_lea.smem [#allocation19], 5
          %4500 = sst [smem:[%s4499]] 4
          %4502 = dma.general %s4482, 6144, %s4484, %s4442, [#allocation18], [#allocation19], %s4480, 0
        $region84: #{tpu_custom_call.1} parent=51 // pred_fallthru
          _
      $region52: #{tpu_custom_call.1} parent=5 // pred_fallthru
        _
      %p4503 = scmp.le.s32.totalorder 2, %s30
      // Predicated region
      $region85: #{tpu_custom_call.1} parent=5 // pred_check
        %p4504 = pneg %p4503
      $region86: #{tpu_custom_call.1} parent=5 // pred_check_branch
        %4506 = sbr.rel (%p4504) target = $region88
      $region87: #{tpu_custom_call.1} parent=5 // pred_region
        %s4507 = ssub.s32 %s30, 2
        // Predicated region
        $region89: #{tpu_custom_call.1} parent=87 // pred_check
          %p4508 = pneg %p237
        $region90: #{tpu_custom_call.1} parent=87 // pred_check_branch
          %4510 = sbr.rel (%p4508) target = $region92
        $region91: #{tpu_custom_call.1} parent=87 // pred_region
          %s4511 = sand.u32 %s222, 1
          %s4512 = scalar_lea.sflag [#allocation4], %s4511
          %s4513 = sand.u32 %s222, 1
          %s4514 = smul.addr %s4513, 128
          %s4515 = scalar_lea.vmem [#allocation13], %s4514
          %4517 = dma.done %s4512, 2048
        $region92: #{tpu_custom_call.1} parent=87 // pred_fallthru
          _
        // Predicated region
        $region93: #{tpu_custom_call.1} parent=87 // pred_check
          %p4518 = pneg %p263
        $region94: #{tpu_custom_call.1} parent=87 // pred_check_branch
          %4520 = sbr.rel (%p4518) target = $region96
        $region95: #{tpu_custom_call.1} parent=87 // pred_region
          %s4521 = sand.u32 %s248, 1
          %s4522 = scalar_lea.sflag [#allocation15], %s4521
          %s4523 = sand.u32 %s248, 1
          %s4524 = smul.addr %s4523, 384
          %s4525 = scalar_lea.vmem [#allocation14], %s4524
          %4527 = dma.done %s4522, 6144
        $region96: #{tpu_custom_call.1} parent=87 // pred_fallthru
          _
      $region88: #{tpu_custom_call.1} parent=5 // pred_fallthru
        _
    $region6: #{tpu_custom_call.1} parent=1 // loop_footer
      %s34 = sadd.s32 1, %s30
    $region7: #{tpu_custom_call.1} parent=1 // loop_footer_branch
      %29 = sbr.rel target = $region3
    $region8: #{tpu_custom_call.1} parent=1 // loop_exit
      _
    %4528 = vsyncpa [#allocation3], 1
    %s4529 = scalar_lea.sflag [#allocation3], 1
    %4530 = vsyncpa %s4529, 1
    %4531 = vsyncpa [#allocation6], 1
    %s4532 = scalar_lea.sflag [#allocation6], 1
    %4533 = vsyncpa %s4532, 1
    %4534 = vsyncpa [#allocation9], 1
    %4535 = vsyncpa [#allocation12], 1
    %4536 = vsyncpa [#allocation4], 1
    %s4537 = scalar_lea.sflag [#allocation4], 1
    %4538 = vsyncpa %s4537, 1
    %4539 = vsyncpa [#allocation15], 1
    %s4540 = scalar_lea.sflag [#allocation15], 1
    %4541 = vsyncpa %s4540, 1

</llo_original>
